<compile_context>
chip_gen: v5e
topology: v5e:2x2
jax: 0.10.0
libtpu: 0.0.40
codegen_flags: <defaults>
</compile_context>

<pallas_src>
import functools

import jax
import jax.numpy as jnp
from jax.experimental import pallas as pl
from jax.experimental.pallas import tpu as pltpu

F32 = jnp.float32
BF16 = jnp.bfloat16


def _leaky(v, slope):
    return jnp.where(v >= 0, v, slope * v)


# ------------------------------ fused Pallas kernel ------------------------------ #

def _fused_hinet_kernel(*refs, H, W, Cin, Cout, half, slope, eps,
                        use_hin, downsample, BH, BHD):
    """One batch element per grid step; everything after the input load stays in VMEM."""
    if downsample:
        (x_ref, w1_ref, b1_ref, g_ref, bt_ref, w2_ref, b2_ref, wid_ref,
         bid_ref, mask_ref, wd_ref, y_ref, yd_ref, y1p_ref, yp_ref) = refs
    else:
        (x_ref, w1_ref, b1_ref, g_ref, bt_ref, w2_ref, b2_ref, wid_ref,
         bid_ref, mask_ref, y_ref, y1p_ref) = refs
        wd_ref = yd_ref = yp_ref = None

    Wp = W + 2                       # padded width
    PADB = (-(Wp + 1)) % 8           # leading rows so interior stores are sublane aligned
    OFF = PADB + Wp + 1              # flat row of real pixel (0, 0)
    NBR = BH * Wp                    # rows of one conv band in the (H, Wp) "junk" grid
    nb = H // BH

    mask = mask_ref[...]             # (NBR, 1) f32: 1 for real columns (j < W), 0 for junk

    # make the zero padding that conv2 / downsample rely on real
    y1p_ref[...] = jnp.zeros(y1p_ref.shape, y1p_ref.dtype)
    if downsample:
        yp_ref[...] = jnp.zeros(yp_ref.shape, yp_ref.dtype)

    w1 = w1_ref[...]                 # (9*Cin, Cout) bf16
    b1 = b1_ref[...]                 # (1, Cout)     f32

    # ---- pass 1: conv1 as ONE K=9*Cin matmul per band + HIN sum / sum-of-squares ----
    s1 = jnp.zeros((1, half), F32)
    s2 = jnp.zeros((1, half), F32)
    for b in range(nb):
        t0 = b * NBR
        taps = [x_ref[pl.ds(PADB + t0 + kh * Wp + kw, NBR), :]
                for kh in range(3) for kw in range(3)]
        p = jnp.concatenate(taps, axis=1).astype(BF16)          # (NBR, 9*Cin)
        acc = jnp.dot(p, w1, preferred_element_type=F32) + b1   # (NBR, Cout) f32
        acc = acc * mask                                        # zero junk columns
        if use_hin:
            s1 = s1 + jnp.sum(acc[:, :half], axis=0, keepdims=True)
            s2 = s2 + jnp.sum(acc[:, :half] * acc[:, :half], axis=0, keepdims=True)
        y1p_ref[pl.ds(OFF + t0, NBR), :] = acc

    # ---- HIN -> per-channel affine (only the first half of the channels is normalized) ----
    if use_hin:
        inv_n = 1.0 / float(H * W)
        mean = s1 * inv_n
        var = s2 * inv_n - mean * mean                          # biased, like PyTorch
        a_half = g_ref[...] * jax.lax.rsqrt(var + eps)          # (1, half)
        b_half = bt_ref[...] - mean * a_half
        a_full = jnp.concatenate([a_half, jnp.ones((1, Cout - half), F32)], axis=1)
        b_full = jnp.concatenate([b_half, jnp.zeros((1, Cout - half), F32)], axis=1)
    else:
        a_full = jnp.ones((1, Cout), F32)
        b_full = jnp.zeros((1, Cout), F32)

    # ---- pass 2: y1 <- LeakyReLU(a*y1 + b), in place; junk / padding kept at zero ----
    for b in range(nb):
        r0 = OFF + b * NBR
        v = y1p_ref[pl.ds(r0, NBR), :]
        y1p_ref[pl.ds(r0, NBR), :] = _leaky(a_full * v + b_full, slope) * mask

    w2 = w2_ref[...]
    b2 = b2_ref[...]
    wid = wid_ref[...]
    bid = bid_ref[...]

    # ---- pass 3: conv2 (one K=9*Cout matmul) + LeakyReLU + 1x1 identity residual ----
    for b in range(nb):
        t0 = b * NBR
        taps = [y1p_ref[pl.ds(PADB + t0 + kh * Wp + kw, NBR), :]
                for kh in range(3) for kw in range(3)]
        p = jnp.concatenate(taps, axis=1).astype(BF16)          # (NBR, 9*Cout)
        acc = _leaky(jnp.dot(p, w2, preferred_element_type=F32) + b2, slope)
        xi = x_ref[pl.ds(OFF + t0, NBR), :].astype(BF16)        # (NBR, Cin)
        acc = acc + jnp.dot(xi, wid, preferred_element_type=F32) + bid
        acc = acc * mask
        y_ref[pl.ds(t0, NBR), :] = acc
        if downsample:
            yp_ref[pl.ds(OFF + t0, NBR), :] = acc

    # ---- pass 4: 4x4 / stride-2 downsample as one K=16*Cout matmul per band ----
    if downsample:
        wd = wd_ref[...]
        NBD = BHD * Wp
        for b in range((H // 2) // BHD):
            s0 = b * NBD
            taps = [yp_ref[pl.ds(PADB + kh * Wp + kw + 2 * s0, NBD, stride=2), :]
                    for kh in range(4) for kw in range(4)]
            p = jnp.concatenate(taps, axis=1).astype(BF16)      # (NBD, 16*Cout)
            yd_ref[pl.ds(s0, NBD), :] = jnp.dot(p, wd, preferred_element_type=F32)


# ------------------------------------- wrapper ------------------------------------- #

def hinet_conv_block(x_nchw, params, *, relu_slope=0.2, use_hin=True,
                     downsample=True, eps=1e-5):
    """Forward pass of HINetConvBlock (single-tensor input path)."""
    x = jnp.transpose(x_nchw, (0, 2, 3, 1)).astype(F32)        # NCHW -> NHWC
    n, h, w, cin = x.shape
    cout = params["w1"].shape[-1]
    half = cout // 2
    wp = w + 2
    padb = (-(wp + 1)) % 8
    if use_hin:
        assert cout % 2 == 0
    if downsample:
        assert h % 2 == 0 and w % 2 == 0
    ho, wo = h // 2, w // 2

    bh = 8 if h % 8 == 0 else h                                # conv row-band height
    bhd = 4 if (ho % 4 == 0 and ho > 0) else max(ho, 1)        # downsample band height

    # padded-flat activation: alignment rows + 1-pixel zero border + 2 slack rows
    xp = jnp.pad(x, ((0, 0), (1, 2), (1, 1), (0, 0)))          # (n, h+3, w+2, cin)
    xp = xp.reshape(n, (h + 3) * wp, cin)
    xp = jnp.pad(xp, ((0, 0), (padb, 0), (0, 0)))
    r_in = padb + (h + 3) * wp

    w1 = params["w1"].reshape(9 * cin, cout).astype(BF16)      # taps folded into K
    w2 = params["w2"].reshape(9 * cout, cout).astype(BF16)
    wid = params["w_id"].astype(BF16)
    b1 = params["b1"].reshape(1, cout).astype(F32)
    b2 = params["b2"].reshape(1, cout).astype(F32)
    bid = params["b_id"].reshape(1, cout).astype(F32)
    gam = params["hin_gamma"].reshape(1, half).astype(F32)
    bet = params["hin_beta"].reshape(1, half).astype(F32)

    # per-band junk-column mask (1 where j < w on the (bh, wp) junk grid)
    mask = jnp.tile((jnp.arange(wp) < w).astype(F32), bh).reshape(bh * wp, 1)

    kern = functools.partial(
        _fused_hinet_kernel, H=h, W=w, Cin=cin, Cout=cout, half=half,
        slope=relu_slope, eps=eps, use_hin=use_hin, downsample=downsample,
        BH=bh, BHD=bhd)

    def full_spec(shape):
        nd = len(shape)
        return pl.BlockSpec(shape, lambda i, _n=nd: (0,) * _n)

    in_specs = [
        pl.BlockSpec((None, r_in, cin), lambda i: (i, 0, 0)),   # padded-flat activation
        full_spec((9 * cin, cout)), full_spec((1, cout)),       # w1, b1
        full_spec((1, half)), full_spec((1, half)),             # gamma, beta
        full_spec((9 * cout, cout)), full_spec((1, cout)),      # w2, b2
        full_spec((cin, cout)), full_spec((1, cout)),           # w_id, b_id
        full_spec((bh * wp, 1)),                                # junk-column mask
    ]
    inputs = [xp, w1, b1, gam, bet, w2, b2, wid, bid, mask]

    y_shape = jax.ShapeDtypeStruct((n, h * wp, cout), F32)
    y_spec = pl.BlockSpec((None, h * wp, cout), lambda i: (i, 0, 0))
    scratch = [pltpu.VMEM((padb + (h + 3) * wp, cout), F32)]    # padded y1

    if downsample:
        wd = params["w_down"].reshape(16 * cout, cout).astype(BF16)
        in_specs.append(full_spec((16 * cout, cout)))
        inputs.append(wd)
        out_shape = (y_shape, jax.ShapeDtypeStruct((n, ho * wp, cout), F32))
        out_specs = (y_spec, pl.BlockSpec((None, ho * wp, cout), lambda i: (i, 0, 0)))
        scratch.append(pltpu.VMEM((padb + (h + 4) * wp, cout), F32))  # padded y
    else:
        out_shape = y_shape
        out_specs = y_spec

    outs = pl.pallas_call(
        kern,
        out_shape=out_shape,
        grid=(n,),
        in_specs=in_specs,
        out_specs=out_specs,
        scratch_shapes=scratch,
        compiler_params=pltpu.CompilerParams(dimension_semantics=("parallel",)),
    )(*inputs)

    if downsample:
        y_flat, yd_flat = outs
    else:
        y_flat = outs

    y = y_flat.reshape(n, h, wp, cout)[:, :, :w, :]
    y_nchw = jnp.transpose(y, (0, 3, 1, 2))
    if not downsample:
        return None, y_nchw
    yd = yd_flat.reshape(n, ho, wp, cout)[:, :, :wo, :]
    return jnp.transpose(yd, (0, 3, 1, 2)), y_nchw


# --------------------------- deterministic parameter init --------------------------- #

def init_params(key, cin, cout):
    ks = jax.random.split(key, 9)
    s = 0.1
    return dict(
        w1=jax.random.normal(ks[0], (3, 3, cin, cout), F32) * s,     # HWIO
        b1=jax.random.normal(ks[1], (cout,), F32) * s,
        w2=jax.random.normal(ks[2], (3, 3, cout, cout), F32) * s,
        b2=jax.random.normal(ks[3], (cout,), F32) * s,
        w_id=jax.random.normal(ks[4], (cin, cout), F32) * s,         # 1x1 conv
        b_id=jax.random.normal(ks[5], (cout,), F32) * s,
        hin_gamma=1.0 + jax.random.normal(ks[6], (cout // 2,), F32) * s,
        hin_beta=jax.random.normal(ks[7], (cout // 2,), F32) * s,
        w_down=jax.random.normal(ks[8], (4, 4, cout, cout), F32) * s,
    )


# ------------------------------- pure-JAX reference --------------------------------- #

def reference_forward(x_nchw, params, relu_slope=0.2, eps=1e-5,
                      use_hin=True, downsample=True):
    def q(v):  # mirror the kernel's bf16 matmul-operand rounding (f32 accumulation)
        return v.astype(BF16).astype(F32)

    x = jnp.transpose(x_nchw, (0, 2, 3, 1)).astype(F32)

    def conv(v, w, b=None, stride=1, pad=1):
        out = jax.lax.conv_general_dilated(
            q(v), q(w), (stride, stride), [(pad, pad), (pad, pad)],
            dimension_numbers=("NHWC", "HWIO", "NHWC"),
            preferred_element_type=F32)
        return out if b is None else out + b

    def leaky(v):
        return jnp.where(v >= 0, v, relu_slope * v)

    y = conv(x, params["w1"], params["b1"])
    if use_hin:
        half = y.shape[-1] // 2
        y1, y2 = y[..., :half], y[..., half:]
        mean = jnp.mean(y1, axis=(1, 2), keepdims=True)
        var = jnp.mean((y1 - mean) ** 2, axis=(1, 2), keepdims=True)
        y1 = (y1 - mean) / jnp.sqrt(var + eps) * params["hin_gamma"] + params["hin_beta"]
        y = jnp.concatenate([y1, y2], axis=-1)
    y = leaky(y)
    y = leaky(conv(y, params["w2"], params["b2"]))
    y = y + (jnp.einsum("nhwc,cd->nhwd", q(x), q(params["w_id"])) + params["b_id"])
    y_nchw = jnp.transpose(y, (0, 3, 1, 2))
    if not downsample:
        return None, y_nchw
    yd = conv(y, params["w_down"], None, stride=2, pad=1)
    return jnp.transpose(yd, (0, 3, 1, 2)), y_nchw


# --------------------------------------- main --------------------------------------- #

if __name__ == "__main__":
    key = jax.random.PRNGKey(0)
    N, Cin, Cout, H, W = 2, 4, 8, 16, 16
    kx, kp = jax.random.split(key)
    x = jax.random.normal(kx, (N, Cin, H, W), F32)               # NCHW, like PyTorch
    params = init_params(kp, Cin, Cout)

    y_down, y = hinet_conv_block(x, params, relu_slope=0.2,
                                 use_hin=True, downsample=True)
    jax.block_until_ready((y_down, y))

    ref_down, ref_y = reference_forward(x, params)
    for name, got, want in (("y", y, ref_y), ("y_down", y_down, ref_down)):
        err = float(jnp.max(jnp.abs(got - want)))
        scale = float(jnp.max(jnp.abs(want))) + 1e-6
        assert err <= 2e-2 * scale + 1e-3, f"{name} mismatch: err={err}, scale={scale}"

    print("KERNEL_OK")
</pallas_src>

<mosaic_0001>
module attributes {stable_mosaic.version = 11 : i64} {
  func.func @_fused_hinet_kernel(%arg0: i32, %arg1: memref<1x347x4xf32, #tpu.memory_space<vmem>>, %arg2: memref<36x8xbf16, #tpu.memory_space<vmem>>, %arg3: memref<1x8xf32, #tpu.memory_space<vmem>>, %arg4: memref<1x4xf32, #tpu.memory_space<vmem>>, %arg5: memref<1x4xf32, #tpu.memory_space<vmem>>, %arg6: memref<72x8xbf16, #tpu.memory_space<vmem>>, %arg7: memref<1x8xf32, #tpu.memory_space<vmem>>, %arg8: memref<4x8xbf16, #tpu.memory_space<vmem>>, %arg9: memref<1x8xf32, #tpu.memory_space<vmem>>, %arg10: memref<144x1xf32, #tpu.memory_space<vmem>>, %arg11: memref<128x8xbf16, #tpu.memory_space<vmem>>, %arg12: memref<1x288x8xf32, #tpu.memory_space<vmem>>, %arg13: memref<1x144x8xf32, #tpu.memory_space<vmem>>, %arg14: memref<347x8xf32, #tpu.memory_space<vmem>>, %arg15: memref<365x8xf32, #tpu.memory_space<vmem>>) attributes {dimension_semantics = [#tpu.dimension_semantics<parallel>], iteration_bounds = array<i64: 2>, scalar_prefetch = 0 : i64, scratch_operands = 2 : i64, tpu.core_type = #tpu.core_type<tc>, window_params = [{transform_indices = @transform_0, window_bounds = array<i64: 1, 347, 4>}, {pipeline_mode = #tpu.pipeline_mode<synchronous>, transform_indices = @transform_1, window_bounds = array<i64: 36, 8>}, {pipeline_mode = #tpu.pipeline_mode<synchronous>, transform_indices = @transform_2, window_bounds = array<i64: 1, 8>}, {pipeline_mode = #tpu.pipeline_mode<synchronous>, transform_indices = @transform_3, window_bounds = array<i64: 1, 4>}, {pipeline_mode = #tpu.pipeline_mode<synchronous>, transform_indices = @transform_4, window_bounds = array<i64: 1, 4>}, {pipeline_mode = #tpu.pipeline_mode<synchronous>, transform_indices = @transform_5, window_bounds = array<i64: 72, 8>}, {pipeline_mode = #tpu.pipeline_mode<synchronous>, transform_indices = @transform_6, window_bounds = array<i64: 1, 8>}, {pipeline_mode = #tpu.pipeline_mode<synchronous>, transform_indices = @transform_7, window_bounds = array<i64: 4, 8>}, {pipeline_mode = #tpu.pipeline_mode<synchronous>, transform_indices = @transform_8, window_bounds = array<i64: 1, 8>}, {pipeline_mode = #tpu.pipeline_mode<synchronous>, transform_indices = @transform_9, window_bounds = array<i64: 144, 1>}, {pipeline_mode = #tpu.pipeline_mode<synchronous>, transform_indices = @transform_10, window_bounds = array<i64: 128, 8>}, {transform_indices = @transform_11, window_bounds = array<i64: 1, 288, 8>}, {transform_indices = @transform_12, window_bounds = array<i64: 1, 144, 8>}]} {
    %c0 = arith.constant 0 : index
    %c0_0 = arith.constant 0 : index
    %0 = vector.load %arg10[%c0, %c0_0] : memref<144x1xf32, #tpu.memory_space<vmem>>, vector<144x1xf32>
    %cst = arith.constant 0.000000e+00 : f32
    %1 = vector.broadcast %cst : f32 to vector<347x8xf32>
    %c0_1 = arith.constant 0 : index
    %c0_2 = arith.constant 0 : index
    %2 = vector.load %arg14[%c0_1, %c0_2] : memref<347x8xf32, #tpu.memory_space<vmem>>, vector<347x8xf32>
    tpu.vector_store %arg14[%c0_1, %c0_2], %1 {strides = array<i32>} : memref<347x8xf32, #tpu.memory_space<vmem>>, vector<347x8xf32>,
    %cst_3 = arith.constant 0.000000e+00 : f32
    %3 = vector.broadcast %cst_3 : f32 to vector<365x8xf32>
    %c0_4 = arith.constant 0 : index
    %c0_5 = arith.constant 0 : index
    %4 = vector.load %arg15[%c0_4, %c0_5] : memref<365x8xf32, #tpu.memory_space<vmem>>, vector<365x8xf32>
    tpu.vector_store %arg15[%c0_4, %c0_5], %3 {strides = array<i32>} : memref<365x8xf32, #tpu.memory_space<vmem>>, vector<365x8xf32>,
    %c0_6 = arith.constant 0 : index
    %c0_7 = arith.constant 0 : index
    %5 = vector.load %arg2[%c0_6, %c0_7] : memref<36x8xbf16, #tpu.memory_space<vmem>>, vector<36x8xbf16>
    %c0_8 = arith.constant 0 : index
    %c0_9 = arith.constant 0 : index
    %6 = vector.load %arg3[%c0_8, %c0_9] : memref<1x8xf32, #tpu.memory_space<vmem>>, vector<1x8xf32>
    %cst_10 = arith.constant 0.000000e+00 : f32
    %7 = vector.broadcast %cst_10 : f32 to vector<1x4xf32>
    %cst_11 = arith.constant 0.000000e+00 : f32
    %8 = vector.broadcast %cst_11 : f32 to vector<1x4xf32>
    %c0_12 = arith.constant 0 : index
    %c5 = arith.constant 5 : index
    %c0_13 = arith.constant 0 : index
    %9 = vector.load %arg1[%c0_12, %c5, %c0_13] : memref<1x347x4xf32, #tpu.memory_space<vmem>>, vector<1x144x4xf32>
    %10 = vector.shape_cast %9 : vector<1x144x4xf32> to vector<144x4xf32>
    %c0_14 = arith.constant 0 : index
    %c6 = arith.constant 6 : index
    %c0_15 = arith.constant 0 : index
    %11 = vector.load %arg1[%c0_14, %c6, %c0_15] : memref<1x347x4xf32, #tpu.memory_space<vmem>>, vector<1x144x4xf32>
    %12 = vector.shape_cast %11 : vector<1x144x4xf32> to vector<144x4xf32>
    %c0_16 = arith.constant 0 : index
    %c7 = arith.constant 7 : index
    %c0_17 = arith.constant 0 : index
    %13 = vector.load %arg1[%c0_16, %c7, %c0_17] : memref<1x347x4xf32, #tpu.memory_space<vmem>>, vector<1x144x4xf32>
    %14 = vector.shape_cast %13 : vector<1x144x4xf32> to vector<144x4xf32>
    %c0_18 = arith.constant 0 : index
    %c23 = arith.constant 23 : index
    %c0_19 = arith.constant 0 : index
    %15 = vector.load %arg1[%c0_18, %c23, %c0_19] : memref<1x347x4xf32, #tpu.memory_space<vmem>>, vector<1x144x4xf32>
    %16 = vector.shape_cast %15 : vector<1x144x4xf32> to vector<144x4xf32>
    %c0_20 = arith.constant 0 : index
    %c24 = arith.constant 24 : index
    %c0_21 = arith.constant 0 : index
    %17 = vector.load %arg1[%c0_20, %c24, %c0_21] : memref<1x347x4xf32, #tpu.memory_space<vmem>>, vector<1x144x4xf32>
    %18 = vector.shape_cast %17 : vector<1x144x4xf32> to vector<144x4xf32>
    %c0_22 = arith.constant 0 : index
    %c25 = arith.constant 25 : index
    %c0_23 = arith.constant 0 : index
    %19 = vector.load %arg1[%c0_22, %c25, %c0_23] : memref<1x347x4xf32, #tpu.memory_space<vmem>>, vector<1x144x4xf32>
    %20 = vector.shape_cast %19 : vector<1x144x4xf32> to vector<144x4xf32>
    %c0_24 = arith.constant 0 : index
    %c41 = arith.constant 41 : index
    %c0_25 = arith.constant 0 : index
    %21 = vector.load %arg1[%c0_24, %c41, %c0_25] : memref<1x347x4xf32, #tpu.memory_space<vmem>>, vector<1x144x4xf32>
    %22 = vector.shape_cast %21 : vector<1x144x4xf32> to vector<144x4xf32>
    %c0_26 = arith.constant 0 : index
    %c42 = arith.constant 42 : index
    %c0_27 = arith.constant 0 : index
    %23 = vector.load %arg1[%c0_26, %c42, %c0_27] : memref<1x347x4xf32, #tpu.memory_space<vmem>>, vector<1x144x4xf32>
    %24 = vector.shape_cast %23 : vector<1x144x4xf32> to vector<144x4xf32>
    %c0_28 = arith.constant 0 : index
    %c43 = arith.constant 43 : index
    %c0_29 = arith.constant 0 : index
    %25 = vector.load %arg1[%c0_28, %c43, %c0_29] : memref<1x347x4xf32, #tpu.memory_space<vmem>>, vector<1x144x4xf32>
    %26 = vector.shape_cast %25 : vector<1x144x4xf32> to vector<144x4xf32>
    %27 = tpu.concatenate %10, %12, %14, %16, %18, %20, %22, %24, %26 in 1 : vector<144x4xf32>, vector<144x4xf32>, vector<144x4xf32>, vector<144x4xf32>, vector<144x4xf32>, vector<144x4xf32>, vector<144x4xf32>, vector<144x4xf32>, vector<144x4xf32> -> vector<144x36xf32>
    %28 = arith.truncf %27 : vector<144x36xf32> to vector<144x36xbf16>
    %cst_30 = arith.constant dense<0.000000e+00> : vector<144x8xf32>
    %29 = tpu.matmul %28, %5, %cst_30 {dimension_numbers = #tpu.dot_dimension_numbers<[1], [0], [0], [1], [0, 0, 1, 1], [], []>} : vector<144x36xbf16>, vector<36x8xbf16>, vector<144x8xf32> -> vector<144x8xf32>
    %30 = vector.broadcast %6 : vector<1x8xf32> to vector<144x8xf32>
    %31 = arith.addf %29, %30 : vector<144x8xf32>
    %32 = vector.broadcast %0 : vector<144x1xf32> to vector<144x8xf32>
    %33 = arith.mulf %31, %32 : vector<144x8xf32>
    %34 = vector.extract_strided_slice %33 {offsets = [0, 0], sizes = [144, 4], strides = [1, 1]} : vector<144x8xf32> to vector<144x4xf32>
    %cst_31 = arith.constant dense<0.000000e+00> : vector<4xf32>
    %35 = vector.multi_reduction <add>, %34, %cst_31 [0] : vector<144x4xf32> to vector<4xf32>
    %36 = vector.shape_cast %35 : vector<4xf32> to vector<1x4xf32>
    %37 = arith.addf %7, %36 : vector<1x4xf32>
    %38 = vector.extract_strided_slice %33 {offsets = [0, 0], sizes = [144, 4], strides = [1, 1]} : vector<144x8xf32> to vector<144x4xf32>
    %39 = vector.extract_strided_slice %33 {offsets = [0, 0], sizes = [144, 4], strides = [1, 1]} : vector<144x8xf32> to vector<144x4xf32>
    %40 = arith.mulf %38, %39 : vector<144x4xf32>
    %cst_32 = arith.constant dense<0.000000e+00> : vector<4xf32>
    %41 = vector.multi_reduction <add>, %40, %cst_32 [0] : vector<144x4xf32> to vector<4xf32>
    %42 = vector.shape_cast %41 : vector<4xf32> to vector<1x4xf32>
    %43 = arith.addf %8, %42 : vector<1x4xf32>
    %c24_33 = arith.constant 24 : index
    %c0_34 = arith.constant 0 : index
    %44 = vector.load %arg14[%c24_33, %c0_34] : memref<347x8xf32, #tpu.memory_space<vmem>>, vector<144x8xf32>
    tpu.vector_store %arg14[%c24_33, %c0_34], %33 {strides = array<i32>} : memref<347x8xf32, #tpu.memory_space<vmem>>, vector<144x8xf32>,
    %c0_35 = arith.constant 0 : index
    %c149 = arith.constant 149 : index
    %c0_36 = arith.constant 0 : index
    %45 = vector.load %arg1[%c0_35, %c149, %c0_36] : memref<1x347x4xf32, #tpu.memory_space<vmem>>, vector<1x144x4xf32>
    %46 = vector.shape_cast %45 : vector<1x144x4xf32> to vector<144x4xf32>
    %c0_37 = arith.constant 0 : index
    %c150 = arith.constant 150 : index
    %c0_38 = arith.constant 0 : index
    %47 = vector.load %arg1[%c0_37, %c150, %c0_38] : memref<1x347x4xf32, #tpu.memory_space<vmem>>, vector<1x144x4xf32>
    %48 = vector.shape_cast %47 : vector<1x144x4xf32> to vector<144x4xf32>
    %c0_39 = arith.constant 0 : index
    %c151 = arith.constant 151 : index
    %c0_40 = arith.constant 0 : index
    %49 = vector.load %arg1[%c0_39, %c151, %c0_40] : memref<1x347x4xf32, #tpu.memory_space<vmem>>, vector<1x144x4xf32>
    %50 = vector.shape_cast %49 : vector<1x144x4xf32> to vector<144x4xf32>
    %c0_41 = arith.constant 0 : index
    %c167 = arith.constant 167 : index
    %c0_42 = arith.constant 0 : index
    %51 = vector.load %arg1[%c0_41, %c167, %c0_42] : memref<1x347x4xf32, #tpu.memory_space<vmem>>, vector<1x144x4xf32>
    %52 = vector.shape_cast %51 : vector<1x144x4xf32> to vector<144x4xf32>
    %c0_43 = arith.constant 0 : index
    %c168 = arith.constant 168 : index
    %c0_44 = arith.constant 0 : index
    %53 = vector.load %arg1[%c0_43, %c168, %c0_44] : memref<1x347x4xf32, #tpu.memory_space<vmem>>, vector<1x144x4xf32>
    %54 = vector.shape_cast %53 : vector<1x144x4xf32> to vector<144x4xf32>
    %c0_45 = arith.constant 0 : index
    %c169 = arith.constant 169 : index
    %c0_46 = arith.constant 0 : index
    %55 = vector.load %arg1[%c0_45, %c169, %c0_46] : memref<1x347x4xf32, #tpu.memory_space<vmem>>, vector<1x144x4xf32>
    %56 = vector.shape_cast %55 : vector<1x144x4xf32> to vector<144x4xf32>
    %c0_47 = arith.constant 0 : index
    %c185 = arith.constant 185 : index
    %c0_48 = arith.constant 0 : index
    %57 = vector.load %arg1[%c0_47, %c185, %c0_48] : memref<1x347x4xf32, #tpu.memory_space<vmem>>, vector<1x144x4xf32>
    %58 = vector.shape_cast %57 : vector<1x144x4xf32> to vector<144x4xf32>
    %c0_49 = arith.constant 0 : index
    %c186 = arith.constant 186 : index
    %c0_50 = arith.constant 0 : index
    %59 = vector.load %arg1[%c0_49, %c186, %c0_50] : memref<1x347x4xf32, #tpu.memory_space<vmem>>, vector<1x144x4xf32>
    %60 = vector.shape_cast %59 : vector<1x144x4xf32> to vector<144x4xf32>
    %c0_51 = arith.constant 0 : index
    %c187 = arith.constant 187 : index
    %c0_52 = arith.constant 0 : index
    %61 = vector.load %arg1[%c0_51, %c187, %c0_52] : memref<1x347x4xf32, #tpu.memory_space<vmem>>, vector<1x144x4xf32>
    %62 = vector.shape_cast %61 : vector<1x144x4xf32> to vector<144x4xf32>
    %63 = tpu.concatenate %46, %48, %50, %52, %54, %56, %58, %60, %62 in 1 : vector<144x4xf32>, vector<144x4xf32>, vector<144x4xf32>, vector<144x4xf32>, vector<144x4xf32>, vector<144x4xf32>, vector<144x4xf32>, vector<144x4xf32>, vector<144x4xf32> -> vector<144x36xf32>
    %64 = arith.truncf %63 : vector<144x36xf32> to vector<144x36xbf16>
    %cst_53 = arith.constant dense<0.000000e+00> : vector<144x8xf32>
    %65 = tpu.matmul %64, %5, %cst_53 {dimension_numbers = #tpu.dot_dimension_numbers<[1], [0], [0], [1], [0, 0, 1, 1], [], []>} : vector<144x36xbf16>, vector<36x8xbf16>, vector<144x8xf32> -> vector<144x8xf32>
    %66 = vector.broadcast %6 : vector<1x8xf32> to vector<144x8xf32>
    %67 = arith.addf %65, %66 : vector<144x8xf32>
    %68 = vector.broadcast %0 : vector<144x1xf32> to vector<144x8xf32>
    %69 = arith.mulf %67, %68 : vector<144x8xf32>
    %70 = vector.extract_strided_slice %69 {offsets = [0, 0], sizes = [144, 4], strides = [1, 1]} : vector<144x8xf32> to vector<144x4xf32>
    %cst_54 = arith.constant dense<0.000000e+00> : vector<4xf32>
    %71 = vector.multi_reduction <add>, %70, %cst_54 [0] : vector<144x4xf32> to vector<4xf32>
    %72 = vector.shape_cast %71 : vector<4xf32> to vector<1x4xf32>
    %73 = arith.addf %37, %72 : vector<1x4xf32>
    %74 = vector.extract_strided_slice %69 {offsets = [0, 0], sizes = [144, 4], strides = [1, 1]} : vector<144x8xf32> to vector<144x4xf32>
    %75 = vector.extract_strided_slice %69 {offsets = [0, 0], sizes = [144, 4], strides = [1, 1]} : vector<144x8xf32> to vector<144x4xf32>
    %76 = arith.mulf %74, %75 : vector<144x4xf32>
    %cst_55 = arith.constant dense<0.000000e+00> : vector<4xf32>
    %77 = vector.multi_reduction <add>, %76, %cst_55 [0] : vector<144x4xf32> to vector<4xf32>
    %78 = vector.shape_cast %77 : vector<4xf32> to vector<1x4xf32>
    %79 = arith.addf %43, %78 : vector<1x4xf32>
    %c168_56 = arith.constant 168 : index
    %c0_57 = arith.constant 0 : index
    %80 = vector.load %arg14[%c168_56, %c0_57] : memref<347x8xf32, #tpu.memory_space<vmem>>, vector<144x8xf32>
    tpu.vector_store %arg14[%c168_56, %c0_57], %69 {strides = array<i32>} : memref<347x8xf32, #tpu.memory_space<vmem>>, vector<144x8xf32>,
    %cst_58 = arith.constant 3.906250e-03 : f32
    %81 = vector.broadcast %cst_58 : f32 to vector<1x4xf32>
    %82 = arith.mulf %73, %81 : vector<1x4xf32>
    %cst_59 = arith.constant 3.906250e-03 : f32
    %83 = vector.broadcast %cst_59 : f32 to vector<1x4xf32>
    %84 = arith.mulf %79, %83 : vector<1x4xf32>
    %85 = arith.mulf %82, %82 : vector<1x4xf32>
    %86 = arith.subf %84, %85 : vector<1x4xf32>
    %c0_60 = arith.constant 0 : index
    %c0_61 = arith.constant 0 : index
    %87 = vector.load %arg4[%c0_60, %c0_61] : memref<1x4xf32, #tpu.memory_space<vmem>>, vector<1x4xf32>
    %cst_62 = arith.constant 9.99999974E-6 : f32
    %88 = vector.broadcast %cst_62 : f32 to vector<1x4xf32>
    %89 = arith.addf %86, %88 : vector<1x4xf32>
    %90 = math.rsqrt %89 : vector<1x4xf32>
    %91 = arith.mulf %87, %90 : vector<1x4xf32>
    %c0_63 = arith.constant 0 : index
    %c0_64 = arith.constant 0 : index
    %92 = vector.load %arg5[%c0_63, %c0_64] : memref<1x4xf32, #tpu.memory_space<vmem>>, vector<1x4xf32>
    %93 = arith.mulf %82, %91 : vector<1x4xf32>
    %94 = arith.subf %92, %93 : vector<1x4xf32>
    %cst_65 = arith.constant 1.000000e+00 : f32
    %95 = vector.broadcast %cst_65 : f32 to vector<1x4xf32>
    %96 = tpu.concatenate %91, %95 in 1 : vector<1x4xf32>, vector<1x4xf32> -> vector<1x8xf32>
    %cst_66 = arith.constant 0.000000e+00 : f32
    %97 = vector.broadcast %cst_66 : f32 to vector<1x4xf32>
    %98 = tpu.concatenate %94, %97 in 1 : vector<1x4xf32>, vector<1x4xf32> -> vector<1x8xf32>
    %c24_67 = arith.constant 24 : index
    %c0_68 = arith.constant 0 : index
    %99 = vector.load %arg14[%c24_67, %c0_68] : memref<347x8xf32, #tpu.memory_space<vmem>>, vector<144x8xf32>
    %100 = vector.broadcast %96 : vector<1x8xf32> to vector<144x8xf32>
    %101 = arith.mulf %100, %99 : vector<144x8xf32>
    %102 = vector.broadcast %98 : vector<1x8xf32> to vector<144x8xf32>
    %103 = arith.addf %101, %102 : vector<144x8xf32>
    %cst_69 = arith.constant 0.000000e+00 : f32
    %104 = vector.broadcast %cst_69 : f32 to vector<144x8xf32>
    %105 = arith.cmpf oge, %103, %104 : vector<144x8xf32>
    %cst_70 = arith.constant 2.000000e-01 : f32
    %106 = vector.broadcast %cst_70 : f32 to vector<144x8xf32>
    %107 = arith.mulf %106, %103 : vector<144x8xf32>
    %108 = arith.select %105, %103, %107 : vector<144x8xi1>, vector<144x8xf32>
    %109 = vector.broadcast %0 : vector<144x1xf32> to vector<144x8xf32>
    %110 = arith.mulf %108, %109 : vector<144x8xf32>
    %c24_71 = arith.constant 24 : index
    %c0_72 = arith.constant 0 : index
    %111 = vector.load %arg14[%c24_71, %c0_72] : memref<347x8xf32, #tpu.memory_space<vmem>>, vector<144x8xf32>
    tpu.vector_store %arg14[%c24_71, %c0_72], %110 {strides = array<i32>} : memref<347x8xf32, #tpu.memory_space<vmem>>, vector<144x8xf32>,
    %c168_73 = arith.constant 168 : index
    %c0_74 = arith.constant 0 : index
    %112 = vector.load %arg14[%c168_73, %c0_74] : memref<347x8xf32, #tpu.memory_space<vmem>>, vector<144x8xf32>
    %113 = vector.broadcast %96 : vector<1x8xf32> to vector<144x8xf32>
    %114 = arith.mulf %113, %112 : vector<144x8xf32>
    %115 = vector.broadcast %98 : vector<1x8xf32> to vector<144x8xf32>
    %116 = arith.addf %114, %115 : vector<144x8xf32>
    %cst_75 = arith.constant 0.000000e+00 : f32
    %117 = vector.broadcast %cst_75 : f32 to vector<144x8xf32>
    %118 = arith.cmpf oge, %116, %117 : vector<144x8xf32>
    %cst_76 = arith.constant 2.000000e-01 : f32
    %119 = vector.broadcast %cst_76 : f32 to vector<144x8xf32>
    %120 = arith.mulf %119, %116 : vector<144x8xf32>
    %121 = arith.select %118, %116, %120 : vector<144x8xi1>, vector<144x8xf32>
    %122 = vector.broadcast %0 : vector<144x1xf32> to vector<144x8xf32>
    %123 = arith.mulf %121, %122 : vector<144x8xf32>
    %c168_77 = arith.constant 168 : index
    %c0_78 = arith.constant 0 : index
    %124 = vector.load %arg14[%c168_77, %c0_78] : memref<347x8xf32, #tpu.memory_space<vmem>>, vector<144x8xf32>
    tpu.vector_store %arg14[%c168_77, %c0_78], %123 {strides = array<i32>} : memref<347x8xf32, #tpu.memory_space<vmem>>, vector<144x8xf32>,
    %c0_79 = arith.constant 0 : index
    %c0_80 = arith.constant 0 : index
    %125 = vector.load %arg6[%c0_79, %c0_80] : memref<72x8xbf16, #tpu.memory_space<vmem>>, vector<72x8xbf16>
    %c0_81 = arith.constant 0 : index
    %c0_82 = arith.constant 0 : index
    %126 = vector.load %arg7[%c0_81, %c0_82] : memref<1x8xf32, #tpu.memory_space<vmem>>, vector<1x8xf32>
    %c0_83 = arith.constant 0 : index
    %c0_84 = arith.constant 0 : index
    %127 = vector.load %arg8[%c0_83, %c0_84] : memref<4x8xbf16, #tpu.memory_space<vmem>>, vector<4x8xbf16>
    %c0_85 = arith.constant 0 : index
    %c0_86 = arith.constant 0 : index
    %128 = vector.load %arg9[%c0_85, %c0_86] : memref<1x8xf32, #tpu.memory_space<vmem>>, vector<1x8xf32>
    %c5_87 = arith.constant 5 : index
    %c0_88 = arith.constant 0 : index
    %129 = vector.load %arg14[%c5_87, %c0_88] : memref<347x8xf32, #tpu.memory_space<vmem>>, vector<144x8xf32>
    %c6_89 = arith.constant 6 : index
    %c0_90 = arith.constant 0 : index
    %130 = vector.load %arg14[%c6_89, %c0_90] : memref<347x8xf32, #tpu.memory_space<vmem>>, vector<144x8xf32>
    %c7_91 = arith.constant 7 : index
    %c0_92 = arith.constant 0 : index
    %131 = vector.load %arg14[%c7_91, %c0_92] : memref<347x8xf32, #tpu.memory_space<vmem>>, vector<144x8xf32>
    %c23_93 = arith.constant 23 : index
    %c0_94 = arith.constant 0 : index
    %132 = vector.load %arg14[%c23_93, %c0_94] : memref<347x8xf32, #tpu.memory_space<vmem>>, vector<144x8xf32>
    %c24_95 = arith.constant 24 : index
    %c0_96 = arith.constant 0 : index
    %133 = vector.load %arg14[%c24_95, %c0_96] : memref<347x8xf32, #tpu.memory_space<vmem>>, vector<144x8xf32>
    %c25_97 = arith.constant 25 : index
    %c0_98 = arith.constant 0 : index
    %134 = vector.load %arg14[%c25_97, %c0_98] : memref<347x8xf32, #tpu.memory_space<vmem>>, vector<144x8xf32>
    %c41_99 = arith.constant 41 : index
    %c0_100 = arith.constant 0 : index
    %135 = vector.load %arg14[%c41_99, %c0_100] : memref<347x8xf32, #tpu.memory_space<vmem>>, vector<144x8xf32>
    %c42_101 = arith.constant 42 : index
    %c0_102 = arith.constant 0 : index
    %136 = vector.load %arg14[%c42_101, %c0_102] : memref<347x8xf32, #tpu.memory_space<vmem>>, vector<144x8xf32>
    %c43_103 = arith.constant 43 : index
    %c0_104 = arith.constant 0 : index
    %137 = vector.load %arg14[%c43_103, %c0_104] : memref<347x8xf32, #tpu.memory_space<vmem>>, vector<144x8xf32>
    %138 = tpu.concatenate %129, %130, %131, %132, %133, %134, %135, %136, %137 in 1 : vector<144x8xf32>, vector<144x8xf32>, vector<144x8xf32>, vector<144x8xf32>, vector<144x8xf32>, vector<144x8xf32>, vector<144x8xf32>, vector<144x8xf32>, vector<144x8xf32> -> vector<144x72xf32>
    %139 = arith.truncf %138 : vector<144x72xf32> to vector<144x72xbf16>
    %cst_105 = arith.constant dense<0.000000e+00> : vector<144x8xf32>
    %140 = tpu.matmul %139, %125, %cst_105 {dimension_numbers = #tpu.dot_dimension_numbers<[1], [0], [0], [1], [0, 0, 1, 1], [], []>} : vector<144x72xbf16>, vector<72x8xbf16>, vector<144x8xf32> -> vector<144x8xf32>
    %141 = vector.broadcast %126 : vector<1x8xf32> to vector<144x8xf32>
    %142 = arith.addf %140, %141 : vector<144x8xf32>
    %cst_106 = arith.constant 0.000000e+00 : f32
    %143 = vector.broadcast %cst_106 : f32 to vector<144x8xf32>
    %144 = arith.cmpf oge, %142, %143 : vector<144x8xf32>
    %cst_107 = arith.constant 2.000000e-01 : f32
    %145 = vector.broadcast %cst_107 : f32 to vector<144x8xf32>
    %146 = arith.mulf %145, %142 : vector<144x8xf32>
    %147 = arith.select %144, %142, %146 : vector<144x8xi1>, vector<144x8xf32>
    %c0_108 = arith.constant 0 : index
    %c24_109 = arith.constant 24 : index
    %c0_110 = arith.constant 0 : index
    %148 = vector.load %arg1[%c0_108, %c24_109, %c0_110] : memref<1x347x4xf32, #tpu.memory_space<vmem>>, vector<1x144x4xf32>
    %149 = vector.shape_cast %148 : vector<1x144x4xf32> to vector<144x4xf32>
    %150 = arith.truncf %149 : vector<144x4xf32> to vector<144x4xbf16>
    %cst_111 = arith.constant dense<0.000000e+00> : vector<144x8xf32>
    %151 = tpu.matmul %150, %127, %cst_111 {dimension_numbers = #tpu.dot_dimension_numbers<[1], [0], [0], [1], [0, 0, 1, 1], [], []>} : vector<144x4xbf16>, vector<4x8xbf16>, vector<144x8xf32> -> vector<144x8xf32>
    %152 = arith.addf %147, %151 : vector<144x8xf32>
    %153 = vector.broadcast %128 : vector<1x8xf32> to vector<144x8xf32>
    %154 = arith.addf %152, %153 : vector<144x8xf32>
    %155 = vector.broadcast %0 : vector<144x1xf32> to vector<144x8xf32>
    %156 = arith.mulf %154, %155 : vector<144x8xf32>
    %c0_112 = arith.constant 0 : index
    %c0_113 = arith.constant 0 : index
    %c0_114 = arith.constant 0 : index
    %157 = vector.load %arg12[%c0_112, %c0_113, %c0_114] : memref<1x288x8xf32, #tpu.memory_space<vmem>>, vector<1x144x8xf32>
    %158 = vector.shape_cast %157 : vector<1x144x8xf32> to vector<144x8xf32>
    %159 = vector.shape_cast %156 : vector<144x8xf32> to vector<1x144x8xf32>
    tpu.vector_store %arg12[%c0_112, %c0_113, %c0_114], %159 {strides = array<i32>} : memref<1x288x8xf32, #tpu.memory_space<vmem>>, vector<1x144x8xf32>,
    %c24_115 = arith.constant 24 : index
    %c0_116 = arith.constant 0 : index
    %160 = vector.load %arg15[%c24_115, %c0_116] : memref<365x8xf32, #tpu.memory_space<vmem>>, vector<144x8xf32>
    tpu.vector_store %arg15[%c24_115, %c0_116], %156 {strides = array<i32>} : memref<365x8xf32, #tpu.memory_space<vmem>>, vector<144x8xf32>,
    %c149_117 = arith.constant 149 : index
    %c0_118 = arith.constant 0 : index
    %161 = vector.load %arg14[%c149_117, %c0_118] : memref<347x8xf32, #tpu.memory_space<vmem>>, vector<144x8xf32>
    %c150_119 = arith.constant 150 : index
    %c0_120 = arith.constant 0 : index
    %162 = vector.load %arg14[%c150_119, %c0_120] : memref<347x8xf32, #tpu.memory_space<vmem>>, vector<144x8xf32>
    %c151_121 = arith.constant 151 : index
    %c0_122 = arith.constant 0 : index
    %163 = vector.load %arg14[%c151_121, %c0_122] : memref<347x8xf32, #tpu.memory_space<vmem>>, vector<144x8xf32>
    %c167_123 = arith.constant 167 : index
    %c0_124 = arith.constant 0 : index
    %164 = vector.load %arg14[%c167_123, %c0_124] : memref<347x8xf32, #tpu.memory_space<vmem>>, vector<144x8xf32>
    %c168_125 = arith.constant 168 : index
    %c0_126 = arith.constant 0 : index
    %165 = vector.load %arg14[%c168_125, %c0_126] : memref<347x8xf32, #tpu.memory_space<vmem>>, vector<144x8xf32>
    %c169_127 = arith.constant 169 : index
    %c0_128 = arith.constant 0 : index
    %166 = vector.load %arg14[%c169_127, %c0_128] : memref<347x8xf32, #tpu.memory_space<vmem>>, vector<144x8xf32>
    %c185_129 = arith.constant 185 : index
    %c0_130 = arith.constant 0 : index
    %167 = vector.load %arg14[%c185_129, %c0_130] : memref<347x8xf32, #tpu.memory_space<vmem>>, vector<144x8xf32>
    %c186_131 = arith.constant 186 : index
    %c0_132 = arith.constant 0 : index
    %168 = vector.load %arg14[%c186_131, %c0_132] : memref<347x8xf32, #tpu.memory_space<vmem>>, vector<144x8xf32>
    %c187_133 = arith.constant 187 : index
    %c0_134 = arith.constant 0 : index
    %169 = vector.load %arg14[%c187_133, %c0_134] : memref<347x8xf32, #tpu.memory_space<vmem>>, vector<144x8xf32>
    %170 = tpu.concatenate %161, %162, %163, %164, %165, %166, %167, %168, %169 in 1 : vector<144x8xf32>, vector<144x8xf32>, vector<144x8xf32>, vector<144x8xf32>, vector<144x8xf32>, vector<144x8xf32>, vector<144x8xf32>, vector<144x8xf32>, vector<144x8xf32> -> vector<144x72xf32>
    %171 = arith.truncf %170 : vector<144x72xf32> to vector<144x72xbf16>
    %cst_135 = arith.constant dense<0.000000e+00> : vector<144x8xf32>
    %172 = tpu.matmul %171, %125, %cst_135 {dimension_numbers = #tpu.dot_dimension_numbers<[1], [0], [0], [1], [0, 0, 1, 1], [], []>} : vector<144x72xbf16>, vector<72x8xbf16>, vector<144x8xf32> -> vector<144x8xf32>
    %173 = vector.broadcast %126 : vector<1x8xf32> to vector<144x8xf32>
    %174 = arith.addf %172, %173 : vector<144x8xf32>
    %cst_136 = arith.constant 0.000000e+00 : f32
    %175 = vector.broadcast %cst_136 : f32 to vector<144x8xf32>
    %176 = arith.cmpf oge, %174, %175 : vector<144x8xf32>
    %cst_137 = arith.constant 2.000000e-01 : f32
    %177 = vector.broadcast %cst_137 : f32 to vector<144x8xf32>
    %178 = arith.mulf %177, %174 : vector<144x8xf32>
    %179 = arith.select %176, %174, %178 : vector<144x8xi1>, vector<144x8xf32>
    %c0_138 = arith.constant 0 : index
    %c168_139 = arith.constant 168 : index
    %c0_140 = arith.constant 0 : index
    %180 = vector.load %arg1[%c0_138, %c168_139, %c0_140] : memref<1x347x4xf32, #tpu.memory_space<vmem>>, vector<1x144x4xf32>
    %181 = vector.shape_cast %180 : vector<1x144x4xf32> to vector<144x4xf32>
    %182 = arith.truncf %181 : vector<144x4xf32> to vector<144x4xbf16>
    %cst_141 = arith.constant dense<0.000000e+00> : vector<144x8xf32>
    %183 = tpu.matmul %182, %127, %cst_141 {dimension_numbers = #tpu.dot_dimension_numbers<[1], [0], [0], [1], [0, 0, 1, 1], [], []>} : vector<144x4xbf16>, vector<4x8xbf16>, vector<144x8xf32> -> vector<144x8xf32>
    %184 = arith.addf %179, %183 : vector<144x8xf32>
    %185 = vector.broadcast %128 : vector<1x8xf32> to vector<144x8xf32>
    %186 = arith.addf %184, %185 : vector<144x8xf32>
    %187 = vector.broadcast %0 : vector<144x1xf32> to vector<144x8xf32>
    %188 = arith.mulf %186, %187 : vector<144x8xf32>
    %c0_142 = arith.constant 0 : index
    %c144 = arith.constant 144 : index
    %c0_143 = arith.constant 0 : index
    %189 = vector.load %arg12[%c0_142, %c144, %c0_143] : memref<1x288x8xf32, #tpu.memory_space<vmem>>, vector<1x144x8xf32>
    %190 = vector.shape_cast %189 : vector<1x144x8xf32> to vector<144x8xf32>
    %191 = vector.shape_cast %188 : vector<144x8xf32> to vector<1x144x8xf32>
    tpu.vector_store %arg12[%c0_142, %c144, %c0_143], %191 {strides = array<i32>} : memref<1x288x8xf32, #tpu.memory_space<vmem>>, vector<1x144x8xf32>,
    %c168_144 = arith.constant 168 : index
    %c0_145 = arith.constant 0 : index
    %192 = vector.load %arg15[%c168_144, %c0_145] : memref<365x8xf32, #tpu.memory_space<vmem>>, vector<144x8xf32>
    tpu.vector_store %arg15[%c168_144, %c0_145], %188 {strides = array<i32>} : memref<365x8xf32, #tpu.memory_space<vmem>>, vector<144x8xf32>,
    %c0_146 = arith.constant 0 : index
    %c0_147 = arith.constant 0 : index
    %193 = vector.load %arg11[%c0_146, %c0_147] : memref<128x8xbf16, #tpu.memory_space<vmem>>, vector<128x8xbf16>
    %c5_148 = arith.constant 5 : index
    %c0_149 = arith.constant 0 : index
    %194 = tpu.strided_load %arg15[%c5_148, %c0_149] {strides = array<i32: 2, 1>} : memref<365x8xf32, #tpu.memory_space<vmem>>, vector<72x8xf32>
    %c6_150 = arith.constant 6 : index
    %c0_151 = arith.constant 0 : index
    %195 = tpu.strided_load %arg15[%c6_150, %c0_151] {strides = array<i32: 2, 1>} : memref<365x8xf32, #tpu.memory_space<vmem>>, vector<72x8xf32>
    %c7_152 = arith.constant 7 : index
    %c0_153 = arith.constant 0 : index
    %196 = tpu.strided_load %arg15[%c7_152, %c0_153] {strides = array<i32: 2, 1>} : memref<365x8xf32, #tpu.memory_space<vmem>>, vector<72x8xf32>
    %c8 = arith.constant 8 : index
    %c0_154 = arith.constant 0 : index
    %197 = tpu.strided_load %arg15[%c8, %c0_154] {strides = array<i32: 2, 1>} : memref<365x8xf32, #tpu.memory_space<vmem>>, vector<72x8xf32>
    %c23_155 = arith.constant 23 : index
    %c0_156 = arith.constant 0 : index
    %198 = tpu.strided_load %arg15[%c23_155, %c0_156] {strides = array<i32: 2, 1>} : memref<365x8xf32, #tpu.memory_space<vmem>>, vector<72x8xf32>
    %c24_157 = arith.constant 24 : index
    %c0_158 = arith.constant 0 : index
    %199 = tpu.strided_load %arg15[%c24_157, %c0_158] {strides = array<i32: 2, 1>} : memref<365x8xf32, #tpu.memory_space<vmem>>, vector<72x8xf32>
    %c25_159 = arith.constant 25 : index
    %c0_160 = arith.constant 0 : index
    %200 = tpu.strided_load %arg15[%c25_159, %c0_160] {strides = array<i32: 2, 1>} : memref<365x8xf32, #tpu.memory_space<vmem>>, vector<72x8xf32>
    %c26 = arith.constant 26 : index
    %c0_161 = arith.constant 0 : index
    %201 = tpu.strided_load %arg15[%c26, %c0_161] {strides = array<i32: 2, 1>} : memref<365x8xf32, #tpu.memory_space<vmem>>, vector<72x8xf32>
    %c41_162 = arith.constant 41 : index
    %c0_163 = arith.constant 0 : index
    %202 = tpu.strided_load %arg15[%c41_162, %c0_163] {strides = array<i32: 2, 1>} : memref<365x8xf32, #tpu.memory_space<vmem>>, vector<72x8xf32>
    %c42_164 = arith.constant 42 : index
    %c0_165 = arith.constant 0 : index
    %203 = tpu.strided_load %arg15[%c42_164, %c0_165] {strides = array<i32: 2, 1>} : memref<365x8xf32, #tpu.memory_space<vmem>>, vector<72x8xf32>
    %c43_166 = arith.constant 43 : index
    %c0_167 = arith.constant 0 : index
    %204 = tpu.strided_load %arg15[%c43_166, %c0_167] {strides = array<i32: 2, 1>} : memref<365x8xf32, #tpu.memory_space<vmem>>, vector<72x8xf32>
    %c44 = arith.constant 44 : index
    %c0_168 = arith.constant 0 : index
    %205 = tpu.strided_load %arg15[%c44, %c0_168] {strides = array<i32: 2, 1>} : memref<365x8xf32, #tpu.memory_space<vmem>>, vector<72x8xf32>
    %c59 = arith.constant 59 : index
    %c0_169 = arith.constant 0 : index
    %206 = tpu.strided_load %arg15[%c59, %c0_169] {strides = array<i32: 2, 1>} : memref<365x8xf32, #tpu.memory_space<vmem>>, vector<72x8xf32>
    %c60 = arith.constant 60 : index
    %c0_170 = arith.constant 0 : index
    %207 = tpu.strided_load %arg15[%c60, %c0_170] {strides = array<i32: 2, 1>} : memref<365x8xf32, #tpu.memory_space<vmem>>, vector<72x8xf32>
    %c61 = arith.constant 61 : index
    %c0_171 = arith.constant 0 : index
    %208 = tpu.strided_load %arg15[%c61, %c0_171] {strides = array<i32: 2, 1>} : memref<365x8xf32, #tpu.memory_space<vmem>>, vector<72x8xf32>
    %c62 = arith.constant 62 : index
    %c0_172 = arith.constant 0 : index
    %209 = tpu.strided_load %arg15[%c62, %c0_172] {strides = array<i32: 2, 1>} : memref<365x8xf32, #tpu.memory_space<vmem>>, vector<72x8xf32>
    %210 = tpu.concatenate %194, %195, %196, %197, %198, %199, %200, %201, %202, %203, %204, %205, %206, %207, %208, %209 in 1 : vector<72x8xf32>, vector<72x8xf32>, vector<72x8xf32>, vector<72x8xf32>, vector<72x8xf32>, vector<72x8xf32>, vector<72x8xf32>, vector<72x8xf32>, vector<72x8xf32>, vector<72x8xf32>, vector<72x8xf32>, vector<72x8xf32>, vector<72x8xf32>, vector<72x8xf32>, vector<72x8xf32>, vector<72x8xf32> -> vector<72x128xf32>
    %211 = arith.truncf %210 : vector<72x128xf32> to vector<72x128xbf16>
    %cst_173 = arith.constant dense<0.000000e+00> : vector<72x8xf32>
    %212 = tpu.matmul %211, %193, %cst_173 {dimension_numbers = #tpu.dot_dimension_numbers<[1], [0], [0], [1], [0, 0, 1, 1], [], []>} : vector<72x128xbf16>, vector<128x8xbf16>, vector<72x8xf32> -> vector<72x8xf32>
    %c0_174 = arith.constant 0 : index
    %c0_175 = arith.constant 0 : index
    %c0_176 = arith.constant 0 : index
    %213 = vector.load %arg13[%c0_174, %c0_175, %c0_176] : memref<1x144x8xf32, #tpu.memory_space<vmem>>, vector<1x72x8xf32>
    %214 = vector.shape_cast %213 : vector<1x72x8xf32> to vector<72x8xf32>
    %215 = vector.shape_cast %212 : vector<72x8xf32> to vector<1x72x8xf32>
    tpu.vector_store %arg13[%c0_174, %c0_175, %c0_176], %215 {strides = array<i32>} : memref<1x144x8xf32, #tpu.memory_space<vmem>>, vector<1x72x8xf32>,
    %c149_177 = arith.constant 149 : index
    %c0_178 = arith.constant 0 : index
    %216 = tpu.strided_load %arg15[%c149_177, %c0_178] {strides = array<i32: 2, 1>} : memref<365x8xf32, #tpu.memory_space<vmem>>, vector<72x8xf32>
    %c150_179 = arith.constant 150 : index
    %c0_180 = arith.constant 0 : index
    %217 = tpu.strided_load %arg15[%c150_179, %c0_180] {strides = array<i32: 2, 1>} : memref<365x8xf32, #tpu.memory_space<vmem>>, vector<72x8xf32>
    %c151_181 = arith.constant 151 : index
    %c0_182 = arith.constant 0 : index
    %218 = tpu.strided_load %arg15[%c151_181, %c0_182] {strides = array<i32: 2, 1>} : memref<365x8xf32, #tpu.memory_space<vmem>>, vector<72x8xf32>
    %c152 = arith.constant 152 : index
    %c0_183 = arith.constant 0 : index
    %219 = tpu.strided_load %arg15[%c152, %c0_183] {strides = array<i32: 2, 1>} : memref<365x8xf32, #tpu.memory_space<vmem>>, vector<72x8xf32>
    %c167_184 = arith.constant 167 : index
    %c0_185 = arith.constant 0 : index
    %220 = tpu.strided_load %arg15[%c167_184, %c0_185] {strides = array<i32: 2, 1>} : memref<365x8xf32, #tpu.memory_space<vmem>>, vector<72x8xf32>
    %c168_186 = arith.constant 168 : index
    %c0_187 = arith.constant 0 : index
    %221 = tpu.strided_load %arg15[%c168_186, %c0_187] {strides = array<i32: 2, 1>} : memref<365x8xf32, #tpu.memory_space<vmem>>, vector<72x8xf32>
    %c169_188 = arith.constant 169 : index
    %c0_189 = arith.constant 0 : index
    %222 = tpu.strided_load %arg15[%c169_188, %c0_189] {strides = array<i32: 2, 1>} : memref<365x8xf32, #tpu.memory_space<vmem>>, vector<72x8xf32>
    %c170 = arith.constant 170 : index
    %c0_190 = arith.constant 0 : index
    %223 = tpu.strided_load %arg15[%c170, %c0_190] {strides = array<i32: 2, 1>} : memref<365x8xf32, #tpu.memory_space<vmem>>, vector<72x8xf32>
    %c185_191 = arith.constant 185 : index
    %c0_192 = arith.constant 0 : index
    %224 = tpu.strided_load %arg15[%c185_191, %c0_192] {strides = array<i32: 2, 1>} : memref<365x8xf32, #tpu.memory_space<vmem>>, vector<72x8xf32>
    %c186_193 = arith.constant 186 : index
    %c0_194 = arith.constant 0 : index
    %225 = tpu.strided_load %arg15[%c186_193, %c0_194] {strides = array<i32: 2, 1>} : memref<365x8xf32, #tpu.memory_space<vmem>>, vector<72x8xf32>
    %c187_195 = arith.constant 187 : index
    %c0_196 = arith.constant 0 : index
    %226 = tpu.strided_load %arg15[%c187_195, %c0_196] {strides = array<i32: 2, 1>} : memref<365x8xf32, #tpu.memory_space<vmem>>, vector<72x8xf32>
    %c188 = arith.constant 188 : index
    %c0_197 = arith.constant 0 : index
    %227 = tpu.strided_load %arg15[%c188, %c0_197] {strides = array<i32: 2, 1>} : memref<365x8xf32, #tpu.memory_space<vmem>>, vector<72x8xf32>
    %c203 = arith.constant 203 : index
    %c0_198 = arith.constant 0 : index
    %228 = tpu.strided_load %arg15[%c203, %c0_198] {strides = array<i32: 2, 1>} : memref<365x8xf32, #tpu.memory_space<vmem>>, vector<72x8xf32>
    %c204 = arith.constant 204 : index
    %c0_199 = arith.constant 0 : index
    %229 = tpu.strided_load %arg15[%c204, %c0_199] {strides = array<i32: 2, 1>} : memref<365x8xf32, #tpu.memory_space<vmem>>, vector<72x8xf32>
    %c205 = arith.constant 205 : index
    %c0_200 = arith.constant 0 : index
    %230 = tpu.strided_load %arg15[%c205, %c0_200] {strides = array<i32: 2, 1>} : memref<365x8xf32, #tpu.memory_space<vmem>>, vector<72x8xf32>
    %c206 = arith.constant 206 : index
    %c0_201 = arith.constant 0 : index
    %231 = tpu.strided_load %arg15[%c206, %c0_201] {strides = array<i32: 2, 1>} : memref<365x8xf32, #tpu.memory_space<vmem>>, vector<72x8xf32>
    %232 = tpu.concatenate %216, %217, %218, %219, %220, %221, %222, %223, %224, %225, %226, %227, %228, %229, %230, %231 in 1 : vector<72x8xf32>, vector<72x8xf32>, vector<72x8xf32>, vector<72x8xf32>, vector<72x8xf32>, vector<72x8xf32>, vector<72x8xf32>, vector<72x8xf32>, vector<72x8xf32>, vector<72x8xf32>, vector<72x8xf32>, vector<72x8xf32>, vector<72x8xf32>, vector<72x8xf32>, vector<72x8xf32>, vector<72x8xf32> -> vector<72x128xf32>
    %233 = arith.truncf %232 : vector<72x128xf32> to vector<72x128xbf16>
    %cst_202 = arith.constant dense<0.000000e+00> : vector<72x8xf32>
    %234 = tpu.matmul %233, %193, %cst_202 {dimension_numbers = #tpu.dot_dimension_numbers<[1], [0], [0], [1], [0, 0, 1, 1], [], []>} : vector<72x128xbf16>, vector<128x8xbf16>, vector<72x8xf32> -> vector<72x8xf32>
    %c0_203 = arith.constant 0 : index
    %c72 = arith.constant 72 : index
    %c0_204 = arith.constant 0 : index
    %235 = vector.load %arg13[%c0_203, %c72, %c0_204] : memref<1x144x8xf32, #tpu.memory_space<vmem>>, vector<1x72x8xf32>
    %236 = vector.shape_cast %235 : vector<1x72x8xf32> to vector<72x8xf32>
    %237 = vector.shape_cast %234 : vector<72x8xf32> to vector<1x72x8xf32>
    tpu.vector_store %arg13[%c0_203, %c72, %c0_204], %237 {strides = array<i32>} : memref<1x144x8xf32, #tpu.memory_space<vmem>>, vector<1x72x8xf32>,
    return
  }
  func.func @transform_0(%arg0: i32) -> (i32, i32, i32) {
    %c0_i32 = arith.constant 0 : i32
    %c0_i32_0 = arith.constant 0 : i32
    %c0_i32_1 = arith.constant 0 : i32
    return %arg0, %c0_i32, %c0_i32_0 : i32, i32, i32
  }
  func.func @transform_1(%arg0: i32) -> (i32, i32) {
    %c0_i32 = arith.constant 0 : i32
    %c0_i32_0 = arith.constant 0 : i32
    %c0_i32_1 = arith.constant 0 : i32
    return %c0_i32, %c0_i32_0 : i32, i32
  }
  func.func @transform_2(%arg0: i32) -> (i32, i32) {
    %c0_i32 = arith.constant 0 : i32
    %c0_i32_0 = arith.constant 0 : i32
    %c0_i32_1 = arith.constant 0 : i32
    return %c0_i32, %c0_i32_0 : i32, i32
  }
  func.func @transform_3(%arg0: i32) -> (i32, i32) {
    %c0_i32 = arith.constant 0 : i32
    %c0_i32_0 = arith.constant 0 : i32
    %c0_i32_1 = arith.constant 0 : i32
    return %c0_i32, %c0_i32_0 : i32, i32
  }
  func.func @transform_4(%arg0: i32) -> (i32, i32) {
    %c0_i32 = arith.constant 0 : i32
    %c0_i32_0 = arith.constant 0 : i32
    %c0_i32_1 = arith.constant 0 : i32
    return %c0_i32, %c0_i32_0 : i32, i32
  }
  func.func @transform_5(%arg0: i32) -> (i32, i32) {
    %c0_i32 = arith.constant 0 : i32
    %c0_i32_0 = arith.constant 0 : i32
    %c0_i32_1 = arith.constant 0 : i32
    return %c0_i32, %c0_i32_0 : i32, i32
  }
  func.func @transform_6(%arg0: i32) -> (i32, i32) {
    %c0_i32 = arith.constant 0 : i32
    %c0_i32_0 = arith.constant 0 : i32
    %c0_i32_1 = arith.constant 0 : i32
    return %c0_i32, %c0_i32_0 : i32, i32
  }
  func.func @transform_7(%arg0: i32) -> (i32, i32) {
    %c0_i32 = arith.constant 0 : i32
    %c0_i32_0 = arith.constant 0 : i32
    %c0_i32_1 = arith.constant 0 : i32
    return %c0_i32, %c0_i32_0 : i32, i32
  }
  func.func @transform_8(%arg0: i32) -> (i32, i32) {
    %c0_i32 = arith.constant 0 : i32
    %c0_i32_0 = arith.constant 0 : i32
    %c0_i32_1 = arith.constant 0 : i32
    return %c0_i32, %c0_i32_0 : i32, i32
  }
  func.func @transform_9(%arg0: i32) -> (i32, i32) {
    %c0_i32 = arith.constant 0 : i32
    %c0_i32_0 = arith.constant 0 : i32
    %c0_i32_1 = arith.constant 0 : i32
    return %c0_i32, %c0_i32_0 : i32, i32
  }
  func.func @transform_10(%arg0: i32) -> (i32, i32) {
    %c0_i32 = arith.constant 0 : i32
    %c0_i32_0 = arith.constant 0 : i32
    %c0_i32_1 = arith.constant 0 : i32
    return %c0_i32, %c0_i32_0 : i32, i32
  }
  func.func @transform_11(%arg0: i32) -> (i32, i32, i32) {
    %c0_i32 = arith.constant 0 : i32
    %c0_i32_0 = arith.constant 0 : i32
    %c0_i32_1 = arith.constant 0 : i32
    return %arg0, %c0_i32, %c0_i32_0 : i32, i32, i32
  }
  func.func @transform_12(%arg0: i32) -> (i32, i32, i32) {
    %c0_i32 = arith.constant 0 : i32
    %c0_i32_0 = arith.constant 0 : i32
    %c0_i32_1 = arith.constant 0 : i32
    return %arg0, %c0_i32, %c0_i32_0 : i32, i32, i32
  }
}

</mosaic_0001>

<llo_original>
// kernel: tpu_custom_call.1
$region0: #{tpu_custom_call.1}
  #allocation0 [shape = 'u32[]', space=smem, size = 0x4, offset = 0x4, fixed_abs, tag = 'smem constant byte address 0x4 - core index']
  #allocation1 [shape = 'u32[72,128]{1,0:T(1,128)}', space=vmem, size = 0x9000, scoped, tag = 'internal scratch']
  #allocation2 [shape = 'f32[347,8]{1,0:T(8,128)}', space=vmem, size = 0x2c000, scoped, tag = 'scratch operand']
  #allocation3 [shape = 'f32[365,8]{1,0:T(8,128)}', space=vmem, size = 0x2e000, scoped, tag = 'scratch operand']
  %s0 = inlined_call_operand.vmem [shape: f32[2,347,4], index: 0, kind: input, shape index: {}]
  %s1 = inlined_call_operand.vmem [shape: bf16[36,8], index: 1, kind: input, shape index: {}]
  %s2 = inlined_call_operand.vmem [shape: f32[1,8], index: 2, kind: input, shape index: {}]
  %s3 = inlined_call_operand.vmem [shape: f32[1,4], index: 3, kind: input, shape index: {}]
  %s4 = inlined_call_operand.vmem [shape: f32[1,4], index: 4, kind: input, shape index: {}]
  %s5 = inlined_call_operand.vmem [shape: bf16[72,8], index: 5, kind: input, shape index: {}]
  %s6 = inlined_call_operand.vmem [shape: f32[1,8], index: 6, kind: input, shape index: {}]
  %s7 = inlined_call_operand.vmem [shape: bf16[4,8], index: 7, kind: input, shape index: {}]
  %s8 = inlined_call_operand.vmem [shape: f32[1,8], index: 8, kind: input, shape index: {}]
  %s9 = inlined_call_operand.vmem [shape: f32[144,1], index: 9, kind: input, shape index: {}]
  %s10 = inlined_call_operand.vmem [shape: bf16[128,8], index: 10, kind: input, shape index: {}]
  %s11 = inlined_call_operand.vmem [shape: f32[2,288,8], index: 11, kind: output, shape index: {0}]
  %s12 = inlined_call_operand.vmem [shape: f32[2,144,8], index: 12, kind: output, shape index: {1}]
  %13 = xla_tuple %s11, %s12
  %s14 = sld [smem:[#allocation0]]
  $region85: #{tpu_custom_call.1} parent=0
    _
  %s16 = ssub.s32 1, %s14
  %s17 = scalar_select 0, %s16, %s14
  loop: start=0, step=1, limit=4
  $region2: #{tpu_custom_call.1} parent=0 // loop_pre_header
    _
  $region3: #{tpu_custom_call.1} parent=0 // loop_header
    %s19 = sphi 0, %s23
    %p20 = scmp.ge.s32.totalorder %s19, 4
    %s29 = sphi 0, %s31
    %s32 = sphi 0, %s29
    %s33 = sphi 0, %s32
    %s49 = sphi 0, %s33
    %s53 = sphi 0, %s53
    %s55 = sphi 0, %s53
    %s56 = sphi 0, %s55
    %s70 = sphi 0, %s56
    %s74 = sphi 0, %s74
    %s76 = sphi 0, %s74
    %s77 = sphi 0, %s76
    %s91 = sphi 0, %s77
    %s95 = sphi 0, %s95
    %s97 = sphi 0, %s95
    %s98 = sphi 0, %s97
    %s112 = sphi 0, %s98
    %s116 = sphi 0, %s116
    %s118 = sphi 0, %s116
    %s119 = sphi 0, %s118
    %s133 = sphi 0, %s119
    %s137 = sphi 0, %s137
    %s139 = sphi 0, %s137
    %s140 = sphi 0, %s139
    %s154 = sphi 0, %s140
    %s158 = sphi 0, %s158
    %s160 = sphi 0, %s158
    %s161 = sphi 0, %s160
    %s175 = sphi 0, %s161
    %s179 = sphi 0, %s179
    %s181 = sphi 0, %s179
    %s182 = sphi 0, %s181
    %s196 = sphi 0, %s182
    %s200 = sphi 0, %s200
    %s202 = sphi 0, %s200
    %s203 = sphi 0, %s202
    %s217 = sphi 0, %s203
    %s221 = sphi 0, %s221
    %s223 = sphi 0, %s221
    %s224 = sphi 0, %s223
    %s238 = sphi 0, %s224
    %s242 = sphi 0, %s242
    %s244 = sphi 0, %s242
    %s245 = sphi 0, %s244
    %s259 = sphi 0, %s245
    %s265 = sphi 0, %s267
    %s268 = sphi 0, %s265
    %s269 = sphi 0, %s268
    %s285 = sphi 0, %s269
    %s291 = sphi 0, %s293
    %s294 = sphi 0, %s291
    %s295 = sphi 0, %s294
    %s311 = sphi 0, %s295
  $region4: #{tpu_custom_call.1} parent=0 // loop_header_branch
    %22 = sbr.rel (%p20) target = $region8
  $region5: #{tpu_custom_call.1} parent=0 // loop_body
    %s24 = ssub.s32 %s19, 1
    %s25 = ssub.s32 %s19, 2
    %s26 = sadd.s32 %s19, 1
    %s27 = ssub.s32 %s19, %s26
    %p28 = scmp.eq.s32.totalorder %s27, 0
    %s30 = sadd.s32 %s29, 1
    %s31 = scalar_select %p28, %s29, %s30
    %p34 = pneg %p28
    %p35 = scmp.eq.s32.totalorder %s19, 1
    %p36 = por %p34, %p35
    %p37 = scmp.ne.s32.totalorder %s29, %s32
    %p38 = scmp.eq.s32.totalorder %s19, 0
    %p39 = por %p37, %p38
    %p40 = scmp.ne.s32.totalorder %s29, %s32
    %p41 = scmp.eq.s32.totalorder %s24, 1
    %p42 = por %p40, %p41
    %p43 = scmp.ne.s32.totalorder %s32, %s33
    %p44 = scmp.eq.s32.totalorder %s24, 0
    %p45 = por %p43, %p44
    %p46 = scmp.ne.s32.totalorder %s32, %s33
    %p47 = scmp.eq.s32.totalorder %s25, 1
    %p48 = por %p46, %p47
    %p50 = scmp.ne.s32.totalorder %s33, %s49
    %p51 = scmp.eq.s32.totalorder %s25, 0
    %p52 = por %p50, %p51
    %s54 = sadd.s32 %s53, 1
    %p57 = scmp.eq.s32.totalorder %s19, 1
    %p58 = scmp.ne.s32.totalorder %s53, %s55
    %p59 = scmp.eq.s32.totalorder %s19, 0
    %p60 = por %p58, %p59
    %p61 = scmp.ne.s32.totalorder %s53, %s55
    %p62 = scmp.eq.s32.totalorder %s24, 1
    %p63 = por %p61, %p62
    %p64 = scmp.ne.s32.totalorder %s55, %s56
    %p65 = scmp.eq.s32.totalorder %s24, 0
    %p66 = por %p64, %p65
    %p67 = scmp.ne.s32.totalorder %s55, %s56
    %p68 = scmp.eq.s32.totalorder %s25, 1
    %p69 = por %p67, %p68
    %p71 = scmp.ne.s32.totalorder %s56, %s70
    %p72 = scmp.eq.s32.totalorder %s25, 0
    %p73 = por %p71, %p72
    %s75 = sadd.s32 %s74, 1
    %p78 = scmp.eq.s32.totalorder %s19, 1
    %p79 = scmp.ne.s32.totalorder %s74, %s76
    %p80 = scmp.eq.s32.totalorder %s19, 0
    %p81 = por %p79, %p80
    %p82 = scmp.ne.s32.totalorder %s74, %s76
    %p83 = scmp.eq.s32.totalorder %s24, 1
    %p84 = por %p82, %p83
    %p85 = scmp.ne.s32.totalorder %s76, %s77
    %p86 = scmp.eq.s32.totalorder %s24, 0
    %p87 = por %p85, %p86
    %p88 = scmp.ne.s32.totalorder %s76, %s77
    %p89 = scmp.eq.s32.totalorder %s25, 1
    %p90 = por %p88, %p89
    %p92 = scmp.ne.s32.totalorder %s77, %s91
    %p93 = scmp.eq.s32.totalorder %s25, 0
    %p94 = por %p92, %p93
    %s96 = sadd.s32 %s95, 1
    %p99 = scmp.eq.s32.totalorder %s19, 1
    %p100 = scmp.ne.s32.totalorder %s95, %s97
    %p101 = scmp.eq.s32.totalorder %s19, 0
    %p102 = por %p100, %p101
    %p103 = scmp.ne.s32.totalorder %s95, %s97
    %p104 = scmp.eq.s32.totalorder %s24, 1
    %p105 = por %p103, %p104
    %p106 = scmp.ne.s32.totalorder %s97, %s98
    %p107 = scmp.eq.s32.totalorder %s24, 0
    %p108 = por %p106, %p107
    %p109 = scmp.ne.s32.totalorder %s97, %s98
    %p110 = scmp.eq.s32.totalorder %s25, 1
    %p111 = por %p109, %p110
    %p113 = scmp.ne.s32.totalorder %s98, %s112
    %p114 = scmp.eq.s32.totalorder %s25, 0
    %p115 = por %p113, %p114
    %s117 = sadd.s32 %s116, 1
    %p120 = scmp.eq.s32.totalorder %s19, 1
    %p121 = scmp.ne.s32.totalorder %s116, %s118
    %p122 = scmp.eq.s32.totalorder %s19, 0
    %p123 = por %p121, %p122
    %p124 = scmp.ne.s32.totalorder %s116, %s118
    %p125 = scmp.eq.s32.totalorder %s24, 1
    %p126 = por %p124, %p125
    %p127 = scmp.ne.s32.totalorder %s118, %s119
    %p128 = scmp.eq.s32.totalorder %s24, 0
    %p129 = por %p127, %p128
    %p130 = scmp.ne.s32.totalorder %s118, %s119
    %p131 = scmp.eq.s32.totalorder %s25, 1
    %p132 = por %p130, %p131
    %p134 = scmp.ne.s32.totalorder %s119, %s133
    %p135 = scmp.eq.s32.totalorder %s25, 0
    %p136 = por %p134, %p135
    %s138 = sadd.s32 %s137, 1
    %p141 = scmp.eq.s32.totalorder %s19, 1
    %p142 = scmp.ne.s32.totalorder %s137, %s139
    %p143 = scmp.eq.s32.totalorder %s19, 0
    %p144 = por %p142, %p143
    %p145 = scmp.ne.s32.totalorder %s137, %s139
    %p146 = scmp.eq.s32.totalorder %s24, 1
    %p147 = por %p145, %p146
    %p148 = scmp.ne.s32.totalorder %s139, %s140
    %p149 = scmp.eq.s32.totalorder %s24, 0
    %p150 = por %p148, %p149
    %p151 = scmp.ne.s32.totalorder %s139, %s140
    %p152 = scmp.eq.s32.totalorder %s25, 1
    %p153 = por %p151, %p152
    %p155 = scmp.ne.s32.totalorder %s140, %s154
    %p156 = scmp.eq.s32.totalorder %s25, 0
    %p157 = por %p155, %p156
    %s159 = sadd.s32 %s158, 1
    %p162 = scmp.eq.s32.totalorder %s19, 1
    %p163 = scmp.ne.s32.totalorder %s158, %s160
    %p164 = scmp.eq.s32.totalorder %s19, 0
    %p165 = por %p163, %p164
    %p166 = scmp.ne.s32.totalorder %s158, %s160
    %p167 = scmp.eq.s32.totalorder %s24, 1
    %p168 = por %p166, %p167
    %p169 = scmp.ne.s32.totalorder %s160, %s161
    %p170 = scmp.eq.s32.totalorder %s24, 0
    %p171 = por %p169, %p170
    %p172 = scmp.ne.s32.totalorder %s160, %s161
    %p173 = scmp.eq.s32.totalorder %s25, 1
    %p174 = por %p172, %p173
    %p176 = scmp.ne.s32.totalorder %s161, %s175
    %p177 = scmp.eq.s32.totalorder %s25, 0
    %p178 = por %p176, %p177
    %s180 = sadd.s32 %s179, 1
    %p183 = scmp.eq.s32.totalorder %s19, 1
    %p184 = scmp.ne.s32.totalorder %s179, %s181
    %p185 = scmp.eq.s32.totalorder %s19, 0
    %p186 = por %p184, %p185
    %p187 = scmp.ne.s32.totalorder %s179, %s181
    %p188 = scmp.eq.s32.totalorder %s24, 1
    %p189 = por %p187, %p188
    %p190 = scmp.ne.s32.totalorder %s181, %s182
    %p191 = scmp.eq.s32.totalorder %s24, 0
    %p192 = por %p190, %p191
    %p193 = scmp.ne.s32.totalorder %s181, %s182
    %p194 = scmp.eq.s32.totalorder %s25, 1
    %p195 = por %p193, %p194
    %p197 = scmp.ne.s32.totalorder %s182, %s196
    %p198 = scmp.eq.s32.totalorder %s25, 0
    %p199 = por %p197, %p198
    %s201 = sadd.s32 %s200, 1
    %p204 = scmp.eq.s32.totalorder %s19, 1
    %p205 = scmp.ne.s32.totalorder %s200, %s202
    %p206 = scmp.eq.s32.totalorder %s19, 0
    %p207 = por %p205, %p206
    %p208 = scmp.ne.s32.totalorder %s200, %s202
    %p209 = scmp.eq.s32.totalorder %s24, 1
    %p210 = por %p208, %p209
    %p211 = scmp.ne.s32.totalorder %s202, %s203
    %p212 = scmp.eq.s32.totalorder %s24, 0
    %p213 = por %p211, %p212
    %p214 = scmp.ne.s32.totalorder %s202, %s203
    %p215 = scmp.eq.s32.totalorder %s25, 1
    %p216 = por %p214, %p215
    %p218 = scmp.ne.s32.totalorder %s203, %s217
    %p219 = scmp.eq.s32.totalorder %s25, 0
    %p220 = por %p218, %p219
    %s222 = sadd.s32 %s221, 1
    %p225 = scmp.eq.s32.totalorder %s19, 1
    %p226 = scmp.ne.s32.totalorder %s221, %s223
    %p227 = scmp.eq.s32.totalorder %s19, 0
    %p228 = por %p226, %p227
    %p229 = scmp.ne.s32.totalorder %s221, %s223
    %p230 = scmp.eq.s32.totalorder %s24, 1
    %p231 = por %p229, %p230
    %p232 = scmp.ne.s32.totalorder %s223, %s224
    %p233 = scmp.eq.s32.totalorder %s24, 0
    %p234 = por %p232, %p233
    %p235 = scmp.ne.s32.totalorder %s223, %s224
    %p236 = scmp.eq.s32.totalorder %s25, 1
    %p237 = por %p235, %p236
    %p239 = scmp.ne.s32.totalorder %s224, %s238
    %p240 = scmp.eq.s32.totalorder %s25, 0
    %p241 = por %p239, %p240
    %s243 = sadd.s32 %s242, 1
    %p246 = scmp.eq.s32.totalorder %s19, 1
    %p247 = scmp.ne.s32.totalorder %s242, %s244
    %p248 = scmp.eq.s32.totalorder %s19, 0
    %p249 = por %p247, %p248
    %p250 = scmp.ne.s32.totalorder %s242, %s244
    %p251 = scmp.eq.s32.totalorder %s24, 1
    %p252 = por %p250, %p251
    %p253 = scmp.ne.s32.totalorder %s244, %s245
    %p254 = scmp.eq.s32.totalorder %s24, 0
    %p255 = por %p253, %p254
    %p256 = scmp.ne.s32.totalorder %s244, %s245
    %p257 = scmp.eq.s32.totalorder %s25, 1
    %p258 = por %p256, %p257
    %p260 = scmp.ne.s32.totalorder %s245, %s259
    %p261 = scmp.eq.s32.totalorder %s25, 0
    %p262 = por %p260, %p261
    %s263 = ssub.s32 %s19, %s26
    %p264 = scmp.eq.s32.totalorder %s263, 0
    %s266 = sadd.s32 %s265, 1
    %s267 = scalar_select %p264, %s265, %s266
    %p270 = pneg %p264
    %p271 = scmp.eq.s32.totalorder %s19, 1
    %p272 = por %p270, %p271
    %p273 = scmp.ne.s32.totalorder %s265, %s268
    %p274 = scmp.eq.s32.totalorder %s19, 0
    %p275 = por %p273, %p274
    %p276 = scmp.ne.s32.totalorder %s265, %s268
    %p277 = scmp.eq.s32.totalorder %s24, 1
    %p278 = por %p276, %p277
    %p279 = scmp.ne.s32.totalorder %s268, %s269
    %p280 = scmp.eq.s32.totalorder %s24, 0
    %p281 = por %p279, %p280
    %p282 = scmp.ne.s32.totalorder %s268, %s269
    %p283 = scmp.eq.s32.totalorder %s25, 1
    %p284 = por %p282, %p283
    %p286 = scmp.ne.s32.totalorder %s269, %s285
    %p287 = scmp.eq.s32.totalorder %s25, 0
    %p288 = por %p286, %p287
    %s289 = ssub.s32 %s19, %s26
    %p290 = scmp.eq.s32.totalorder %s289, 0
    %s292 = sadd.s32 %s291, 1
    %s293 = scalar_select %p290, %s291, %s292
    %p296 = pneg %p290
    %p297 = scmp.eq.s32.totalorder %s19, 1
    %p298 = por %p296, %p297
    %p299 = scmp.ne.s32.totalorder %s291, %s294
    %p300 = scmp.eq.s32.totalorder %s19, 0
    %p301 = por %p299, %p300
    %p302 = scmp.ne.s32.totalorder %s291, %s294
    %p303 = scmp.eq.s32.totalorder %s24, 1
    %p304 = por %p302, %p303
    %p305 = scmp.ne.s32.totalorder %s294, %s295
    %p306 = scmp.eq.s32.totalorder %s24, 0
    %p307 = por %p305, %p306
    %p308 = scmp.ne.s32.totalorder %s294, %s295
    %p309 = scmp.eq.s32.totalorder %s25, 1
    %p310 = por %p308, %p309
    %p312 = scmp.ne.s32.totalorder %s295, %s311
    %p313 = scmp.eq.s32.totalorder %s25, 0
    %p314 = por %p312, %p313
    %p315 = scmp.le.s32.totalorder 1, %s19
    %p316 = scmp.lt.s32.totalorder %s19, 3
    %p317 = pnand %p315, %p316
    %p318 = pneg %p317
    // Predicated region
    $region9: #{tpu_custom_call.1} parent=5 // pred_check
      _
    $region10: #{tpu_custom_call.1} parent=5 // pred_check_branch
      %320 = sbr.rel (%p317) target = $region12
    $region11: #{tpu_custom_call.1} parent=5 // pred_region
      %s321 = ssub.s32 %s19, 1
      // Predicated region
      $region13: #{tpu_custom_call.1} parent=11 // pred_check
        %p322 = pneg %p66
      $region14: #{tpu_custom_call.1} parent=11 // pred_check_branch
        %324 = sbr.rel (%p322) target = $region16
      $region15: #{tpu_custom_call.1} parent=11 // pred_region
        _
      $region16: #{tpu_custom_call.1} parent=11 // pred_fallthru
        _
      // Predicated region
      $region17: #{tpu_custom_call.1} parent=11 // pred_check
        %p325 = pneg %p87
      $region18: #{tpu_custom_call.1} parent=11 // pred_check_branch
        %327 = sbr.rel (%p325) target = $region20
      $region19: #{tpu_custom_call.1} parent=11 // pred_region
        _
      $region20: #{tpu_custom_call.1} parent=11 // pred_fallthru
        _
      // Predicated region
      $region21: #{tpu_custom_call.1} parent=11 // pred_check
        %p328 = pneg %p108
      $region22: #{tpu_custom_call.1} parent=11 // pred_check_branch
        %330 = sbr.rel (%p328) target = $region24
      $region23: #{tpu_custom_call.1} parent=11 // pred_region
        _
      $region24: #{tpu_custom_call.1} parent=11 // pred_fallthru
        _
      // Predicated region
      $region25: #{tpu_custom_call.1} parent=11 // pred_check
        %p331 = pneg %p129
      $region26: #{tpu_custom_call.1} parent=11 // pred_check_branch
        %333 = sbr.rel (%p331) target = $region28
      $region27: #{tpu_custom_call.1} parent=11 // pred_region
        _
      $region28: #{tpu_custom_call.1} parent=11 // pred_fallthru
        _
      // Predicated region
      $region29: #{tpu_custom_call.1} parent=11 // pred_check
        %p334 = pneg %p150
      $region30: #{tpu_custom_call.1} parent=11 // pred_check_branch
        %336 = sbr.rel (%p334) target = $region32
      $region31: #{tpu_custom_call.1} parent=11 // pred_region
        _
      $region32: #{tpu_custom_call.1} parent=11 // pred_fallthru
        _
      // Predicated region
      $region33: #{tpu_custom_call.1} parent=11 // pred_check
        %p337 = pneg %p171
      $region34: #{tpu_custom_call.1} parent=11 // pred_check_branch
        %339 = sbr.rel (%p337) target = $region36
      $region35: #{tpu_custom_call.1} parent=11 // pred_region
        _
      $region36: #{tpu_custom_call.1} parent=11 // pred_fallthru
        _
      // Predicated region
      $region37: #{tpu_custom_call.1} parent=11 // pred_check
        %p340 = pneg %p192
      $region38: #{tpu_custom_call.1} parent=11 // pred_check_branch
        %342 = sbr.rel (%p340) target = $region40
      $region39: #{tpu_custom_call.1} parent=11 // pred_region
        _
      $region40: #{tpu_custom_call.1} parent=11 // pred_fallthru
        _
      // Predicated region
      $region41: #{tpu_custom_call.1} parent=11 // pred_check
        %p343 = pneg %p213
      $region42: #{tpu_custom_call.1} parent=11 // pred_check_branch
        %345 = sbr.rel (%p343) target = $region44
      $region43: #{tpu_custom_call.1} parent=11 // pred_region
        _
      $region44: #{tpu_custom_call.1} parent=11 // pred_fallthru
        _
      // Predicated region
      $region45: #{tpu_custom_call.1} parent=11 // pred_check
        %p346 = pneg %p234
      $region46: #{tpu_custom_call.1} parent=11 // pred_check_branch
        %348 = sbr.rel (%p346) target = $region48
      $region47: #{tpu_custom_call.1} parent=11 // pred_region
        _
      $region48: #{tpu_custom_call.1} parent=11 // pred_fallthru
        _
      // Predicated region
      $region49: #{tpu_custom_call.1} parent=11 // pred_check
        %p349 = pneg %p255
      $region50: #{tpu_custom_call.1} parent=11 // pred_check_branch
        %351 = sbr.rel (%p349) target = $region52
      $region51: #{tpu_custom_call.1} parent=11 // pred_region
        _
      $region52: #{tpu_custom_call.1} parent=11 // pred_fallthru
        _
    $region12: #{tpu_custom_call.1} parent=5 // pred_fallthru
      _
    %p352 = scmp.lt.s32.totalorder %s19, 2
    // Predicated region
    $region53: #{tpu_custom_call.1} parent=5 // pred_check
      %p353 = pneg %p352
    $region54: #{tpu_custom_call.1} parent=5 // pred_check_branch
      %355 = sbr.rel (%p353) target = $region56
    $region55: #{tpu_custom_call.1} parent=5 // pred_region
      // Predicated region
      $region57: #{tpu_custom_call.1} parent=55 // pred_check
        %p356 = pneg %p39
      $region58: #{tpu_custom_call.1} parent=55 // pred_check_branch
        %358 = sbr.rel (%p356) target = $region60
      $region59: #{tpu_custom_call.1} parent=55 // pred_region
        %p359 = scmp.lt.s32.totalorder %s19, 1
        %s360 = scalar_select %p359, %s19, 1
        %s361 = smul.addr %s360, 44
        %s362 = smul.addr %s361, 8
        %s363 = scalar_lea.vmem %s0, %s362
      $region60: #{tpu_custom_call.1} parent=55 // pred_fallthru
        _
    $region56: #{tpu_custom_call.1} parent=5 // pred_fallthru
      _
    %p364 = scmp.le.s32.totalorder 1, %s19
    %p365 = scmp.lt.s32.totalorder %s19, 3
    %p366 = pnand %p364, %p365
    %p367 = pneg %p366
    // Predicated region
    $region61: #{tpu_custom_call.1} parent=5 // pred_check
      _
    $region62: #{tpu_custom_call.1} parent=5 // pred_check_branch
      %369 = sbr.rel (%p366) target = $region64
    $region63: #{tpu_custom_call.1} parent=5 // pred_region
      %s370 = ssub.s32 %s19, 1
      %p371 = scmp.lt.s32.totalorder %s24, 1
      %s372 = scalar_select %p371, %s24, 1
      %s373 = smul.addr %s372, 44
      %s374 = smul.addr %s373, 8
      %s375 = scalar_lea.vmem %s0, %s374
      %p376 = pneg %p45
      %p377 = pneg %p42
      %p378 = pneg %p66
      %p379 = pneg %p63
      %p380 = pneg %p87
      %p381 = pneg %p84
      %p382 = pneg %p108
      %p383 = pneg %p105
      %p384 = pneg %p129
      %p385 = pneg %p126
      %p386 = pneg %p150
      %p387 = pneg %p147
      %p388 = pneg %p171
      %p389 = pneg %p168
      %p390 = pneg %p192
      %p391 = pneg %p189
      %p392 = pneg %p213
      %p393 = pneg %p210
      %p394 = pneg %p234
      %p395 = pneg %p231
      %p396 = pneg %p255
      %p397 = pneg %p252
      %p398 = pneg %p281
      %p399 = pneg %p278
      %p400 = scmp.lt.s32.totalorder %s24, 1
      %s401 = scalar_select %p400, %s24, 1
      %s402 = smul.addr %s401, 36
      %s403 = smul.addr %s402, 8
      %s404 = scalar_lea.vmem %s11, %s403
      %p405 = pneg %p307
      %p406 = pneg %p304
      %p407 = scmp.lt.s32.totalorder %s24, 1
      %s408 = scalar_select %p407, %s24, 1
      %s409 = smul.addr %s408, 18
      %s410 = smul.addr %s409, 8
      %s411 = scalar_lea.vmem %s12, %s410
      %p412 = scmp.lt.s32.totalorder %s24, 1
      %s413 = scalar_select %p412, %s24, 1
      %s414 = smul.addr %s413, 44
      %s415 = smul.addr %s414, 8
      %s416 = scalar_lea.vmem %s0, %s415
      %p417 = scmp.lt.s32.totalorder %s24, 1
      %s418 = scalar_select %p417, %s24, 1
      %s419 = smul.addr %s418, 36
      %s420 = smul.addr %s419, 8
      %s421 = scalar_lea.vmem %s11, %s420
      %p422 = scmp.lt.s32.totalorder %s24, 1
      %s423 = scalar_select %p422, %s24, 1
      %s424 = smul.addr %s423, 18
      %s425 = smul.addr %s424, 8
      %s426 = scalar_lea.vmem %s12, %s425
      %v428 = vld [vmem:[%s9] sm:$0xff]
      %v429 = vld [vmem:[%s9 + $0x8] sm:$0xff]
      %v430 = vld [vmem:[%s9 + $0x10] sm:$0xff]
      %v431 = vld [vmem:[%s9 + $0x18] sm:$0xff]
      %v432 = vld [vmem:[%s9 + $0x20] sm:$0xff]
      %v433 = vld [vmem:[%s9 + $0x28] sm:$0xff]
      %v434 = vld [vmem:[%s9 + $0x30] sm:$0xff]
      %v435 = vld [vmem:[%s9 + $0x38] sm:$0xff]
      %v436 = vld [vmem:[%s9 + $0x40] sm:$0xff]
      %v437 = vld [vmem:[%s9 + $0x48] sm:$0xff]
      %v438 = vld [vmem:[%s9 + $0x50] sm:$0xff]
      %v439 = vld [vmem:[%s9 + $0x58] sm:$0xff]
      %v440 = vld [vmem:[%s9 + $0x60] sm:$0xff]
      %v441 = vld [vmem:[%s9 + $0x68] sm:$0xff]
      %v442 = vld [vmem:[%s9 + $0x70] sm:$0xff]
      %v443 = vld [vmem:[%s9 + $0x78] sm:$0xff]
      %v444 = vld [vmem:[%s9 + $0x80] sm:$0xff]
      %v445 = vld [vmem:[%s9 + $0x88] sm:$0xff]
      %vm446 = vcmask 64512
      %447 = vst.msk [vmem:[#allocation2] sm:$0xff] %vm446, 0.0
      %448 = vst.msk [vmem:[#allocation2 + $0x8] sm:$0xff] %vm446, 0.0
      %449 = vst.msk [vmem:[#allocation2 + $0x10] sm:$0xff] %vm446, 0.0
      %450 = vst.msk [vmem:[#allocation2 + $0x18] sm:$0xff] %vm446, 0.0
      %451 = vst.msk [vmem:[#allocation2 + $0x20] sm:$0xff] %vm446, 0.0
      %452 = vst.msk [vmem:[#allocation2 + $0x28] sm:$0xff] %vm446, 0.0
      %453 = vst.msk [vmem:[#allocation2 + $0x30] sm:$0xff] %vm446, 0.0
      %454 = vst.msk [vmem:[#allocation2 + $0x38] sm:$0xff] %vm446, 0.0
      %455 = vst.msk [vmem:[#allocation2 + $0x40] sm:$0xff] %vm446, 0.0
      %456 = vst.msk [vmem:[#allocation2 + $0x48] sm:$0xff] %vm446, 0.0
      %457 = vst.msk [vmem:[#allocation2 + $0x50] sm:$0xff] %vm446, 0.0
      %458 = vst.msk [vmem:[#allocation2 + $0x58] sm:$0xff] %vm446, 0.0
      %459 = vst.msk [vmem:[#allocation2 + $0x60] sm:$0xff] %vm446, 0.0
      %460 = vst.msk [vmem:[#allocation2 + $0x68] sm:$0xff] %vm446, 0.0
      %461 = vst.msk [vmem:[#allocation2 + $0x70] sm:$0xff] %vm446, 0.0
      %462 = vst.msk [vmem:[#allocation2 + $0x78] sm:$0xff] %vm446, 0.0
      %463 = vst.msk [vmem:[#allocation2 + $0x80] sm:$0xff] %vm446, 0.0
      %464 = vst.msk [vmem:[#allocation2 + $0x88] sm:$0xff] %vm446, 0.0
      %465 = vst.msk [vmem:[#allocation2 + $0x90] sm:$0xff] %vm446, 0.0
      %466 = vst.msk [vmem:[#allocation2 + $0x98] sm:$0xff] %vm446, 0.0
      %467 = vst.msk [vmem:[#allocation2 + $0xa0] sm:$0xff] %vm446, 0.0
      %468 = vst.msk [vmem:[#allocation2 + $0xa8] sm:$0xff] %vm446, 0.0
      %469 = vst.msk [vmem:[#allocation2 + $0xb0] sm:$0xff] %vm446, 0.0
      %470 = vst.msk [vmem:[#allocation2 + $0xb8] sm:$0xff] %vm446, 0.0
      %471 = vst.msk [vmem:[#allocation2 + $0xc0] sm:$0xff] %vm446, 0.0
      %472 = vst.msk [vmem:[#allocation2 + $0xc8] sm:$0xff] %vm446, 0.0
      %473 = vst.msk [vmem:[#allocation2 + $0xd0] sm:$0xff] %vm446, 0.0
      %474 = vst.msk [vmem:[#allocation2 + $0xd8] sm:$0xff] %vm446, 0.0
      %475 = vst.msk [vmem:[#allocation2 + $0xe0] sm:$0xff] %vm446, 0.0
      %476 = vst.msk [vmem:[#allocation2 + $0xe8] sm:$0xff] %vm446, 0.0
      %477 = vst.msk [vmem:[#allocation2 + $0xf0] sm:$0xff] %vm446, 0.0
      %478 = vst.msk [vmem:[#allocation2 + $0xf8] sm:$0xff] %vm446, 0.0
      %479 = vst.msk [vmem:[#allocation2 + $0x100] sm:$0xff] %vm446, 0.0
      %480 = vst.msk [vmem:[#allocation2 + $0x108] sm:$0xff] %vm446, 0.0
      %481 = vst.msk [vmem:[#allocation2 + $0x110] sm:$0xff] %vm446, 0.0
      %482 = vst.msk [vmem:[#allocation2 + $0x118] sm:$0xff] %vm446, 0.0
      %483 = vst.msk [vmem:[#allocation2 + $0x120] sm:$0xff] %vm446, 0.0
      %484 = vst.msk [vmem:[#allocation2 + $0x128] sm:$0xff] %vm446, 0.0
      %485 = vst.msk [vmem:[#allocation2 + $0x130] sm:$0xff] %vm446, 0.0
      %486 = vst.msk [vmem:[#allocation2 + $0x138] sm:$0xff] %vm446, 0.0
      %487 = vst.msk [vmem:[#allocation2 + $0x140] sm:$0xff] %vm446, 0.0
      %488 = vst.msk [vmem:[#allocation2 + $0x148] sm:$0xff] %vm446, 0.0
      %489 = vst.msk [vmem:[#allocation2 + $0x150] sm:$0xff] %vm446, 0.0
      %vm490 = vcmask 59392
      %491 = vst.msk [vmem:[#allocation2 + $0x158] sm:$0x7] %vm490, 0.0
      %492 = vst.msk [vmem:[#allocation3] sm:$0xff] %vm446, 0.0
      %493 = vst.msk [vmem:[#allocation3 + $0x8] sm:$0xff] %vm446, 0.0
      %494 = vst.msk [vmem:[#allocation3 + $0x10] sm:$0xff] %vm446, 0.0
      %495 = vst.msk [vmem:[#allocation3 + $0x18] sm:$0xff] %vm446, 0.0
      %496 = vst.msk [vmem:[#allocation3 + $0x20] sm:$0xff] %vm446, 0.0
      %497 = vst.msk [vmem:[#allocation3 + $0x28] sm:$0xff] %vm446, 0.0
      %498 = vst.msk [vmem:[#allocation3 + $0x30] sm:$0xff] %vm446, 0.0
      %499 = vst.msk [vmem:[#allocation3 + $0x38] sm:$0xff] %vm446, 0.0
      %500 = vst.msk [vmem:[#allocation3 + $0x40] sm:$0xff] %vm446, 0.0
      %501 = vst.msk [vmem:[#allocation3 + $0x48] sm:$0xff] %vm446, 0.0
      %502 = vst.msk [vmem:[#allocation3 + $0x50] sm:$0xff] %vm446, 0.0
      %503 = vst.msk [vmem:[#allocation3 + $0x58] sm:$0xff] %vm446, 0.0
      %504 = vst.msk [vmem:[#allocation3 + $0x60] sm:$0xff] %vm446, 0.0
      %505 = vst.msk [vmem:[#allocation3 + $0x68] sm:$0xff] %vm446, 0.0
      %506 = vst.msk [vmem:[#allocation3 + $0x70] sm:$0xff] %vm446, 0.0
      %507 = vst.msk [vmem:[#allocation3 + $0x78] sm:$0xff] %vm446, 0.0
      %508 = vst.msk [vmem:[#allocation3 + $0x80] sm:$0xff] %vm446, 0.0
      %509 = vst.msk [vmem:[#allocation3 + $0x88] sm:$0xff] %vm446, 0.0
      %510 = vst.msk [vmem:[#allocation3 + $0x90] sm:$0xff] %vm446, 0.0
      %511 = vst.msk [vmem:[#allocation3 + $0x98] sm:$0xff] %vm446, 0.0
      %512 = vst.msk [vmem:[#allocation3 + $0xa0] sm:$0xff] %vm446, 0.0
      %513 = vst.msk [vmem:[#allocation3 + $0xa8] sm:$0xff] %vm446, 0.0
      %514 = vst.msk [vmem:[#allocation3 + $0xb0] sm:$0xff] %vm446, 0.0
      %515 = vst.msk [vmem:[#allocation3 + $0xb8] sm:$0xff] %vm446, 0.0
      %516 = vst.msk [vmem:[#allocation3 + $0xc0] sm:$0xff] %vm446, 0.0
      %517 = vst.msk [vmem:[#allocation3 + $0xc8] sm:$0xff] %vm446, 0.0
      %518 = vst.msk [vmem:[#allocation3 + $0xd0] sm:$0xff] %vm446, 0.0
      %519 = vst.msk [vmem:[#allocation3 + $0xd8] sm:$0xff] %vm446, 0.0
      %520 = vst.msk [vmem:[#allocation3 + $0xe0] sm:$0xff] %vm446, 0.0
      %521 = vst.msk [vmem:[#allocation3 + $0xe8] sm:$0xff] %vm446, 0.0
      %522 = vst.msk [vmem:[#allocation3 + $0xf0] sm:$0xff] %vm446, 0.0
      %523 = vst.msk [vmem:[#allocation3 + $0xf8] sm:$0xff] %vm446, 0.0
      %524 = vst.msk [vmem:[#allocation3 + $0x100] sm:$0xff] %vm446, 0.0
      %525 = vst.msk [vmem:[#allocation3 + $0x108] sm:$0xff] %vm446, 0.0
      %526 = vst.msk [vmem:[#allocation3 + $0x110] sm:$0xff] %vm446, 0.0
      %527 = vst.msk [vmem:[#allocation3 + $0x118] sm:$0xff] %vm446, 0.0
      %528 = vst.msk [vmem:[#allocation3 + $0x120] sm:$0xff] %vm446, 0.0
      %529 = vst.msk [vmem:[#allocation3 + $0x128] sm:$0xff] %vm446, 0.0
      %530 = vst.msk [vmem:[#allocation3 + $0x130] sm:$0xff] %vm446, 0.0
      %531 = vst.msk [vmem:[#allocation3 + $0x138] sm:$0xff] %vm446, 0.0
      %532 = vst.msk [vmem:[#allocation3 + $0x140] sm:$0xff] %vm446, 0.0
      %533 = vst.msk [vmem:[#allocation3 + $0x148] sm:$0xff] %vm446, 0.0
      %534 = vst.msk [vmem:[#allocation3 + $0x150] sm:$0xff] %vm446, 0.0
      %535 = vst.msk [vmem:[#allocation3 + $0x158] sm:$0xff] %vm446, 0.0
      %536 = vst.msk [vmem:[#allocation3 + $0x160] sm:$0xff] %vm446, 0.0
      %vm537 = vcmask 61440
      %538 = vst.msk [vmem:[#allocation3 + $0x168] sm:$0x1f] %vm537, 0.0
      %v539 = vld [vmem:[%s1] sm:$0xf]
      %v540 = vld [vmem:[%s1 + $0x4] sm:$0xf]
      %v541 = vld [vmem:[%s1 + $0x8] sm:$0xf]
      %v542 = vld [vmem:[%s1 + $0xc] sm:$0xf]
      %v543 = vld [vmem:[%s1 + $0x10] sm:$0x3]
      %v544 = vld [vmem:[%s2] sm:$0x1]
      %v545 = vld [vmem:[%s416 + $0x5] sm:$0xff]
      %v546 = vld [vmem:[%s416 + $0xd] sm:$0xff]
      %v547 = vld [vmem:[%s416 + $0x15] sm:$0xff]
      %v548 = vld [vmem:[%s416 + $0x1d] sm:$0xff]
      %v549 = vld [vmem:[%s416 + $0x25] sm:$0xff]
      %v550 = vld [vmem:[%s416 + $0x2d] sm:$0xff]
      %v551 = vld [vmem:[%s416 + $0x35] sm:$0xff]
      %v552 = vld [vmem:[%s416 + $0x3d] sm:$0xff]
      %v553 = vld [vmem:[%s416 + $0x45] sm:$0xff]
      %v554 = vld [vmem:[%s416 + $0x4d] sm:$0xff]
      %v555 = vld [vmem:[%s416 + $0x55] sm:$0xff]
      %v556 = vld [vmem:[%s416 + $0x5d] sm:$0xff]
      %v557 = vld [vmem:[%s416 + $0x65] sm:$0xff]
      %v558 = vld [vmem:[%s416 + $0x6d] sm:$0xff]
      %v559 = vld [vmem:[%s416 + $0x75] sm:$0xff]
      %v560 = vld [vmem:[%s416 + $0x7d] sm:$0xff]
      %v561 = vld [vmem:[%s416 + $0x85] sm:$0xff]
      %v562 = vld [vmem:[%s416 + $0x8d] sm:$0xff]
      %v563 = vld [vmem:[%s416 + $0x6] sm:$0xff]
      %v564 = vld [vmem:[%s416 + $0xe] sm:$0xff]
      %v565 = vld [vmem:[%s416 + $0x16] sm:$0xff]
      %v566 = vld [vmem:[%s416 + $0x1e] sm:$0xff]
      %v567 = vld [vmem:[%s416 + $0x26] sm:$0xff]
      %v568 = vld [vmem:[%s416 + $0x2e] sm:$0xff]
      %v569 = vld [vmem:[%s416 + $0x36] sm:$0xff]
      %v570 = vld [vmem:[%s416 + $0x3e] sm:$0xff]
      %v571 = vld [vmem:[%s416 + $0x46] sm:$0xff]
      %v572 = vld [vmem:[%s416 + $0x4e] sm:$0xff]
      %v573 = vld [vmem:[%s416 + $0x56] sm:$0xff]
      %v574 = vld [vmem:[%s416 + $0x5e] sm:$0xff]
      %v575 = vld [vmem:[%s416 + $0x66] sm:$0xff]
      %v576 = vld [vmem:[%s416 + $0x6e] sm:$0xff]
      %v577 = vld [vmem:[%s416 + $0x76] sm:$0xff]
      %v578 = vld [vmem:[%s416 + $0x7e] sm:$0xff]
      %v579 = vld [vmem:[%s416 + $0x86] sm:$0xff]
      %v580 = vld [vmem:[%s416 + $0x8e] sm:$0xff]
      %v581 = vld [vmem:[%s416 + $0x7] sm:$0xff]
      %v582 = vld [vmem:[%s416 + $0xf] sm:$0xff]
      %v583 = vld [vmem:[%s416 + $0x17] sm:$0xff]
      %v584 = vld [vmem:[%s416 + $0x1f] sm:$0xff]
      %v585 = vld [vmem:[%s416 + $0x27] sm:$0xff]
      %v586 = vld [vmem:[%s416 + $0x2f] sm:$0xff]
      %v587 = vld [vmem:[%s416 + $0x37] sm:$0xff]
      %v588 = vld [vmem:[%s416 + $0x3f] sm:$0xff]
      %v589 = vld [vmem:[%s416 + $0x47] sm:$0xff]
      %v590 = vld [vmem:[%s416 + $0x4f] sm:$0xff]
      %v591 = vld [vmem:[%s416 + $0x57] sm:$0xff]
      %v592 = vld [vmem:[%s416 + $0x5f] sm:$0xff]
      %v593 = vld [vmem:[%s416 + $0x67] sm:$0xff]
      %v594 = vld [vmem:[%s416 + $0x6f] sm:$0xff]
      %v595 = vld [vmem:[%s416 + $0x77] sm:$0xff]
      %v596 = vld [vmem:[%s416 + $0x7f] sm:$0xff]
      %v597 = vld [vmem:[%s416 + $0x87] sm:$0xff]
      %v598 = vld [vmem:[%s416 + $0x8f] sm:$0xff]
      %v599 = vld [vmem:[%s416 + $0x97] sm:$0xff]
      %v600 = vld [vmem:[%s416 + $0x9f] sm:$0xff]
      %v601 = vld [vmem:[%s416 + $0x18] sm:$0xff]
      %v602 = vld [vmem:[%s416 + $0x20] sm:$0xff]
      %v603 = vld [vmem:[%s416 + $0x28] sm:$0xff]
      %v604 = vld [vmem:[%s416 + $0x30] sm:$0xff]
      %v605 = vld [vmem:[%s416 + $0x38] sm:$0xff]
      %v606 = vld [vmem:[%s416 + $0x40] sm:$0xff]
      %v607 = vld [vmem:[%s416 + $0x48] sm:$0xff]
      %v608 = vld [vmem:[%s416 + $0x50] sm:$0xff]
      %v609 = vld [vmem:[%s416 + $0x58] sm:$0xff]
      %v610 = vld [vmem:[%s416 + $0x60] sm:$0xff]
      %v611 = vld [vmem:[%s416 + $0x68] sm:$0xff]
      %v612 = vld [vmem:[%s416 + $0x70] sm:$0xff]
      %v613 = vld [vmem:[%s416 + $0x78] sm:$0xff]
      %v614 = vld [vmem:[%s416 + $0x80] sm:$0xff]
      %v615 = vld [vmem:[%s416 + $0x88] sm:$0xff]
      %v616 = vld [vmem:[%s416 + $0x90] sm:$0xff]
      %v617 = vld [vmem:[%s416 + $0x98] sm:$0xff]
      %v618 = vld [vmem:[%s416 + $0xa0] sm:$0xff]
      %v619 = vld [vmem:[%s416 + $0x19] sm:$0xff]
      %v620 = vld [vmem:[%s416 + $0x21] sm:$0xff]
      %v621 = vld [vmem:[%s416 + $0x29] sm:$0xff]
      %v622 = vld [vmem:[%s416 + $0x31] sm:$0xff]
      %v623 = vld [vmem:[%s416 + $0x39] sm:$0xff]
      %v624 = vld [vmem:[%s416 + $0x41] sm:$0xff]
      %v625 = vld [vmem:[%s416 + $0x49] sm:$0xff]
      %v626 = vld [vmem:[%s416 + $0x51] sm:$0xff]
      %v627 = vld [vmem:[%s416 + $0x59] sm:$0xff]
      %v628 = vld [vmem:[%s416 + $0x61] sm:$0xff]
      %v629 = vld [vmem:[%s416 + $0x69] sm:$0xff]
      %v630 = vld [vmem:[%s416 + $0x71] sm:$0xff]
      %v631 = vld [vmem:[%s416 + $0x79] sm:$0xff]
      %v632 = vld [vmem:[%s416 + $0x81] sm:$0xff]
      %v633 = vld [vmem:[%s416 + $0x89] sm:$0xff]
      %v634 = vld [vmem:[%s416 + $0x91] sm:$0xff]
      %v635 = vld [vmem:[%s416 + $0x99] sm:$0xff]
      %v636 = vld [vmem:[%s416 + $0xa1] sm:$0xff]
      %v637 = vld [vmem:[%s416 + $0xa9] sm:$0xff]
      %v638 = vld [vmem:[%s416 + $0xb1] sm:$0xff]
      %v639 = vld [vmem:[%s416 + $0x2a] sm:$0xff]
      %v640 = vld [vmem:[%s416 + $0x32] sm:$0xff]
      %v641 = vld [vmem:[%s416 + $0x3a] sm:$0xff]
      %v642 = vld [vmem:[%s416 + $0x42] sm:$0xff]
      %v643 = vld [vmem:[%s416 + $0x4a] sm:$0xff]
      %v644 = vld [vmem:[%s416 + $0x52] sm:$0xff]
      %v645 = vld [vmem:[%s416 + $0x5a] sm:$0xff]
      %v646 = vld [vmem:[%s416 + $0x62] sm:$0xff]
      %v647 = vld [vmem:[%s416 + $0x6a] sm:$0xff]
      %v648 = vld [vmem:[%s416 + $0x72] sm:$0xff]
      %v649 = vld [vmem:[%s416 + $0x7a] sm:$0xff]
      %v650 = vld [vmem:[%s416 + $0x82] sm:$0xff]
      %v651 = vld [vmem:[%s416 + $0x8a] sm:$0xff]
      %v652 = vld [vmem:[%s416 + $0x92] sm:$0xff]
      %v653 = vld [vmem:[%s416 + $0x9a] sm:$0xff]
      %v654 = vld [vmem:[%s416 + $0xa2] sm:$0xff]
      %v655 = vld [vmem:[%s416 + $0xaa] sm:$0xff]
      %v656 = vld [vmem:[%s416 + $0xb2] sm:$0xff]
      %v657 = vld [vmem:[%s416 + $0x2b] sm:$0xff]
      %v658 = vld [vmem:[%s416 + $0x33] sm:$0xff]
      %v659 = vld [vmem:[%s416 + $0x3b] sm:$0xff]
      %v660 = vld [vmem:[%s416 + $0x43] sm:$0xff]
      %v661 = vld [vmem:[%s416 + $0x4b] sm:$0xff]
      %v662 = vld [vmem:[%s416 + $0x53] sm:$0xff]
      %v663 = vld [vmem:[%s416 + $0x5b] sm:$0xff]
      %v664 = vld [vmem:[%s416 + $0x63] sm:$0xff]
      %v665 = vld [vmem:[%s416 + $0x6b] sm:$0xff]
      %v666 = vld [vmem:[%s416 + $0x73] sm:$0xff]
      %v667 = vld [vmem:[%s416 + $0x7b] sm:$0xff]
      %v668 = vld [vmem:[%s416 + $0x83] sm:$0xff]
      %v669 = vld [vmem:[%s416 + $0x8b] sm:$0xff]
      %v670 = vld [vmem:[%s416 + $0x93] sm:$0xff]
      %v671 = vld [vmem:[%s416 + $0x9b] sm:$0xff]
      %v672 = vld [vmem:[%s416 + $0xa3] sm:$0xff]
      %v673 = vld [vmem:[%s416 + $0xab] sm:$0xff]
      %v674 = vld [vmem:[%s416 + $0xb3] sm:$0xff]
      %693 = vrot.lane.b32.xlu0 %v563, 4
      %v694 = vpop.permute.xlu0 %693
      %695 = vrot.lane.b32.xlu0 %v564, 4
      %v696 = vpop.permute.xlu0 %695
      %697 = vrot.lane.b32.xlu0 %v565, 4
      %v698 = vpop.permute.xlu0 %697
      %699 = vrot.lane.b32.xlu0 %v566, 4
      %v700 = vpop.permute.xlu0 %699
      %701 = vrot.lane.b32.xlu0 %v567, 4
      %v702 = vpop.permute.xlu0 %701
      %703 = vrot.lane.b32.xlu0 %v568, 4
      %v704 = vpop.permute.xlu0 %703
      %705 = vrot.lane.b32.xlu0 %v569, 4
      %v706 = vpop.permute.xlu0 %705
      %707 = vrot.lane.b32.xlu0 %v570, 4
      %v708 = vpop.permute.xlu0 %707
      %709 = vrot.lane.b32.xlu0 %v571, 4
      %v710 = vpop.permute.xlu0 %709
      %711 = vrot.lane.b32.xlu0 %v572, 4
      %v712 = vpop.permute.xlu0 %711
      %713 = vrot.lane.b32.xlu0 %v573, 4
      %v714 = vpop.permute.xlu0 %713
      %715 = vrot.lane.b32.xlu0 %v574, 4
      %v716 = vpop.permute.xlu0 %715
      %717 = vrot.lane.b32.xlu0 %v575, 4
      %v718 = vpop.permute.xlu0 %717
      %719 = vrot.lane.b32.xlu0 %v576, 4
      %v720 = vpop.permute.xlu0 %719
      %721 = vrot.lane.b32.xlu0 %v577, 4
      %v722 = vpop.permute.xlu0 %721
      %723 = vrot.lane.b32.xlu0 %v578, 4
      %v724 = vpop.permute.xlu0 %723
      %725 = vrot.lane.b32.xlu0 %v579, 4
      %v726 = vpop.permute.xlu0 %725
      %727 = vrot.lane.b32.xlu0 %v580, 4
      %v728 = vpop.permute.xlu0 %727
      %765 = vrot.lane.b32.xlu0 %v581, 8
      %v766 = vpop.permute.xlu0 %765
      %767 = vrot.lane.b32.xlu0 %v582, 8
      %v768 = vpop.permute.xlu0 %767
      %769 = vrot.lane.b32.xlu0 %v583, 8
      %v770 = vpop.permute.xlu0 %769
      %771 = vrot.lane.b32.xlu0 %v584, 8
      %v772 = vpop.permute.xlu0 %771
      %773 = vrot.lane.b32.xlu0 %v585, 8
      %v774 = vpop.permute.xlu0 %773
      %775 = vrot.lane.b32.xlu0 %v586, 8
      %v776 = vpop.permute.xlu0 %775
      %777 = vrot.lane.b32.xlu0 %v587, 8
      %v778 = vpop.permute.xlu0 %777
      %779 = vrot.lane.b32.xlu0 %v588, 8
      %v780 = vpop.permute.xlu0 %779
      %781 = vrot.lane.b32.xlu0 %v589, 8
      %v782 = vpop.permute.xlu0 %781
      %783 = vrot.lane.b32.xlu0 %v590, 8
      %v784 = vpop.permute.xlu0 %783
      %785 = vrot.lane.b32.xlu0 %v591, 8
      %v786 = vpop.permute.xlu0 %785
      %787 = vrot.lane.b32.xlu0 %v592, 8
      %v788 = vpop.permute.xlu0 %787
      %789 = vrot.lane.b32.xlu0 %v593, 8
      %v790 = vpop.permute.xlu0 %789
      %791 = vrot.lane.b32.xlu0 %v594, 8
      %v792 = vpop.permute.xlu0 %791
      %793 = vrot.lane.b32.xlu0 %v595, 8
      %v794 = vpop.permute.xlu0 %793
      %795 = vrot.lane.b32.xlu0 %v596, 8
      %v796 = vpop.permute.xlu0 %795
      %797 = vrot.lane.b32.xlu0 %v597, 8
      %v798 = vpop.permute.xlu0 %797
      %799 = vrot.lane.b32.xlu0 %v598, 8
      %v800 = vpop.permute.xlu0 %799
      %821 = vrot.lane.b32.xlu0 %v583, 12
      %v822 = vpop.permute.xlu0 %821
      %823 = vrot.lane.b32.xlu0 %v584, 12
      %v824 = vpop.permute.xlu0 %823
      %825 = vrot.lane.b32.xlu0 %v585, 12
      %v826 = vpop.permute.xlu0 %825
      %827 = vrot.lane.b32.xlu0 %v586, 12
      %v828 = vpop.permute.xlu0 %827
      %829 = vrot.lane.b32.xlu0 %v587, 12
      %v830 = vpop.permute.xlu0 %829
      %831 = vrot.lane.b32.xlu0 %v588, 12
      %v832 = vpop.permute.xlu0 %831
      %833 = vrot.lane.b32.xlu0 %v589, 12
      %v834 = vpop.permute.xlu0 %833
      %835 = vrot.lane.b32.xlu0 %v590, 12
      %v836 = vpop.permute.xlu0 %835
      %837 = vrot.lane.b32.xlu0 %v591, 12
      %v838 = vpop.permute.xlu0 %837
      %839 = vrot.lane.b32.xlu0 %v592, 12
      %v840 = vpop.permute.xlu0 %839
      %841 = vrot.lane.b32.xlu0 %v593, 12
      %v842 = vpop.permute.xlu0 %841
      %843 = vrot.lane.b32.xlu0 %v594, 12
      %v844 = vpop.permute.xlu0 %843
      %845 = vrot.lane.b32.xlu0 %v595, 12
      %v846 = vpop.permute.xlu0 %845
      %847 = vrot.lane.b32.xlu0 %v596, 12
      %v848 = vpop.permute.xlu0 %847
      %849 = vrot.lane.b32.xlu0 %v597, 12
      %v850 = vpop.permute.xlu0 %849
      %851 = vrot.lane.b32.xlu0 %v598, 12
      %v852 = vpop.permute.xlu0 %851
      %853 = vrot.lane.b32.xlu0 %v599, 12
      %v854 = vpop.permute.xlu0 %853
      %855 = vrot.lane.b32.xlu0 %v600, 12
      %v856 = vpop.permute.xlu0 %855
      %893 = vrot.lane.b32.xlu0 %v601, 16
      %v894 = vpop.permute.xlu0 %893
      %895 = vrot.lane.b32.xlu0 %v602, 16
      %v896 = vpop.permute.xlu0 %895
      %897 = vrot.lane.b32.xlu0 %v603, 16
      %v898 = vpop.permute.xlu0 %897
      %899 = vrot.lane.b32.xlu0 %v604, 16
      %v900 = vpop.permute.xlu0 %899
      %901 = vrot.lane.b32.xlu0 %v605, 16
      %v902 = vpop.permute.xlu0 %901
      %903 = vrot.lane.b32.xlu0 %v606, 16
      %v904 = vpop.permute.xlu0 %903
      %905 = vrot.lane.b32.xlu0 %v607, 16
      %v906 = vpop.permute.xlu0 %905
      %907 = vrot.lane.b32.xlu0 %v608, 16
      %v908 = vpop.permute.xlu0 %907
      %909 = vrot.lane.b32.xlu0 %v609, 16
      %v910 = vpop.permute.xlu0 %909
      %911 = vrot.lane.b32.xlu0 %v610, 16
      %v912 = vpop.permute.xlu0 %911
      %913 = vrot.lane.b32.xlu0 %v611, 16
      %v914 = vpop.permute.xlu0 %913
      %915 = vrot.lane.b32.xlu0 %v612, 16
      %v916 = vpop.permute.xlu0 %915
      %917 = vrot.lane.b32.xlu0 %v613, 16
      %v918 = vpop.permute.xlu0 %917
      %919 = vrot.lane.b32.xlu0 %v614, 16
      %v920 = vpop.permute.xlu0 %919
      %921 = vrot.lane.b32.xlu0 %v615, 16
      %v922 = vpop.permute.xlu0 %921
      %923 = vrot.lane.b32.xlu0 %v616, 16
      %v924 = vpop.permute.xlu0 %923
      %925 = vrot.lane.b32.xlu0 %v617, 16
      %v926 = vpop.permute.xlu0 %925
      %927 = vrot.lane.b32.xlu0 %v618, 16
      %v928 = vpop.permute.xlu0 %927
      %965 = vrot.lane.b32.xlu0 %v619, 20
      %v966 = vpop.permute.xlu0 %965
      %967 = vrot.lane.b32.xlu0 %v620, 20
      %v968 = vpop.permute.xlu0 %967
      %969 = vrot.lane.b32.xlu0 %v621, 20
      %v970 = vpop.permute.xlu0 %969
      %971 = vrot.lane.b32.xlu0 %v622, 20
      %v972 = vpop.permute.xlu0 %971
      %973 = vrot.lane.b32.xlu0 %v623, 20
      %v974 = vpop.permute.xlu0 %973
      %975 = vrot.lane.b32.xlu0 %v624, 20
      %v976 = vpop.permute.xlu0 %975
      %977 = vrot.lane.b32.xlu0 %v625, 20
      %v978 = vpop.permute.xlu0 %977
      %979 = vrot.lane.b32.xlu0 %v626, 20
      %v980 = vpop.permute.xlu0 %979
      %981 = vrot.lane.b32.xlu0 %v627, 20
      %v982 = vpop.permute.xlu0 %981
      %983 = vrot.lane.b32.xlu0 %v628, 20
      %v984 = vpop.permute.xlu0 %983
      %985 = vrot.lane.b32.xlu0 %v629, 20
      %v986 = vpop.permute.xlu0 %985
      %987 = vrot.lane.b32.xlu0 %v630, 20
      %v988 = vpop.permute.xlu0 %987
      %989 = vrot.lane.b32.xlu0 %v631, 20
      %v990 = vpop.permute.xlu0 %989
      %991 = vrot.lane.b32.xlu0 %v632, 20
      %v992 = vpop.permute.xlu0 %991
      %993 = vrot.lane.b32.xlu0 %v633, 20
      %v994 = vpop.permute.xlu0 %993
      %995 = vrot.lane.b32.xlu0 %v634, 20
      %v996 = vpop.permute.xlu0 %995
      %997 = vrot.lane.b32.xlu0 %v635, 20
      %v998 = vpop.permute.xlu0 %997
      %999 = vrot.lane.b32.xlu0 %v636, 20
      %v1000 = vpop.permute.xlu0 %999
      %1021 = vrot.lane.b32.xlu0 %v621, 24
      %v1022 = vpop.permute.xlu0 %1021
      %1023 = vrot.lane.b32.xlu0 %v622, 24
      %v1024 = vpop.permute.xlu0 %1023
      %1025 = vrot.lane.b32.xlu0 %v623, 24
      %v1026 = vpop.permute.xlu0 %1025
      %1027 = vrot.lane.b32.xlu0 %v624, 24
      %v1028 = vpop.permute.xlu0 %1027
      %1029 = vrot.lane.b32.xlu0 %v625, 24
      %v1030 = vpop.permute.xlu0 %1029
      %1031 = vrot.lane.b32.xlu0 %v626, 24
      %v1032 = vpop.permute.xlu0 %1031
      %1033 = vrot.lane.b32.xlu0 %v627, 24
      %v1034 = vpop.permute.xlu0 %1033
      %1035 = vrot.lane.b32.xlu0 %v628, 24
      %v1036 = vpop.permute.xlu0 %1035
      %1037 = vrot.lane.b32.xlu0 %v629, 24
      %v1038 = vpop.permute.xlu0 %1037
      %1039 = vrot.lane.b32.xlu0 %v630, 24
      %v1040 = vpop.permute.xlu0 %1039
      %1041 = vrot.lane.b32.xlu0 %v631, 24
      %v1042 = vpop.permute.xlu0 %1041
      %1043 = vrot.lane.b32.xlu0 %v632, 24
      %v1044 = vpop.permute.xlu0 %1043
      %1045 = vrot.lane.b32.xlu0 %v633, 24
      %v1046 = vpop.permute.xlu0 %1045
      %1047 = vrot.lane.b32.xlu0 %v634, 24
      %v1048 = vpop.permute.xlu0 %1047
      %1049 = vrot.lane.b32.xlu0 %v635, 24
      %v1050 = vpop.permute.xlu0 %1049
      %1051 = vrot.lane.b32.xlu0 %v636, 24
      %v1052 = vpop.permute.xlu0 %1051
      %1053 = vrot.lane.b32.xlu0 %v637, 24
      %v1054 = vpop.permute.xlu0 %1053
      %1055 = vrot.lane.b32.xlu0 %v638, 24
      %v1056 = vpop.permute.xlu0 %1055
      %1093 = vrot.lane.b32.xlu0 %v639, 28
      %v1094 = vpop.permute.xlu0 %1093
      %1095 = vrot.lane.b32.xlu0 %v640, 28
      %v1096 = vpop.permute.xlu0 %1095
      %1097 = vrot.lane.b32.xlu0 %v641, 28
      %v1098 = vpop.permute.xlu0 %1097
      %1099 = vrot.lane.b32.xlu0 %v642, 28
      %v1100 = vpop.permute.xlu0 %1099
      %1101 = vrot.lane.b32.xlu0 %v643, 28
      %v1102 = vpop.permute.xlu0 %1101
      %1103 = vrot.lane.b32.xlu0 %v644, 28
      %v1104 = vpop.permute.xlu0 %1103
      %1105 = vrot.lane.b32.xlu0 %v645, 28
      %v1106 = vpop.permute.xlu0 %1105
      %1107 = vrot.lane.b32.xlu0 %v646, 28
      %v1108 = vpop.permute.xlu0 %1107
      %1109 = vrot.lane.b32.xlu0 %v647, 28
      %v1110 = vpop.permute.xlu0 %1109
      %1111 = vrot.lane.b32.xlu0 %v648, 28
      %v1112 = vpop.permute.xlu0 %1111
      %1113 = vrot.lane.b32.xlu0 %v649, 28
      %v1114 = vpop.permute.xlu0 %1113
      %1115 = vrot.lane.b32.xlu0 %v650, 28
      %v1116 = vpop.permute.xlu0 %1115
      %1117 = vrot.lane.b32.xlu0 %v651, 28
      %v1118 = vpop.permute.xlu0 %1117
      %1119 = vrot.lane.b32.xlu0 %v652, 28
      %v1120 = vpop.permute.xlu0 %1119
      %1121 = vrot.lane.b32.xlu0 %v653, 28
      %v1122 = vpop.permute.xlu0 %1121
      %1123 = vrot.lane.b32.xlu0 %v654, 28
      %v1124 = vpop.permute.xlu0 %1123
      %1125 = vrot.lane.b32.xlu0 %v655, 28
      %v1126 = vpop.permute.xlu0 %1125
      %1127 = vrot.lane.b32.xlu0 %v656, 28
      %v1128 = vpop.permute.xlu0 %1127
      %1165 = vrot.lane.b32.xlu0 %v657, 32
      %v1166 = vpop.permute.xlu0 %1165
      %1167 = vrot.lane.b32.xlu0 %v658, 32
      %v1168 = vpop.permute.xlu0 %1167
      %1169 = vrot.lane.b32.xlu0 %v659, 32
      %v1170 = vpop.permute.xlu0 %1169
      %1171 = vrot.lane.b32.xlu0 %v660, 32
      %v1172 = vpop.permute.xlu0 %1171
      %1173 = vrot.lane.b32.xlu0 %v661, 32
      %v1174 = vpop.permute.xlu0 %1173
      %1175 = vrot.lane.b32.xlu0 %v662, 32
      %v1176 = vpop.permute.xlu0 %1175
      %1177 = vrot.lane.b32.xlu0 %v663, 32
      %v1178 = vpop.permute.xlu0 %1177
      %1179 = vrot.lane.b32.xlu0 %v664, 32
      %v1180 = vpop.permute.xlu0 %1179
      %1181 = vrot.lane.b32.xlu0 %v665, 32
      %v1182 = vpop.permute.xlu0 %1181
      %1183 = vrot.lane.b32.xlu0 %v666, 32
      %v1184 = vpop.permute.xlu0 %1183
      %1185 = vrot.lane.b32.xlu0 %v667, 32
      %v1186 = vpop.permute.xlu0 %1185
      %1187 = vrot.lane.b32.xlu0 %v668, 32
      %v1188 = vpop.permute.xlu0 %1187
      %1189 = vrot.lane.b32.xlu0 %v669, 32
      %v1190 = vpop.permute.xlu0 %1189
      %1191 = vrot.lane.b32.xlu0 %v670, 32
      %v1192 = vpop.permute.xlu0 %1191
      %1193 = vrot.lane.b32.xlu0 %v671, 32
      %v1194 = vpop.permute.xlu0 %1193
      %1195 = vrot.lane.b32.xlu0 %v672, 32
      %v1196 = vpop.permute.xlu0 %1195
      %1197 = vrot.lane.b32.xlu0 %v673, 32
      %v1198 = vpop.permute.xlu0 %1197
      %1199 = vrot.lane.b32.xlu0 %v674, 32
      %v1200 = vpop.permute.xlu0 %1199
      %vm1219 = vcmask 31744
      %v1220 = vsel %vm1219, %v545, %v694
      %v1221 = vsel %vm1219, %v546, %v696
      %v1222 = vsel %vm1219, %v547, %v698
      %v1223 = vsel %vm1219, %v548, %v700
      %v1224 = vsel %vm1219, %v549, %v702
      %v1225 = vsel %vm1219, %v550, %v704
      %v1226 = vsel %vm1219, %v551, %v706
      %v1227 = vsel %vm1219, %v552, %v708
      %v1228 = vsel %vm1219, %v553, %v710
      %v1229 = vsel %vm1219, %v554, %v712
      %v1230 = vsel %vm1219, %v555, %v714
      %v1231 = vsel %vm1219, %v556, %v716
      %v1232 = vsel %vm1219, %v557, %v718
      %v1233 = vsel %vm1219, %v558, %v720
      %v1234 = vsel %vm1219, %v559, %v722
      %v1235 = vsel %vm1219, %v560, %v724
      %v1236 = vsel %vm1219, %v561, %v726
      %v1237 = vsel %vm1219, %v562, %v728
      %v1238 = vsel %vm446, %v1220, %v766
      %v1239 = vsel %vm446, %v1221, %v768
      %v1240 = vsel %vm446, %v1222, %v770
      %v1241 = vsel %vm446, %v1223, %v772
      %v1242 = vsel %vm446, %v1224, %v774
      %v1243 = vsel %vm446, %v1225, %v776
      %v1244 = vsel %vm446, %v1226, %v778
      %v1245 = vsel %vm446, %v1227, %v780
      %v1246 = vsel %vm446, %v1228, %v782
      %v1247 = vsel %vm446, %v1229, %v784
      %v1248 = vsel %vm446, %v1230, %v786
      %v1249 = vsel %vm446, %v1231, %v788
      %v1250 = vsel %vm446, %v1232, %v790
      %v1251 = vsel %vm446, %v1233, %v792
      %v1252 = vsel %vm446, %v1234, %v794
      %v1253 = vsel %vm446, %v1235, %v796
      %v1254 = vsel %vm446, %v1236, %v798
      %v1255 = vsel %vm446, %v1237, %v800
      %vm1256 = vcmask 97280
      %v1257 = vsel %vm1256, %v1238, %v822
      %v1258 = vsel %vm1256, %v1239, %v824
      %v1259 = vsel %vm1256, %v1240, %v826
      %v1260 = vsel %vm1256, %v1241, %v828
      %v1261 = vsel %vm1256, %v1242, %v830
      %v1262 = vsel %vm1256, %v1243, %v832
      %v1263 = vsel %vm1256, %v1244, %v834
      %v1264 = vsel %vm1256, %v1245, %v836
      %v1265 = vsel %vm1256, %v1246, %v838
      %v1266 = vsel %vm1256, %v1247, %v840
      %v1267 = vsel %vm1256, %v1248, %v842
      %v1268 = vsel %vm1256, %v1249, %v844
      %v1269 = vsel %vm1256, %v1250, %v846
      %v1270 = vsel %vm1256, %v1251, %v848
      %v1271 = vsel %vm1256, %v1252, %v850
      %v1272 = vsel %vm1256, %v1253, %v852
      %v1273 = vsel %vm1256, %v1254, %v854
      %v1274 = vsel %vm1256, %v1255, %v856
      %vm1275 = vcmask 130048
      %v1276 = vsel %vm1275, %v1257, %v894
      %v1277 = vsel %vm1275, %v1258, %v896
      %v1278 = vsel %vm1275, %v1259, %v898
      %v1279 = vsel %vm1275, %v1260, %v900
      %v1280 = vsel %vm1275, %v1261, %v902
      %v1281 = vsel %vm1275, %v1262, %v904
      %v1282 = vsel %vm1275, %v1263, %v906
      %v1283 = vsel %vm1275, %v1264, %v908
      %v1284 = vsel %vm1275, %v1265, %v910
      %v1285 = vsel %vm1275, %v1266, %v912
      %v1286 = vsel %vm1275, %v1267, %v914
      %v1287 = vsel %vm1275, %v1268, %v916
      %v1288 = vsel %vm1275, %v1269, %v918
      %v1289 = vsel %vm1275, %v1270, %v920
      %v1290 = vsel %vm1275, %v1271, %v922
      %v1291 = vsel %vm1275, %v1272, %v924
      %v1292 = vsel %vm1275, %v1273, %v926
      %v1293 = vsel %vm1275, %v1274, %v928
      %vm1294 = vcmask 162816
      %v1295 = vsel %vm1294, %v1276, %v966
      %v1296 = vsel %vm1294, %v1277, %v968
      %v1297 = vsel %vm1294, %v1278, %v970
      %v1298 = vsel %vm1294, %v1279, %v972
      %v1299 = vsel %vm1294, %v1280, %v974
      %v1300 = vsel %vm1294, %v1281, %v976
      %v1301 = vsel %vm1294, %v1282, %v978
      %v1302 = vsel %vm1294, %v1283, %v980
      %v1303 = vsel %vm1294, %v1284, %v982
      %v1304 = vsel %vm1294, %v1285, %v984
      %v1305 = vsel %vm1294, %v1286, %v986
      %v1306 = vsel %vm1294, %v1287, %v988
      %v1307 = vsel %vm1294, %v1288, %v990
      %v1308 = vsel %vm1294, %v1289, %v992
      %v1309 = vsel %vm1294, %v1290, %v994
      %v1310 = vsel %vm1294, %v1291, %v996
      %v1311 = vsel %vm1294, %v1292, %v998
      %v1312 = vsel %vm1294, %v1293, %v1000
      %vm1313 = vcmask 195584
      %v1314 = vsel %vm1313, %v1295, %v1022
      %v1315 = vsel %vm1313, %v1296, %v1024
      %v1316 = vsel %vm1313, %v1297, %v1026
      %v1317 = vsel %vm1313, %v1298, %v1028
      %v1318 = vsel %vm1313, %v1299, %v1030
      %v1319 = vsel %vm1313, %v1300, %v1032
      %v1320 = vsel %vm1313, %v1301, %v1034
      %v1321 = vsel %vm1313, %v1302, %v1036
      %v1322 = vsel %vm1313, %v1303, %v1038
      %v1323 = vsel %vm1313, %v1304, %v1040
      %v1324 = vsel %vm1313, %v1305, %v1042
      %v1325 = vsel %vm1313, %v1306, %v1044
      %v1326 = vsel %vm1313, %v1307, %v1046
      %v1327 = vsel %vm1313, %v1308, %v1048
      %v1328 = vsel %vm1313, %v1309, %v1050
      %v1329 = vsel %vm1313, %v1310, %v1052
      %v1330 = vsel %vm1313, %v1311, %v1054
      %v1331 = vsel %vm1313, %v1312, %v1056
      %vm1332 = vcmask 228352
      %v1333 = vsel %vm1332, %v1314, %v1094
      %v1334 = vsel %vm1332, %v1315, %v1096
      %v1335 = vsel %vm1332, %v1316, %v1098
      %v1336 = vsel %vm1332, %v1317, %v1100
      %v1337 = vsel %vm1332, %v1318, %v1102
      %v1338 = vsel %vm1332, %v1319, %v1104
      %v1339 = vsel %vm1332, %v1320, %v1106
      %v1340 = vsel %vm1332, %v1321, %v1108
      %v1341 = vsel %vm1332, %v1322, %v1110
      %v1342 = vsel %vm1332, %v1323, %v1112
      %v1343 = vsel %vm1332, %v1324, %v1114
      %v1344 = vsel %vm1332, %v1325, %v1116
      %v1345 = vsel %vm1332, %v1326, %v1118
      %v1346 = vsel %vm1332, %v1327, %v1120
      %v1347 = vsel %vm1332, %v1328, %v1122
      %v1348 = vsel %vm1332, %v1329, %v1124
      %v1349 = vsel %vm1332, %v1330, %v1126
      %v1350 = vsel %vm1332, %v1331, %v1128
      %vm1351 = vcmask 261120
      %v1352 = vsel %vm1351, %v1333, %v1166
      %v1353 = vsel %vm1351, %v1334, %v1168
      %v1354 = vsel %vm1351, %v1335, %v1170
      %v1355 = vsel %vm1351, %v1336, %v1172
      %v1356 = vsel %vm1351, %v1337, %v1174
      %v1357 = vsel %vm1351, %v1338, %v1176
      %v1358 = vsel %vm1351, %v1339, %v1178
      %v1359 = vsel %vm1351, %v1340, %v1180
      %v1360 = vsel %vm1351, %v1341, %v1182
      %v1361 = vsel %vm1351, %v1342, %v1184
      %v1362 = vsel %vm1351, %v1343, %v1186
      %v1363 = vsel %vm1351, %v1344, %v1188
      %v1364 = vsel %vm1351, %v1345, %v1190
      %v1365 = vsel %vm1351, %v1346, %v1192
      %v1366 = vsel %vm1351, %v1347, %v1194
      %v1367 = vsel %vm1351, %v1348, %v1196
      %v1368 = vsel %vm1351, %v1349, %v1198
      %v1369 = vsel %vm1351, %v1350, %v1200
      %v1370 = vpack.c.bf16 %v1353, %v1352
      %v1371 = vpack.c.bf16 %v1355, %v1354
      %v1372 = vpack.c.bf16 %v1357, %v1356
      %v1373 = vpack.c.bf16 %v1359, %v1358
      %v1374 = vpack.c.bf16 %v1361, %v1360
      %v1375 = vpack.c.bf16 %v1363, %v1362
      %v1376 = vpack.c.bf16 %v1365, %v1364
      %v1377 = vpack.c.bf16 %v1367, %v1366
      %v1378 = vpack.c.bf16 %v1369, %v1368
      %v1380 = vperm.slane %v544, 0
      %v1387 = vunpack.c.l.b16 %v539
      %v1388 = vunpack.c.l.b16 %v540
      %v1389 = vunpack.c.l.b16 %v541
      %v1390 = vunpack.c.l.b16 %v542
      %v1391 = vunpack.c.l.b16 %v543
      %v1392 = vpack.c.b16 %v1388, %v1387
      %v1393 = vpack.c.b16 %v1390, %v1389
      %v1394 = vpack.c.b16 %v1391, %v1391
      %vm1397 = vcmask 293888
      %v1399 = vsel %vm1397, %v1370, 0
      %v1402 = vsel %vm1397, %v1371, 0
      %v1405 = vsel %vm1397, %v1372, 0
      %v1408 = vsel %vm1397, %v1373, 0
      %v1411 = vsel %vm1397, %v1374, 0
      %v1414 = vsel %vm1397, %v1375, 0
      %v1417 = vsel %vm1397, %v1376, 0
      %v1420 = vsel %vm1397, %v1377, 0
      %v1423 = vsel %vm1397, %v1378, 0
      %vm1425 = vcmask 1041408
      %v1427 = vsel %vm1425, %v1394, 0
      %1429 = vmatpush.bf16.msra.mxu0 0
      %1430 = vmatpush.bf16.msra.mxu0 0
      %1431 = vmatpush.bf16.msra.mxu0 0
      %1432 = vmatpush.bf16.msra.mxu0 0
      %1433 = vmatpush.bf16.msra.mxu0 0
      %1434 = vmatpush.bf16.msra.mxu0 %v1427
      %1435 = vmatpush.bf16.msra.mxu0 %v1393
      %1436 = vmatpush.bf16.msra.mxu0 %v1392
      %1437 = vmatmul.bf16.gmra.mxu0 %v1399
      %v1438 = vpop.f32.mrf.mxu0
      %v1439 = vadd.f32 %v1380, %v1438
      %v1440 = vpop.f32.mrf.mxu0
      %v1441 = vadd.f32 %v1380, %v1440
      %1442 = vmatmul.bf16.gmra.mxu0 %v1402
      %v1443 = vpop.f32.mrf.mxu0
      %v1444 = vadd.f32 %v1380, %v1443
      %v1445 = vpop.f32.mrf.mxu0
      %v1446 = vadd.f32 %v1380, %v1445
      %1447 = vmatmul.bf16.gmra.mxu0 %v1405
      %v1448 = vpop.f32.mrf.mxu0
      %v1449 = vadd.f32 %v1380, %v1448
      %v1450 = vpop.f32.mrf.mxu0
      %v1451 = vadd.f32 %v1380, %v1450
      %1452 = vmatmul.bf16.gmra.mxu0 %v1408
      %v1453 = vpop.f32.mrf.mxu0
      %v1454 = vadd.f32 %v1380, %v1453
      %v1455 = vpop.f32.mrf.mxu0
      %v1456 = vadd.f32 %v1380, %v1455
      %1457 = vmatmul.bf16.gmra.mxu0 %v1411
      %v1458 = vpop.f32.mrf.mxu0
      %v1459 = vadd.f32 %v1380, %v1458
      %v1460 = vpop.f32.mrf.mxu0
      %v1461 = vadd.f32 %v1380, %v1460
      %1462 = vmatmul.bf16.gmra.mxu0 %v1414
      %v1463 = vpop.f32.mrf.mxu0
      %v1464 = vadd.f32 %v1380, %v1463
      %v1465 = vpop.f32.mrf.mxu0
      %v1466 = vadd.f32 %v1380, %v1465
      %1467 = vmatmul.bf16.gmra.mxu0 %v1417
      %v1468 = vpop.f32.mrf.mxu0
      %v1469 = vadd.f32 %v1380, %v1468
      %v1470 = vpop.f32.mrf.mxu0
      %v1471 = vadd.f32 %v1380, %v1470
      %1472 = vmatmul.bf16.gmra.mxu0 %v1420
      %v1473 = vpop.f32.mrf.mxu0
      %v1474 = vadd.f32 %v1380, %v1473
      %v1475 = vpop.f32.mrf.mxu0
      %v1476 = vadd.f32 %v1380, %v1475
      %1477 = vmatmul.bf16.gmra.mxu0 %v1423
      %v1478 = vpop.f32.mrf.mxu0
      %v1479 = vadd.f32 %v1380, %v1478
      %v1480 = vpop.f32.mrf.mxu0
      %v1481 = vadd.f32 %v1380, %v1480
      %1482 = vdwg.mxu0
      %1484 = vset.pattern.permute.xlu0 0
      %1485 = vperm.xlu0 %1484, %v428
      %v1486 = vpop.permute.xlu0 %1485
      %1489 = vset.pattern.permute.xlu0 0
      %1490 = vperm.xlu0 %1489, %v429
      %v1491 = vpop.permute.xlu0 %1490
      %1494 = vset.pattern.permute.xlu0 0
      %1495 = vperm.xlu0 %1494, %v430
      %v1496 = vpop.permute.xlu0 %1495
      %1499 = vset.pattern.permute.xlu0 0
      %1500 = vperm.xlu0 %1499, %v431
      %v1501 = vpop.permute.xlu0 %1500
      %1504 = vset.pattern.permute.xlu0 0
      %1505 = vperm.xlu0 %1504, %v432
      %v1506 = vpop.permute.xlu0 %1505
      %1509 = vset.pattern.permute.xlu0 0
      %1510 = vperm.xlu0 %1509, %v433
      %v1511 = vpop.permute.xlu0 %1510
      %1514 = vset.pattern.permute.xlu0 0
      %1515 = vperm.xlu0 %1514, %v434
      %v1516 = vpop.permute.xlu0 %1515
      %1519 = vset.pattern.permute.xlu0 0
      %1520 = vperm.xlu0 %1519, %v435
      %v1521 = vpop.permute.xlu0 %1520
      %1524 = vset.pattern.permute.xlu0 0
      %1525 = vperm.xlu0 %1524, %v436
      %v1526 = vpop.permute.xlu0 %1525
      %1529 = vset.pattern.permute.xlu0 0
      %1530 = vperm.xlu0 %1529, %v437
      %v1531 = vpop.permute.xlu0 %1530
      %1534 = vset.pattern.permute.xlu0 0
      %1535 = vperm.xlu0 %1534, %v438
      %v1536 = vpop.permute.xlu0 %1535
      %1539 = vset.pattern.permute.xlu0 0
      %1540 = vperm.xlu0 %1539, %v439
      %v1541 = vpop.permute.xlu0 %1540
      %1544 = vset.pattern.permute.xlu0 0
      %1545 = vperm.xlu0 %1544, %v440
      %v1546 = vpop.permute.xlu0 %1545
      %1549 = vset.pattern.permute.xlu0 0
      %1550 = vperm.xlu0 %1549, %v441
      %v1551 = vpop.permute.xlu0 %1550
      %1554 = vset.pattern.permute.xlu0 0
      %1555 = vperm.xlu0 %1554, %v442
      %v1556 = vpop.permute.xlu0 %1555
      %1559 = vset.pattern.permute.xlu0 0
      %1560 = vperm.xlu0 %1559, %v443
      %v1561 = vpop.permute.xlu0 %1560
      %1564 = vset.pattern.permute.xlu0 0
      %1565 = vperm.xlu0 %1564, %v444
      %v1566 = vpop.permute.xlu0 %1565
      %1569 = vset.pattern.permute.xlu0 0
      %1570 = vperm.xlu0 %1569, %v445
      %v1571 = vpop.permute.xlu0 %1570
      %v1573 = vmul.f32 %v1439, %v1486
      %v1574 = vmul.f32 %v1441, %v1491
      %v1575 = vmul.f32 %v1444, %v1496
      %v1576 = vmul.f32 %v1446, %v1501
      %v1577 = vmul.f32 %v1449, %v1506
      %v1578 = vmul.f32 %v1451, %v1511
      %v1579 = vmul.f32 %v1454, %v1516
      %v1580 = vmul.f32 %v1456, %v1521
      %v1581 = vmul.f32 %v1459, %v1526
      %v1582 = vmul.f32 %v1461, %v1531
      %v1583 = vmul.f32 %v1464, %v1536
      %v1584 = vmul.f32 %v1466, %v1541
      %v1585 = vmul.f32 %v1469, %v1546
      %v1586 = vmul.f32 %v1471, %v1551
      %v1587 = vmul.f32 %v1474, %v1556
      %v1588 = vmul.f32 %v1476, %v1561
      %v1589 = vmul.f32 %v1479, %v1566
      %v1590 = vmul.f32 %v1481, %v1571
      %v1591 = vsel %vm1219, %v1573, 0.0
      %v1592 = vsel %vm1219, %v1574, 0.0
      %v1593 = vadd.f32 %v1591, %v1592
      %v1594 = vsel %vm1219, %v1575, 0.0
      %v1595 = vadd.f32 %v1593, %v1594
      %v1596 = vsel %vm1219, %v1576, 0.0
      %v1597 = vadd.f32 %v1595, %v1596
      %v1598 = vsel %vm1219, %v1577, 0.0
      %v1599 = vadd.f32 %v1597, %v1598
      %v1600 = vsel %vm1219, %v1578, 0.0
      %v1601 = vadd.f32 %v1599, %v1600
      %v1602 = vsel %vm1219, %v1579, 0.0
      %v1603 = vadd.f32 %v1601, %v1602
      %v1604 = vsel %vm1219, %v1580, 0.0
      %v1605 = vadd.f32 %v1603, %v1604
      %v1606 = vsel %vm1219, %v1581, 0.0
      %v1607 = vadd.f32 %v1605, %v1606
      %v1608 = vsel %vm1219, %v1582, 0.0
      %v1609 = vadd.f32 %v1607, %v1608
      %v1610 = vsel %vm1219, %v1583, 0.0
      %v1611 = vadd.f32 %v1609, %v1610
      %v1612 = vsel %vm1219, %v1584, 0.0
      %v1613 = vadd.f32 %v1611, %v1612
      %v1614 = vsel %vm1219, %v1585, 0.0
      %v1615 = vadd.f32 %v1613, %v1614
      %v1616 = vsel %vm1219, %v1586, 0.0
      %v1617 = vadd.f32 %v1615, %v1616
      %v1618 = vsel %vm1219, %v1587, 0.0
      %v1619 = vadd.f32 %v1617, %v1618
      %v1620 = vsel %vm1219, %v1588, 0.0
      %v1621 = vadd.f32 %v1619, %v1620
      %v1622 = vsel %vm1219, %v1589, 0.0
      %v1623 = vadd.f32 %v1621, %v1622
      %v1624 = vsel %vm1219, %v1590, 0.0
      %v1625 = vadd.f32 %v1623, %v1624
      %v1626 = vrot.slane %v1625, 4
      %v1627 = vadd.f32 %v1625, %v1626
      %v1628 = vrot.slane %v1627, 2
      %v1629 = vadd.f32 %v1627, %v1628
      %v1630 = vrot.slane %v1629, 1
      %v1631 = vadd.f32 %v1629, %v1630
      %v1632 = vadd.f32 %v1631, 0.0
      %v1633 = vmul.f32 %v1573, %v1573
      %v1634 = vmul.f32 %v1574, %v1574
      %v1635 = vmul.f32 %v1575, %v1575
      %v1636 = vmul.f32 %v1576, %v1576
      %v1637 = vmul.f32 %v1577, %v1577
      %v1638 = vmul.f32 %v1578, %v1578
      %v1639 = vmul.f32 %v1579, %v1579
      %v1640 = vmul.f32 %v1580, %v1580
      %v1641 = vmul.f32 %v1581, %v1581
      %v1642 = vmul.f32 %v1582, %v1582
      %v1643 = vmul.f32 %v1583, %v1583
      %v1644 = vmul.f32 %v1584, %v1584
      %v1645 = vmul.f32 %v1585, %v1585
      %v1646 = vmul.f32 %v1586, %v1586
      %v1647 = vmul.f32 %v1587, %v1587
      %v1648 = vmul.f32 %v1588, %v1588
      %v1649 = vmul.f32 %v1589, %v1589
      %v1650 = vmul.f32 %v1590, %v1590
      %v1651 = vsel %vm1219, %v1633, 0.0
      %v1652 = vsel %vm1219, %v1634, 0.0
      %v1653 = vadd.f32 %v1651, %v1652
      %v1654 = vsel %vm1219, %v1635, 0.0
      %v1655 = vadd.f32 %v1653, %v1654
      %v1656 = vsel %vm1219, %v1636, 0.0
      %v1657 = vadd.f32 %v1655, %v1656
      %v1658 = vsel %vm1219, %v1637, 0.0
      %v1659 = vadd.f32 %v1657, %v1658
      %v1660 = vsel %vm1219, %v1638, 0.0
      %v1661 = vadd.f32 %v1659, %v1660
      %v1662 = vsel %vm1219, %v1639, 0.0
      %v1663 = vadd.f32 %v1661, %v1662
      %v1664 = vsel %vm1219, %v1640, 0.0
      %v1665 = vadd.f32 %v1663, %v1664
      %v1666 = vsel %vm1219, %v1641, 0.0
      %v1667 = vadd.f32 %v1665, %v1666
      %v1668 = vsel %vm1219, %v1642, 0.0
      %v1669 = vadd.f32 %v1667, %v1668
      %v1670 = vsel %vm1219, %v1643, 0.0
      %v1671 = vadd.f32 %v1669, %v1670
      %v1672 = vsel %vm1219, %v1644, 0.0
      %v1673 = vadd.f32 %v1671, %v1672
      %v1674 = vsel %vm1219, %v1645, 0.0
      %v1675 = vadd.f32 %v1673, %v1674
      %v1676 = vsel %vm1219, %v1646, 0.0
      %v1677 = vadd.f32 %v1675, %v1676
      %v1678 = vsel %vm1219, %v1647, 0.0
      %v1679 = vadd.f32 %v1677, %v1678
      %v1680 = vsel %vm1219, %v1648, 0.0
      %v1681 = vadd.f32 %v1679, %v1680
      %v1682 = vsel %vm1219, %v1649, 0.0
      %v1683 = vadd.f32 %v1681, %v1682
      %v1684 = vsel %vm1219, %v1650, 0.0
      %v1685 = vadd.f32 %v1683, %v1684
      %v1686 = vrot.slane %v1685, 4
      %v1687 = vadd.f32 %v1685, %v1686
      %v1688 = vrot.slane %v1687, 2
      %v1689 = vadd.f32 %v1687, %v1688
      %v1690 = vrot.slane %v1689, 1
      %v1691 = vadd.f32 %v1689, %v1690
      %v1692 = vadd.f32 %v1691, 0.0
      %1693 = vst.msk [vmem:[#allocation2 + $0x18] sm:$0xff] %vm446, %v1573
      %1694 = vst.msk [vmem:[#allocation2 + $0x20] sm:$0xff] %vm446, %v1574
      %1695 = vst.msk [vmem:[#allocation2 + $0x28] sm:$0xff] %vm446, %v1575
      %1696 = vst.msk [vmem:[#allocation2 + $0x30] sm:$0xff] %vm446, %v1576
      %1697 = vst.msk [vmem:[#allocation2 + $0x38] sm:$0xff] %vm446, %v1577
      %1698 = vst.msk [vmem:[#allocation2 + $0x40] sm:$0xff] %vm446, %v1578
      %1699 = vst.msk [vmem:[#allocation2 + $0x48] sm:$0xff] %vm446, %v1579
      %1700 = vst.msk [vmem:[#allocation2 + $0x50] sm:$0xff] %vm446, %v1580
      %1701 = vst.msk [vmem:[#allocation2 + $0x58] sm:$0xff] %vm446, %v1581
      %1702 = vst.msk [vmem:[#allocation2 + $0x60] sm:$0xff] %vm446, %v1582
      %1703 = vst.msk [vmem:[#allocation2 + $0x68] sm:$0xff] %vm446, %v1583
      %1704 = vst.msk [vmem:[#allocation2 + $0x70] sm:$0xff] %vm446, %v1584
      %1705 = vst.msk [vmem:[#allocation2 + $0x78] sm:$0xff] %vm446, %v1585
      %1706 = vst.msk [vmem:[#allocation2 + $0x80] sm:$0xff] %vm446, %v1586
      %1707 = vst.msk [vmem:[#allocation2 + $0x88] sm:$0xff] %vm446, %v1587
      %1708 = vst.msk [vmem:[#allocation2 + $0x90] sm:$0xff] %vm446, %v1588
      %1709 = vst.msk [vmem:[#allocation2 + $0x98] sm:$0xff] %vm446, %v1589
      %1710 = vst.msk [vmem:[#allocation2 + $0xa0] sm:$0xff] %vm446, %v1590
      %v1711 = vld [vmem:[%s416 + $0x95] sm:$0xff]
      %v1712 = vld [vmem:[%s416 + $0x9d] sm:$0xff]
      %v1713 = vld [vmem:[%s416 + $0xa5] sm:$0xff]
      %v1714 = vld [vmem:[%s416 + $0xad] sm:$0xff]
      %v1715 = vld [vmem:[%s416 + $0xb5] sm:$0xff]
      %v1716 = vld [vmem:[%s416 + $0xbd] sm:$0xff]
      %v1717 = vld [vmem:[%s416 + $0xc5] sm:$0xff]
      %v1718 = vld [vmem:[%s416 + $0xcd] sm:$0xff]
      %v1719 = vld [vmem:[%s416 + $0xd5] sm:$0xff]
      %v1720 = vld [vmem:[%s416 + $0xdd] sm:$0xff]
      %v1721 = vld [vmem:[%s416 + $0xe5] sm:$0xff]
      %v1722 = vld [vmem:[%s416 + $0xed] sm:$0xff]
      %v1723 = vld [vmem:[%s416 + $0xf5] sm:$0xff]
      %v1724 = vld [vmem:[%s416 + $0xfd] sm:$0xff]
      %v1725 = vld [vmem:[%s416 + $0x105] sm:$0xff]
      %v1726 = vld [vmem:[%s416 + $0x10d] sm:$0xff]
      %v1727 = vld [vmem:[%s416 + $0x115] sm:$0xff]
      %v1728 = vld [vmem:[%s416 + $0x11d] sm:$0xff]
      %v1729 = vld [vmem:[%s416 + $0x96] sm:$0xff]
      %v1730 = vld [vmem:[%s416 + $0x9e] sm:$0xff]
      %v1731 = vld [vmem:[%s416 + $0xa6] sm:$0xff]
      %v1732 = vld [vmem:[%s416 + $0xae] sm:$0xff]
      %v1733 = vld [vmem:[%s416 + $0xb6] sm:$0xff]
      %v1734 = vld [vmem:[%s416 + $0xbe] sm:$0xff]
      %v1735 = vld [vmem:[%s416 + $0xc6] sm:$0xff]
      %v1736 = vld [vmem:[%s416 + $0xce] sm:$0xff]
      %v1737 = vld [vmem:[%s416 + $0xd6] sm:$0xff]
      %v1738 = vld [vmem:[%s416 + $0xde] sm:$0xff]
      %v1739 = vld [vmem:[%s416 + $0xe6] sm:$0xff]
      %v1740 = vld [vmem:[%s416 + $0xee] sm:$0xff]
      %v1741 = vld [vmem:[%s416 + $0xf6] sm:$0xff]
      %v1742 = vld [vmem:[%s416 + $0xfe] sm:$0xff]
      %v1743 = vld [vmem:[%s416 + $0x106] sm:$0xff]
      %v1744 = vld [vmem:[%s416 + $0x10e] sm:$0xff]
      %v1745 = vld [vmem:[%s416 + $0x116] sm:$0xff]
      %v1746 = vld [vmem:[%s416 + $0x11e] sm:$0xff]
      %v1747 = vld [vmem:[%s416 + $0x97] sm:$0xff]
      %v1748 = vld [vmem:[%s416 + $0x9f] sm:$0xff]
      %v1749 = vld [vmem:[%s416 + $0xa7] sm:$0xff]
      %v1750 = vld [vmem:[%s416 + $0xaf] sm:$0xff]
      %v1751 = vld [vmem:[%s416 + $0xb7] sm:$0xff]
      %v1752 = vld [vmem:[%s416 + $0xbf] sm:$0xff]
      %v1753 = vld [vmem:[%s416 + $0xc7] sm:$0xff]
      %v1754 = vld [vmem:[%s416 + $0xcf] sm:$0xff]
      %v1755 = vld [vmem:[%s416 + $0xd7] sm:$0xff]
      %v1756 = vld [vmem:[%s416 + $0xdf] sm:$0xff]
      %v1757 = vld [vmem:[%s416 + $0xe7] sm:$0xff]
      %v1758 = vld [vmem:[%s416 + $0xef] sm:$0xff]
      %v1759 = vld [vmem:[%s416 + $0xf7] sm:$0xff]
      %v1760 = vld [vmem:[%s416 + $0xff] sm:$0xff]
      %v1761 = vld [vmem:[%s416 + $0x107] sm:$0xff]
      %v1762 = vld [vmem:[%s416 + $0x10f] sm:$0xff]
      %v1763 = vld [vmem:[%s416 + $0x117] sm:$0xff]
      %v1764 = vld [vmem:[%s416 + $0x11f] sm:$0xff]
      %v1765 = vld [vmem:[%s416 + $0x127] sm:$0xff]
      %v1766 = vld [vmem:[%s416 + $0x12f] sm:$0xff]
      %v1767 = vld [vmem:[%s416 + $0xa8] sm:$0xff]
      %v1768 = vld [vmem:[%s416 + $0xb0] sm:$0xff]
      %v1769 = vld [vmem:[%s416 + $0xb8] sm:$0xff]
      %v1770 = vld [vmem:[%s416 + $0xc0] sm:$0xff]
      %v1771 = vld [vmem:[%s416 + $0xc8] sm:$0xff]
      %v1772 = vld [vmem:[%s416 + $0xd0] sm:$0xff]
      %v1773 = vld [vmem:[%s416 + $0xd8] sm:$0xff]
      %v1774 = vld [vmem:[%s416 + $0xe0] sm:$0xff]
      %v1775 = vld [vmem:[%s416 + $0xe8] sm:$0xff]
      %v1776 = vld [vmem:[%s416 + $0xf0] sm:$0xff]
      %v1777 = vld [vmem:[%s416 + $0xf8] sm:$0xff]
      %v1778 = vld [vmem:[%s416 + $0x100] sm:$0xff]
      %v1779 = vld [vmem:[%s416 + $0x108] sm:$0xff]
      %v1780 = vld [vmem:[%s416 + $0x110] sm:$0xff]
      %v1781 = vld [vmem:[%s416 + $0x118] sm:$0xff]
      %v1782 = vld [vmem:[%s416 + $0x120] sm:$0xff]
      %v1783 = vld [vmem:[%s416 + $0x128] sm:$0xff]
      %v1784 = vld [vmem:[%s416 + $0x130] sm:$0xff]
      %v1785 = vld [vmem:[%s416 + $0xa9] sm:$0xff]
      %v1786 = vld [vmem:[%s416 + $0xb1] sm:$0xff]
      %v1787 = vld [vmem:[%s416 + $0xb9] sm:$0xff]
      %v1788 = vld [vmem:[%s416 + $0xc1] sm:$0xff]
      %v1789 = vld [vmem:[%s416 + $0xc9] sm:$0xff]
      %v1790 = vld [vmem:[%s416 + $0xd1] sm:$0xff]
      %v1791 = vld [vmem:[%s416 + $0xd9] sm:$0xff]
      %v1792 = vld [vmem:[%s416 + $0xe1] sm:$0xff]
      %v1793 = vld [vmem:[%s416 + $0xe9] sm:$0xff]
      %v1794 = vld [vmem:[%s416 + $0xf1] sm:$0xff]
      %v1795 = vld [vmem:[%s416 + $0xf9] sm:$0xff]
      %v1796 = vld [vmem:[%s416 + $0x101] sm:$0xff]
      %v1797 = vld [vmem:[%s416 + $0x109] sm:$0xff]
      %v1798 = vld [vmem:[%s416 + $0x111] sm:$0xff]
      %v1799 = vld [vmem:[%s416 + $0x119] sm:$0xff]
      %v1800 = vld [vmem:[%s416 + $0x121] sm:$0xff]
      %v1801 = vld [vmem:[%s416 + $0x129] sm:$0xff]
      %v1802 = vld [vmem:[%s416 + $0x131] sm:$0xff]
      %v1803 = vld [vmem:[%s416 + $0x139] sm:$0xff]
      %v1804 = vld [vmem:[%s416 + $0x141] sm:$0xff]
      %v1805 = vld [vmem:[%s416 + $0xba] sm:$0xff]
      %v1806 = vld [vmem:[%s416 + $0xc2] sm:$0xff]
      %v1807 = vld [vmem:[%s416 + $0xca] sm:$0xff]
      %v1808 = vld [vmem:[%s416 + $0xd2] sm:$0xff]
      %v1809 = vld [vmem:[%s416 + $0xda] sm:$0xff]
      %v1810 = vld [vmem:[%s416 + $0xe2] sm:$0xff]
      %v1811 = vld [vmem:[%s416 + $0xea] sm:$0xff]
      %v1812 = vld [vmem:[%s416 + $0xf2] sm:$0xff]
      %v1813 = vld [vmem:[%s416 + $0xfa] sm:$0xff]
      %v1814 = vld [vmem:[%s416 + $0x102] sm:$0xff]
      %v1815 = vld [vmem:[%s416 + $0x10a] sm:$0xff]
      %v1816 = vld [vmem:[%s416 + $0x112] sm:$0xff]
      %v1817 = vld [vmem:[%s416 + $0x11a] sm:$0xff]
      %v1818 = vld [vmem:[%s416 + $0x122] sm:$0xff]
      %v1819 = vld [vmem:[%s416 + $0x12a] sm:$0xff]
      %v1820 = vld [vmem:[%s416 + $0x132] sm:$0xff]
      %v1821 = vld [vmem:[%s416 + $0x13a] sm:$0xff]
      %v1822 = vld [vmem:[%s416 + $0x142] sm:$0xff]
      %v1823 = vld [vmem:[%s416 + $0xbb] sm:$0xff]
      %v1824 = vld [vmem:[%s416 + $0xc3] sm:$0xff]
      %v1825 = vld [vmem:[%s416 + $0xcb] sm:$0xff]
      %v1826 = vld [vmem:[%s416 + $0xd3] sm:$0xff]
      %v1827 = vld [vmem:[%s416 + $0xdb] sm:$0xff]
      %v1828 = vld [vmem:[%s416 + $0xe3] sm:$0xff]
      %v1829 = vld [vmem:[%s416 + $0xeb] sm:$0xff]
      %v1830 = vld [vmem:[%s416 + $0xf3] sm:$0xff]
      %v1831 = vld [vmem:[%s416 + $0xfb] sm:$0xff]
      %v1832 = vld [vmem:[%s416 + $0x103] sm:$0xff]
      %v1833 = vld [vmem:[%s416 + $0x10b] sm:$0xff]
      %v1834 = vld [vmem:[%s416 + $0x113] sm:$0xff]
      %v1835 = vld [vmem:[%s416 + $0x11b] sm:$0xff]
      %v1836 = vld [vmem:[%s416 + $0x123] sm:$0xff]
      %v1837 = vld [vmem:[%s416 + $0x12b] sm:$0xff]
      %v1838 = vld [vmem:[%s416 + $0x133] sm:$0xff]
      %v1839 = vld [vmem:[%s416 + $0x13b] sm:$0xff]
      %v1840 = vld [vmem:[%s416 + $0x143] sm:$0xff]
      %1859 = vrot.lane.b32.xlu0 %v1729, 4
      %v1860 = vpop.permute.xlu0 %1859
      %1861 = vrot.lane.b32.xlu0 %v1730, 4
      %v1862 = vpop.permute.xlu0 %1861
      %1863 = vrot.lane.b32.xlu0 %v1731, 4
      %v1864 = vpop.permute.xlu0 %1863
      %1865 = vrot.lane.b32.xlu0 %v1732, 4
      %v1866 = vpop.permute.xlu0 %1865
      %1867 = vrot.lane.b32.xlu0 %v1733, 4
      %v1868 = vpop.permute.xlu0 %1867
      %1869 = vrot.lane.b32.xlu0 %v1734, 4
      %v1870 = vpop.permute.xlu0 %1869
      %1871 = vrot.lane.b32.xlu0 %v1735, 4
      %v1872 = vpop.permute.xlu0 %1871
      %1873 = vrot.lane.b32.xlu0 %v1736, 4
      %v1874 = vpop.permute.xlu0 %1873
      %1875 = vrot.lane.b32.xlu0 %v1737, 4
      %v1876 = vpop.permute.xlu0 %1875
      %1877 = vrot.lane.b32.xlu0 %v1738, 4
      %v1878 = vpop.permute.xlu0 %1877
      %1879 = vrot.lane.b32.xlu0 %v1739, 4
      %v1880 = vpop.permute.xlu0 %1879
      %1881 = vrot.lane.b32.xlu0 %v1740, 4
      %v1882 = vpop.permute.xlu0 %1881
      %1883 = vrot.lane.b32.xlu0 %v1741, 4
      %v1884 = vpop.permute.xlu0 %1883
      %1885 = vrot.lane.b32.xlu0 %v1742, 4
      %v1886 = vpop.permute.xlu0 %1885
      %1887 = vrot.lane.b32.xlu0 %v1743, 4
      %v1888 = vpop.permute.xlu0 %1887
      %1889 = vrot.lane.b32.xlu0 %v1744, 4
      %v1890 = vpop.permute.xlu0 %1889
      %1891 = vrot.lane.b32.xlu0 %v1745, 4
      %v1892 = vpop.permute.xlu0 %1891
      %1893 = vrot.lane.b32.xlu0 %v1746, 4
      %v1894 = vpop.permute.xlu0 %1893
      %1931 = vrot.lane.b32.xlu0 %v1747, 8
      %v1932 = vpop.permute.xlu0 %1931
      %1933 = vrot.lane.b32.xlu0 %v1748, 8
      %v1934 = vpop.permute.xlu0 %1933
      %1935 = vrot.lane.b32.xlu0 %v1749, 8
      %v1936 = vpop.permute.xlu0 %1935
      %1937 = vrot.lane.b32.xlu0 %v1750, 8
      %v1938 = vpop.permute.xlu0 %1937
      %1939 = vrot.lane.b32.xlu0 %v1751, 8
      %v1940 = vpop.permute.xlu0 %1939
      %1941 = vrot.lane.b32.xlu0 %v1752, 8
      %v1942 = vpop.permute.xlu0 %1941
      %1943 = vrot.lane.b32.xlu0 %v1753, 8
      %v1944 = vpop.permute.xlu0 %1943
      %1945 = vrot.lane.b32.xlu0 %v1754, 8
      %v1946 = vpop.permute.xlu0 %1945
      %1947 = vrot.lane.b32.xlu0 %v1755, 8
      %v1948 = vpop.permute.xlu0 %1947
      %1949 = vrot.lane.b32.xlu0 %v1756, 8
      %v1950 = vpop.permute.xlu0 %1949
      %1951 = vrot.lane.b32.xlu0 %v1757, 8
      %v1952 = vpop.permute.xlu0 %1951
      %1953 = vrot.lane.b32.xlu0 %v1758, 8
      %v1954 = vpop.permute.xlu0 %1953
      %1955 = vrot.lane.b32.xlu0 %v1759, 8
      %v1956 = vpop.permute.xlu0 %1955
      %1957 = vrot.lane.b32.xlu0 %v1760, 8
      %v1958 = vpop.permute.xlu0 %1957
      %1959 = vrot.lane.b32.xlu0 %v1761, 8
      %v1960 = vpop.permute.xlu0 %1959
      %1961 = vrot.lane.b32.xlu0 %v1762, 8
      %v1962 = vpop.permute.xlu0 %1961
      %1963 = vrot.lane.b32.xlu0 %v1763, 8
      %v1964 = vpop.permute.xlu0 %1963
      %1965 = vrot.lane.b32.xlu0 %v1764, 8
      %v1966 = vpop.permute.xlu0 %1965
      %1987 = vrot.lane.b32.xlu0 %v1749, 12
      %v1988 = vpop.permute.xlu0 %1987
      %1989 = vrot.lane.b32.xlu0 %v1750, 12
      %v1990 = vpop.permute.xlu0 %1989
      %1991 = vrot.lane.b32.xlu0 %v1751, 12
      %v1992 = vpop.permute.xlu0 %1991
      %1993 = vrot.lane.b32.xlu0 %v1752, 12
      %v1994 = vpop.permute.xlu0 %1993
      %1995 = vrot.lane.b32.xlu0 %v1753, 12
      %v1996 = vpop.permute.xlu0 %1995
      %1997 = vrot.lane.b32.xlu0 %v1754, 12
      %v1998 = vpop.permute.xlu0 %1997
      %1999 = vrot.lane.b32.xlu0 %v1755, 12
      %v2000 = vpop.permute.xlu0 %1999
      %2001 = vrot.lane.b32.xlu0 %v1756, 12
      %v2002 = vpop.permute.xlu0 %2001
      %2003 = vrot.lane.b32.xlu0 %v1757, 12
      %v2004 = vpop.permute.xlu0 %2003
      %2005 = vrot.lane.b32.xlu0 %v1758, 12
      %v2006 = vpop.permute.xlu0 %2005
      %2007 = vrot.lane.b32.xlu0 %v1759, 12
      %v2008 = vpop.permute.xlu0 %2007
      %2009 = vrot.lane.b32.xlu0 %v1760, 12
      %v2010 = vpop.permute.xlu0 %2009
      %2011 = vrot.lane.b32.xlu0 %v1761, 12
      %v2012 = vpop.permute.xlu0 %2011
      %2013 = vrot.lane.b32.xlu0 %v1762, 12
      %v2014 = vpop.permute.xlu0 %2013
      %2015 = vrot.lane.b32.xlu0 %v1763, 12
      %v2016 = vpop.permute.xlu0 %2015
      %2017 = vrot.lane.b32.xlu0 %v1764, 12
      %v2018 = vpop.permute.xlu0 %2017
      %2019 = vrot.lane.b32.xlu0 %v1765, 12
      %v2020 = vpop.permute.xlu0 %2019
      %2021 = vrot.lane.b32.xlu0 %v1766, 12
      %v2022 = vpop.permute.xlu0 %2021
      %2059 = vrot.lane.b32.xlu0 %v1767, 16
      %v2060 = vpop.permute.xlu0 %2059
      %2061 = vrot.lane.b32.xlu0 %v1768, 16
      %v2062 = vpop.permute.xlu0 %2061
      %2063 = vrot.lane.b32.xlu0 %v1769, 16
      %v2064 = vpop.permute.xlu0 %2063
      %2065 = vrot.lane.b32.xlu0 %v1770, 16
      %v2066 = vpop.permute.xlu0 %2065
      %2067 = vrot.lane.b32.xlu0 %v1771, 16
      %v2068 = vpop.permute.xlu0 %2067
      %2069 = vrot.lane.b32.xlu0 %v1772, 16
      %v2070 = vpop.permute.xlu0 %2069
      %2071 = vrot.lane.b32.xlu0 %v1773, 16
      %v2072 = vpop.permute.xlu0 %2071
      %2073 = vrot.lane.b32.xlu0 %v1774, 16
      %v2074 = vpop.permute.xlu0 %2073
      %2075 = vrot.lane.b32.xlu0 %v1775, 16
      %v2076 = vpop.permute.xlu0 %2075
      %2077 = vrot.lane.b32.xlu0 %v1776, 16
      %v2078 = vpop.permute.xlu0 %2077
      %2079 = vrot.lane.b32.xlu0 %v1777, 16
      %v2080 = vpop.permute.xlu0 %2079
      %2081 = vrot.lane.b32.xlu0 %v1778, 16
      %v2082 = vpop.permute.xlu0 %2081
      %2083 = vrot.lane.b32.xlu0 %v1779, 16
      %v2084 = vpop.permute.xlu0 %2083
      %2085 = vrot.lane.b32.xlu0 %v1780, 16
      %v2086 = vpop.permute.xlu0 %2085
      %2087 = vrot.lane.b32.xlu0 %v1781, 16
      %v2088 = vpop.permute.xlu0 %2087
      %2089 = vrot.lane.b32.xlu0 %v1782, 16
      %v2090 = vpop.permute.xlu0 %2089
      %2091 = vrot.lane.b32.xlu0 %v1783, 16
      %v2092 = vpop.permute.xlu0 %2091
      %2093 = vrot.lane.b32.xlu0 %v1784, 16
      %v2094 = vpop.permute.xlu0 %2093
      %2131 = vrot.lane.b32.xlu0 %v1785, 20
      %v2132 = vpop.permute.xlu0 %2131
      %2133 = vrot.lane.b32.xlu0 %v1786, 20
      %v2134 = vpop.permute.xlu0 %2133
      %2135 = vrot.lane.b32.xlu0 %v1787, 20
      %v2136 = vpop.permute.xlu0 %2135
      %2137 = vrot.lane.b32.xlu0 %v1788, 20
      %v2138 = vpop.permute.xlu0 %2137
      %2139 = vrot.lane.b32.xlu0 %v1789, 20
      %v2140 = vpop.permute.xlu0 %2139
      %2141 = vrot.lane.b32.xlu0 %v1790, 20
      %v2142 = vpop.permute.xlu0 %2141
      %2143 = vrot.lane.b32.xlu0 %v1791, 20
      %v2144 = vpop.permute.xlu0 %2143
      %2145 = vrot.lane.b32.xlu0 %v1792, 20
      %v2146 = vpop.permute.xlu0 %2145
      %2147 = vrot.lane.b32.xlu0 %v1793, 20
      %v2148 = vpop.permute.xlu0 %2147
      %2149 = vrot.lane.b32.xlu0 %v1794, 20
      %v2150 = vpop.permute.xlu0 %2149
      %2151 = vrot.lane.b32.xlu0 %v1795, 20
      %v2152 = vpop.permute.xlu0 %2151
      %2153 = vrot.lane.b32.xlu0 %v1796, 20
      %v2154 = vpop.permute.xlu0 %2153
      %2155 = vrot.lane.b32.xlu0 %v1797, 20
      %v2156 = vpop.permute.xlu0 %2155
      %2157 = vrot.lane.b32.xlu0 %v1798, 20
      %v2158 = vpop.permute.xlu0 %2157
      %2159 = vrot.lane.b32.xlu0 %v1799, 20
      %v2160 = vpop.permute.xlu0 %2159
      %2161 = vrot.lane.b32.xlu0 %v1800, 20
      %v2162 = vpop.permute.xlu0 %2161
      %2163 = vrot.lane.b32.xlu0 %v1801, 20
      %v2164 = vpop.permute.xlu0 %2163
      %2165 = vrot.lane.b32.xlu0 %v1802, 20
      %v2166 = vpop.permute.xlu0 %2165
      %2187 = vrot.lane.b32.xlu0 %v1787, 24
      %v2188 = vpop.permute.xlu0 %2187
      %2189 = vrot.lane.b32.xlu0 %v1788, 24
      %v2190 = vpop.permute.xlu0 %2189
      %2191 = vrot.lane.b32.xlu0 %v1789, 24
      %v2192 = vpop.permute.xlu0 %2191
      %2193 = vrot.lane.b32.xlu0 %v1790, 24
      %v2194 = vpop.permute.xlu0 %2193
      %2195 = vrot.lane.b32.xlu0 %v1791, 24
      %v2196 = vpop.permute.xlu0 %2195
      %2197 = vrot.lane.b32.xlu0 %v1792, 24
      %v2198 = vpop.permute.xlu0 %2197
      %2199 = vrot.lane.b32.xlu0 %v1793, 24
      %v2200 = vpop.permute.xlu0 %2199
      %2201 = vrot.lane.b32.xlu0 %v1794, 24
      %v2202 = vpop.permute.xlu0 %2201
      %2203 = vrot.lane.b32.xlu0 %v1795, 24
      %v2204 = vpop.permute.xlu0 %2203
      %2205 = vrot.lane.b32.xlu0 %v1796, 24
      %v2206 = vpop.permute.xlu0 %2205
      %2207 = vrot.lane.b32.xlu0 %v1797, 24
      %v2208 = vpop.permute.xlu0 %2207
      %2209 = vrot.lane.b32.xlu0 %v1798, 24
      %v2210 = vpop.permute.xlu0 %2209
      %2211 = vrot.lane.b32.xlu0 %v1799, 24
      %v2212 = vpop.permute.xlu0 %2211
      %2213 = vrot.lane.b32.xlu0 %v1800, 24
      %v2214 = vpop.permute.xlu0 %2213
      %2215 = vrot.lane.b32.xlu0 %v1801, 24
      %v2216 = vpop.permute.xlu0 %2215
      %2217 = vrot.lane.b32.xlu0 %v1802, 24
      %v2218 = vpop.permute.xlu0 %2217
      %2219 = vrot.lane.b32.xlu0 %v1803, 24
      %v2220 = vpop.permute.xlu0 %2219
      %2221 = vrot.lane.b32.xlu0 %v1804, 24
      %v2222 = vpop.permute.xlu0 %2221
      %2259 = vrot.lane.b32.xlu0 %v1805, 28
      %v2260 = vpop.permute.xlu0 %2259
      %2261 = vrot.lane.b32.xlu0 %v1806, 28
      %v2262 = vpop.permute.xlu0 %2261
      %2263 = vrot.lane.b32.xlu0 %v1807, 28
      %v2264 = vpop.permute.xlu0 %2263
      %2265 = vrot.lane.b32.xlu0 %v1808, 28
      %v2266 = vpop.permute.xlu0 %2265
      %2267 = vrot.lane.b32.xlu0 %v1809, 28
      %v2268 = vpop.permute.xlu0 %2267
      %2269 = vrot.lane.b32.xlu0 %v1810, 28
      %v2270 = vpop.permute.xlu0 %2269
      %2271 = vrot.lane.b32.xlu0 %v1811, 28
      %v2272 = vpop.permute.xlu0 %2271
      %2273 = vrot.lane.b32.xlu0 %v1812, 28
      %v2274 = vpop.permute.xlu0 %2273
      %2275 = vrot.lane.b32.xlu0 %v1813, 28
      %v2276 = vpop.permute.xlu0 %2275
      %2277 = vrot.lane.b32.xlu0 %v1814, 28
      %v2278 = vpop.permute.xlu0 %2277
      %2279 = vrot.lane.b32.xlu0 %v1815, 28
      %v2280 = vpop.permute.xlu0 %2279
      %2281 = vrot.lane.b32.xlu0 %v1816, 28
      %v2282 = vpop.permute.xlu0 %2281
      %2283 = vrot.lane.b32.xlu0 %v1817, 28
      %v2284 = vpop.permute.xlu0 %2283
      %2285 = vrot.lane.b32.xlu0 %v1818, 28
      %v2286 = vpop.permute.xlu0 %2285
      %2287 = vrot.lane.b32.xlu0 %v1819, 28
      %v2288 = vpop.permute.xlu0 %2287
      %2289 = vrot.lane.b32.xlu0 %v1820, 28
      %v2290 = vpop.permute.xlu0 %2289
      %2291 = vrot.lane.b32.xlu0 %v1821, 28
      %v2292 = vpop.permute.xlu0 %2291
      %2293 = vrot.lane.b32.xlu0 %v1822, 28
      %v2294 = vpop.permute.xlu0 %2293
      %2331 = vrot.lane.b32.xlu0 %v1823, 32
      %v2332 = vpop.permute.xlu0 %2331
      %2333 = vrot.lane.b32.xlu0 %v1824, 32
      %v2334 = vpop.permute.xlu0 %2333
      %2335 = vrot.lane.b32.xlu0 %v1825, 32
      %v2336 = vpop.permute.xlu0 %2335
      %2337 = vrot.lane.b32.xlu0 %v1826, 32
      %v2338 = vpop.permute.xlu0 %2337
      %2339 = vrot.lane.b32.xlu0 %v1827, 32
      %v2340 = vpop.permute.xlu0 %2339
      %2341 = vrot.lane.b32.xlu0 %v1828, 32
      %v2342 = vpop.permute.xlu0 %2341
      %2343 = vrot.lane.b32.xlu0 %v1829, 32
      %v2344 = vpop.permute.xlu0 %2343
      %2345 = vrot.lane.b32.xlu0 %v1830, 32
      %v2346 = vpop.permute.xlu0 %2345
      %2347 = vrot.lane.b32.xlu0 %v1831, 32
      %v2348 = vpop.permute.xlu0 %2347
      %2349 = vrot.lane.b32.xlu0 %v1832, 32
      %v2350 = vpop.permute.xlu0 %2349
      %2351 = vrot.lane.b32.xlu0 %v1833, 32
      %v2352 = vpop.permute.xlu0 %2351
      %2353 = vrot.lane.b32.xlu0 %v1834, 32
      %v2354 = vpop.permute.xlu0 %2353
      %2355 = vrot.lane.b32.xlu0 %v1835, 32
      %v2356 = vpop.permute.xlu0 %2355
      %2357 = vrot.lane.b32.xlu0 %v1836, 32
      %v2358 = vpop.permute.xlu0 %2357
      %2359 = vrot.lane.b32.xlu0 %v1837, 32
      %v2360 = vpop.permute.xlu0 %2359
      %2361 = vrot.lane.b32.xlu0 %v1838, 32
      %v2362 = vpop.permute.xlu0 %2361
      %2363 = vrot.lane.b32.xlu0 %v1839, 32
      %v2364 = vpop.permute.xlu0 %2363
      %2365 = vrot.lane.b32.xlu0 %v1840, 32
      %v2366 = vpop.permute.xlu0 %2365
      %v2385 = vsel %vm1219, %v1711, %v1860
      %v2386 = vsel %vm1219, %v1712, %v1862
      %v2387 = vsel %vm1219, %v1713, %v1864
      %v2388 = vsel %vm1219, %v1714, %v1866
      %v2389 = vsel %vm1219, %v1715, %v1868
      %v2390 = vsel %vm1219, %v1716, %v1870
      %v2391 = vsel %vm1219, %v1717, %v1872
      %v2392 = vsel %vm1219, %v1718, %v1874
      %v2393 = vsel %vm1219, %v1719, %v1876
      %v2394 = vsel %vm1219, %v1720, %v1878
      %v2395 = vsel %vm1219, %v1721, %v1880
      %v2396 = vsel %vm1219, %v1722, %v1882
      %v2397 = vsel %vm1219, %v1723, %v1884
      %v2398 = vsel %vm1219, %v1724, %v1886
      %v2399 = vsel %vm1219, %v1725, %v1888
      %v2400 = vsel %vm1219, %v1726, %v1890
      %v2401 = vsel %vm1219, %v1727, %v1892
      %v2402 = vsel %vm1219, %v1728, %v1894
      %v2403 = vsel %vm446, %v2385, %v1932
      %v2404 = vsel %vm446, %v2386, %v1934
      %v2405 = vsel %vm446, %v2387, %v1936
      %v2406 = vsel %vm446, %v2388, %v1938
      %v2407 = vsel %vm446, %v2389, %v1940
      %v2408 = vsel %vm446, %v2390, %v1942
      %v2409 = vsel %vm446, %v2391, %v1944
      %v2410 = vsel %vm446, %v2392, %v1946
      %v2411 = vsel %vm446, %v2393, %v1948
      %v2412 = vsel %vm446, %v2394, %v1950
      %v2413 = vsel %vm446, %v2395, %v1952
      %v2414 = vsel %vm446, %v2396, %v1954
      %v2415 = vsel %vm446, %v2397, %v1956
      %v2416 = vsel %vm446, %v2398, %v1958
      %v2417 = vsel %vm446, %v2399, %v1960
      %v2418 = vsel %vm446, %v2400, %v1962
      %v2419 = vsel %vm446, %v2401, %v1964
      %v2420 = vsel %vm446, %v2402, %v1966
      %v2421 = vsel %vm1256, %v2403, %v1988
      %v2422 = vsel %vm1256, %v2404, %v1990
      %v2423 = vsel %vm1256, %v2405, %v1992
      %v2424 = vsel %vm1256, %v2406, %v1994
      %v2425 = vsel %vm1256, %v2407, %v1996
      %v2426 = vsel %vm1256, %v2408, %v1998
      %v2427 = vsel %vm1256, %v2409, %v2000
      %v2428 = vsel %vm1256, %v2410, %v2002
      %v2429 = vsel %vm1256, %v2411, %v2004
      %v2430 = vsel %vm1256, %v2412, %v2006
      %v2431 = vsel %vm1256, %v2413, %v2008
      %v2432 = vsel %vm1256, %v2414, %v2010
      %v2433 = vsel %vm1256, %v2415, %v2012
      %v2434 = vsel %vm1256, %v2416, %v2014
      %v2435 = vsel %vm1256, %v2417, %v2016
      %v2436 = vsel %vm1256, %v2418, %v2018
      %v2437 = vsel %vm1256, %v2419, %v2020
      %v2438 = vsel %vm1256, %v2420, %v2022
      %v2439 = vsel %vm1275, %v2421, %v2060
      %v2440 = vsel %vm1275, %v2422, %v2062
      %v2441 = vsel %vm1275, %v2423, %v2064
      %v2442 = vsel %vm1275, %v2424, %v2066
      %v2443 = vsel %vm1275, %v2425, %v2068
      %v2444 = vsel %vm1275, %v2426, %v2070
      %v2445 = vsel %vm1275, %v2427, %v2072
      %v2446 = vsel %vm1275, %v2428, %v2074
      %v2447 = vsel %vm1275, %v2429, %v2076
      %v2448 = vsel %vm1275, %v2430, %v2078
      %v2449 = vsel %vm1275, %v2431, %v2080
      %v2450 = vsel %vm1275, %v2432, %v2082
      %v2451 = vsel %vm1275, %v2433, %v2084
      %v2452 = vsel %vm1275, %v2434, %v2086
      %v2453 = vsel %vm1275, %v2435, %v2088
      %v2454 = vsel %vm1275, %v2436, %v2090
      %v2455 = vsel %vm1275, %v2437, %v2092
      %v2456 = vsel %vm1275, %v2438, %v2094
      %v2457 = vsel %vm1294, %v2439, %v2132
      %v2458 = vsel %vm1294, %v2440, %v2134
      %v2459 = vsel %vm1294, %v2441, %v2136
      %v2460 = vsel %vm1294, %v2442, %v2138
      %v2461 = vsel %vm1294, %v2443, %v2140
      %v2462 = vsel %vm1294, %v2444, %v2142
      %v2463 = vsel %vm1294, %v2445, %v2144
      %v2464 = vsel %vm1294, %v2446, %v2146
      %v2465 = vsel %vm1294, %v2447, %v2148
      %v2466 = vsel %vm1294, %v2448, %v2150
      %v2467 = vsel %vm1294, %v2449, %v2152
      %v2468 = vsel %vm1294, %v2450, %v2154
      %v2469 = vsel %vm1294, %v2451, %v2156
      %v2470 = vsel %vm1294, %v2452, %v2158
      %v2471 = vsel %vm1294, %v2453, %v2160
      %v2472 = vsel %vm1294, %v2454, %v2162
      %v2473 = vsel %vm1294, %v2455, %v2164
      %v2474 = vsel %vm1294, %v2456, %v2166
      %v2475 = vsel %vm1313, %v2457, %v2188
      %v2476 = vsel %vm1313, %v2458, %v2190
      %v2477 = vsel %vm1313, %v2459, %v2192
      %v2478 = vsel %vm1313, %v2460, %v2194
      %v2479 = vsel %vm1313, %v2461, %v2196
      %v2480 = vsel %vm1313, %v2462, %v2198
      %v2481 = vsel %vm1313, %v2463, %v2200
      %v2482 = vsel %vm1313, %v2464, %v2202
      %v2483 = vsel %vm1313, %v2465, %v2204
      %v2484 = vsel %vm1313, %v2466, %v2206
      %v2485 = vsel %vm1313, %v2467, %v2208
      %v2486 = vsel %vm1313, %v2468, %v2210
      %v2487 = vsel %vm1313, %v2469, %v2212
      %v2488 = vsel %vm1313, %v2470, %v2214
      %v2489 = vsel %vm1313, %v2471, %v2216
      %v2490 = vsel %vm1313, %v2472, %v2218
      %v2491 = vsel %vm1313, %v2473, %v2220
      %v2492 = vsel %vm1313, %v2474, %v2222
      %v2493 = vsel %vm1332, %v2475, %v2260
      %v2494 = vsel %vm1332, %v2476, %v2262
      %v2495 = vsel %vm1332, %v2477, %v2264
      %v2496 = vsel %vm1332, %v2478, %v2266
      %v2497 = vsel %vm1332, %v2479, %v2268
      %v2498 = vsel %vm1332, %v2480, %v2270
      %v2499 = vsel %vm1332, %v2481, %v2272
      %v2500 = vsel %vm1332, %v2482, %v2274
      %v2501 = vsel %vm1332, %v2483, %v2276
      %v2502 = vsel %vm1332, %v2484, %v2278
      %v2503 = vsel %vm1332, %v2485, %v2280
      %v2504 = vsel %vm1332, %v2486, %v2282
      %v2505 = vsel %vm1332, %v2487, %v2284
      %v2506 = vsel %vm1332, %v2488, %v2286
      %v2507 = vsel %vm1332, %v2489, %v2288
      %v2508 = vsel %vm1332, %v2490, %v2290
      %v2509 = vsel %vm1332, %v2491, %v2292
      %v2510 = vsel %vm1332, %v2492, %v2294
      %v2511 = vsel %vm1351, %v2493, %v2332
      %v2512 = vsel %vm1351, %v2494, %v2334
      %v2513 = vsel %vm1351, %v2495, %v2336
      %v2514 = vsel %vm1351, %v2496, %v2338
      %v2515 = vsel %vm1351, %v2497, %v2340
      %v2516 = vsel %vm1351, %v2498, %v2342
      %v2517 = vsel %vm1351, %v2499, %v2344
      %v2518 = vsel %vm1351, %v2500, %v2346
      %v2519 = vsel %vm1351, %v2501, %v2348
      %v2520 = vsel %vm1351, %v2502, %v2350
      %v2521 = vsel %vm1351, %v2503, %v2352
      %v2522 = vsel %vm1351, %v2504, %v2354
      %v2523 = vsel %vm1351, %v2505, %v2356
      %v2524 = vsel %vm1351, %v2506, %v2358
      %v2525 = vsel %vm1351, %v2507, %v2360
      %v2526 = vsel %vm1351, %v2508, %v2362
      %v2527 = vsel %vm1351, %v2509, %v2364
      %v2528 = vsel %vm1351, %v2510, %v2366
      %v2529 = vpack.c.bf16 %v2512, %v2511
      %v2530 = vpack.c.bf16 %v2514, %v2513
      %v2531 = vpack.c.bf16 %v2516, %v2515
      %v2532 = vpack.c.bf16 %v2518, %v2517
      %v2533 = vpack.c.bf16 %v2520, %v2519
      %v2534 = vpack.c.bf16 %v2522, %v2521
      %v2535 = vpack.c.bf16 %v2524, %v2523
      %v2536 = vpack.c.bf16 %v2526, %v2525
      %v2537 = vpack.c.bf16 %v2528, %v2527
      %v2539 = vsel %vm1397, %v2529, 0
      %v2542 = vsel %vm1397, %v2530, 0
      %v2545 = vsel %vm1397, %v2531, 0
      %v2548 = vsel %vm1397, %v2532, 0
      %v2551 = vsel %vm1397, %v2533, 0
      %v2554 = vsel %vm1397, %v2534, 0
      %v2557 = vsel %vm1397, %v2535, 0
      %v2560 = vsel %vm1397, %v2536, 0
      %v2563 = vsel %vm1397, %v2537, 0
      %2565 = vmatpush.bf16.msra.mxu0 0
      %2566 = vmatpush.bf16.msra.mxu0 0
      %2567 = vmatpush.bf16.msra.mxu0 0
      %2568 = vmatpush.bf16.msra.mxu0 0
      %2569 = vmatpush.bf16.msra.mxu0 0
      %2570 = vmatpush.bf16.msra.mxu0 %v1427
      %2571 = vmatpush.bf16.msra.mxu0 %v1393
      %2572 = vmatpush.bf16.msra.mxu0 %v1392
      %2573 = vmatmul.bf16.gmra.mxu0 %v2539
      %v2574 = vpop.f32.mrf.mxu0
      %v2575 = vadd.f32 %v1380, %v2574
      %v2576 = vpop.f32.mrf.mxu0
      %v2577 = vadd.f32 %v1380, %v2576
      %2578 = vmatmul.bf16.gmra.mxu0 %v2542
      %v2579 = vpop.f32.mrf.mxu0
      %v2580 = vadd.f32 %v1380, %v2579
      %v2581 = vpop.f32.mrf.mxu0
      %v2582 = vadd.f32 %v1380, %v2581
      %2583 = vmatmul.bf16.gmra.mxu0 %v2545
      %v2584 = vpop.f32.mrf.mxu0
      %v2585 = vadd.f32 %v1380, %v2584
      %v2586 = vpop.f32.mrf.mxu0
      %v2587 = vadd.f32 %v1380, %v2586
      %2588 = vmatmul.bf16.gmra.mxu0 %v2548
      %v2589 = vpop.f32.mrf.mxu0
      %v2590 = vadd.f32 %v1380, %v2589
      %v2591 = vpop.f32.mrf.mxu0
      %v2592 = vadd.f32 %v1380, %v2591
      %2593 = vmatmul.bf16.gmra.mxu0 %v2551
      %v2594 = vpop.f32.mrf.mxu0
      %v2595 = vadd.f32 %v1380, %v2594
      %v2596 = vpop.f32.mrf.mxu0
      %v2597 = vadd.f32 %v1380, %v2596
      %2598 = vmatmul.bf16.gmra.mxu0 %v2554
      %v2599 = vpop.f32.mrf.mxu0
      %v2600 = vadd.f32 %v1380, %v2599
      %v2601 = vpop.f32.mrf.mxu0
      %v2602 = vadd.f32 %v1380, %v2601
      %2603 = vmatmul.bf16.gmra.mxu0 %v2557
      %v2604 = vpop.f32.mrf.mxu0
      %v2605 = vadd.f32 %v1380, %v2604
      %v2606 = vpop.f32.mrf.mxu0
      %v2607 = vadd.f32 %v1380, %v2606
      %2608 = vmatmul.bf16.gmra.mxu0 %v2560
      %v2609 = vpop.f32.mrf.mxu0
      %v2610 = vadd.f32 %v1380, %v2609
      %v2611 = vpop.f32.mrf.mxu0
      %v2612 = vadd.f32 %v1380, %v2611
      %2613 = vmatmul.bf16.gmra.mxu0 %v2563
      %v2614 = vpop.f32.mrf.mxu0
      %v2615 = vadd.f32 %v1380, %v2614
      %v2616 = vpop.f32.mrf.mxu0
      %v2617 = vadd.f32 %v1380, %v2616
      %2618 = vdwg.mxu0
      %v2619 = vmul.f32 %v2575, %v1486
      %v2620 = vmul.f32 %v2577, %v1491
      %v2621 = vmul.f32 %v2580, %v1496
      %v2622 = vmul.f32 %v2582, %v1501
      %v2623 = vmul.f32 %v2585, %v1506
      %v2624 = vmul.f32 %v2587, %v1511
      %v2625 = vmul.f32 %v2590, %v1516
      %v2626 = vmul.f32 %v2592, %v1521
      %v2627 = vmul.f32 %v2595, %v1526
      %v2628 = vmul.f32 %v2597, %v1531
      %v2629 = vmul.f32 %v2600, %v1536
      %v2630 = vmul.f32 %v2602, %v1541
      %v2631 = vmul.f32 %v2605, %v1546
      %v2632 = vmul.f32 %v2607, %v1551
      %v2633 = vmul.f32 %v2610, %v1556
      %v2634 = vmul.f32 %v2612, %v1561
      %v2635 = vmul.f32 %v2615, %v1566
      %v2636 = vmul.f32 %v2617, %v1571
      %v2637 = vsel %vm1219, %v2619, 0.0
      %v2638 = vsel %vm1219, %v2620, 0.0
      %v2639 = vadd.f32 %v2637, %v2638
      %v2640 = vsel %vm1219, %v2621, 0.0
      %v2641 = vadd.f32 %v2639, %v2640
      %v2642 = vsel %vm1219, %v2622, 0.0
      %v2643 = vadd.f32 %v2641, %v2642
      %v2644 = vsel %vm1219, %v2623, 0.0
      %v2645 = vadd.f32 %v2643, %v2644
      %v2646 = vsel %vm1219, %v2624, 0.0
      %v2647 = vadd.f32 %v2645, %v2646
      %v2648 = vsel %vm1219, %v2625, 0.0
      %v2649 = vadd.f32 %v2647, %v2648
      %v2650 = vsel %vm1219, %v2626, 0.0
      %v2651 = vadd.f32 %v2649, %v2650
      %v2652 = vsel %vm1219, %v2627, 0.0
      %v2653 = vadd.f32 %v2651, %v2652
      %v2654 = vsel %vm1219, %v2628, 0.0
      %v2655 = vadd.f32 %v2653, %v2654
      %v2656 = vsel %vm1219, %v2629, 0.0
      %v2657 = vadd.f32 %v2655, %v2656
      %v2658 = vsel %vm1219, %v2630, 0.0
      %v2659 = vadd.f32 %v2657, %v2658
      %v2660 = vsel %vm1219, %v2631, 0.0
      %v2661 = vadd.f32 %v2659, %v2660
      %v2662 = vsel %vm1219, %v2632, 0.0
      %v2663 = vadd.f32 %v2661, %v2662
      %v2664 = vsel %vm1219, %v2633, 0.0
      %v2665 = vadd.f32 %v2663, %v2664
      %v2666 = vsel %vm1219, %v2634, 0.0
      %v2667 = vadd.f32 %v2665, %v2666
      %v2668 = vsel %vm1219, %v2635, 0.0
      %v2669 = vadd.f32 %v2667, %v2668
      %v2670 = vsel %vm1219, %v2636, 0.0
      %v2671 = vadd.f32 %v2669, %v2670
      %v2672 = vrot.slane %v2671, 4
      %v2673 = vadd.f32 %v2671, %v2672
      %v2674 = vrot.slane %v2673, 2
      %v2675 = vadd.f32 %v2673, %v2674
      %v2676 = vrot.slane %v2675, 1
      %v2677 = vadd.f32 %v2675, %v2676
      %v2678 = vadd.f32 %v1632, %v2677
      %v2679 = vmul.f32 %v2619, %v2619
      %v2680 = vmul.f32 %v2620, %v2620
      %v2681 = vmul.f32 %v2621, %v2621
      %v2682 = vmul.f32 %v2622, %v2622
      %v2683 = vmul.f32 %v2623, %v2623
      %v2684 = vmul.f32 %v2624, %v2624
      %v2685 = vmul.f32 %v2625, %v2625
      %v2686 = vmul.f32 %v2626, %v2626
      %v2687 = vmul.f32 %v2627, %v2627
      %v2688 = vmul.f32 %v2628, %v2628
      %v2689 = vmul.f32 %v2629, %v2629
      %v2690 = vmul.f32 %v2630, %v2630
      %v2691 = vmul.f32 %v2631, %v2631
      %v2692 = vmul.f32 %v2632, %v2632
      %v2693 = vmul.f32 %v2633, %v2633
      %v2694 = vmul.f32 %v2634, %v2634
      %v2695 = vmul.f32 %v2635, %v2635
      %v2696 = vmul.f32 %v2636, %v2636
      %v2697 = vsel %vm1219, %v2679, 0.0
      %v2698 = vsel %vm1219, %v2680, 0.0
      %v2699 = vadd.f32 %v2697, %v2698
      %v2700 = vsel %vm1219, %v2681, 0.0
      %v2701 = vadd.f32 %v2699, %v2700
      %v2702 = vsel %vm1219, %v2682, 0.0
      %v2703 = vadd.f32 %v2701, %v2702
      %v2704 = vsel %vm1219, %v2683, 0.0
      %v2705 = vadd.f32 %v2703, %v2704
      %v2706 = vsel %vm1219, %v2684, 0.0
      %v2707 = vadd.f32 %v2705, %v2706
      %v2708 = vsel %vm1219, %v2685, 0.0
      %v2709 = vadd.f32 %v2707, %v2708
      %v2710 = vsel %vm1219, %v2686, 0.0
      %v2711 = vadd.f32 %v2709, %v2710
      %v2712 = vsel %vm1219, %v2687, 0.0
      %v2713 = vadd.f32 %v2711, %v2712
      %v2714 = vsel %vm1219, %v2688, 0.0
      %v2715 = vadd.f32 %v2713, %v2714
      %v2716 = vsel %vm1219, %v2689, 0.0
      %v2717 = vadd.f32 %v2715, %v2716
      %v2718 = vsel %vm1219, %v2690, 0.0
      %v2719 = vadd.f32 %v2717, %v2718
      %v2720 = vsel %vm1219, %v2691, 0.0
      %v2721 = vadd.f32 %v2719, %v2720
      %v2722 = vsel %vm1219, %v2692, 0.0
      %v2723 = vadd.f32 %v2721, %v2722
      %v2724 = vsel %vm1219, %v2693, 0.0
      %v2725 = vadd.f32 %v2723, %v2724
      %v2726 = vsel %vm1219, %v2694, 0.0
      %v2727 = vadd.f32 %v2725, %v2726
      %v2728 = vsel %vm1219, %v2695, 0.0
      %v2729 = vadd.f32 %v2727, %v2728
      %v2730 = vsel %vm1219, %v2696, 0.0
      %v2731 = vadd.f32 %v2729, %v2730
      %v2732 = vrot.slane %v2731, 4
      %v2733 = vadd.f32 %v2731, %v2732
      %v2734 = vrot.slane %v2733, 2
      %v2735 = vadd.f32 %v2733, %v2734
      %v2736 = vrot.slane %v2735, 1
      %v2737 = vadd.f32 %v2735, %v2736
      %v2738 = vadd.f32 %v1692, %v2737
      %2739 = vst.msk [vmem:[#allocation2 + $0xa8] sm:$0xff] %vm446, %v2619
      %2740 = vst.msk [vmem:[#allocation2 + $0xb0] sm:$0xff] %vm446, %v2620
      %2741 = vst.msk [vmem:[#allocation2 + $0xb8] sm:$0xff] %vm446, %v2621
      %2742 = vst.msk [vmem:[#allocation2 + $0xc0] sm:$0xff] %vm446, %v2622
      %2743 = vst.msk [vmem:[#allocation2 + $0xc8] sm:$0xff] %vm446, %v2623
      %2744 = vst.msk [vmem:[#allocation2 + $0xd0] sm:$0xff] %vm446, %v2624
      %2745 = vst.msk [vmem:[#allocation2 + $0xd8] sm:$0xff] %vm446, %v2625
      %2746 = vst.msk [vmem:[#allocation2 + $0xe0] sm:$0xff] %vm446, %v2626
      %2747 = vst.msk [vmem:[#allocation2 + $0xe8] sm:$0xff] %vm446, %v2627
      %2748 = vst.msk [vmem:[#allocation2 + $0xf0] sm:$0xff] %vm446, %v2628
      %2749 = vst.msk [vmem:[#allocation2 + $0xf8] sm:$0xff] %vm446, %v2629
      %2750 = vst.msk [vmem:[#allocation2 + $0x100] sm:$0xff] %vm446, %v2630
      %2751 = vst.msk [vmem:[#allocation2 + $0x108] sm:$0xff] %vm446, %v2631
      %2752 = vst.msk [vmem:[#allocation2 + $0x110] sm:$0xff] %vm446, %v2632
      %2753 = vst.msk [vmem:[#allocation2 + $0x118] sm:$0xff] %vm446, %v2633
      %2754 = vst.msk [vmem:[#allocation2 + $0x120] sm:$0xff] %vm446, %v2634
      %2755 = vst.msk [vmem:[#allocation2 + $0x128] sm:$0xff] %vm446, %v2635
      %2756 = vst.msk [vmem:[#allocation2 + $0x130] sm:$0xff] %vm446, %v2636
      %v2757 = vmul.f32 %v2678, 0.00390625
      %v2758 = vmul.f32 %v2738, 0.00390625
      %v2759 = vmul.f32 %v2757, %v2757
      %v2760 = vsub.f32 %v2758, %v2759
      %v2761 = vld [vmem:[%s3] sm:$0x1]
      %v2762 = vadd.f32 %v2760, 1e-05
      %v2763 = vrsqrt.pop %v2762
      %v2764 = vmul.f32 %v2763, %v2762
      %v2765 = vmul.f32 %v2764, %v2763
      %v2766 = vmul.f32 0.5, %v2765
      %v2767 = vsub.f32 1.5, %v2766
      %v2768 = vmul.f32 %v2763, %v2767
      %vm2769 = vweird.f32 %v2762
      %vm2770 = vweird.f32 %v2763
      %vm2771 = vmor %vm2769, %vm2770
      %v2772 = vsel %vm2771, %v2763, %v2768
      %v2773 = vmul.f32 %v2761, %v2772
      %v2774 = vld [vmem:[%s4] sm:$0x1]
      %v2775 = vmul.f32 %v2757, %v2773
      %v2776 = vsub.f32 %v2774, %v2775
      %v2777 = vsel %vm1219, %v2773, 1.0
      %v2778 = vsel %vm1219, %v2776, 0.0
      %v2779 = vld [vmem:[#allocation2 + $0x18] sm:$0xff]
      %v2780 = vld [vmem:[#allocation2 + $0x20] sm:$0xff]
      %v2781 = vld [vmem:[#allocation2 + $0x28] sm:$0xff]
      %v2782 = vld [vmem:[#allocation2 + $0x30] sm:$0xff]
      %v2783 = vld [vmem:[#allocation2 + $0x38] sm:$0xff]
      %v2784 = vld [vmem:[#allocation2 + $0x40] sm:$0xff]
      %v2785 = vld [vmem:[#allocation2 + $0x48] sm:$0xff]
      %v2786 = vld [vmem:[#allocation2 + $0x50] sm:$0xff]
      %v2787 = vld [vmem:[#allocation2 + $0x58] sm:$0xff]
      %v2788 = vld [vmem:[#allocation2 + $0x60] sm:$0xff]
      %v2789 = vld [vmem:[#allocation2 + $0x68] sm:$0xff]
      %v2790 = vld [vmem:[#allocation2 + $0x70] sm:$0xff]
      %v2791 = vld [vmem:[#allocation2 + $0x78] sm:$0xff]
      %v2792 = vld [vmem:[#allocation2 + $0x80] sm:$0xff]
      %v2793 = vld [vmem:[#allocation2 + $0x88] sm:$0xff]
      %v2794 = vld [vmem:[#allocation2 + $0x90] sm:$0xff]
      %v2795 = vld [vmem:[#allocation2 + $0x98] sm:$0xff]
      %v2796 = vld [vmem:[#allocation2 + $0xa0] sm:$0xff]
      %v2797 = vperm.slane %v2777, 0
      %v2798 = vmul.f32 %v2797, %v2779
      %v2799 = vmul.f32 %v2797, %v2780
      %v2800 = vmul.f32 %v2797, %v2781
      %v2801 = vmul.f32 %v2797, %v2782
      %v2802 = vmul.f32 %v2797, %v2783
      %v2803 = vmul.f32 %v2797, %v2784
      %v2804 = vmul.f32 %v2797, %v2785
      %v2805 = vmul.f32 %v2797, %v2786
      %v2806 = vmul.f32 %v2797, %v2787
      %v2807 = vmul.f32 %v2797, %v2788
      %v2808 = vmul.f32 %v2797, %v2789
      %v2809 = vmul.f32 %v2797, %v2790
      %v2810 = vmul.f32 %v2797, %v2791
      %v2811 = vmul.f32 %v2797, %v2792
      %v2812 = vmul.f32 %v2797, %v2793
      %v2813 = vmul.f32 %v2797, %v2794
      %v2814 = vmul.f32 %v2797, %v2795
      %v2815 = vmul.f32 %v2797, %v2796
      %v2816 = vperm.slane %v2778, 0
      %v2817 = vadd.f32 %v2798, %v2816
      %v2818 = vadd.f32 %v2799, %v2816
      %v2819 = vadd.f32 %v2800, %v2816
      %v2820 = vadd.f32 %v2801, %v2816
      %v2821 = vadd.f32 %v2802, %v2816
      %v2822 = vadd.f32 %v2803, %v2816
      %v2823 = vadd.f32 %v2804, %v2816
      %v2824 = vadd.f32 %v2805, %v2816
      %v2825 = vadd.f32 %v2806, %v2816
      %v2826 = vadd.f32 %v2807, %v2816
      %v2827 = vadd.f32 %v2808, %v2816
      %v2828 = vadd.f32 %v2809, %v2816
      %v2829 = vadd.f32 %v2810, %v2816
      %v2830 = vadd.f32 %v2811, %v2816
      %v2831 = vadd.f32 %v2812, %v2816
      %v2832 = vadd.f32 %v2813, %v2816
      %v2833 = vadd.f32 %v2814, %v2816
      %v2834 = vadd.f32 %v2815, %v2816
      %vm2835 = vcmp.ge.f32.partialorder %v2817, 0.0
      %vm2836 = vcmp.ge.f32.partialorder %v2818, 0.0
      %vm2837 = vcmp.ge.f32.partialorder %v2819, 0.0
      %vm2838 = vcmp.ge.f32.partialorder %v2820, 0.0
      %vm2839 = vcmp.ge.f32.partialorder %v2821, 0.0
      %vm2840 = vcmp.ge.f32.partialorder %v2822, 0.0
      %vm2841 = vcmp.ge.f32.partialorder %v2823, 0.0
      %vm2842 = vcmp.ge.f32.partialorder %v2824, 0.0
      %vm2843 = vcmp.ge.f32.partialorder %v2825, 0.0
      %vm2844 = vcmp.ge.f32.partialorder %v2826, 0.0
      %vm2845 = vcmp.ge.f32.partialorder %v2827, 0.0
      %vm2846 = vcmp.ge.f32.partialorder %v2828, 0.0
      %vm2847 = vcmp.ge.f32.partialorder %v2829, 0.0
      %vm2848 = vcmp.ge.f32.partialorder %v2830, 0.0
      %vm2849 = vcmp.ge.f32.partialorder %v2831, 0.0
      %vm2850 = vcmp.ge.f32.partialorder %v2832, 0.0
      %vm2851 = vcmp.ge.f32.partialorder %v2833, 0.0
      %vm2852 = vcmp.ge.f32.partialorder %v2834, 0.0
      %v2853 = vmul.f32 %v2817, 0.2
      %v2854 = vmul.f32 %v2818, 0.2
      %v2855 = vmul.f32 %v2819, 0.2
      %v2856 = vmul.f32 %v2820, 0.2
      %v2857 = vmul.f32 %v2821, 0.2
      %v2858 = vmul.f32 %v2822, 0.2
      %v2859 = vmul.f32 %v2823, 0.2
      %v2860 = vmul.f32 %v2824, 0.2
      %v2861 = vmul.f32 %v2825, 0.2
      %v2862 = vmul.f32 %v2826, 0.2
      %v2863 = vmul.f32 %v2827, 0.2
      %v2864 = vmul.f32 %v2828, 0.2
      %v2865 = vmul.f32 %v2829, 0.2
      %v2866 = vmul.f32 %v2830, 0.2
      %v2867 = vmul.f32 %v2831, 0.2
      %v2868 = vmul.f32 %v2832, 0.2
      %v2869 = vmul.f32 %v2833, 0.2
      %v2870 = vmul.f32 %v2834, 0.2
      %v2871 = vsel %vm2835, %v2817, %v2853
      %v2872 = vsel %vm2836, %v2818, %v2854
      %v2873 = vsel %vm2837, %v2819, %v2855
      %v2874 = vsel %vm2838, %v2820, %v2856
      %v2875 = vsel %vm2839, %v2821, %v2857
      %v2876 = vsel %vm2840, %v2822, %v2858
      %v2877 = vsel %vm2841, %v2823, %v2859
      %v2878 = vsel %vm2842, %v2824, %v2860
      %v2879 = vsel %vm2843, %v2825, %v2861
      %v2880 = vsel %vm2844, %v2826, %v2862
      %v2881 = vsel %vm2845, %v2827, %v2863
      %v2882 = vsel %vm2846, %v2828, %v2864
      %v2883 = vsel %vm2847, %v2829, %v2865
      %v2884 = vsel %vm2848, %v2830, %v2866
      %v2885 = vsel %vm2849, %v2831, %v2867
      %v2886 = vsel %vm2850, %v2832, %v2868
      %v2887 = vsel %vm2851, %v2833, %v2869
      %v2888 = vsel %vm2852, %v2834, %v2870
      %v2889 = vmul.f32 %v2871, %v1486
      %v2890 = vmul.f32 %v2872, %v1491
      %v2891 = vmul.f32 %v2873, %v1496
      %v2892 = vmul.f32 %v2874, %v1501
      %v2893 = vmul.f32 %v2875, %v1506
      %v2894 = vmul.f32 %v2876, %v1511
      %v2895 = vmul.f32 %v2877, %v1516
      %v2896 = vmul.f32 %v2878, %v1521
      %v2897 = vmul.f32 %v2879, %v1526
      %v2898 = vmul.f32 %v2880, %v1531
      %v2899 = vmul.f32 %v2881, %v1536
      %v2900 = vmul.f32 %v2882, %v1541
      %v2901 = vmul.f32 %v2883, %v1546
      %v2902 = vmul.f32 %v2884, %v1551
      %v2903 = vmul.f32 %v2885, %v1556
      %v2904 = vmul.f32 %v2886, %v1561
      %v2905 = vmul.f32 %v2887, %v1566
      %v2906 = vmul.f32 %v2888, %v1571
      %2907 = vst.msk [vmem:[#allocation2 + $0x18] sm:$0xff] %vm446, %v2889
      %2908 = vst.msk [vmem:[#allocation2 + $0x20] sm:$0xff] %vm446, %v2890
      %2909 = vst.msk [vmem:[#allocation2 + $0x28] sm:$0xff] %vm446, %v2891
      %2910 = vst.msk [vmem:[#allocation2 + $0x30] sm:$0xff] %vm446, %v2892
      %2911 = vst.msk [vmem:[#allocation2 + $0x38] sm:$0xff] %vm446, %v2893
      %2912 = vst.msk [vmem:[#allocation2 + $0x40] sm:$0xff] %vm446, %v2894
      %2913 = vst.msk [vmem:[#allocation2 + $0x48] sm:$0xff] %vm446, %v2895
      %2914 = vst.msk [vmem:[#allocation2 + $0x50] sm:$0xff] %vm446, %v2896
      %2915 = vst.msk [vmem:[#allocation2 + $0x58] sm:$0xff] %vm446, %v2897
      %2916 = vst.msk [vmem:[#allocation2 + $0x60] sm:$0xff] %vm446, %v2898
      %2917 = vst.msk [vmem:[#allocation2 + $0x68] sm:$0xff] %vm446, %v2899
      %2918 = vst.msk [vmem:[#allocation2 + $0x70] sm:$0xff] %vm446, %v2900
      %2919 = vst.msk [vmem:[#allocation2 + $0x78] sm:$0xff] %vm446, %v2901
      %2920 = vst.msk [vmem:[#allocation2 + $0x80] sm:$0xff] %vm446, %v2902
      %2921 = vst.msk [vmem:[#allocation2 + $0x88] sm:$0xff] %vm446, %v2903
      %2922 = vst.msk [vmem:[#allocation2 + $0x90] sm:$0xff] %vm446, %v2904
      %2923 = vst.msk [vmem:[#allocation2 + $0x98] sm:$0xff] %vm446, %v2905
      %2924 = vst.msk [vmem:[#allocation2 + $0xa0] sm:$0xff] %vm446, %v2906
      %v2925 = vld [vmem:[#allocation2 + $0xa8] sm:$0xff]
      %v2926 = vld [vmem:[#allocation2 + $0xb0] sm:$0xff]
      %v2927 = vld [vmem:[#allocation2 + $0xb8] sm:$0xff]
      %v2928 = vld [vmem:[#allocation2 + $0xc0] sm:$0xff]
      %v2929 = vld [vmem:[#allocation2 + $0xc8] sm:$0xff]
      %v2930 = vld [vmem:[#allocation2 + $0xd0] sm:$0xff]
      %v2931 = vld [vmem:[#allocation2 + $0xd8] sm:$0xff]
      %v2932 = vld [vmem:[#allocation2 + $0xe0] sm:$0xff]
      %v2933 = vld [vmem:[#allocation2 + $0xe8] sm:$0xff]
      %v2934 = vld [vmem:[#allocation2 + $0xf0] sm:$0xff]
      %v2935 = vld [vmem:[#allocation2 + $0xf8] sm:$0xff]
      %v2936 = vld [vmem:[#allocation2 + $0x100] sm:$0xff]
      %v2937 = vld [vmem:[#allocation2 + $0x108] sm:$0xff]
      %v2938 = vld [vmem:[#allocation2 + $0x110] sm:$0xff]
      %v2939 = vld [vmem:[#allocation2 + $0x118] sm:$0xff]
      %v2940 = vld [vmem:[#allocation2 + $0x120] sm:$0xff]
      %v2941 = vld [vmem:[#allocation2 + $0x128] sm:$0xff]
      %v2942 = vld [vmem:[#allocation2 + $0x130] sm:$0xff]
      %v2943 = vmul.f32 %v2797, %v2925
      %v2944 = vmul.f32 %v2797, %v2926
      %v2945 = vmul.f32 %v2797, %v2927
      %v2946 = vmul.f32 %v2797, %v2928
      %v2947 = vmul.f32 %v2797, %v2929
      %v2948 = vmul.f32 %v2797, %v2930
      %v2949 = vmul.f32 %v2797, %v2931
      %v2950 = vmul.f32 %v2797, %v2932
      %v2951 = vmul.f32 %v2797, %v2933
      %v2952 = vmul.f32 %v2797, %v2934
      %v2953 = vmul.f32 %v2797, %v2935
      %v2954 = vmul.f32 %v2797, %v2936
      %v2955 = vmul.f32 %v2797, %v2937
      %v2956 = vmul.f32 %v2797, %v2938
      %v2957 = vmul.f32 %v2797, %v2939
      %v2958 = vmul.f32 %v2797, %v2940
      %v2959 = vmul.f32 %v2797, %v2941
      %v2960 = vmul.f32 %v2797, %v2942
      %v2961 = vadd.f32 %v2943, %v2816
      %v2962 = vadd.f32 %v2944, %v2816
      %v2963 = vadd.f32 %v2945, %v2816
      %v2964 = vadd.f32 %v2946, %v2816
      %v2965 = vadd.f32 %v2947, %v2816
      %v2966 = vadd.f32 %v2948, %v2816
      %v2967 = vadd.f32 %v2949, %v2816
      %v2968 = vadd.f32 %v2950, %v2816
      %v2969 = vadd.f32 %v2951, %v2816
      %v2970 = vadd.f32 %v2952, %v2816
      %v2971 = vadd.f32 %v2953, %v2816
      %v2972 = vadd.f32 %v2954, %v2816
      %v2973 = vadd.f32 %v2955, %v2816
      %v2974 = vadd.f32 %v2956, %v2816
      %v2975 = vadd.f32 %v2957, %v2816
      %v2976 = vadd.f32 %v2958, %v2816
      %v2977 = vadd.f32 %v2959, %v2816
      %v2978 = vadd.f32 %v2960, %v2816
      %vm2979 = vcmp.ge.f32.partialorder %v2961, 0.0
      %vm2980 = vcmp.ge.f32.partialorder %v2962, 0.0
      %vm2981 = vcmp.ge.f32.partialorder %v2963, 0.0
      %vm2982 = vcmp.ge.f32.partialorder %v2964, 0.0
      %vm2983 = vcmp.ge.f32.partialorder %v2965, 0.0
      %vm2984 = vcmp.ge.f32.partialorder %v2966, 0.0
      %vm2985 = vcmp.ge.f32.partialorder %v2967, 0.0
      %vm2986 = vcmp.ge.f32.partialorder %v2968, 0.0
      %vm2987 = vcmp.ge.f32.partialorder %v2969, 0.0
      %vm2988 = vcmp.ge.f32.partialorder %v2970, 0.0
      %vm2989 = vcmp.ge.f32.partialorder %v2971, 0.0
      %vm2990 = vcmp.ge.f32.partialorder %v2972, 0.0
      %vm2991 = vcmp.ge.f32.partialorder %v2973, 0.0
      %vm2992 = vcmp.ge.f32.partialorder %v2974, 0.0
      %vm2993 = vcmp.ge.f32.partialorder %v2975, 0.0
      %vm2994 = vcmp.ge.f32.partialorder %v2976, 0.0
      %vm2995 = vcmp.ge.f32.partialorder %v2977, 0.0
      %vm2996 = vcmp.ge.f32.partialorder %v2978, 0.0
      %v2997 = vmul.f32 %v2961, 0.2
      %v2998 = vmul.f32 %v2962, 0.2
      %v2999 = vmul.f32 %v2963, 0.2
      %v3000 = vmul.f32 %v2964, 0.2
      %v3001 = vmul.f32 %v2965, 0.2
      %v3002 = vmul.f32 %v2966, 0.2
      %v3003 = vmul.f32 %v2967, 0.2
      %v3004 = vmul.f32 %v2968, 0.2
      %v3005 = vmul.f32 %v2969, 0.2
      %v3006 = vmul.f32 %v2970, 0.2
      %v3007 = vmul.f32 %v2971, 0.2
      %v3008 = vmul.f32 %v2972, 0.2
      %v3009 = vmul.f32 %v2973, 0.2
      %v3010 = vmul.f32 %v2974, 0.2
      %v3011 = vmul.f32 %v2975, 0.2
      %v3012 = vmul.f32 %v2976, 0.2
      %v3013 = vmul.f32 %v2977, 0.2
      %v3014 = vmul.f32 %v2978, 0.2
      %v3015 = vsel %vm2979, %v2961, %v2997
      %v3016 = vsel %vm2980, %v2962, %v2998
      %v3017 = vsel %vm2981, %v2963, %v2999
      %v3018 = vsel %vm2982, %v2964, %v3000
      %v3019 = vsel %vm2983, %v2965, %v3001
      %v3020 = vsel %vm2984, %v2966, %v3002
      %v3021 = vsel %vm2985, %v2967, %v3003
      %v3022 = vsel %vm2986, %v2968, %v3004
      %v3023 = vsel %vm2987, %v2969, %v3005
      %v3024 = vsel %vm2988, %v2970, %v3006
      %v3025 = vsel %vm2989, %v2971, %v3007
      %v3026 = vsel %vm2990, %v2972, %v3008
      %v3027 = vsel %vm2991, %v2973, %v3009
      %v3028 = vsel %vm2992, %v2974, %v3010
      %v3029 = vsel %vm2993, %v2975, %v3011
      %v3030 = vsel %vm2994, %v2976, %v3012
      %v3031 = vsel %vm2995, %v2977, %v3013
      %v3032 = vsel %vm2996, %v2978, %v3014
      %v3033 = vmul.f32 %v3015, %v1486
      %v3034 = vmul.f32 %v3016, %v1491
      %v3035 = vmul.f32 %v3017, %v1496
      %v3036 = vmul.f32 %v3018, %v1501
      %v3037 = vmul.f32 %v3019, %v1506
      %v3038 = vmul.f32 %v3020, %v1511
      %v3039 = vmul.f32 %v3021, %v1516
      %v3040 = vmul.f32 %v3022, %v1521
      %v3041 = vmul.f32 %v3023, %v1526
      %v3042 = vmul.f32 %v3024, %v1531
      %v3043 = vmul.f32 %v3025, %v1536
      %v3044 = vmul.f32 %v3026, %v1541
      %v3045 = vmul.f32 %v3027, %v1546
      %v3046 = vmul.f32 %v3028, %v1551
      %v3047 = vmul.f32 %v3029, %v1556
      %v3048 = vmul.f32 %v3030, %v1561
      %v3049 = vmul.f32 %v3031, %v1566
      %v3050 = vmul.f32 %v3032, %v1571
      %3051 = vst.msk [vmem:[#allocation2 + $0xa8] sm:$0xff] %vm446, %v3033
      %3052 = vst.msk [vmem:[#allocation2 + $0xb0] sm:$0xff] %vm446, %v3034
      %3053 = vst.msk [vmem:[#allocation2 + $0xb8] sm:$0xff] %vm446, %v3035
      %3054 = vst.msk [vmem:[#allocation2 + $0xc0] sm:$0xff] %vm446, %v3036
      %3055 = vst.msk [vmem:[#allocation2 + $0xc8] sm:$0xff] %vm446, %v3037
      %3056 = vst.msk [vmem:[#allocation2 + $0xd0] sm:$0xff] %vm446, %v3038
      %3057 = vst.msk [vmem:[#allocation2 + $0xd8] sm:$0xff] %vm446, %v3039
      %3058 = vst.msk [vmem:[#allocation2 + $0xe0] sm:$0xff] %vm446, %v3040
      %3059 = vst.msk [vmem:[#allocation2 + $0xe8] sm:$0xff] %vm446, %v3041
      %3060 = vst.msk [vmem:[#allocation2 + $0xf0] sm:$0xff] %vm446, %v3042
      %3061 = vst.msk [vmem:[#allocation2 + $0xf8] sm:$0xff] %vm446, %v3043
      %3062 = vst.msk [vmem:[#allocation2 + $0x100] sm:$0xff] %vm446, %v3044
      %3063 = vst.msk [vmem:[#allocation2 + $0x108] sm:$0xff] %vm446, %v3045
      %3064 = vst.msk [vmem:[#allocation2 + $0x110] sm:$0xff] %vm446, %v3046
      %3065 = vst.msk [vmem:[#allocation2 + $0x118] sm:$0xff] %vm446, %v3047
      %3066 = vst.msk [vmem:[#allocation2 + $0x120] sm:$0xff] %vm446, %v3048
      %3067 = vst.msk [vmem:[#allocation2 + $0x128] sm:$0xff] %vm446, %v3049
      %3068 = vst.msk [vmem:[#allocation2 + $0x130] sm:$0xff] %vm446, %v3050
      %v3069 = vld [vmem:[%s5] sm:$0xf]
      %v3070 = vld [vmem:[%s5 + $0x4] sm:$0xf]
      %v3071 = vld [vmem:[%s5 + $0x8] sm:$0xf]
      %v3072 = vld [vmem:[%s5 + $0xc] sm:$0xf]
      %v3073 = vld [vmem:[%s5 + $0x10] sm:$0xf]
      %v3074 = vld [vmem:[%s5 + $0x14] sm:$0xf]
      %v3075 = vld [vmem:[%s5 + $0x18] sm:$0xf]
      %v3076 = vld [vmem:[%s5 + $0x1c] sm:$0xf]
      %v3077 = vld [vmem:[%s5 + $0x20] sm:$0xf]
      %v3078 = vld [vmem:[%s6] sm:$0x1]
      %v3079 = vld [vmem:[%s7] sm:$0x3]
      %v3080 = vld [vmem:[%s8] sm:$0x1]
      %v3081 = vld [vmem:[#allocation2 + $0x5] sm:$0xff]
      %v3082 = vld [vmem:[#allocation2 + $0xd] sm:$0xff]
      %v3083 = vld [vmem:[#allocation2 + $0x15] sm:$0xff]
      %v3084 = vld [vmem:[#allocation2 + $0x1d] sm:$0xff]
      %v3085 = vld [vmem:[#allocation2 + $0x25] sm:$0xff]
      %v3086 = vld [vmem:[#allocation2 + $0x2d] sm:$0xff]
      %v3087 = vld [vmem:[#allocation2 + $0x35] sm:$0xff]
      %v3088 = vld [vmem:[#allocation2 + $0x3d] sm:$0xff]
      %v3089 = vld [vmem:[#allocation2 + $0x45] sm:$0xff]
      %v3090 = vld [vmem:[#allocation2 + $0x4d] sm:$0xff]
      %v3091 = vld [vmem:[#allocation2 + $0x55] sm:$0xff]
      %v3092 = vld [vmem:[#allocation2 + $0x5d] sm:$0xff]
      %v3093 = vld [vmem:[#allocation2 + $0x65] sm:$0xff]
      %v3094 = vld [vmem:[#allocation2 + $0x6d] sm:$0xff]
      %v3095 = vld [vmem:[#allocation2 + $0x75] sm:$0xff]
      %v3096 = vld [vmem:[#allocation2 + $0x7d] sm:$0xff]
      %v3097 = vld [vmem:[#allocation2 + $0x85] sm:$0xff]
      %v3098 = vld [vmem:[#allocation2 + $0x8d] sm:$0xff]
      %v3099 = vld [vmem:[#allocation2 + $0x6] sm:$0xff]
      %v3100 = vld [vmem:[#allocation2 + $0xe] sm:$0xff]
      %v3101 = vld [vmem:[#allocation2 + $0x16] sm:$0xff]
      %v3102 = vld [vmem:[#allocation2 + $0x1e] sm:$0xff]
      %v3103 = vld [vmem:[#allocation2 + $0x26] sm:$0xff]
      %v3104 = vld [vmem:[#allocation2 + $0x2e] sm:$0xff]
      %v3105 = vld [vmem:[#allocation2 + $0x36] sm:$0xff]
      %v3106 = vld [vmem:[#allocation2 + $0x3e] sm:$0xff]
      %v3107 = vld [vmem:[#allocation2 + $0x46] sm:$0xff]
      %v3108 = vld [vmem:[#allocation2 + $0x4e] sm:$0xff]
      %v3109 = vld [vmem:[#allocation2 + $0x56] sm:$0xff]
      %v3110 = vld [vmem:[#allocation2 + $0x5e] sm:$0xff]
      %v3111 = vld [vmem:[#allocation2 + $0x66] sm:$0xff]
      %v3112 = vld [vmem:[#allocation2 + $0x6e] sm:$0xff]
      %v3113 = vld [vmem:[#allocation2 + $0x76] sm:$0xff]
      %v3114 = vld [vmem:[#allocation2 + $0x7e] sm:$0xff]
      %v3115 = vld [vmem:[#allocation2 + $0x86] sm:$0xff]
      %v3116 = vld [vmem:[#allocation2 + $0x8e] sm:$0xff]
      %v3117 = vld [vmem:[#allocation2 + $0x7] sm:$0xff]
      %v3118 = vld [vmem:[#allocation2 + $0xf] sm:$0xff]
      %v3119 = vld [vmem:[#allocation2 + $0x17] sm:$0xff]
      %v3120 = vld [vmem:[#allocation2 + $0x1f] sm:$0xff]
      %v3121 = vld [vmem:[#allocation2 + $0x27] sm:$0xff]
      %v3122 = vld [vmem:[#allocation2 + $0x2f] sm:$0xff]
      %v3123 = vld [vmem:[#allocation2 + $0x37] sm:$0xff]
      %v3124 = vld [vmem:[#allocation2 + $0x3f] sm:$0xff]
      %v3125 = vld [vmem:[#allocation2 + $0x47] sm:$0xff]
      %v3126 = vld [vmem:[#allocation2 + $0x4f] sm:$0xff]
      %v3127 = vld [vmem:[#allocation2 + $0x57] sm:$0xff]
      %v3128 = vld [vmem:[#allocation2 + $0x5f] sm:$0xff]
      %v3129 = vld [vmem:[#allocation2 + $0x67] sm:$0xff]
      %v3130 = vld [vmem:[#allocation2 + $0x6f] sm:$0xff]
      %v3131 = vld [vmem:[#allocation2 + $0x77] sm:$0xff]
      %v3132 = vld [vmem:[#allocation2 + $0x7f] sm:$0xff]
      %v3133 = vld [vmem:[#allocation2 + $0x87] sm:$0xff]
      %v3134 = vld [vmem:[#allocation2 + $0x8f] sm:$0xff]
      %v3135 = vld [vmem:[#allocation2 + $0x97] sm:$0xff]
      %v3136 = vld [vmem:[#allocation2 + $0x9f] sm:$0xff]
      %v3137 = vld [vmem:[#allocation2 + $0x18] sm:$0xff]
      %v3138 = vld [vmem:[#allocation2 + $0x20] sm:$0xff]
      %v3139 = vld [vmem:[#allocation2 + $0x28] sm:$0xff]
      %v3140 = vld [vmem:[#allocation2 + $0x30] sm:$0xff]
      %v3141 = vld [vmem:[#allocation2 + $0x38] sm:$0xff]
      %v3142 = vld [vmem:[#allocation2 + $0x40] sm:$0xff]
      %v3143 = vld [vmem:[#allocation2 + $0x48] sm:$0xff]
      %v3144 = vld [vmem:[#allocation2 + $0x50] sm:$0xff]
      %v3145 = vld [vmem:[#allocation2 + $0x58] sm:$0xff]
      %v3146 = vld [vmem:[#allocation2 + $0x60] sm:$0xff]
      %v3147 = vld [vmem:[#allocation2 + $0x68] sm:$0xff]
      %v3148 = vld [vmem:[#allocation2 + $0x70] sm:$0xff]
      %v3149 = vld [vmem:[#allocation2 + $0x78] sm:$0xff]
      %v3150 = vld [vmem:[#allocation2 + $0x80] sm:$0xff]
      %v3151 = vld [vmem:[#allocation2 + $0x88] sm:$0xff]
      %v3152 = vld [vmem:[#allocation2 + $0x90] sm:$0xff]
      %v3153 = vld [vmem:[#allocation2 + $0x98] sm:$0xff]
      %v3154 = vld [vmem:[#allocation2 + $0xa0] sm:$0xff]
      %v3155 = vld [vmem:[#allocation2 + $0x19] sm:$0xff]
      %v3156 = vld [vmem:[#allocation2 + $0x21] sm:$0xff]
      %v3157 = vld [vmem:[#allocation2 + $0x29] sm:$0xff]
      %v3158 = vld [vmem:[#allocation2 + $0x31] sm:$0xff]
      %v3159 = vld [vmem:[#allocation2 + $0x39] sm:$0xff]
      %v3160 = vld [vmem:[#allocation2 + $0x41] sm:$0xff]
      %v3161 = vld [vmem:[#allocation2 + $0x49] sm:$0xff]
      %v3162 = vld [vmem:[#allocation2 + $0x51] sm:$0xff]
      %v3163 = vld [vmem:[#allocation2 + $0x59] sm:$0xff]
      %v3164 = vld [vmem:[#allocation2 + $0x61] sm:$0xff]
      %v3165 = vld [vmem:[#allocation2 + $0x69] sm:$0xff]
      %v3166 = vld [vmem:[#allocation2 + $0x71] sm:$0xff]
      %v3167 = vld [vmem:[#allocation2 + $0x79] sm:$0xff]
      %v3168 = vld [vmem:[#allocation2 + $0x81] sm:$0xff]
      %v3169 = vld [vmem:[#allocation2 + $0x89] sm:$0xff]
      %v3170 = vld [vmem:[#allocation2 + $0x91] sm:$0xff]
      %v3171 = vld [vmem:[#allocation2 + $0x99] sm:$0xff]
      %v3172 = vld [vmem:[#allocation2 + $0xa1] sm:$0xff]
      %v3173 = vld [vmem:[#allocation2 + $0xa9] sm:$0xff]
      %v3174 = vld [vmem:[#allocation2 + $0xb1] sm:$0xff]
      %v3175 = vld [vmem:[#allocation2 + $0x2a] sm:$0xff]
      %v3176 = vld [vmem:[#allocation2 + $0x32] sm:$0xff]
      %v3177 = vld [vmem:[#allocation2 + $0x3a] sm:$0xff]
      %v3178 = vld [vmem:[#allocation2 + $0x42] sm:$0xff]
      %v3179 = vld [vmem:[#allocation2 + $0x4a] sm:$0xff]
      %v3180 = vld [vmem:[#allocation2 + $0x52] sm:$0xff]
      %v3181 = vld [vmem:[#allocation2 + $0x5a] sm:$0xff]
      %v3182 = vld [vmem:[#allocation2 + $0x62] sm:$0xff]
      %v3183 = vld [vmem:[#allocation2 + $0x6a] sm:$0xff]
      %v3184 = vld [vmem:[#allocation2 + $0x72] sm:$0xff]
      %v3185 = vld [vmem:[#allocation2 + $0x7a] sm:$0xff]
      %v3186 = vld [vmem:[#allocation2 + $0x82] sm:$0xff]
      %v3187 = vld [vmem:[#allocation2 + $0x8a] sm:$0xff]
      %v3188 = vld [vmem:[#allocation2 + $0x92] sm:$0xff]
      %v3189 = vld [vmem:[#allocation2 + $0x9a] sm:$0xff]
      %v3190 = vld [vmem:[#allocation2 + $0xa2] sm:$0xff]
      %v3191 = vld [vmem:[#allocation2 + $0xaa] sm:$0xff]
      %v3192 = vld [vmem:[#allocation2 + $0xb2] sm:$0xff]
      %v3193 = vld [vmem:[#allocation2 + $0x2b] sm:$0xff]
      %v3194 = vld [vmem:[#allocation2 + $0x33] sm:$0xff]
      %v3195 = vld [vmem:[#allocation2 + $0x3b] sm:$0xff]
      %v3196 = vld [vmem:[#allocation2 + $0x43] sm:$0xff]
      %v3197 = vld [vmem:[#allocation2 + $0x4b] sm:$0xff]
      %v3198 = vld [vmem:[#allocation2 + $0x53] sm:$0xff]
      %v3199 = vld [vmem:[#allocation2 + $0x5b] sm:$0xff]
      %v3200 = vld [vmem:[#allocation2 + $0x63] sm:$0xff]
      %v3201 = vld [vmem:[#allocation2 + $0x6b] sm:$0xff]
      %v3202 = vld [vmem:[#allocation2 + $0x73] sm:$0xff]
      %v3203 = vld [vmem:[#allocation2 + $0x7b] sm:$0xff]
      %v3204 = vld [vmem:[#allocation2 + $0x83] sm:$0xff]
      %v3205 = vld [vmem:[#allocation2 + $0x8b] sm:$0xff]
      %v3206 = vld [vmem:[#allocation2 + $0x93] sm:$0xff]
      %v3207 = vld [vmem:[#allocation2 + $0x9b] sm:$0xff]
      %v3208 = vld [vmem:[#allocation2 + $0xa3] sm:$0xff]
      %v3209 = vld [vmem:[#allocation2 + $0xab] sm:$0xff]
      %v3210 = vld [vmem:[#allocation2 + $0xb3] sm:$0xff]
      %3229 = vrot.lane.b32.xlu0 %v3099, 8
      %v3230 = vpop.permute.xlu0 %3229
      %3231 = vrot.lane.b32.xlu0 %v3100, 8
      %v3232 = vpop.permute.xlu0 %3231
      %3233 = vrot.lane.b32.xlu0 %v3101, 8
      %v3234 = vpop.permute.xlu0 %3233
      %3235 = vrot.lane.b32.xlu0 %v3102, 8
      %v3236 = vpop.permute.xlu0 %3235
      %3237 = vrot.lane.b32.xlu0 %v3103, 8
      %v3238 = vpop.permute.xlu0 %3237
      %3239 = vrot.lane.b32.xlu0 %v3104, 8
      %v3240 = vpop.permute.xlu0 %3239
      %3241 = vrot.lane.b32.xlu0 %v3105, 8
      %v3242 = vpop.permute.xlu0 %3241
      %3243 = vrot.lane.b32.xlu0 %v3106, 8
      %v3244 = vpop.permute.xlu0 %3243
      %3245 = vrot.lane.b32.xlu0 %v3107, 8
      %v3246 = vpop.permute.xlu0 %3245
      %3247 = vrot.lane.b32.xlu0 %v3108, 8
      %v3248 = vpop.permute.xlu0 %3247
      %3249 = vrot.lane.b32.xlu0 %v3109, 8
      %v3250 = vpop.permute.xlu0 %3249
      %3251 = vrot.lane.b32.xlu0 %v3110, 8
      %v3252 = vpop.permute.xlu0 %3251
      %3253 = vrot.lane.b32.xlu0 %v3111, 8
      %v3254 = vpop.permute.xlu0 %3253
      %3255 = vrot.lane.b32.xlu0 %v3112, 8
      %v3256 = vpop.permute.xlu0 %3255
      %3257 = vrot.lane.b32.xlu0 %v3113, 8
      %v3258 = vpop.permute.xlu0 %3257
      %3259 = vrot.lane.b32.xlu0 %v3114, 8
      %v3260 = vpop.permute.xlu0 %3259
      %3261 = vrot.lane.b32.xlu0 %v3115, 8
      %v3262 = vpop.permute.xlu0 %3261
      %3263 = vrot.lane.b32.xlu0 %v3116, 8
      %v3264 = vpop.permute.xlu0 %3263
      %3301 = vrot.lane.b32.xlu0 %v3117, 16
      %v3302 = vpop.permute.xlu0 %3301
      %3303 = vrot.lane.b32.xlu0 %v3118, 16
      %v3304 = vpop.permute.xlu0 %3303
      %3305 = vrot.lane.b32.xlu0 %v3119, 16
      %v3306 = vpop.permute.xlu0 %3305
      %3307 = vrot.lane.b32.xlu0 %v3120, 16
      %v3308 = vpop.permute.xlu0 %3307
      %3309 = vrot.lane.b32.xlu0 %v3121, 16
      %v3310 = vpop.permute.xlu0 %3309
      %3311 = vrot.lane.b32.xlu0 %v3122, 16
      %v3312 = vpop.permute.xlu0 %3311
      %3313 = vrot.lane.b32.xlu0 %v3123, 16
      %v3314 = vpop.permute.xlu0 %3313
      %3315 = vrot.lane.b32.xlu0 %v3124, 16
      %v3316 = vpop.permute.xlu0 %3315
      %3317 = vrot.lane.b32.xlu0 %v3125, 16
      %v3318 = vpop.permute.xlu0 %3317
      %3319 = vrot.lane.b32.xlu0 %v3126, 16
      %v3320 = vpop.permute.xlu0 %3319
      %3321 = vrot.lane.b32.xlu0 %v3127, 16
      %v3322 = vpop.permute.xlu0 %3321
      %3323 = vrot.lane.b32.xlu0 %v3128, 16
      %v3324 = vpop.permute.xlu0 %3323
      %3325 = vrot.lane.b32.xlu0 %v3129, 16
      %v3326 = vpop.permute.xlu0 %3325
      %3327 = vrot.lane.b32.xlu0 %v3130, 16
      %v3328 = vpop.permute.xlu0 %3327
      %3329 = vrot.lane.b32.xlu0 %v3131, 16
      %v3330 = vpop.permute.xlu0 %3329
      %3331 = vrot.lane.b32.xlu0 %v3132, 16
      %v3332 = vpop.permute.xlu0 %3331
      %3333 = vrot.lane.b32.xlu0 %v3133, 16
      %v3334 = vpop.permute.xlu0 %3333
      %3335 = vrot.lane.b32.xlu0 %v3134, 16
      %v3336 = vpop.permute.xlu0 %3335
      %3357 = vrot.lane.b32.xlu0 %v3119, 24
      %v3358 = vpop.permute.xlu0 %3357
      %3359 = vrot.lane.b32.xlu0 %v3120, 24
      %v3360 = vpop.permute.xlu0 %3359
      %3361 = vrot.lane.b32.xlu0 %v3121, 24
      %v3362 = vpop.permute.xlu0 %3361
      %3363 = vrot.lane.b32.xlu0 %v3122, 24
      %v3364 = vpop.permute.xlu0 %3363
      %3365 = vrot.lane.b32.xlu0 %v3123, 24
      %v3366 = vpop.permute.xlu0 %3365
      %3367 = vrot.lane.b32.xlu0 %v3124, 24
      %v3368 = vpop.permute.xlu0 %3367
      %3369 = vrot.lane.b32.xlu0 %v3125, 24
      %v3370 = vpop.permute.xlu0 %3369
      %3371 = vrot.lane.b32.xlu0 %v3126, 24
      %v3372 = vpop.permute.xlu0 %3371
      %3373 = vrot.lane.b32.xlu0 %v3127, 24
      %v3374 = vpop.permute.xlu0 %3373
      %3375 = vrot.lane.b32.xlu0 %v3128, 24
      %v3376 = vpop.permute.xlu0 %3375
      %3377 = vrot.lane.b32.xlu0 %v3129, 24
      %v3378 = vpop.permute.xlu0 %3377
      %3379 = vrot.lane.b32.xlu0 %v3130, 24
      %v3380 = vpop.permute.xlu0 %3379
      %3381 = vrot.lane.b32.xlu0 %v3131, 24
      %v3382 = vpop.permute.xlu0 %3381
      %3383 = vrot.lane.b32.xlu0 %v3132, 24
      %v3384 = vpop.permute.xlu0 %3383
      %3385 = vrot.lane.b32.xlu0 %v3133, 24
      %v3386 = vpop.permute.xlu0 %3385
      %3387 = vrot.lane.b32.xlu0 %v3134, 24
      %v3388 = vpop.permute.xlu0 %3387
      %3389 = vrot.lane.b32.xlu0 %v3135, 24
      %v3390 = vpop.permute.xlu0 %3389
      %3391 = vrot.lane.b32.xlu0 %v3136, 24
      %v3392 = vpop.permute.xlu0 %3391
      %3429 = vrot.lane.b32.xlu0 %v3137, 32
      %v3430 = vpop.permute.xlu0 %3429
      %3431 = vrot.lane.b32.xlu0 %v3138, 32
      %v3432 = vpop.permute.xlu0 %3431
      %3433 = vrot.lane.b32.xlu0 %v3139, 32
      %v3434 = vpop.permute.xlu0 %3433
      %3435 = vrot.lane.b32.xlu0 %v3140, 32
      %v3436 = vpop.permute.xlu0 %3435
      %3437 = vrot.lane.b32.xlu0 %v3141, 32
      %v3438 = vpop.permute.xlu0 %3437
      %3439 = vrot.lane.b32.xlu0 %v3142, 32
      %v3440 = vpop.permute.xlu0 %3439
      %3441 = vrot.lane.b32.xlu0 %v3143, 32
      %v3442 = vpop.permute.xlu0 %3441
      %3443 = vrot.lane.b32.xlu0 %v3144, 32
      %v3444 = vpop.permute.xlu0 %3443
      %3445 = vrot.lane.b32.xlu0 %v3145, 32
      %v3446 = vpop.permute.xlu0 %3445
      %3447 = vrot.lane.b32.xlu0 %v3146, 32
      %v3448 = vpop.permute.xlu0 %3447
      %3449 = vrot.lane.b32.xlu0 %v3147, 32
      %v3450 = vpop.permute.xlu0 %3449
      %3451 = vrot.lane.b32.xlu0 %v3148, 32
      %v3452 = vpop.permute.xlu0 %3451
      %3453 = vrot.lane.b32.xlu0 %v3149, 32
      %v3454 = vpop.permute.xlu0 %3453
      %3455 = vrot.lane.b32.xlu0 %v3150, 32
      %v3456 = vpop.permute.xlu0 %3455
      %3457 = vrot.lane.b32.xlu0 %v3151, 32
      %v3458 = vpop.permute.xlu0 %3457
      %3459 = vrot.lane.b32.xlu0 %v3152, 32
      %v3460 = vpop.permute.xlu0 %3459
      %3461 = vrot.lane.b32.xlu0 %v3153, 32
      %v3462 = vpop.permute.xlu0 %3461
      %3463 = vrot.lane.b32.xlu0 %v3154, 32
      %v3464 = vpop.permute.xlu0 %3463
      %3501 = vrot.lane.b32.xlu0 %v3155, 40
      %v3502 = vpop.permute.xlu0 %3501
      %3503 = vrot.lane.b32.xlu0 %v3156, 40
      %v3504 = vpop.permute.xlu0 %3503
      %3505 = vrot.lane.b32.xlu0 %v3157, 40
      %v3506 = vpop.permute.xlu0 %3505
      %3507 = vrot.lane.b32.xlu0 %v3158, 40
      %v3508 = vpop.permute.xlu0 %3507
      %3509 = vrot.lane.b32.xlu0 %v3159, 40
      %v3510 = vpop.permute.xlu0 %3509
      %3511 = vrot.lane.b32.xlu0 %v3160, 40
      %v3512 = vpop.permute.xlu0 %3511
      %3513 = vrot.lane.b32.xlu0 %v3161, 40
      %v3514 = vpop.permute.xlu0 %3513
      %3515 = vrot.lane.b32.xlu0 %v3162, 40
      %v3516 = vpop.permute.xlu0 %3515
      %3517 = vrot.lane.b32.xlu0 %v3163, 40
      %v3518 = vpop.permute.xlu0 %3517
      %3519 = vrot.lane.b32.xlu0 %v3164, 40
      %v3520 = vpop.permute.xlu0 %3519
      %3521 = vrot.lane.b32.xlu0 %v3165, 40
      %v3522 = vpop.permute.xlu0 %3521
      %3523 = vrot.lane.b32.xlu0 %v3166, 40
      %v3524 = vpop.permute.xlu0 %3523
      %3525 = vrot.lane.b32.xlu0 %v3167, 40
      %v3526 = vpop.permute.xlu0 %3525
      %3527 = vrot.lane.b32.xlu0 %v3168, 40
      %v3528 = vpop.permute.xlu0 %3527
      %3529 = vrot.lane.b32.xlu0 %v3169, 40
      %v3530 = vpop.permute.xlu0 %3529
      %3531 = vrot.lane.b32.xlu0 %v3170, 40
      %v3532 = vpop.permute.xlu0 %3531
      %3533 = vrot.lane.b32.xlu0 %v3171, 40
      %v3534 = vpop.permute.xlu0 %3533
      %3535 = vrot.lane.b32.xlu0 %v3172, 40
      %v3536 = vpop.permute.xlu0 %3535
      %3557 = vrot.lane.b32.xlu0 %v3157, 48
      %v3558 = vpop.permute.xlu0 %3557
      %3559 = vrot.lane.b32.xlu0 %v3158, 48
      %v3560 = vpop.permute.xlu0 %3559
      %3561 = vrot.lane.b32.xlu0 %v3159, 48
      %v3562 = vpop.permute.xlu0 %3561
      %3563 = vrot.lane.b32.xlu0 %v3160, 48
      %v3564 = vpop.permute.xlu0 %3563
      %3565 = vrot.lane.b32.xlu0 %v3161, 48
      %v3566 = vpop.permute.xlu0 %3565
      %3567 = vrot.lane.b32.xlu0 %v3162, 48
      %v3568 = vpop.permute.xlu0 %3567
      %3569 = vrot.lane.b32.xlu0 %v3163, 48
      %v3570 = vpop.permute.xlu0 %3569
      %3571 = vrot.lane.b32.xlu0 %v3164, 48
      %v3572 = vpop.permute.xlu0 %3571
      %3573 = vrot.lane.b32.xlu0 %v3165, 48
      %v3574 = vpop.permute.xlu0 %3573
      %3575 = vrot.lane.b32.xlu0 %v3166, 48
      %v3576 = vpop.permute.xlu0 %3575
      %3577 = vrot.lane.b32.xlu0 %v3167, 48
      %v3578 = vpop.permute.xlu0 %3577
      %3579 = vrot.lane.b32.xlu0 %v3168, 48
      %v3580 = vpop.permute.xlu0 %3579
      %3581 = vrot.lane.b32.xlu0 %v3169, 48
      %v3582 = vpop.permute.xlu0 %3581
      %3583 = vrot.lane.b32.xlu0 %v3170, 48
      %v3584 = vpop.permute.xlu0 %3583
      %3585 = vrot.lane.b32.xlu0 %v3171, 48
      %v3586 = vpop.permute.xlu0 %3585
      %3587 = vrot.lane.b32.xlu0 %v3172, 48
      %v3588 = vpop.permute.xlu0 %3587
      %3589 = vrot.lane.b32.xlu0 %v3173, 48
      %v3590 = vpop.permute.xlu0 %3589
      %3591 = vrot.lane.b32.xlu0 %v3174, 48
      %v3592 = vpop.permute.xlu0 %3591
      %3629 = vrot.lane.b32.xlu0 %v3175, 56
      %v3630 = vpop.permute.xlu0 %3629
      %3631 = vrot.lane.b32.xlu0 %v3176, 56
      %v3632 = vpop.permute.xlu0 %3631
      %3633 = vrot.lane.b32.xlu0 %v3177, 56
      %v3634 = vpop.permute.xlu0 %3633
      %3635 = vrot.lane.b32.xlu0 %v3178, 56
      %v3636 = vpop.permute.xlu0 %3635
      %3637 = vrot.lane.b32.xlu0 %v3179, 56
      %v3638 = vpop.permute.xlu0 %3637
      %3639 = vrot.lane.b32.xlu0 %v3180, 56
      %v3640 = vpop.permute.xlu0 %3639
      %3641 = vrot.lane.b32.xlu0 %v3181, 56
      %v3642 = vpop.permute.xlu0 %3641
      %3643 = vrot.lane.b32.xlu0 %v3182, 56
      %v3644 = vpop.permute.xlu0 %3643
      %3645 = vrot.lane.b32.xlu0 %v3183, 56
      %v3646 = vpop.permute.xlu0 %3645
      %3647 = vrot.lane.b32.xlu0 %v3184, 56
      %v3648 = vpop.permute.xlu0 %3647
      %3649 = vrot.lane.b32.xlu0 %v3185, 56
      %v3650 = vpop.permute.xlu0 %3649
      %3651 = vrot.lane.b32.xlu0 %v3186, 56
      %v3652 = vpop.permute.xlu0 %3651
      %3653 = vrot.lane.b32.xlu0 %v3187, 56
      %v3654 = vpop.permute.xlu0 %3653
      %3655 = vrot.lane.b32.xlu0 %v3188, 56
      %v3656 = vpop.permute.xlu0 %3655
      %3657 = vrot.lane.b32.xlu0 %v3189, 56
      %v3658 = vpop.permute.xlu0 %3657
      %3659 = vrot.lane.b32.xlu0 %v3190, 56
      %v3660 = vpop.permute.xlu0 %3659
      %3661 = vrot.lane.b32.xlu0 %v3191, 56
      %v3662 = vpop.permute.xlu0 %3661
      %3663 = vrot.lane.b32.xlu0 %v3192, 56
      %v3664 = vpop.permute.xlu0 %3663
      %3701 = vrot.lane.b32.xlu0 %v3193, 64
      %v3702 = vpop.permute.xlu0 %3701
      %3703 = vrot.lane.b32.xlu0 %v3194, 64
      %v3704 = vpop.permute.xlu0 %3703
      %3705 = vrot.lane.b32.xlu0 %v3195, 64
      %v3706 = vpop.permute.xlu0 %3705
      %3707 = vrot.lane.b32.xlu0 %v3196, 64
      %v3708 = vpop.permute.xlu0 %3707
      %3709 = vrot.lane.b32.xlu0 %v3197, 64
      %v3710 = vpop.permute.xlu0 %3709
      %3711 = vrot.lane.b32.xlu0 %v3198, 64
      %v3712 = vpop.permute.xlu0 %3711
      %3713 = vrot.lane.b32.xlu0 %v3199, 64
      %v3714 = vpop.permute.xlu0 %3713
      %3715 = vrot.lane.b32.xlu0 %v3200, 64
      %v3716 = vpop.permute.xlu0 %3715
      %3717 = vrot.lane.b32.xlu0 %v3201, 64
      %v3718 = vpop.permute.xlu0 %3717
      %3719 = vrot.lane.b32.xlu0 %v3202, 64
      %v3720 = vpop.permute.xlu0 %3719
      %3721 = vrot.lane.b32.xlu0 %v3203, 64
      %v3722 = vpop.permute.xlu0 %3721
      %3723 = vrot.lane.b32.xlu0 %v3204, 64
      %v3724 = vpop.permute.xlu0 %3723
      %3725 = vrot.lane.b32.xlu0 %v3205, 64
      %v3726 = vpop.permute.xlu0 %3725
      %3727 = vrot.lane.b32.xlu0 %v3206, 64
      %v3728 = vpop.permute.xlu0 %3727
      %3729 = vrot.lane.b32.xlu0 %v3207, 64
      %v3730 = vpop.permute.xlu0 %3729
      %3731 = vrot.lane.b32.xlu0 %v3208, 64
      %v3732 = vpop.permute.xlu0 %3731
      %3733 = vrot.lane.b32.xlu0 %v3209, 64
      %v3734 = vpop.permute.xlu0 %3733
      %3735 = vrot.lane.b32.xlu0 %v3210, 64
      %v3736 = vpop.permute.xlu0 %3735
      %v3755 = vsel %vm446, %v3081, %v3230
      %v3756 = vsel %vm446, %v3082, %v3232
      %v3757 = vsel %vm446, %v3083, %v3234
      %v3758 = vsel %vm446, %v3084, %v3236
      %v3759 = vsel %vm446, %v3085, %v3238
      %v3760 = vsel %vm446, %v3086, %v3240
      %v3761 = vsel %vm446, %v3087, %v3242
      %v3762 = vsel %vm446, %v3088, %v3244
      %v3763 = vsel %vm446, %v3089, %v3246
      %v3764 = vsel %vm446, %v3090, %v3248
      %v3765 = vsel %vm446, %v3091, %v3250
      %v3766 = vsel %vm446, %v3092, %v3252
      %v3767 = vsel %vm446, %v3093, %v3254
      %v3768 = vsel %vm446, %v3094, %v3256
      %v3769 = vsel %vm446, %v3095, %v3258
      %v3770 = vsel %vm446, %v3096, %v3260
      %v3771 = vsel %vm446, %v3097, %v3262
      %v3772 = vsel %vm446, %v3098, %v3264
      %v3773 = vsel %vm1275, %v3755, %v3302
      %v3774 = vsel %vm1275, %v3756, %v3304
      %v3775 = vsel %vm1275, %v3757, %v3306
      %v3776 = vsel %vm1275, %v3758, %v3308
      %v3777 = vsel %vm1275, %v3759, %v3310
      %v3778 = vsel %vm1275, %v3760, %v3312
      %v3779 = vsel %vm1275, %v3761, %v3314
      %v3780 = vsel %vm1275, %v3762, %v3316
      %v3781 = vsel %vm1275, %v3763, %v3318
      %v3782 = vsel %vm1275, %v3764, %v3320
      %v3783 = vsel %vm1275, %v3765, %v3322
      %v3784 = vsel %vm1275, %v3766, %v3324
      %v3785 = vsel %vm1275, %v3767, %v3326
      %v3786 = vsel %vm1275, %v3768, %v3328
      %v3787 = vsel %vm1275, %v3769, %v3330
      %v3788 = vsel %vm1275, %v3770, %v3332
      %v3789 = vsel %vm1275, %v3771, %v3334
      %v3790 = vsel %vm1275, %v3772, %v3336
      %v3791 = vsel %vm1313, %v3773, %v3358
      %v3792 = vsel %vm1313, %v3774, %v3360
      %v3793 = vsel %vm1313, %v3775, %v3362
      %v3794 = vsel %vm1313, %v3776, %v3364
      %v3795 = vsel %vm1313, %v3777, %v3366
      %v3796 = vsel %vm1313, %v3778, %v3368
      %v3797 = vsel %vm1313, %v3779, %v3370
      %v3798 = vsel %vm1313, %v3780, %v3372
      %v3799 = vsel %vm1313, %v3781, %v3374
      %v3800 = vsel %vm1313, %v3782, %v3376
      %v3801 = vsel %vm1313, %v3783, %v3378
      %v3802 = vsel %vm1313, %v3784, %v3380
      %v3803 = vsel %vm1313, %v3785, %v3382
      %v3804 = vsel %vm1313, %v3786, %v3384
      %v3805 = vsel %vm1313, %v3787, %v3386
      %v3806 = vsel %vm1313, %v3788, %v3388
      %v3807 = vsel %vm1313, %v3789, %v3390
      %v3808 = vsel %vm1313, %v3790, %v3392
      %v3809 = vsel %vm1351, %v3791, %v3430
      %v3810 = vsel %vm1351, %v3792, %v3432
      %v3811 = vsel %vm1351, %v3793, %v3434
      %v3812 = vsel %vm1351, %v3794, %v3436
      %v3813 = vsel %vm1351, %v3795, %v3438
      %v3814 = vsel %vm1351, %v3796, %v3440
      %v3815 = vsel %vm1351, %v3797, %v3442
      %v3816 = vsel %vm1351, %v3798, %v3444
      %v3817 = vsel %vm1351, %v3799, %v3446
      %v3818 = vsel %vm1351, %v3800, %v3448
      %v3819 = vsel %vm1351, %v3801, %v3450
      %v3820 = vsel %vm1351, %v3802, %v3452
      %v3821 = vsel %vm1351, %v3803, %v3454
      %v3822 = vsel %vm1351, %v3804, %v3456
      %v3823 = vsel %vm1351, %v3805, %v3458
      %v3824 = vsel %vm1351, %v3806, %v3460
      %v3825 = vsel %vm1351, %v3807, %v3462
      %v3826 = vsel %vm1351, %v3808, %v3464
      %vm3827 = vcmask 326656
      %v3828 = vsel %vm3827, %v3809, %v3502
      %v3829 = vsel %vm3827, %v3810, %v3504
      %v3830 = vsel %vm3827, %v3811, %v3506
      %v3831 = vsel %vm3827, %v3812, %v3508
      %v3832 = vsel %vm3827, %v3813, %v3510
      %v3833 = vsel %vm3827, %v3814, %v3512
      %v3834 = vsel %vm3827, %v3815, %v3514
      %v3835 = vsel %vm3827, %v3816, %v3516
      %v3836 = vsel %vm3827, %v3817, %v3518
      %v3837 = vsel %vm3827, %v3818, %v3520
      %v3838 = vsel %vm3827, %v3819, %v3522
      %v3839 = vsel %vm3827, %v3820, %v3524
      %v3840 = vsel %vm3827, %v3821, %v3526
      %v3841 = vsel %vm3827, %v3822, %v3528
      %v3842 = vsel %vm3827, %v3823, %v3530
      %v3843 = vsel %vm3827, %v3824, %v3532
      %v3844 = vsel %vm3827, %v3825, %v3534
      %v3845 = vsel %vm3827, %v3826, %v3536
      %vm3846 = vcmask 392192
      %v3847 = vsel %vm3846, %v3828, %v3558
      %v3848 = vsel %vm3846, %v3829, %v3560
      %v3849 = vsel %vm3846, %v3830, %v3562
      %v3850 = vsel %vm3846, %v3831, %v3564
      %v3851 = vsel %vm3846, %v3832, %v3566
      %v3852 = vsel %vm3846, %v3833, %v3568
      %v3853 = vsel %vm3846, %v3834, %v3570
      %v3854 = vsel %vm3846, %v3835, %v3572
      %v3855 = vsel %vm3846, %v3836, %v3574
      %v3856 = vsel %vm3846, %v3837, %v3576
      %v3857 = vsel %vm3846, %v3838, %v3578
      %v3858 = vsel %vm3846, %v3839, %v3580
      %v3859 = vsel %vm3846, %v3840, %v3582
      %v3860 = vsel %vm3846, %v3841, %v3584
      %v3861 = vsel %vm3846, %v3842, %v3586
      %v3862 = vsel %vm3846, %v3843, %v3588
      %v3863 = vsel %vm3846, %v3844, %v3590
      %v3864 = vsel %vm3846, %v3845, %v3592
      %vm3865 = vcmask 457728
      %v3866 = vsel %vm3865, %v3847, %v3630
      %v3867 = vsel %vm3865, %v3848, %v3632
      %v3868 = vsel %vm3865, %v3849, %v3634
      %v3869 = vsel %vm3865, %v3850, %v3636
      %v3870 = vsel %vm3865, %v3851, %v3638
      %v3871 = vsel %vm3865, %v3852, %v3640
      %v3872 = vsel %vm3865, %v3853, %v3642
      %v3873 = vsel %vm3865, %v3854, %v3644
      %v3874 = vsel %vm3865, %v3855, %v3646
      %v3875 = vsel %vm3865, %v3856, %v3648
      %v3876 = vsel %vm3865, %v3857, %v3650
      %v3877 = vsel %vm3865, %v3858, %v3652
      %v3878 = vsel %vm3865, %v3859, %v3654
      %v3879 = vsel %vm3865, %v3860, %v3656
      %v3880 = vsel %vm3865, %v3861, %v3658
      %v3881 = vsel %vm3865, %v3862, %v3660
      %v3882 = vsel %vm3865, %v3863, %v3662
      %v3883 = vsel %vm3865, %v3864, %v3664
      %vm3884 = vcmask 523264
      %v3885 = vsel %vm3884, %v3866, %v3702
      %v3886 = vsel %vm3884, %v3867, %v3704
      %v3887 = vsel %vm3884, %v3868, %v3706
      %v3888 = vsel %vm3884, %v3869, %v3708
      %v3889 = vsel %vm3884, %v3870, %v3710
      %v3890 = vsel %vm3884, %v3871, %v3712
      %v3891 = vsel %vm3884, %v3872, %v3714
      %v3892 = vsel %vm3884, %v3873, %v3716
      %v3893 = vsel %vm3884, %v3874, %v3718
      %v3894 = vsel %vm3884, %v3875, %v3720
      %v3895 = vsel %vm3884, %v3876, %v3722
      %v3896 = vsel %vm3884, %v3877, %v3724
      %v3897 = vsel %vm3884, %v3878, %v3726
      %v3898 = vsel %vm3884, %v3879, %v3728
      %v3899 = vsel %vm3884, %v3880, %v3730
      %v3900 = vsel %vm3884, %v3881, %v3732
      %v3901 = vsel %vm3884, %v3882, %v3734
      %v3902 = vsel %vm3884, %v3883, %v3736
      %v3903 = vpack.c.bf16 %v3886, %v3885
      %v3904 = vpack.c.bf16 %v3888, %v3887
      %v3905 = vpack.c.bf16 %v3890, %v3889
      %v3906 = vpack.c.bf16 %v3892, %v3891
      %v3907 = vpack.c.bf16 %v3894, %v3893
      %v3908 = vpack.c.bf16 %v3896, %v3895
      %v3909 = vpack.c.bf16 %v3898, %v3897
      %v3910 = vpack.c.bf16 %v3900, %v3899
      %v3911 = vpack.c.bf16 %v3902, %v3901
      %v3913 = vperm.slane %v3078, 0
      %v3924 = vunpack.c.l.b16 %v3069
      %v3925 = vunpack.c.l.b16 %v3070
      %v3926 = vunpack.c.l.b16 %v3071
      %v3927 = vunpack.c.l.b16 %v3072
      %v3928 = vunpack.c.l.b16 %v3073
      %v3929 = vunpack.c.l.b16 %v3074
      %v3930 = vunpack.c.l.b16 %v3075
      %v3931 = vunpack.c.l.b16 %v3076
      %v3932 = vunpack.c.l.b16 %v3077
      %v3933 = vpack.c.b16 %v3925, %v3924
      %v3934 = vpack.c.b16 %v3927, %v3926
      %v3935 = vpack.c.b16 %v3929, %v3928
      %v3936 = vpack.c.b16 %v3931, %v3930
      %v3937 = vpack.c.b16 %v3932, %v3932
      %vm3942 = vcmask 588800
      %v3944 = vsel %vm3942, %v3903, 0
      %v3947 = vsel %vm3942, %v3904, 0
      %v3950 = vsel %vm3942, %v3905, 0
      %v3953 = vsel %vm3942, %v3906, 0
      %v3956 = vsel %vm3942, %v3907, 0
      %v3959 = vsel %vm3942, %v3908, 0
      %v3962 = vsel %vm3942, %v3909, 0
      %v3965 = vsel %vm3942, %v3910, 0
      %v3968 = vsel %vm3942, %v3911, 0
      %vm3970 = vcmask 1043456
      %v3972 = vsel %vm3970, %v3937, 0
      %3974 = vmatpush.bf16.msra.mxu0 0
      %3975 = vmatpush.bf16.msra.mxu0 0
      %3976 = vmatpush.bf16.msra.mxu0 0
      %3977 = vmatpush.bf16.msra.mxu0 %v3972
      %3978 = vmatpush.bf16.msra.mxu0 %v3936
      %3979 = vmatpush.bf16.msra.mxu0 %v3935
      %3980 = vmatpush.bf16.msra.mxu0 %v3934
      %3981 = vmatpush.bf16.msra.mxu0 %v3933
      %3982 = vmatmul.bf16.gmra.mxu0 %v3944
      %v3983 = vpop.f32.mrf.mxu0
      %v3984 = vadd.f32 %v3913, %v3983
      %v3985 = vpop.f32.mrf.mxu0
      %v3986 = vadd.f32 %v3913, %v3985
      %3987 = vmatmul.bf16.gmra.mxu0 %v3947
      %v3988 = vpop.f32.mrf.mxu0
      %v3989 = vadd.f32 %v3913, %v3988
      %v3990 = vpop.f32.mrf.mxu0
      %v3991 = vadd.f32 %v3913, %v3990
      %3992 = vmatmul.bf16.gmra.mxu0 %v3950
      %v3993 = vpop.f32.mrf.mxu0
      %v3994 = vadd.f32 %v3913, %v3993
      %v3995 = vpop.f32.mrf.mxu0
      %v3996 = vadd.f32 %v3913, %v3995
      %3997 = vmatmul.bf16.gmra.mxu0 %v3953
      %v3998 = vpop.f32.mrf.mxu0
      %v3999 = vadd.f32 %v3913, %v3998
      %v4000 = vpop.f32.mrf.mxu0
      %v4001 = vadd.f32 %v3913, %v4000
      %4002 = vmatmul.bf16.gmra.mxu0 %v3956
      %v4003 = vpop.f32.mrf.mxu0
      %v4004 = vadd.f32 %v3913, %v4003
      %v4005 = vpop.f32.mrf.mxu0
      %v4006 = vadd.f32 %v3913, %v4005
      %4007 = vmatmul.bf16.gmra.mxu0 %v3959
      %v4008 = vpop.f32.mrf.mxu0
      %v4009 = vadd.f32 %v3913, %v4008
      %v4010 = vpop.f32.mrf.mxu0
      %v4011 = vadd.f32 %v3913, %v4010
      %4012 = vmatmul.bf16.gmra.mxu0 %v3962
      %v4013 = vpop.f32.mrf.mxu0
      %v4014 = vadd.f32 %v3913, %v4013
      %v4015 = vpop.f32.mrf.mxu0
      %v4016 = vadd.f32 %v3913, %v4015
      %4017 = vmatmul.bf16.gmra.mxu0 %v3965
      %v4018 = vpop.f32.mrf.mxu0
      %v4019 = vadd.f32 %v3913, %v4018
      %v4020 = vpop.f32.mrf.mxu0
      %v4021 = vadd.f32 %v3913, %v4020
      %4022 = vmatmul.bf16.gmra.mxu0 %v3968
      %v4023 = vpop.f32.mrf.mxu0
      %v4024 = vadd.f32 %v3913, %v4023
      %v4025 = vpop.f32.mrf.mxu0
      %v4026 = vadd.f32 %v3913, %v4025
      %4027 = vdwg.mxu0
      %vm4028 = vcmp.ge.f32.partialorder %v3984, 0.0
      %vm4029 = vcmp.ge.f32.partialorder %v3986, 0.0
      %vm4030 = vcmp.ge.f32.partialorder %v3989, 0.0
      %vm4031 = vcmp.ge.f32.partialorder %v3991, 0.0
      %vm4032 = vcmp.ge.f32.partialorder %v3994, 0.0
      %vm4033 = vcmp.ge.f32.partialorder %v3996, 0.0
      %vm4034 = vcmp.ge.f32.partialorder %v3999, 0.0
      %vm4035 = vcmp.ge.f32.partialorder %v4001, 0.0
      %vm4036 = vcmp.ge.f32.partialorder %v4004, 0.0
      %vm4037 = vcmp.ge.f32.partialorder %v4006, 0.0
      %vm4038 = vcmp.ge.f32.partialorder %v4009, 0.0
      %vm4039 = vcmp.ge.f32.partialorder %v4011, 0.0
      %vm4040 = vcmp.ge.f32.partialorder %v4014, 0.0
      %vm4041 = vcmp.ge.f32.partialorder %v4016, 0.0
      %vm4042 = vcmp.ge.f32.partialorder %v4019, 0.0
      %vm4043 = vcmp.ge.f32.partialorder %v4021, 0.0
      %vm4044 = vcmp.ge.f32.partialorder %v4024, 0.0
      %vm4045 = vcmp.ge.f32.partialorder %v4026, 0.0
      %v4046 = vmul.f32 %v3984, 0.2
      %v4047 = vmul.f32 %v3986, 0.2
      %v4048 = vmul.f32 %v3989, 0.2
      %v4049 = vmul.f32 %v3991, 0.2
      %v4050 = vmul.f32 %v3994, 0.2
      %v4051 = vmul.f32 %v3996, 0.2
      %v4052 = vmul.f32 %v3999, 0.2
      %v4053 = vmul.f32 %v4001, 0.2
      %v4054 = vmul.f32 %v4004, 0.2
      %v4055 = vmul.f32 %v4006, 0.2
      %v4056 = vmul.f32 %v4009, 0.2
      %v4057 = vmul.f32 %v4011, 0.2
      %v4058 = vmul.f32 %v4014, 0.2
      %v4059 = vmul.f32 %v4016, 0.2
      %v4060 = vmul.f32 %v4019, 0.2
      %v4061 = vmul.f32 %v4021, 0.2
      %v4062 = vmul.f32 %v4024, 0.2
      %v4063 = vmul.f32 %v4026, 0.2
      %v4064 = vsel %vm4028, %v3984, %v4046
      %v4065 = vsel %vm4029, %v3986, %v4047
      %v4066 = vsel %vm4030, %v3989, %v4048
      %v4067 = vsel %vm4031, %v3991, %v4049
      %v4068 = vsel %vm4032, %v3994, %v4050
      %v4069 = vsel %vm4033, %v3996, %v4051
      %v4070 = vsel %vm4034, %v3999, %v4052
      %v4071 = vsel %vm4035, %v4001, %v4053
      %v4072 = vsel %vm4036, %v4004, %v4054
      %v4073 = vsel %vm4037, %v4006, %v4055
      %v4074 = vsel %vm4038, %v4009, %v4056
      %v4075 = vsel %vm4039, %v4011, %v4057
      %v4076 = vsel %vm4040, %v4014, %v4058
      %v4077 = vsel %vm4041, %v4016, %v4059
      %v4078 = vsel %vm4042, %v4019, %v4060
      %v4079 = vsel %vm4043, %v4021, %v4061
      %v4080 = vsel %vm4044, %v4024, %v4062
      %v4081 = vsel %vm4045, %v4026, %v4063
      %v4082 = vld [vmem:[%s416 + $0x18] sm:$0xff]
      %v4083 = vld [vmem:[%s416 + $0x20] sm:$0xff]
      %v4084 = vld [vmem:[%s416 + $0x28] sm:$0xff]
      %v4085 = vld [vmem:[%s416 + $0x30] sm:$0xff]
      %v4086 = vld [vmem:[%s416 + $0x38] sm:$0xff]
      %v4087 = vld [vmem:[%s416 + $0x40] sm:$0xff]
      %v4088 = vld [vmem:[%s416 + $0x48] sm:$0xff]
      %v4089 = vld [vmem:[%s416 + $0x50] sm:$0xff]
      %v4090 = vld [vmem:[%s416 + $0x58] sm:$0xff]
      %v4091 = vld [vmem:[%s416 + $0x60] sm:$0xff]
      %v4092 = vld [vmem:[%s416 + $0x68] sm:$0xff]
      %v4093 = vld [vmem:[%s416 + $0x70] sm:$0xff]
      %v4094 = vld [vmem:[%s416 + $0x78] sm:$0xff]
      %v4095 = vld [vmem:[%s416 + $0x80] sm:$0xff]
      %v4096 = vld [vmem:[%s416 + $0x88] sm:$0xff]
      %v4097 = vld [vmem:[%s416 + $0x90] sm:$0xff]
      %v4098 = vld [vmem:[%s416 + $0x98] sm:$0xff]
      %v4099 = vld [vmem:[%s416 + $0xa0] sm:$0xff]
      %v4100 = vpack.c.bf16 %v4083, %v4082
      %v4101 = vpack.c.bf16 %v4085, %v4084
      %v4102 = vpack.c.bf16 %v4087, %v4086
      %v4103 = vpack.c.bf16 %v4089, %v4088
      %v4104 = vpack.c.bf16 %v4091, %v4090
      %v4105 = vpack.c.bf16 %v4093, %v4092
      %v4106 = vpack.c.bf16 %v4095, %v4094
      %v4107 = vpack.c.bf16 %v4097, %v4096
      %v4108 = vpack.c.bf16 %v4099, %v4098
      %v4110 = vsel %vm1219, %v4100, 0
      %v4113 = vsel %vm1219, %v4101, 0
      %v4116 = vsel %vm1219, %v4102, 0
      %v4119 = vsel %vm1219, %v4103, 0
      %v4122 = vsel %vm1219, %v4104, 0
      %v4125 = vsel %vm1219, %v4105, 0
      %v4128 = vsel %vm1219, %v4106, 0
      %v4131 = vsel %vm1219, %v4107, 0
      %v4134 = vsel %vm1219, %v4108, 0
      %v4137 = vsel %vm1425, %v3079, 0
      %4139 = vmatpush.bf16.msra.mxu0 0
      %4140 = vmatpush.bf16.msra.mxu0 0
      %4141 = vmatpush.bf16.msra.mxu0 0
      %4142 = vmatpush.bf16.msra.mxu0 0
      %4143 = vmatpush.bf16.msra.mxu0 0
      %4144 = vmatpush.bf16.msra.mxu0 0
      %4145 = vmatpush.bf16.msra.mxu0 0
      %4146 = vmatpush.bf16.msra.mxu0 %v4137
      %4147 = vmatmul.bf16.gmra.mxu0 %v4110
      %v4148 = vpop.f32.mrf.mxu0
      %v4149 = vadd.f32 0.0, %v4148
      %v4150 = vpop.f32.mrf.mxu0
      %v4151 = vadd.f32 0.0, %v4150
      %4152 = vmatmul.bf16.gmra.mxu0 %v4113
      %v4153 = vpop.f32.mrf.mxu0
      %v4154 = vadd.f32 0.0, %v4153
      %v4155 = vpop.f32.mrf.mxu0
      %v4156 = vadd.f32 0.0, %v4155
      %4157 = vmatmul.bf16.gmra.mxu0 %v4116
      %v4158 = vpop.f32.mrf.mxu0
      %v4159 = vadd.f32 0.0, %v4158
      %v4160 = vpop.f32.mrf.mxu0
      %v4161 = vadd.f32 0.0, %v4160
      %4162 = vmatmul.bf16.gmra.mxu0 %v4119
      %v4163 = vpop.f32.mrf.mxu0
      %v4164 = vadd.f32 0.0, %v4163
      %v4165 = vpop.f32.mrf.mxu0
      %v4166 = vadd.f32 0.0, %v4165
      %4167 = vmatmul.bf16.gmra.mxu0 %v4122
      %v4168 = vpop.f32.mrf.mxu0
      %v4169 = vadd.f32 0.0, %v4168
      %v4170 = vpop.f32.mrf.mxu0
      %v4171 = vadd.f32 0.0, %v4170
      %4172 = vmatmul.bf16.gmra.mxu0 %v4125
      %v4173 = vpop.f32.mrf.mxu0
      %v4174 = vadd.f32 0.0, %v4173
      %v4175 = vpop.f32.mrf.mxu0
      %v4176 = vadd.f32 0.0, %v4175
      %4177 = vmatmul.bf16.gmra.mxu0 %v4128
      %v4178 = vpop.f32.mrf.mxu0
      %v4179 = vadd.f32 0.0, %v4178
      %v4180 = vpop.f32.mrf.mxu0
      %v4181 = vadd.f32 0.0, %v4180
      %4182 = vmatmul.bf16.gmra.mxu0 %v4131
      %v4183 = vpop.f32.mrf.mxu0
      %v4184 = vadd.f32 0.0, %v4183
      %v4185 = vpop.f32.mrf.mxu0
      %v4186 = vadd.f32 0.0, %v4185
      %4187 = vmatmul.bf16.gmra.mxu0 %v4134
      %v4188 = vpop.f32.mrf.mxu0
      %v4189 = vadd.f32 0.0, %v4188
      %v4190 = vpop.f32.mrf.mxu0
      %v4191 = vadd.f32 0.0, %v4190
      %4192 = vdwg.mxu0
      %v4193 = vadd.f32 %v4064, %v4149
      %v4194 = vadd.f32 %v4065, %v4151
      %v4195 = vadd.f32 %v4066, %v4154
      %v4196 = vadd.f32 %v4067, %v4156
      %v4197 = vadd.f32 %v4068, %v4159
      %v4198 = vadd.f32 %v4069, %v4161
      %v4199 = vadd.f32 %v4070, %v4164
      %v4200 = vadd.f32 %v4071, %v4166
      %v4201 = vadd.f32 %v4072, %v4169
      %v4202 = vadd.f32 %v4073, %v4171
      %v4203 = vadd.f32 %v4074, %v4174
      %v4204 = vadd.f32 %v4075, %v4176
      %v4205 = vadd.f32 %v4076, %v4179
      %v4206 = vadd.f32 %v4077, %v4181
      %v4207 = vadd.f32 %v4078, %v4184
      %v4208 = vadd.f32 %v4079, %v4186
      %v4209 = vadd.f32 %v4080, %v4189
      %v4210 = vadd.f32 %v4081, %v4191
      %v4212 = vperm.slane %v3080, 0
      %v4214 = vadd.f32 %v4193, %v4212
      %v4215 = vadd.f32 %v4194, %v4212
      %v4216 = vadd.f32 %v4195, %v4212
      %v4217 = vadd.f32 %v4196, %v4212
      %v4218 = vadd.f32 %v4197, %v4212
      %v4219 = vadd.f32 %v4198, %v4212
      %v4220 = vadd.f32 %v4199, %v4212
      %v4221 = vadd.f32 %v4200, %v4212
      %v4222 = vadd.f32 %v4201, %v4212
      %v4223 = vadd.f32 %v4202, %v4212
      %v4224 = vadd.f32 %v4203, %v4212
      %v4225 = vadd.f32 %v4204, %v4212
      %v4226 = vadd.f32 %v4205, %v4212
      %v4227 = vadd.f32 %v4206, %v4212
      %v4228 = vadd.f32 %v4207, %v4212
      %v4229 = vadd.f32 %v4208, %v4212
      %v4230 = vadd.f32 %v4209, %v4212
      %v4231 = vadd.f32 %v4210, %v4212
      %v4232 = vmul.f32 %v4214, %v1486
      %v4233 = vmul.f32 %v4215, %v1491
      %v4234 = vmul.f32 %v4216, %v1496
      %v4235 = vmul.f32 %v4217, %v1501
      %v4236 = vmul.f32 %v4218, %v1506
      %v4237 = vmul.f32 %v4219, %v1511
      %v4238 = vmul.f32 %v4220, %v1516
      %v4239 = vmul.f32 %v4221, %v1521
      %v4240 = vmul.f32 %v4222, %v1526
      %v4241 = vmul.f32 %v4223, %v1531
      %v4242 = vmul.f32 %v4224, %v1536
      %v4243 = vmul.f32 %v4225, %v1541
      %v4244 = vmul.f32 %v4226, %v1546
      %v4245 = vmul.f32 %v4227, %v1551
      %v4246 = vmul.f32 %v4228, %v1556
      %v4247 = vmul.f32 %v4229, %v1561
      %v4248 = vmul.f32 %v4230, %v1566
      %v4249 = vmul.f32 %v4231, %v1571
      %4250 = vst.msk [vmem:[%s421] sm:$0xff] %vm446, %v4232
      %4251 = vst.msk [vmem:[%s421 + $0x8] sm:$0xff] %vm446, %v4233
      %4252 = vst.msk [vmem:[%s421 + $0x10] sm:$0xff] %vm446, %v4234
      %4253 = vst.msk [vmem:[%s421 + $0x18] sm:$0xff] %vm446, %v4235
      %4254 = vst.msk [vmem:[%s421 + $0x20] sm:$0xff] %vm446, %v4236
      %4255 = vst.msk [vmem:[%s421 + $0x28] sm:$0xff] %vm446, %v4237
      %4256 = vst.msk [vmem:[%s421 + $0x30] sm:$0xff] %vm446, %v4238
      %4257 = vst.msk [vmem:[%s421 + $0x38] sm:$0xff] %vm446, %v4239
      %4258 = vst.msk [vmem:[%s421 + $0x40] sm:$0xff] %vm446, %v4240
      %4259 = vst.msk [vmem:[%s421 + $0x48] sm:$0xff] %vm446, %v4241
      %4260 = vst.msk [vmem:[%s421 + $0x50] sm:$0xff] %vm446, %v4242
      %4261 = vst.msk [vmem:[%s421 + $0x58] sm:$0xff] %vm446, %v4243
      %4262 = vst.msk [vmem:[%s421 + $0x60] sm:$0xff] %vm446, %v4244
      %4263 = vst.msk [vmem:[%s421 + $0x68] sm:$0xff] %vm446, %v4245
      %4264 = vst.msk [vmem:[%s421 + $0x70] sm:$0xff] %vm446, %v4246
      %4265 = vst.msk [vmem:[%s421 + $0x78] sm:$0xff] %vm446, %v4247
      %4266 = vst.msk [vmem:[%s421 + $0x80] sm:$0xff] %vm446, %v4248
      %4267 = vst.msk [vmem:[%s421 + $0x88] sm:$0xff] %vm446, %v4249
      %4268 = vst.msk [vmem:[#allocation3 + $0x18] sm:$0xff] %vm446, %v4232
      %4269 = vst.msk [vmem:[#allocation3 + $0x20] sm:$0xff] %vm446, %v4233
      %4270 = vst.msk [vmem:[#allocation3 + $0x28] sm:$0xff] %vm446, %v4234
      %4271 = vst.msk [vmem:[#allocation3 + $0x30] sm:$0xff] %vm446, %v4235
      %4272 = vst.msk [vmem:[#allocation3 + $0x38] sm:$0xff] %vm446, %v4236
      %4273 = vst.msk [vmem:[#allocation3 + $0x40] sm:$0xff] %vm446, %v4237
      %4274 = vst.msk [vmem:[#allocation3 + $0x48] sm:$0xff] %vm446, %v4238
      %4275 = vst.msk [vmem:[#allocation3 + $0x50] sm:$0xff] %vm446, %v4239
      %4276 = vst.msk [vmem:[#allocation3 + $0x58] sm:$0xff] %vm446, %v4240
      %4277 = vst.msk [vmem:[#allocation3 + $0x60] sm:$0xff] %vm446, %v4241
      %4278 = vst.msk [vmem:[#allocation3 + $0x68] sm:$0xff] %vm446, %v4242
      %4279 = vst.msk [vmem:[#allocation3 + $0x70] sm:$0xff] %vm446, %v4243
      %4280 = vst.msk [vmem:[#allocation3 + $0x78] sm:$0xff] %vm446, %v4244
      %4281 = vst.msk [vmem:[#allocation3 + $0x80] sm:$0xff] %vm446, %v4245
      %4282 = vst.msk [vmem:[#allocation3 + $0x88] sm:$0xff] %vm446, %v4246
      %4283 = vst.msk [vmem:[#allocation3 + $0x90] sm:$0xff] %vm446, %v4247
      %4284 = vst.msk [vmem:[#allocation3 + $0x98] sm:$0xff] %vm446, %v4248
      %4285 = vst.msk [vmem:[#allocation3 + $0xa0] sm:$0xff] %vm446, %v4249
      %v4286 = vld [vmem:[#allocation2 + $0x95] sm:$0xff]
      %v4287 = vld [vmem:[#allocation2 + $0x9d] sm:$0xff]
      %v4288 = vld [vmem:[#allocation2 + $0xa5] sm:$0xff]
      %v4289 = vld [vmem:[#allocation2 + $0xad] sm:$0xff]
      %v4290 = vld [vmem:[#allocation2 + $0xb5] sm:$0xff]
      %v4291 = vld [vmem:[#allocation2 + $0xbd] sm:$0xff]
      %v4292 = vld [vmem:[#allocation2 + $0xc5] sm:$0xff]
      %v4293 = vld [vmem:[#allocation2 + $0xcd] sm:$0xff]
      %v4294 = vld [vmem:[#allocation2 + $0xd5] sm:$0xff]
      %v4295 = vld [vmem:[#allocation2 + $0xdd] sm:$0xff]
      %v4296 = vld [vmem:[#allocation2 + $0xe5] sm:$0xff]
      %v4297 = vld [vmem:[#allocation2 + $0xed] sm:$0xff]
      %v4298 = vld [vmem:[#allocation2 + $0xf5] sm:$0xff]
      %v4299 = vld [vmem:[#allocation2 + $0xfd] sm:$0xff]
      %v4300 = vld [vmem:[#allocation2 + $0x105] sm:$0xff]
      %v4301 = vld [vmem:[#allocation2 + $0x10d] sm:$0xff]
      %v4302 = vld [vmem:[#allocation2 + $0x115] sm:$0xff]
      %v4303 = vld [vmem:[#allocation2 + $0x11d] sm:$0xff]
      %v4304 = vld [vmem:[#allocation2 + $0x96] sm:$0xff]
      %v4305 = vld [vmem:[#allocation2 + $0x9e] sm:$0xff]
      %v4306 = vld [vmem:[#allocation2 + $0xa6] sm:$0xff]
      %v4307 = vld [vmem:[#allocation2 + $0xae] sm:$0xff]
      %v4308 = vld [vmem:[#allocation2 + $0xb6] sm:$0xff]
      %v4309 = vld [vmem:[#allocation2 + $0xbe] sm:$0xff]
      %v4310 = vld [vmem:[#allocation2 + $0xc6] sm:$0xff]
      %v4311 = vld [vmem:[#allocation2 + $0xce] sm:$0xff]
      %v4312 = vld [vmem:[#allocation2 + $0xd6] sm:$0xff]
      %v4313 = vld [vmem:[#allocation2 + $0xde] sm:$0xff]
      %v4314 = vld [vmem:[#allocation2 + $0xe6] sm:$0xff]
      %v4315 = vld [vmem:[#allocation2 + $0xee] sm:$0xff]
      %v4316 = vld [vmem:[#allocation2 + $0xf6] sm:$0xff]
      %v4317 = vld [vmem:[#allocation2 + $0xfe] sm:$0xff]
      %v4318 = vld [vmem:[#allocation2 + $0x106] sm:$0xff]
      %v4319 = vld [vmem:[#allocation2 + $0x10e] sm:$0xff]
      %v4320 = vld [vmem:[#allocation2 + $0x116] sm:$0xff]
      %v4321 = vld [vmem:[#allocation2 + $0x11e] sm:$0xff]
      %v4322 = vld [vmem:[#allocation2 + $0x97] sm:$0xff]
      %v4323 = vld [vmem:[#allocation2 + $0x9f] sm:$0xff]
      %v4324 = vld [vmem:[#allocation2 + $0xa7] sm:$0xff]
      %v4325 = vld [vmem:[#allocation2 + $0xaf] sm:$0xff]
      %v4326 = vld [vmem:[#allocation2 + $0xb7] sm:$0xff]
      %v4327 = vld [vmem:[#allocation2 + $0xbf] sm:$0xff]
      %v4328 = vld [vmem:[#allocation2 + $0xc7] sm:$0xff]
      %v4329 = vld [vmem:[#allocation2 + $0xcf] sm:$0xff]
      %v4330 = vld [vmem:[#allocation2 + $0xd7] sm:$0xff]
      %v4331 = vld [vmem:[#allocation2 + $0xdf] sm:$0xff]
      %v4332 = vld [vmem:[#allocation2 + $0xe7] sm:$0xff]
      %v4333 = vld [vmem:[#allocation2 + $0xef] sm:$0xff]
      %v4334 = vld [vmem:[#allocation2 + $0xf7] sm:$0xff]
      %v4335 = vld [vmem:[#allocation2 + $0xff] sm:$0xff]
      %v4336 = vld [vmem:[#allocation2 + $0x107] sm:$0xff]
      %v4337 = vld [vmem:[#allocation2 + $0x10f] sm:$0xff]
      %v4338 = vld [vmem:[#allocation2 + $0x117] sm:$0xff]
      %v4339 = vld [vmem:[#allocation2 + $0x11f] sm:$0xff]
      %v4340 = vld [vmem:[#allocation2 + $0x127] sm:$0xff]
      %v4341 = vld [vmem:[#allocation2 + $0x12f] sm:$0xff]
      %v4342 = vld [vmem:[#allocation2 + $0xa8] sm:$0xff]
      %v4343 = vld [vmem:[#allocation2 + $0xb0] sm:$0xff]
      %v4344 = vld [vmem:[#allocation2 + $0xb8] sm:$0xff]
      %v4345 = vld [vmem:[#allocation2 + $0xc0] sm:$0xff]
      %v4346 = vld [vmem:[#allocation2 + $0xc8] sm:$0xff]
      %v4347 = vld [vmem:[#allocation2 + $0xd0] sm:$0xff]
      %v4348 = vld [vmem:[#allocation2 + $0xd8] sm:$0xff]
      %v4349 = vld [vmem:[#allocation2 + $0xe0] sm:$0xff]
      %v4350 = vld [vmem:[#allocation2 + $0xe8] sm:$0xff]
      %v4351 = vld [vmem:[#allocation2 + $0xf0] sm:$0xff]
      %v4352 = vld [vmem:[#allocation2 + $0xf8] sm:$0xff]
      %v4353 = vld [vmem:[#allocation2 + $0x100] sm:$0xff]
      %v4354 = vld [vmem:[#allocation2 + $0x108] sm:$0xff]
      %v4355 = vld [vmem:[#allocation2 + $0x110] sm:$0xff]
      %v4356 = vld [vmem:[#allocation2 + $0x118] sm:$0xff]
      %v4357 = vld [vmem:[#allocation2 + $0x120] sm:$0xff]
      %v4358 = vld [vmem:[#allocation2 + $0x128] sm:$0xff]
      %v4359 = vld [vmem:[#allocation2 + $0x130] sm:$0xff]
      %v4360 = vld [vmem:[#allocation2 + $0xa9] sm:$0xff]
      %v4361 = vld [vmem:[#allocation2 + $0xb1] sm:$0xff]
      %v4362 = vld [vmem:[#allocation2 + $0xb9] sm:$0xff]
      %v4363 = vld [vmem:[#allocation2 + $0xc1] sm:$0xff]
      %v4364 = vld [vmem:[#allocation2 + $0xc9] sm:$0xff]
      %v4365 = vld [vmem:[#allocation2 + $0xd1] sm:$0xff]
      %v4366 = vld [vmem:[#allocation2 + $0xd9] sm:$0xff]
      %v4367 = vld [vmem:[#allocation2 + $0xe1] sm:$0xff]
      %v4368 = vld [vmem:[#allocation2 + $0xe9] sm:$0xff]
      %v4369 = vld [vmem:[#allocation2 + $0xf1] sm:$0xff]
      %v4370 = vld [vmem:[#allocation2 + $0xf9] sm:$0xff]
      %v4371 = vld [vmem:[#allocation2 + $0x101] sm:$0xff]
      %v4372 = vld [vmem:[#allocation2 + $0x109] sm:$0xff]
      %v4373 = vld [vmem:[#allocation2 + $0x111] sm:$0xff]
      %v4374 = vld [vmem:[#allocation2 + $0x119] sm:$0xff]
      %v4375 = vld [vmem:[#allocation2 + $0x121] sm:$0xff]
      %v4376 = vld [vmem:[#allocation2 + $0x129] sm:$0xff]
      %v4377 = vld [vmem:[#allocation2 + $0x131] sm:$0xff]
      %v4378 = vld [vmem:[#allocation2 + $0x139] sm:$0xff]
      %v4379 = vld [vmem:[#allocation2 + $0x141] sm:$0xff]
      %v4380 = vld [vmem:[#allocation2 + $0xba] sm:$0xff]
      %v4381 = vld [vmem:[#allocation2 + $0xc2] sm:$0xff]
      %v4382 = vld [vmem:[#allocation2 + $0xca] sm:$0xff]
      %v4383 = vld [vmem:[#allocation2 + $0xd2] sm:$0xff]
      %v4384 = vld [vmem:[#allocation2 + $0xda] sm:$0xff]
      %v4385 = vld [vmem:[#allocation2 + $0xe2] sm:$0xff]
      %v4386 = vld [vmem:[#allocation2 + $0xea] sm:$0xff]
      %v4387 = vld [vmem:[#allocation2 + $0xf2] sm:$0xff]
      %v4388 = vld [vmem:[#allocation2 + $0xfa] sm:$0xff]
      %v4389 = vld [vmem:[#allocation2 + $0x102] sm:$0xff]
      %v4390 = vld [vmem:[#allocation2 + $0x10a] sm:$0xff]
      %v4391 = vld [vmem:[#allocation2 + $0x112] sm:$0xff]
      %v4392 = vld [vmem:[#allocation2 + $0x11a] sm:$0xff]
      %v4393 = vld [vmem:[#allocation2 + $0x122] sm:$0xff]
      %v4394 = vld [vmem:[#allocation2 + $0x12a] sm:$0xff]
      %v4395 = vld [vmem:[#allocation2 + $0x132] sm:$0xff]
      %v4396 = vld [vmem:[#allocation2 + $0x13a] sm:$0xff]
      %v4397 = vld [vmem:[#allocation2 + $0x142] sm:$0xff]
      %v4398 = vld [vmem:[#allocation2 + $0xbb] sm:$0xff]
      %v4399 = vld [vmem:[#allocation2 + $0xc3] sm:$0xff]
      %v4400 = vld [vmem:[#allocation2 + $0xcb] sm:$0xff]
      %v4401 = vld [vmem:[#allocation2 + $0xd3] sm:$0xff]
      %v4402 = vld [vmem:[#allocation2 + $0xdb] sm:$0xff]
      %v4403 = vld [vmem:[#allocation2 + $0xe3] sm:$0xff]
      %v4404 = vld [vmem:[#allocation2 + $0xeb] sm:$0xff]
      %v4405 = vld [vmem:[#allocation2 + $0xf3] sm:$0xff]
      %v4406 = vld [vmem:[#allocation2 + $0xfb] sm:$0xff]
      %v4407 = vld [vmem:[#allocation2 + $0x103] sm:$0xff]
      %v4408 = vld [vmem:[#allocation2 + $0x10b] sm:$0xff]
      %v4409 = vld [vmem:[#allocation2 + $0x113] sm:$0xff]
      %v4410 = vld [vmem:[#allocation2 + $0x11b] sm:$0xff]
      %v4411 = vld [vmem:[#allocation2 + $0x123] sm:$0xff]
      %v4412 = vld [vmem:[#allocation2 + $0x12b] sm:$0xff]
      %v4413 = vld [vmem:[#allocation2 + $0x133] sm:$0xff]
      %v4414 = vld [vmem:[#allocation2 + $0x13b] sm:$0xff]
      %v4415 = vld [vmem:[#allocation2 + $0x143] sm:$0xff]
      %4434 = vrot.lane.b32.xlu0 %v4304, 8
      %v4435 = vpop.permute.xlu0 %4434
      %4436 = vrot.lane.b32.xlu0 %v4305, 8
      %v4437 = vpop.permute.xlu0 %4436
      %4438 = vrot.lane.b32.xlu0 %v4306, 8
      %v4439 = vpop.permute.xlu0 %4438
      %4440 = vrot.lane.b32.xlu0 %v4307, 8
      %v4441 = vpop.permute.xlu0 %4440
      %4442 = vrot.lane.b32.xlu0 %v4308, 8
      %v4443 = vpop.permute.xlu0 %4442
      %4444 = vrot.lane.b32.xlu0 %v4309, 8
      %v4445 = vpop.permute.xlu0 %4444
      %4446 = vrot.lane.b32.xlu0 %v4310, 8
      %v4447 = vpop.permute.xlu0 %4446
      %4448 = vrot.lane.b32.xlu0 %v4311, 8
      %v4449 = vpop.permute.xlu0 %4448
      %4450 = vrot.lane.b32.xlu0 %v4312, 8
      %v4451 = vpop.permute.xlu0 %4450
      %4452 = vrot.lane.b32.xlu0 %v4313, 8
      %v4453 = vpop.permute.xlu0 %4452
      %4454 = vrot.lane.b32.xlu0 %v4314, 8
      %v4455 = vpop.permute.xlu0 %4454
      %4456 = vrot.lane.b32.xlu0 %v4315, 8
      %v4457 = vpop.permute.xlu0 %4456
      %4458 = vrot.lane.b32.xlu0 %v4316, 8
      %v4459 = vpop.permute.xlu0 %4458
      %4460 = vrot.lane.b32.xlu0 %v4317, 8
      %v4461 = vpop.permute.xlu0 %4460
      %4462 = vrot.lane.b32.xlu0 %v4318, 8
      %v4463 = vpop.permute.xlu0 %4462
      %4464 = vrot.lane.b32.xlu0 %v4319, 8
      %v4465 = vpop.permute.xlu0 %4464
      %4466 = vrot.lane.b32.xlu0 %v4320, 8
      %v4467 = vpop.permute.xlu0 %4466
      %4468 = vrot.lane.b32.xlu0 %v4321, 8
      %v4469 = vpop.permute.xlu0 %4468
      %4506 = vrot.lane.b32.xlu0 %v4322, 16
      %v4507 = vpop.permute.xlu0 %4506
      %4508 = vrot.lane.b32.xlu0 %v4323, 16
      %v4509 = vpop.permute.xlu0 %4508
      %4510 = vrot.lane.b32.xlu0 %v4324, 16
      %v4511 = vpop.permute.xlu0 %4510
      %4512 = vrot.lane.b32.xlu0 %v4325, 16
      %v4513 = vpop.permute.xlu0 %4512
      %4514 = vrot.lane.b32.xlu0 %v4326, 16
      %v4515 = vpop.permute.xlu0 %4514
      %4516 = vrot.lane.b32.xlu0 %v4327, 16
      %v4517 = vpop.permute.xlu0 %4516
      %4518 = vrot.lane.b32.xlu0 %v4328, 16
      %v4519 = vpop.permute.xlu0 %4518
      %4520 = vrot.lane.b32.xlu0 %v4329, 16
      %v4521 = vpop.permute.xlu0 %4520
      %4522 = vrot.lane.b32.xlu0 %v4330, 16
      %v4523 = vpop.permute.xlu0 %4522
      %4524 = vrot.lane.b32.xlu0 %v4331, 16
      %v4525 = vpop.permute.xlu0 %4524
      %4526 = vrot.lane.b32.xlu0 %v4332, 16
      %v4527 = vpop.permute.xlu0 %4526
      %4528 = vrot.lane.b32.xlu0 %v4333, 16
      %v4529 = vpop.permute.xlu0 %4528
      %4530 = vrot.lane.b32.xlu0 %v4334, 16
      %v4531 = vpop.permute.xlu0 %4530
      %4532 = vrot.lane.b32.xlu0 %v4335, 16
      %v4533 = vpop.permute.xlu0 %4532
      %4534 = vrot.lane.b32.xlu0 %v4336, 16
      %v4535 = vpop.permute.xlu0 %4534
      %4536 = vrot.lane.b32.xlu0 %v4337, 16
      %v4537 = vpop.permute.xlu0 %4536
      %4538 = vrot.lane.b32.xlu0 %v4338, 16
      %v4539 = vpop.permute.xlu0 %4538
      %4540 = vrot.lane.b32.xlu0 %v4339, 16
      %v4541 = vpop.permute.xlu0 %4540
      %4562 = vrot.lane.b32.xlu0 %v4324, 24
      %v4563 = vpop.permute.xlu0 %4562
      %4564 = vrot.lane.b32.xlu0 %v4325, 24
      %v4565 = vpop.permute.xlu0 %4564
      %4566 = vrot.lane.b32.xlu0 %v4326, 24
      %v4567 = vpop.permute.xlu0 %4566
      %4568 = vrot.lane.b32.xlu0 %v4327, 24
      %v4569 = vpop.permute.xlu0 %4568
      %4570 = vrot.lane.b32.xlu0 %v4328, 24
      %v4571 = vpop.permute.xlu0 %4570
      %4572 = vrot.lane.b32.xlu0 %v4329, 24
      %v4573 = vpop.permute.xlu0 %4572
      %4574 = vrot.lane.b32.xlu0 %v4330, 24
      %v4575 = vpop.permute.xlu0 %4574
      %4576 = vrot.lane.b32.xlu0 %v4331, 24
      %v4577 = vpop.permute.xlu0 %4576
      %4578 = vrot.lane.b32.xlu0 %v4332, 24
      %v4579 = vpop.permute.xlu0 %4578
      %4580 = vrot.lane.b32.xlu0 %v4333, 24
      %v4581 = vpop.permute.xlu0 %4580
      %4582 = vrot.lane.b32.xlu0 %v4334, 24
      %v4583 = vpop.permute.xlu0 %4582
      %4584 = vrot.lane.b32.xlu0 %v4335, 24
      %v4585 = vpop.permute.xlu0 %4584
      %4586 = vrot.lane.b32.xlu0 %v4336, 24
      %v4587 = vpop.permute.xlu0 %4586
      %4588 = vrot.lane.b32.xlu0 %v4337, 24
      %v4589 = vpop.permute.xlu0 %4588
      %4590 = vrot.lane.b32.xlu0 %v4338, 24
      %v4591 = vpop.permute.xlu0 %4590
      %4592 = vrot.lane.b32.xlu0 %v4339, 24
      %v4593 = vpop.permute.xlu0 %4592
      %4594 = vrot.lane.b32.xlu0 %v4340, 24
      %v4595 = vpop.permute.xlu0 %4594
      %4596 = vrot.lane.b32.xlu0 %v4341, 24
      %v4597 = vpop.permute.xlu0 %4596
      %4634 = vrot.lane.b32.xlu0 %v4342, 32
      %v4635 = vpop.permute.xlu0 %4634
      %4636 = vrot.lane.b32.xlu0 %v4343, 32
      %v4637 = vpop.permute.xlu0 %4636
      %4638 = vrot.lane.b32.xlu0 %v4344, 32
      %v4639 = vpop.permute.xlu0 %4638
      %4640 = vrot.lane.b32.xlu0 %v4345, 32
      %v4641 = vpop.permute.xlu0 %4640
      %4642 = vrot.lane.b32.xlu0 %v4346, 32
      %v4643 = vpop.permute.xlu0 %4642
      %4644 = vrot.lane.b32.xlu0 %v4347, 32
      %v4645 = vpop.permute.xlu0 %4644
      %4646 = vrot.lane.b32.xlu0 %v4348, 32
      %v4647 = vpop.permute.xlu0 %4646
      %4648 = vrot.lane.b32.xlu0 %v4349, 32
      %v4649 = vpop.permute.xlu0 %4648
      %4650 = vrot.lane.b32.xlu0 %v4350, 32
      %v4651 = vpop.permute.xlu0 %4650
      %4652 = vrot.lane.b32.xlu0 %v4351, 32
      %v4653 = vpop.permute.xlu0 %4652
      %4654 = vrot.lane.b32.xlu0 %v4352, 32
      %v4655 = vpop.permute.xlu0 %4654
      %4656 = vrot.lane.b32.xlu0 %v4353, 32
      %v4657 = vpop.permute.xlu0 %4656
      %4658 = vrot.lane.b32.xlu0 %v4354, 32
      %v4659 = vpop.permute.xlu0 %4658
      %4660 = vrot.lane.b32.xlu0 %v4355, 32
      %v4661 = vpop.permute.xlu0 %4660
      %4662 = vrot.lane.b32.xlu0 %v4356, 32
      %v4663 = vpop.permute.xlu0 %4662
      %4664 = vrot.lane.b32.xlu0 %v4357, 32
      %v4665 = vpop.permute.xlu0 %4664
      %4666 = vrot.lane.b32.xlu0 %v4358, 32
      %v4667 = vpop.permute.xlu0 %4666
      %4668 = vrot.lane.b32.xlu0 %v4359, 32
      %v4669 = vpop.permute.xlu0 %4668
      %4706 = vrot.lane.b32.xlu0 %v4360, 40
      %v4707 = vpop.permute.xlu0 %4706
      %4708 = vrot.lane.b32.xlu0 %v4361, 40
      %v4709 = vpop.permute.xlu0 %4708
      %4710 = vrot.lane.b32.xlu0 %v4362, 40
      %v4711 = vpop.permute.xlu0 %4710
      %4712 = vrot.lane.b32.xlu0 %v4363, 40
      %v4713 = vpop.permute.xlu0 %4712
      %4714 = vrot.lane.b32.xlu0 %v4364, 40
      %v4715 = vpop.permute.xlu0 %4714
      %4716 = vrot.lane.b32.xlu0 %v4365, 40
      %v4717 = vpop.permute.xlu0 %4716
      %4718 = vrot.lane.b32.xlu0 %v4366, 40
      %v4719 = vpop.permute.xlu0 %4718
      %4720 = vrot.lane.b32.xlu0 %v4367, 40
      %v4721 = vpop.permute.xlu0 %4720
      %4722 = vrot.lane.b32.xlu0 %v4368, 40
      %v4723 = vpop.permute.xlu0 %4722
      %4724 = vrot.lane.b32.xlu0 %v4369, 40
      %v4725 = vpop.permute.xlu0 %4724
      %4726 = vrot.lane.b32.xlu0 %v4370, 40
      %v4727 = vpop.permute.xlu0 %4726
      %4728 = vrot.lane.b32.xlu0 %v4371, 40
      %v4729 = vpop.permute.xlu0 %4728
      %4730 = vrot.lane.b32.xlu0 %v4372, 40
      %v4731 = vpop.permute.xlu0 %4730
      %4732 = vrot.lane.b32.xlu0 %v4373, 40
      %v4733 = vpop.permute.xlu0 %4732
      %4734 = vrot.lane.b32.xlu0 %v4374, 40
      %v4735 = vpop.permute.xlu0 %4734
      %4736 = vrot.lane.b32.xlu0 %v4375, 40
      %v4737 = vpop.permute.xlu0 %4736
      %4738 = vrot.lane.b32.xlu0 %v4376, 40
      %v4739 = vpop.permute.xlu0 %4738
      %4740 = vrot.lane.b32.xlu0 %v4377, 40
      %v4741 = vpop.permute.xlu0 %4740
      %4762 = vrot.lane.b32.xlu0 %v4362, 48
      %v4763 = vpop.permute.xlu0 %4762
      %4764 = vrot.lane.b32.xlu0 %v4363, 48
      %v4765 = vpop.permute.xlu0 %4764
      %4766 = vrot.lane.b32.xlu0 %v4364, 48
      %v4767 = vpop.permute.xlu0 %4766
      %4768 = vrot.lane.b32.xlu0 %v4365, 48
      %v4769 = vpop.permute.xlu0 %4768
      %4770 = vrot.lane.b32.xlu0 %v4366, 48
      %v4771 = vpop.permute.xlu0 %4770
      %4772 = vrot.lane.b32.xlu0 %v4367, 48
      %v4773 = vpop.permute.xlu0 %4772
      %4774 = vrot.lane.b32.xlu0 %v4368, 48
      %v4775 = vpop.permute.xlu0 %4774
      %4776 = vrot.lane.b32.xlu0 %v4369, 48
      %v4777 = vpop.permute.xlu0 %4776
      %4778 = vrot.lane.b32.xlu0 %v4370, 48
      %v4779 = vpop.permute.xlu0 %4778
      %4780 = vrot.lane.b32.xlu0 %v4371, 48
      %v4781 = vpop.permute.xlu0 %4780
      %4782 = vrot.lane.b32.xlu0 %v4372, 48
      %v4783 = vpop.permute.xlu0 %4782
      %4784 = vrot.lane.b32.xlu0 %v4373, 48
      %v4785 = vpop.permute.xlu0 %4784
      %4786 = vrot.lane.b32.xlu0 %v4374, 48
      %v4787 = vpop.permute.xlu0 %4786
      %4788 = vrot.lane.b32.xlu0 %v4375, 48
      %v4789 = vpop.permute.xlu0 %4788
      %4790 = vrot.lane.b32.xlu0 %v4376, 48
      %v4791 = vpop.permute.xlu0 %4790
      %4792 = vrot.lane.b32.xlu0 %v4377, 48
      %v4793 = vpop.permute.xlu0 %4792
      %4794 = vrot.lane.b32.xlu0 %v4378, 48
      %v4795 = vpop.permute.xlu0 %4794
      %4796 = vrot.lane.b32.xlu0 %v4379, 48
      %v4797 = vpop.permute.xlu0 %4796
      %4834 = vrot.lane.b32.xlu0 %v4380, 56
      %v4835 = vpop.permute.xlu0 %4834
      %4836 = vrot.lane.b32.xlu0 %v4381, 56
      %v4837 = vpop.permute.xlu0 %4836
      %4838 = vrot.lane.b32.xlu0 %v4382, 56
      %v4839 = vpop.permute.xlu0 %4838
      %4840 = vrot.lane.b32.xlu0 %v4383, 56
      %v4841 = vpop.permute.xlu0 %4840
      %4842 = vrot.lane.b32.xlu0 %v4384, 56
      %v4843 = vpop.permute.xlu0 %4842
      %4844 = vrot.lane.b32.xlu0 %v4385, 56
      %v4845 = vpop.permute.xlu0 %4844
      %4846 = vrot.lane.b32.xlu0 %v4386, 56
      %v4847 = vpop.permute.xlu0 %4846
      %4848 = vrot.lane.b32.xlu0 %v4387, 56
      %v4849 = vpop.permute.xlu0 %4848
      %4850 = vrot.lane.b32.xlu0 %v4388, 56
      %v4851 = vpop.permute.xlu0 %4850
      %4852 = vrot.lane.b32.xlu0 %v4389, 56
      %v4853 = vpop.permute.xlu0 %4852
      %4854 = vrot.lane.b32.xlu0 %v4390, 56
      %v4855 = vpop.permute.xlu0 %4854
      %4856 = vrot.lane.b32.xlu0 %v4391, 56
      %v4857 = vpop.permute.xlu0 %4856
      %4858 = vrot.lane.b32.xlu0 %v4392, 56
      %v4859 = vpop.permute.xlu0 %4858
      %4860 = vrot.lane.b32.xlu0 %v4393, 56
      %v4861 = vpop.permute.xlu0 %4860
      %4862 = vrot.lane.b32.xlu0 %v4394, 56
      %v4863 = vpop.permute.xlu0 %4862
      %4864 = vrot.lane.b32.xlu0 %v4395, 56
      %v4865 = vpop.permute.xlu0 %4864
      %4866 = vrot.lane.b32.xlu0 %v4396, 56
      %v4867 = vpop.permute.xlu0 %4866
      %4868 = vrot.lane.b32.xlu0 %v4397, 56
      %v4869 = vpop.permute.xlu0 %4868
      %4906 = vrot.lane.b32.xlu0 %v4398, 64
      %v4907 = vpop.permute.xlu0 %4906
      %4908 = vrot.lane.b32.xlu0 %v4399, 64
      %v4909 = vpop.permute.xlu0 %4908
      %4910 = vrot.lane.b32.xlu0 %v4400, 64
      %v4911 = vpop.permute.xlu0 %4910
      %4912 = vrot.lane.b32.xlu0 %v4401, 64
      %v4913 = vpop.permute.xlu0 %4912
      %4914 = vrot.lane.b32.xlu0 %v4402, 64
      %v4915 = vpop.permute.xlu0 %4914
      %4916 = vrot.lane.b32.xlu0 %v4403, 64
      %v4917 = vpop.permute.xlu0 %4916
      %4918 = vrot.lane.b32.xlu0 %v4404, 64
      %v4919 = vpop.permute.xlu0 %4918
      %4920 = vrot.lane.b32.xlu0 %v4405, 64
      %v4921 = vpop.permute.xlu0 %4920
      %4922 = vrot.lane.b32.xlu0 %v4406, 64
      %v4923 = vpop.permute.xlu0 %4922
      %4924 = vrot.lane.b32.xlu0 %v4407, 64
      %v4925 = vpop.permute.xlu0 %4924
      %4926 = vrot.lane.b32.xlu0 %v4408, 64
      %v4927 = vpop.permute.xlu0 %4926
      %4928 = vrot.lane.b32.xlu0 %v4409, 64
      %v4929 = vpop.permute.xlu0 %4928
      %4930 = vrot.lane.b32.xlu0 %v4410, 64
      %v4931 = vpop.permute.xlu0 %4930
      %4932 = vrot.lane.b32.xlu0 %v4411, 64
      %v4933 = vpop.permute.xlu0 %4932
      %4934 = vrot.lane.b32.xlu0 %v4412, 64
      %v4935 = vpop.permute.xlu0 %4934
      %4936 = vrot.lane.b32.xlu0 %v4413, 64
      %v4937 = vpop.permute.xlu0 %4936
      %4938 = vrot.lane.b32.xlu0 %v4414, 64
      %v4939 = vpop.permute.xlu0 %4938
      %4940 = vrot.lane.b32.xlu0 %v4415, 64
      %v4941 = vpop.permute.xlu0 %4940
      %v4960 = vsel %vm446, %v4286, %v4435
      %v4961 = vsel %vm446, %v4287, %v4437
      %v4962 = vsel %vm446, %v4288, %v4439
      %v4963 = vsel %vm446, %v4289, %v4441
      %v4964 = vsel %vm446, %v4290, %v4443
      %v4965 = vsel %vm446, %v4291, %v4445
      %v4966 = vsel %vm446, %v4292, %v4447
      %v4967 = vsel %vm446, %v4293, %v4449
      %v4968 = vsel %vm446, %v4294, %v4451
      %v4969 = vsel %vm446, %v4295, %v4453
      %v4970 = vsel %vm446, %v4296, %v4455
      %v4971 = vsel %vm446, %v4297, %v4457
      %v4972 = vsel %vm446, %v4298, %v4459
      %v4973 = vsel %vm446, %v4299, %v4461
      %v4974 = vsel %vm446, %v4300, %v4463
      %v4975 = vsel %vm446, %v4301, %v4465
      %v4976 = vsel %vm446, %v4302, %v4467
      %v4977 = vsel %vm446, %v4303, %v4469
      %v4978 = vsel %vm1275, %v4960, %v4507
      %v4979 = vsel %vm1275, %v4961, %v4509
      %v4980 = vsel %vm1275, %v4962, %v4511
      %v4981 = vsel %vm1275, %v4963, %v4513
      %v4982 = vsel %vm1275, %v4964, %v4515
      %v4983 = vsel %vm1275, %v4965, %v4517
      %v4984 = vsel %vm1275, %v4966, %v4519
      %v4985 = vsel %vm1275, %v4967, %v4521
      %v4986 = vsel %vm1275, %v4968, %v4523
      %v4987 = vsel %vm1275, %v4969, %v4525
      %v4988 = vsel %vm1275, %v4970, %v4527
      %v4989 = vsel %vm1275, %v4971, %v4529
      %v4990 = vsel %vm1275, %v4972, %v4531
      %v4991 = vsel %vm1275, %v4973, %v4533
      %v4992 = vsel %vm1275, %v4974, %v4535
      %v4993 = vsel %vm1275, %v4975, %v4537
      %v4994 = vsel %vm1275, %v4976, %v4539
      %v4995 = vsel %vm1275, %v4977, %v4541
      %v4996 = vsel %vm1313, %v4978, %v4563
      %v4997 = vsel %vm1313, %v4979, %v4565
      %v4998 = vsel %vm1313, %v4980, %v4567
      %v4999 = vsel %vm1313, %v4981, %v4569
      %v5000 = vsel %vm1313, %v4982, %v4571
      %v5001 = vsel %vm1313, %v4983, %v4573
      %v5002 = vsel %vm1313, %v4984, %v4575
      %v5003 = vsel %vm1313, %v4985, %v4577
      %v5004 = vsel %vm1313, %v4986, %v4579
      %v5005 = vsel %vm1313, %v4987, %v4581
      %v5006 = vsel %vm1313, %v4988, %v4583
      %v5007 = vsel %vm1313, %v4989, %v4585
      %v5008 = vsel %vm1313, %v4990, %v4587
      %v5009 = vsel %vm1313, %v4991, %v4589
      %v5010 = vsel %vm1313, %v4992, %v4591
      %v5011 = vsel %vm1313, %v4993, %v4593
      %v5012 = vsel %vm1313, %v4994, %v4595
      %v5013 = vsel %vm1313, %v4995, %v4597
      %v5014 = vsel %vm1351, %v4996, %v4635
      %v5015 = vsel %vm1351, %v4997, %v4637
      %v5016 = vsel %vm1351, %v4998, %v4639
      %v5017 = vsel %vm1351, %v4999, %v4641
      %v5018 = vsel %vm1351, %v5000, %v4643
      %v5019 = vsel %vm1351, %v5001, %v4645
      %v5020 = vsel %vm1351, %v5002, %v4647
      %v5021 = vsel %vm1351, %v5003, %v4649
      %v5022 = vsel %vm1351, %v5004, %v4651
      %v5023 = vsel %vm1351, %v5005, %v4653
      %v5024 = vsel %vm1351, %v5006, %v4655
      %v5025 = vsel %vm1351, %v5007, %v4657
      %v5026 = vsel %vm1351, %v5008, %v4659
      %v5027 = vsel %vm1351, %v5009, %v4661
      %v5028 = vsel %vm1351, %v5010, %v4663
      %v5029 = vsel %vm1351, %v5011, %v4665
      %v5030 = vsel %vm1351, %v5012, %v4667
      %v5031 = vsel %vm1351, %v5013, %v4669
      %v5032 = vsel %vm3827, %v5014, %v4707
      %v5033 = vsel %vm3827, %v5015, %v4709
      %v5034 = vsel %vm3827, %v5016, %v4711
      %v5035 = vsel %vm3827, %v5017, %v4713
      %v5036 = vsel %vm3827, %v5018, %v4715
      %v5037 = vsel %vm3827, %v5019, %v4717
      %v5038 = vsel %vm3827, %v5020, %v4719
      %v5039 = vsel %vm3827, %v5021, %v4721
      %v5040 = vsel %vm3827, %v5022, %v4723
      %v5041 = vsel %vm3827, %v5023, %v4725
      %v5042 = vsel %vm3827, %v5024, %v4727
      %v5043 = vsel %vm3827, %v5025, %v4729
      %v5044 = vsel %vm3827, %v5026, %v4731
      %v5045 = vsel %vm3827, %v5027, %v4733
      %v5046 = vsel %vm3827, %v5028, %v4735
      %v5047 = vsel %vm3827, %v5029, %v4737
      %v5048 = vsel %vm3827, %v5030, %v4739
      %v5049 = vsel %vm3827, %v5031, %v4741
      %v5050 = vsel %vm3846, %v5032, %v4763
      %v5051 = vsel %vm3846, %v5033, %v4765
      %v5052 = vsel %vm3846, %v5034, %v4767
      %v5053 = vsel %vm3846, %v5035, %v4769
      %v5054 = vsel %vm3846, %v5036, %v4771
      %v5055 = vsel %vm3846, %v5037, %v4773
      %v5056 = vsel %vm3846, %v5038, %v4775
      %v5057 = vsel %vm3846, %v5039, %v4777
      %v5058 = vsel %vm3846, %v5040, %v4779
      %v5059 = vsel %vm3846, %v5041, %v4781
      %v5060 = vsel %vm3846, %v5042, %v4783
      %v5061 = vsel %vm3846, %v5043, %v4785
      %v5062 = vsel %vm3846, %v5044, %v4787
      %v5063 = vsel %vm3846, %v5045, %v4789
      %v5064 = vsel %vm3846, %v5046, %v4791
      %v5065 = vsel %vm3846, %v5047, %v4793
      %v5066 = vsel %vm3846, %v5048, %v4795
      %v5067 = vsel %vm3846, %v5049, %v4797
      %v5068 = vsel %vm3865, %v5050, %v4835
      %v5069 = vsel %vm3865, %v5051, %v4837
      %v5070 = vsel %vm3865, %v5052, %v4839
      %v5071 = vsel %vm3865, %v5053, %v4841
      %v5072 = vsel %vm3865, %v5054, %v4843
      %v5073 = vsel %vm3865, %v5055, %v4845
      %v5074 = vsel %vm3865, %v5056, %v4847
      %v5075 = vsel %vm3865, %v5057, %v4849
      %v5076 = vsel %vm3865, %v5058, %v4851
      %v5077 = vsel %vm3865, %v5059, %v4853
      %v5078 = vsel %vm3865, %v5060, %v4855
      %v5079 = vsel %vm3865, %v5061, %v4857
      %v5080 = vsel %vm3865, %v5062, %v4859
      %v5081 = vsel %vm3865, %v5063, %v4861
      %v5082 = vsel %vm3865, %v5064, %v4863
      %v5083 = vsel %vm3865, %v5065, %v4865
      %v5084 = vsel %vm3865, %v5066, %v4867
      %v5085 = vsel %vm3865, %v5067, %v4869
      %v5086 = vsel %vm3884, %v5068, %v4907
      %v5087 = vsel %vm3884, %v5069, %v4909
      %v5088 = vsel %vm3884, %v5070, %v4911
      %v5089 = vsel %vm3884, %v5071, %v4913
      %v5090 = vsel %vm3884, %v5072, %v4915
      %v5091 = vsel %vm3884, %v5073, %v4917
      %v5092 = vsel %vm3884, %v5074, %v4919
      %v5093 = vsel %vm3884, %v5075, %v4921
      %v5094 = vsel %vm3884, %v5076, %v4923
      %v5095 = vsel %vm3884, %v5077, %v4925
      %v5096 = vsel %vm3884, %v5078, %v4927
      %v5097 = vsel %vm3884, %v5079, %v4929
      %v5098 = vsel %vm3884, %v5080, %v4931
      %v5099 = vsel %vm3884, %v5081, %v4933
      %v5100 = vsel %vm3884, %v5082, %v4935
      %v5101 = vsel %vm3884, %v5083, %v4937
      %v5102 = vsel %vm3884, %v5084, %v4939
      %v5103 = vsel %vm3884, %v5085, %v4941
      %v5104 = vpack.c.bf16 %v5087, %v5086
      %v5105 = vpack.c.bf16 %v5089, %v5088
      %v5106 = vpack.c.bf16 %v5091, %v5090
      %v5107 = vpack.c.bf16 %v5093, %v5092
      %v5108 = vpack.c.bf16 %v5095, %v5094
      %v5109 = vpack.c.bf16 %v5097, %v5096
      %v5110 = vpack.c.bf16 %v5099, %v5098
      %v5111 = vpack.c.bf16 %v5101, %v5100
      %v5112 = vpack.c.bf16 %v5103, %v5102
      %v5114 = vsel %vm3942, %v5104, 0
      %v5117 = vsel %vm3942, %v5105, 0
      %v5120 = vsel %vm3942, %v5106, 0
      %v5123 = vsel %vm3942, %v5107, 0
      %v5126 = vsel %vm3942, %v5108, 0
      %v5129 = vsel %vm3942, %v5109, 0
      %v5132 = vsel %vm3942, %v5110, 0
      %v5135 = vsel %vm3942, %v5111, 0
      %v5138 = vsel %vm3942, %v5112, 0
      %5140 = vmatpush.bf16.msra.mxu0 0
      %5141 = vmatpush.bf16.msra.mxu0 0
      %5142 = vmatpush.bf16.msra.mxu0 0
      %5143 = vmatpush.bf16.msra.mxu0 %v3972
      %5144 = vmatpush.bf16.msra.mxu0 %v3936
      %5145 = vmatpush.bf16.msra.mxu0 %v3935
      %5146 = vmatpush.bf16.msra.mxu0 %v3934
      %5147 = vmatpush.bf16.msra.mxu0 %v3933
      %5148 = vmatmul.bf16.gmra.mxu0 %v5114
      %v5149 = vpop.f32.mrf.mxu0
      %v5150 = vadd.f32 %v3913, %v5149
      %v5151 = vpop.f32.mrf.mxu0
      %v5152 = vadd.f32 %v3913, %v5151
      %5153 = vmatmul.bf16.gmra.mxu0 %v5117
      %v5154 = vpop.f32.mrf.mxu0
      %v5155 = vadd.f32 %v3913, %v5154
      %v5156 = vpop.f32.mrf.mxu0
      %v5157 = vadd.f32 %v3913, %v5156
      %5158 = vmatmul.bf16.gmra.mxu0 %v5120
      %v5159 = vpop.f32.mrf.mxu0
      %v5160 = vadd.f32 %v3913, %v5159
      %v5161 = vpop.f32.mrf.mxu0
      %v5162 = vadd.f32 %v3913, %v5161
      %5163 = vmatmul.bf16.gmra.mxu0 %v5123
      %v5164 = vpop.f32.mrf.mxu0
      %v5165 = vadd.f32 %v3913, %v5164
      %v5166 = vpop.f32.mrf.mxu0
      %v5167 = vadd.f32 %v3913, %v5166
      %5168 = vmatmul.bf16.gmra.mxu0 %v5126
      %v5169 = vpop.f32.mrf.mxu0
      %v5170 = vadd.f32 %v3913, %v5169
      %v5171 = vpop.f32.mrf.mxu0
      %v5172 = vadd.f32 %v3913, %v5171
      %5173 = vmatmul.bf16.gmra.mxu0 %v5129
      %v5174 = vpop.f32.mrf.mxu0
      %v5175 = vadd.f32 %v3913, %v5174
      %v5176 = vpop.f32.mrf.mxu0
      %v5177 = vadd.f32 %v3913, %v5176
      %5178 = vmatmul.bf16.gmra.mxu0 %v5132
      %v5179 = vpop.f32.mrf.mxu0
      %v5180 = vadd.f32 %v3913, %v5179
      %v5181 = vpop.f32.mrf.mxu0
      %v5182 = vadd.f32 %v3913, %v5181
      %5183 = vmatmul.bf16.gmra.mxu0 %v5135
      %v5184 = vpop.f32.mrf.mxu0
      %v5185 = vadd.f32 %v3913, %v5184
      %v5186 = vpop.f32.mrf.mxu0
      %v5187 = vadd.f32 %v3913, %v5186
      %5188 = vmatmul.bf16.gmra.mxu0 %v5138
      %v5189 = vpop.f32.mrf.mxu0
      %v5190 = vadd.f32 %v3913, %v5189
      %v5191 = vpop.f32.mrf.mxu0
      %v5192 = vadd.f32 %v3913, %v5191
      %5193 = vdwg.mxu0
      %vm5194 = vcmp.ge.f32.partialorder %v5150, 0.0
      %vm5195 = vcmp.ge.f32.partialorder %v5152, 0.0
      %vm5196 = vcmp.ge.f32.partialorder %v5155, 0.0
      %vm5197 = vcmp.ge.f32.partialorder %v5157, 0.0
      %vm5198 = vcmp.ge.f32.partialorder %v5160, 0.0
      %vm5199 = vcmp.ge.f32.partialorder %v5162, 0.0
      %vm5200 = vcmp.ge.f32.partialorder %v5165, 0.0
      %vm5201 = vcmp.ge.f32.partialorder %v5167, 0.0
      %vm5202 = vcmp.ge.f32.partialorder %v5170, 0.0
      %vm5203 = vcmp.ge.f32.partialorder %v5172, 0.0
      %vm5204 = vcmp.ge.f32.partialorder %v5175, 0.0
      %vm5205 = vcmp.ge.f32.partialorder %v5177, 0.0
      %vm5206 = vcmp.ge.f32.partialorder %v5180, 0.0
      %vm5207 = vcmp.ge.f32.partialorder %v5182, 0.0
      %vm5208 = vcmp.ge.f32.partialorder %v5185, 0.0
      %vm5209 = vcmp.ge.f32.partialorder %v5187, 0.0
      %vm5210 = vcmp.ge.f32.partialorder %v5190, 0.0
      %vm5211 = vcmp.ge.f32.partialorder %v5192, 0.0
      %v5212 = vmul.f32 %v5150, 0.2
      %v5213 = vmul.f32 %v5152, 0.2
      %v5214 = vmul.f32 %v5155, 0.2
      %v5215 = vmul.f32 %v5157, 0.2
      %v5216 = vmul.f32 %v5160, 0.2
      %v5217 = vmul.f32 %v5162, 0.2
      %v5218 = vmul.f32 %v5165, 0.2
      %v5219 = vmul.f32 %v5167, 0.2
      %v5220 = vmul.f32 %v5170, 0.2
      %v5221 = vmul.f32 %v5172, 0.2
      %v5222 = vmul.f32 %v5175, 0.2
      %v5223 = vmul.f32 %v5177, 0.2
      %v5224 = vmul.f32 %v5180, 0.2
      %v5225 = vmul.f32 %v5182, 0.2
      %v5226 = vmul.f32 %v5185, 0.2
      %v5227 = vmul.f32 %v5187, 0.2
      %v5228 = vmul.f32 %v5190, 0.2
      %v5229 = vmul.f32 %v5192, 0.2
      %v5230 = vsel %vm5194, %v5150, %v5212
      %v5231 = vsel %vm5195, %v5152, %v5213
      %v5232 = vsel %vm5196, %v5155, %v5214
      %v5233 = vsel %vm5197, %v5157, %v5215
      %v5234 = vsel %vm5198, %v5160, %v5216
      %v5235 = vsel %vm5199, %v5162, %v5217
      %v5236 = vsel %vm5200, %v5165, %v5218
      %v5237 = vsel %vm5201, %v5167, %v5219
      %v5238 = vsel %vm5202, %v5170, %v5220
      %v5239 = vsel %vm5203, %v5172, %v5221
      %v5240 = vsel %vm5204, %v5175, %v5222
      %v5241 = vsel %vm5205, %v5177, %v5223
      %v5242 = vsel %vm5206, %v5180, %v5224
      %v5243 = vsel %vm5207, %v5182, %v5225
      %v5244 = vsel %vm5208, %v5185, %v5226
      %v5245 = vsel %vm5209, %v5187, %v5227
      %v5246 = vsel %vm5210, %v5190, %v5228
      %v5247 = vsel %vm5211, %v5192, %v5229
      %v5248 = vld [vmem:[%s416 + $0xa8] sm:$0xff]
      %v5249 = vld [vmem:[%s416 + $0xb0] sm:$0xff]
      %v5250 = vld [vmem:[%s416 + $0xb8] sm:$0xff]
      %v5251 = vld [vmem:[%s416 + $0xc0] sm:$0xff]
      %v5252 = vld [vmem:[%s416 + $0xc8] sm:$0xff]
      %v5253 = vld [vmem:[%s416 + $0xd0] sm:$0xff]
      %v5254 = vld [vmem:[%s416 + $0xd8] sm:$0xff]
      %v5255 = vld [vmem:[%s416 + $0xe0] sm:$0xff]
      %v5256 = vld [vmem:[%s416 + $0xe8] sm:$0xff]
      %v5257 = vld [vmem:[%s416 + $0xf0] sm:$0xff]
      %v5258 = vld [vmem:[%s416 + $0xf8] sm:$0xff]
      %v5259 = vld [vmem:[%s416 + $0x100] sm:$0xff]
      %v5260 = vld [vmem:[%s416 + $0x108] sm:$0xff]
      %v5261 = vld [vmem:[%s416 + $0x110] sm:$0xff]
      %v5262 = vld [vmem:[%s416 + $0x118] sm:$0xff]
      %v5263 = vld [vmem:[%s416 + $0x120] sm:$0xff]
      %v5264 = vld [vmem:[%s416 + $0x128] sm:$0xff]
      %v5265 = vld [vmem:[%s416 + $0x130] sm:$0xff]
      %v5266 = vpack.c.bf16 %v5249, %v5248
      %v5267 = vpack.c.bf16 %v5251, %v5250
      %v5268 = vpack.c.bf16 %v5253, %v5252
      %v5269 = vpack.c.bf16 %v5255, %v5254
      %v5270 = vpack.c.bf16 %v5257, %v5256
      %v5271 = vpack.c.bf16 %v5259, %v5258
      %v5272 = vpack.c.bf16 %v5261, %v5260
      %v5273 = vpack.c.bf16 %v5263, %v5262
      %v5274 = vpack.c.bf16 %v5265, %v5264
      %v5276 = vsel %vm1219, %v5266, 0
      %v5279 = vsel %vm1219, %v5267, 0
      %v5282 = vsel %vm1219, %v5268, 0
      %v5285 = vsel %vm1219, %v5269, 0
      %v5288 = vsel %vm1219, %v5270, 0
      %v5291 = vsel %vm1219, %v5271, 0
      %v5294 = vsel %vm1219, %v5272, 0
      %v5297 = vsel %vm1219, %v5273, 0
      %v5300 = vsel %vm1219, %v5274, 0
      %5302 = vmatpush.bf16.msra.mxu0 0
      %5303 = vmatpush.bf16.msra.mxu0 0
      %5304 = vmatpush.bf16.msra.mxu0 0
      %5305 = vmatpush.bf16.msra.mxu0 0
      %5306 = vmatpush.bf16.msra.mxu0 0
      %5307 = vmatpush.bf16.msra.mxu0 0
      %5308 = vmatpush.bf16.msra.mxu0 0
      %5309 = vmatpush.bf16.msra.mxu0 %v4137
      %5310 = vmatmul.bf16.gmra.mxu0 %v5276
      %v5311 = vpop.f32.mrf.mxu0
      %v5312 = vadd.f32 0.0, %v5311
      %v5313 = vpop.f32.mrf.mxu0
      %v5314 = vadd.f32 0.0, %v5313
      %5315 = vmatmul.bf16.gmra.mxu0 %v5279
      %v5316 = vpop.f32.mrf.mxu0
      %v5317 = vadd.f32 0.0, %v5316
      %v5318 = vpop.f32.mrf.mxu0
      %v5319 = vadd.f32 0.0, %v5318
      %5320 = vmatmul.bf16.gmra.mxu0 %v5282
      %v5321 = vpop.f32.mrf.mxu0
      %v5322 = vadd.f32 0.0, %v5321
      %v5323 = vpop.f32.mrf.mxu0
      %v5324 = vadd.f32 0.0, %v5323
      %5325 = vmatmul.bf16.gmra.mxu0 %v5285
      %v5326 = vpop.f32.mrf.mxu0
      %v5327 = vadd.f32 0.0, %v5326
      %v5328 = vpop.f32.mrf.mxu0
      %v5329 = vadd.f32 0.0, %v5328
      %5330 = vmatmul.bf16.gmra.mxu0 %v5288
      %v5331 = vpop.f32.mrf.mxu0
      %v5332 = vadd.f32 0.0, %v5331
      %v5333 = vpop.f32.mrf.mxu0
      %v5334 = vadd.f32 0.0, %v5333
      %5335 = vmatmul.bf16.gmra.mxu0 %v5291
      %v5336 = vpop.f32.mrf.mxu0
      %v5337 = vadd.f32 0.0, %v5336
      %v5338 = vpop.f32.mrf.mxu0
      %v5339 = vadd.f32 0.0, %v5338
      %5340 = vmatmul.bf16.gmra.mxu0 %v5294
      %v5341 = vpop.f32.mrf.mxu0
      %v5342 = vadd.f32 0.0, %v5341
      %v5343 = vpop.f32.mrf.mxu0
      %v5344 = vadd.f32 0.0, %v5343
      %5345 = vmatmul.bf16.gmra.mxu0 %v5297
      %v5346 = vpop.f32.mrf.mxu0
      %v5347 = vadd.f32 0.0, %v5346
      %v5348 = vpop.f32.mrf.mxu0
      %v5349 = vadd.f32 0.0, %v5348
      %5350 = vmatmul.bf16.gmra.mxu0 %v5300
      %v5351 = vpop.f32.mrf.mxu0
      %v5352 = vadd.f32 0.0, %v5351
      %v5353 = vpop.f32.mrf.mxu0
      %v5354 = vadd.f32 0.0, %v5353
      %5355 = vdwg.mxu0
      %v5356 = vadd.f32 %v5230, %v5312
      %v5357 = vadd.f32 %v5231, %v5314
      %v5358 = vadd.f32 %v5232, %v5317
      %v5359 = vadd.f32 %v5233, %v5319
      %v5360 = vadd.f32 %v5234, %v5322
      %v5361 = vadd.f32 %v5235, %v5324
      %v5362 = vadd.f32 %v5236, %v5327
      %v5363 = vadd.f32 %v5237, %v5329
      %v5364 = vadd.f32 %v5238, %v5332
      %v5365 = vadd.f32 %v5239, %v5334
      %v5366 = vadd.f32 %v5240, %v5337
      %v5367 = vadd.f32 %v5241, %v5339
      %v5368 = vadd.f32 %v5242, %v5342
      %v5369 = vadd.f32 %v5243, %v5344
      %v5370 = vadd.f32 %v5244, %v5347
      %v5371 = vadd.f32 %v5245, %v5349
      %v5372 = vadd.f32 %v5246, %v5352
      %v5373 = vadd.f32 %v5247, %v5354
      %v5374 = vadd.f32 %v5356, %v4212
      %v5375 = vadd.f32 %v5357, %v4212
      %v5376 = vadd.f32 %v5358, %v4212
      %v5377 = vadd.f32 %v5359, %v4212
      %v5378 = vadd.f32 %v5360, %v4212
      %v5379 = vadd.f32 %v5361, %v4212
      %v5380 = vadd.f32 %v5362, %v4212
      %v5381 = vadd.f32 %v5363, %v4212
      %v5382 = vadd.f32 %v5364, %v4212
      %v5383 = vadd.f32 %v5365, %v4212
      %v5384 = vadd.f32 %v5366, %v4212
      %v5385 = vadd.f32 %v5367, %v4212
      %v5386 = vadd.f32 %v5368, %v4212
      %v5387 = vadd.f32 %v5369, %v4212
      %v5388 = vadd.f32 %v5370, %v4212
      %v5389 = vadd.f32 %v5371, %v4212
      %v5390 = vadd.f32 %v5372, %v4212
      %v5391 = vadd.f32 %v5373, %v4212
      %v5392 = vmul.f32 %v5374, %v1486
      %v5393 = vmul.f32 %v5375, %v1491
      %v5394 = vmul.f32 %v5376, %v1496
      %v5395 = vmul.f32 %v5377, %v1501
      %v5396 = vmul.f32 %v5378, %v1506
      %v5397 = vmul.f32 %v5379, %v1511
      %v5398 = vmul.f32 %v5380, %v1516
      %v5399 = vmul.f32 %v5381, %v1521
      %v5400 = vmul.f32 %v5382, %v1526
      %v5401 = vmul.f32 %v5383, %v1531
      %v5402 = vmul.f32 %v5384, %v1536
      %v5403 = vmul.f32 %v5385, %v1541
      %v5404 = vmul.f32 %v5386, %v1546
      %v5405 = vmul.f32 %v5387, %v1551
      %v5406 = vmul.f32 %v5388, %v1556
      %v5407 = vmul.f32 %v5389, %v1561
      %v5408 = vmul.f32 %v5390, %v1566
      %v5409 = vmul.f32 %v5391, %v1571
      %5410 = vst.msk [vmem:[%s421 + $0x90] sm:$0xff] %vm446, %v5392
      %5411 = vst.msk [vmem:[%s421 + $0x98] sm:$0xff] %vm446, %v5393
      %5412 = vst.msk [vmem:[%s421 + $0xa0] sm:$0xff] %vm446, %v5394
      %5413 = vst.msk [vmem:[%s421 + $0xa8] sm:$0xff] %vm446, %v5395
      %5414 = vst.msk [vmem:[%s421 + $0xb0] sm:$0xff] %vm446, %v5396
      %5415 = vst.msk [vmem:[%s421 + $0xb8] sm:$0xff] %vm446, %v5397
      %5416 = vst.msk [vmem:[%s421 + $0xc0] sm:$0xff] %vm446, %v5398
      %5417 = vst.msk [vmem:[%s421 + $0xc8] sm:$0xff] %vm446, %v5399
      %5418 = vst.msk [vmem:[%s421 + $0xd0] sm:$0xff] %vm446, %v5400
      %5419 = vst.msk [vmem:[%s421 + $0xd8] sm:$0xff] %vm446, %v5401
      %5420 = vst.msk [vmem:[%s421 + $0xe0] sm:$0xff] %vm446, %v5402
      %5421 = vst.msk [vmem:[%s421 + $0xe8] sm:$0xff] %vm446, %v5403
      %5422 = vst.msk [vmem:[%s421 + $0xf0] sm:$0xff] %vm446, %v5404
      %5423 = vst.msk [vmem:[%s421 + $0xf8] sm:$0xff] %vm446, %v5405
      %5424 = vst.msk [vmem:[%s421 + $0x100] sm:$0xff] %vm446, %v5406
      %5425 = vst.msk [vmem:[%s421 + $0x108] sm:$0xff] %vm446, %v5407
      %5426 = vst.msk [vmem:[%s421 + $0x110] sm:$0xff] %vm446, %v5408
      %5427 = vst.msk [vmem:[%s421 + $0x118] sm:$0xff] %vm446, %v5409
      %5428 = vst.msk [vmem:[#allocation3 + $0xa8] sm:$0xff] %vm446, %v5392
      %5429 = vst.msk [vmem:[#allocation3 + $0xb0] sm:$0xff] %vm446, %v5393
      %5430 = vst.msk [vmem:[#allocation3 + $0xb8] sm:$0xff] %vm446, %v5394
      %5431 = vst.msk [vmem:[#allocation3 + $0xc0] sm:$0xff] %vm446, %v5395
      %5432 = vst.msk [vmem:[#allocation3 + $0xc8] sm:$0xff] %vm446, %v5396
      %5433 = vst.msk [vmem:[#allocation3 + $0xd0] sm:$0xff] %vm446, %v5397
      %5434 = vst.msk [vmem:[#allocation3 + $0xd8] sm:$0xff] %vm446, %v5398
      %5435 = vst.msk [vmem:[#allocation3 + $0xe0] sm:$0xff] %vm446, %v5399
      %5436 = vst.msk [vmem:[#allocation3 + $0xe8] sm:$0xff] %vm446, %v5400
      %5437 = vst.msk [vmem:[#allocation3 + $0xf0] sm:$0xff] %vm446, %v5401
      %5438 = vst.msk [vmem:[#allocation3 + $0xf8] sm:$0xff] %vm446, %v5402
      %5439 = vst.msk [vmem:[#allocation3 + $0x100] sm:$0xff] %vm446, %v5403
      %5440 = vst.msk [vmem:[#allocation3 + $0x108] sm:$0xff] %vm446, %v5404
      %5441 = vst.msk [vmem:[#allocation3 + $0x110] sm:$0xff] %vm446, %v5405
      %5442 = vst.msk [vmem:[#allocation3 + $0x118] sm:$0xff] %vm446, %v5406
      %5443 = vst.msk [vmem:[#allocation3 + $0x120] sm:$0xff] %vm446, %v5407
      %5444 = vst.msk [vmem:[#allocation3 + $0x128] sm:$0xff] %vm446, %v5408
      %5445 = vst.msk [vmem:[#allocation3 + $0x130] sm:$0xff] %vm446, %v5409
      %v5446 = vld [vmem:[%s10] sm:$0xf]
      %v5447 = vld [vmem:[%s10 + $0x4] sm:$0xf]
      %v5448 = vld [vmem:[%s10 + $0x8] sm:$0xf]
      %v5449 = vld [vmem:[%s10 + $0xc] sm:$0xf]
      %v5450 = vld [vmem:[%s10 + $0x10] sm:$0xf]
      %v5451 = vld [vmem:[%s10 + $0x14] sm:$0xf]
      %v5452 = vld [vmem:[%s10 + $0x18] sm:$0xf]
      %v5453 = vld [vmem:[%s10 + $0x1c] sm:$0xf]
      %v5454 = vld [vmem:[%s10 + $0x20] sm:$0xf]
      %v5455 = vld [vmem:[%s10 + $0x24] sm:$0xf]
      %v5456 = vld [vmem:[%s10 + $0x28] sm:$0xf]
      %v5457 = vld [vmem:[%s10 + $0x2c] sm:$0xf]
      %v5458 = vld [vmem:[%s10 + $0x30] sm:$0xf]
      %v5459 = vld [vmem:[%s10 + $0x34] sm:$0xf]
      %v5460 = vld [vmem:[%s10 + $0x38] sm:$0xf]
      %v5461 = vld [vmem:[%s10 + $0x3c] sm:$0xf]
      %s5462 = scalar_lea.vmem [#allocation3], 5
      %v5463 = vld [vmem:[%s5462] ss:$2 sm:$0xff]
      %s5464 = scalar_lea.vmem [#allocation3], 21
      %v5465 = vld [vmem:[%s5464] ss:$2 sm:$0xff]
      %s5466 = scalar_lea.vmem [#allocation3], 37
      %v5467 = vld [vmem:[%s5466] ss:$2 sm:$0xff]
      %s5468 = scalar_lea.vmem [#allocation3], 53
      %v5469 = vld [vmem:[%s5468] ss:$2 sm:$0xff]
      %s5470 = scalar_lea.vmem [#allocation3], 69
      %v5471 = vld [vmem:[%s5470] ss:$2 sm:$0xff]
      %s5472 = scalar_lea.vmem [#allocation3], 85
      %v5473 = vld [vmem:[%s5472] ss:$2 sm:$0xff]
      %s5474 = scalar_lea.vmem [#allocation3], 101
      %v5475 = vld [vmem:[%s5474] ss:$2 sm:$0xff]
      %s5476 = scalar_lea.vmem [#allocation3], 117
      %v5477 = vld [vmem:[%s5476] ss:$2 sm:$0xff]
      %s5478 = scalar_lea.vmem [#allocation3], 133
      %v5479 = vld [vmem:[%s5478] ss:$2 sm:$0xff]
      %s5480 = scalar_lea.vmem [#allocation3], 6
      %v5481 = vld [vmem:[%s5480] ss:$2 sm:$0xff]
      %s5482 = scalar_lea.vmem [#allocation3], 22
      %v5483 = vld [vmem:[%s5482] ss:$2 sm:$0xff]
      %s5484 = scalar_lea.vmem [#allocation3], 38
      %v5485 = vld [vmem:[%s5484] ss:$2 sm:$0xff]
      %s5486 = scalar_lea.vmem [#allocation3], 54
      %v5487 = vld [vmem:[%s5486] ss:$2 sm:$0xff]
      %s5488 = scalar_lea.vmem [#allocation3], 70
      %v5489 = vld [vmem:[%s5488] ss:$2 sm:$0xff]
      %s5490 = scalar_lea.vmem [#allocation3], 86
      %v5491 = vld [vmem:[%s5490] ss:$2 sm:$0xff]
      %s5492 = scalar_lea.vmem [#allocation3], 102
      %v5493 = vld [vmem:[%s5492] ss:$2 sm:$0xff]
      %s5494 = scalar_lea.vmem [#allocation3], 118
      %v5495 = vld [vmem:[%s5494] ss:$2 sm:$0xff]
      %s5496 = scalar_lea.vmem [#allocation3], 134
      %v5497 = vld [vmem:[%s5496] ss:$2 sm:$0xff]
      %s5498 = scalar_lea.vmem [#allocation3], 7
      %v5499 = vld [vmem:[%s5498] ss:$2 sm:$0xff]
      %s5500 = scalar_lea.vmem [#allocation3], 23
      %v5501 = vld [vmem:[%s5500] ss:$2 sm:$0xff]
      %s5502 = scalar_lea.vmem [#allocation3], 39
      %v5503 = vld [vmem:[%s5502] ss:$2 sm:$0xff]
      %s5504 = scalar_lea.vmem [#allocation3], 55
      %v5505 = vld [vmem:[%s5504] ss:$2 sm:$0xff]
      %s5506 = scalar_lea.vmem [#allocation3], 71
      %v5507 = vld [vmem:[%s5506] ss:$2 sm:$0xff]
      %s5508 = scalar_lea.vmem [#allocation3], 87
      %v5509 = vld [vmem:[%s5508] ss:$2 sm:$0xff]
      %s5510 = scalar_lea.vmem [#allocation3], 103
      %v5511 = vld [vmem:[%s5510] ss:$2 sm:$0xff]
      %s5512 = scalar_lea.vmem [#allocation3], 119
      %v5513 = vld [vmem:[%s5512] ss:$2 sm:$0xff]
      %s5514 = scalar_lea.vmem [#allocation3], 135
      %v5515 = vld [vmem:[%s5514] ss:$2 sm:$0xff]
      %s5516 = scalar_lea.vmem [#allocation3], 8
      %v5517 = vld [vmem:[%s5516] ss:$2 sm:$0xff]
      %s5518 = scalar_lea.vmem [#allocation3], 24
      %v5519 = vld [vmem:[%s5518] ss:$2 sm:$0xff]
      %s5520 = scalar_lea.vmem [#allocation3], 40
      %v5521 = vld [vmem:[%s5520] ss:$2 sm:$0xff]
      %s5522 = scalar_lea.vmem [#allocation3], 56
      %v5523 = vld [vmem:[%s5522] ss:$2 sm:$0xff]
      %s5524 = scalar_lea.vmem [#allocation3], 72
      %v5525 = vld [vmem:[%s5524] ss:$2 sm:$0xff]
      %s5526 = scalar_lea.vmem [#allocation3], 88
      %v5527 = vld [vmem:[%s5526] ss:$2 sm:$0xff]
      %s5528 = scalar_lea.vmem [#allocation3], 104
      %v5529 = vld [vmem:[%s5528] ss:$2 sm:$0xff]
      %s5530 = scalar_lea.vmem [#allocation3], 120
      %v5531 = vld [vmem:[%s5530] ss:$2 sm:$0xff]
      %s5532 = scalar_lea.vmem [#allocation3], 136
      %v5533 = vld [vmem:[%s5532] ss:$2 sm:$0xff]
      %s5534 = scalar_lea.vmem [#allocation3], 151
      %v5535 = vld [vmem:[%s5534] ss:$2 sm:$0xff]
      %s5536 = scalar_lea.vmem [#allocation3], 152
      %v5537 = vld [vmem:[%s5536] ss:$2 sm:$0xff]
      %s5538 = scalar_lea.vmem [#allocation3], 25
      %v5539 = vld [vmem:[%s5538] ss:$2 sm:$0xff]
      %s5540 = scalar_lea.vmem [#allocation3], 41
      %v5541 = vld [vmem:[%s5540] ss:$2 sm:$0xff]
      %s5542 = scalar_lea.vmem [#allocation3], 57
      %v5543 = vld [vmem:[%s5542] ss:$2 sm:$0xff]
      %s5544 = scalar_lea.vmem [#allocation3], 73
      %v5545 = vld [vmem:[%s5544] ss:$2 sm:$0xff]
      %s5546 = scalar_lea.vmem [#allocation3], 89
      %v5547 = vld [vmem:[%s5546] ss:$2 sm:$0xff]
      %s5548 = scalar_lea.vmem [#allocation3], 105
      %v5549 = vld [vmem:[%s5548] ss:$2 sm:$0xff]
      %s5550 = scalar_lea.vmem [#allocation3], 121
      %v5551 = vld [vmem:[%s5550] ss:$2 sm:$0xff]
      %s5552 = scalar_lea.vmem [#allocation3], 137
      %v5553 = vld [vmem:[%s5552] ss:$2 sm:$0xff]
      %s5554 = scalar_lea.vmem [#allocation3], 153
      %v5555 = vld [vmem:[%s5554] ss:$2 sm:$0xff]
      %s5556 = scalar_lea.vmem [#allocation3], 26
      %v5557 = vld [vmem:[%s5556] ss:$2 sm:$0xff]
      %s5558 = scalar_lea.vmem [#allocation3], 42
      %v5559 = vld [vmem:[%s5558] ss:$2 sm:$0xff]
      %s5560 = scalar_lea.vmem [#allocation3], 58
      %v5561 = vld [vmem:[%s5560] ss:$2 sm:$0xff]
      %s5562 = scalar_lea.vmem [#allocation3], 74
      %v5563 = vld [vmem:[%s5562] ss:$2 sm:$0xff]
      %s5564 = scalar_lea.vmem [#allocation3], 90
      %v5565 = vld [vmem:[%s5564] ss:$2 sm:$0xff]
      %s5566 = scalar_lea.vmem [#allocation3], 106
      %v5567 = vld [vmem:[%s5566] ss:$2 sm:$0xff]
      %s5568 = scalar_lea.vmem [#allocation3], 122
      %v5569 = vld [vmem:[%s5568] ss:$2 sm:$0xff]
      %s5570 = scalar_lea.vmem [#allocation3], 138
      %v5571 = vld [vmem:[%s5570] ss:$2 sm:$0xff]
      %s5572 = scalar_lea.vmem [#allocation3], 154
      %v5573 = vld [vmem:[%s5572] ss:$2 sm:$0xff]
      %s5574 = scalar_lea.vmem [#allocation3], 169
      %v5575 = vld [vmem:[%s5574] ss:$2 sm:$0xff]
      %s5576 = scalar_lea.vmem [#allocation3], 170
      %v5577 = vld [vmem:[%s5576] ss:$2 sm:$0xff]
      %s5578 = scalar_lea.vmem [#allocation3], 43
      %v5579 = vld [vmem:[%s5578] ss:$2 sm:$0xff]
      %s5580 = scalar_lea.vmem [#allocation3], 59
      %v5581 = vld [vmem:[%s5580] ss:$2 sm:$0xff]
      %s5582 = scalar_lea.vmem [#allocation3], 75
      %v5583 = vld [vmem:[%s5582] ss:$2 sm:$0xff]
      %s5584 = scalar_lea.vmem [#allocation3], 91
      %v5585 = vld [vmem:[%s5584] ss:$2 sm:$0xff]
      %s5586 = scalar_lea.vmem [#allocation3], 107
      %v5587 = vld [vmem:[%s5586] ss:$2 sm:$0xff]
      %s5588 = scalar_lea.vmem [#allocation3], 123
      %v5589 = vld [vmem:[%s5588] ss:$2 sm:$0xff]
      %s5590 = scalar_lea.vmem [#allocation3], 139
      %v5591 = vld [vmem:[%s5590] ss:$2 sm:$0xff]
      %s5592 = scalar_lea.vmem [#allocation3], 155
      %v5593 = vld [vmem:[%s5592] ss:$2 sm:$0xff]
      %s5594 = scalar_lea.vmem [#allocation3], 171
      %v5595 = vld [vmem:[%s5594] ss:$2 sm:$0xff]
      %s5596 = scalar_lea.vmem [#allocation3], 44
      %v5597 = vld [vmem:[%s5596] ss:$2 sm:$0xff]
      %s5598 = scalar_lea.vmem [#allocation3], 60
      %v5599 = vld [vmem:[%s5598] ss:$2 sm:$0xff]
      %s5600 = scalar_lea.vmem [#allocation3], 76
      %v5601 = vld [vmem:[%s5600] ss:$2 sm:$0xff]
      %s5602 = scalar_lea.vmem [#allocation3], 92
      %v5603 = vld [vmem:[%s5602] ss:$2 sm:$0xff]
      %s5604 = scalar_lea.vmem [#allocation3], 108
      %v5605 = vld [vmem:[%s5604] ss:$2 sm:$0xff]
      %s5606 = scalar_lea.vmem [#allocation3], 124
      %v5607 = vld [vmem:[%s5606] ss:$2 sm:$0xff]
      %s5608 = scalar_lea.vmem [#allocation3], 140
      %v5609 = vld [vmem:[%s5608] ss:$2 sm:$0xff]
      %s5610 = scalar_lea.vmem [#allocation3], 156
      %v5611 = vld [vmem:[%s5610] ss:$2 sm:$0xff]
      %s5612 = scalar_lea.vmem [#allocation3], 172
      %v5613 = vld [vmem:[%s5612] ss:$2 sm:$0xff]
      %s5614 = scalar_lea.vmem [#allocation3], 187
      %v5615 = vld [vmem:[%s5614] ss:$2 sm:$0xff]
      %s5616 = scalar_lea.vmem [#allocation3], 188
      %v5617 = vld [vmem:[%s5616] ss:$2 sm:$0xff]
      %s5618 = scalar_lea.vmem [#allocation3], 61
      %v5619 = vld [vmem:[%s5618] ss:$2 sm:$0xff]
      %s5620 = scalar_lea.vmem [#allocation3], 77
      %v5621 = vld [vmem:[%s5620] ss:$2 sm:$0xff]
      %s5622 = scalar_lea.vmem [#allocation3], 93
      %v5623 = vld [vmem:[%s5622] ss:$2 sm:$0xff]
      %s5624 = scalar_lea.vmem [#allocation3], 109
      %v5625 = vld [vmem:[%s5624] ss:$2 sm:$0xff]
      %s5626 = scalar_lea.vmem [#allocation3], 125
      %v5627 = vld [vmem:[%s5626] ss:$2 sm:$0xff]
      %s5628 = scalar_lea.vmem [#allocation3], 141
      %v5629 = vld [vmem:[%s5628] ss:$2 sm:$0xff]
      %s5630 = scalar_lea.vmem [#allocation3], 157
      %v5631 = vld [vmem:[%s5630] ss:$2 sm:$0xff]
      %s5632 = scalar_lea.vmem [#allocation3], 173
      %v5633 = vld [vmem:[%s5632] ss:$2 sm:$0xff]
      %s5634 = scalar_lea.vmem [#allocation3], 189
      %v5635 = vld [vmem:[%s5634] ss:$2 sm:$0xff]
      %s5636 = scalar_lea.vmem [#allocation3], 62
      %v5637 = vld [vmem:[%s5636] ss:$2 sm:$0xff]
      %s5638 = scalar_lea.vmem [#allocation3], 78
      %v5639 = vld [vmem:[%s5638] ss:$2 sm:$0xff]
      %s5640 = scalar_lea.vmem [#allocation3], 94
      %v5641 = vld [vmem:[%s5640] ss:$2 sm:$0xff]
      %s5642 = scalar_lea.vmem [#allocation3], 110
      %v5643 = vld [vmem:[%s5642] ss:$2 sm:$0xff]
      %s5644 = scalar_lea.vmem [#allocation3], 126
      %v5645 = vld [vmem:[%s5644] ss:$2 sm:$0xff]
      %s5646 = scalar_lea.vmem [#allocation3], 142
      %v5647 = vld [vmem:[%s5646] ss:$2 sm:$0xff]
      %s5648 = scalar_lea.vmem [#allocation3], 158
      %v5649 = vld [vmem:[%s5648] ss:$2 sm:$0xff]
      %s5650 = scalar_lea.vmem [#allocation3], 174
      %v5651 = vld [vmem:[%s5650] ss:$2 sm:$0xff]
      %s5652 = scalar_lea.vmem [#allocation3], 190
      %v5653 = vld [vmem:[%s5652] ss:$2 sm:$0xff]
      %5663 = vrot.lane.b32.xlu0 %v5481, 8
      %v5664 = vpop.permute.xlu0 %5663
      %5665 = vrot.lane.b32.xlu0 %v5483, 8
      %v5666 = vpop.permute.xlu0 %5665
      %5667 = vrot.lane.b32.xlu0 %v5485, 8
      %v5668 = vpop.permute.xlu0 %5667
      %5669 = vrot.lane.b32.xlu0 %v5487, 8
      %v5670 = vpop.permute.xlu0 %5669
      %5671 = vrot.lane.b32.xlu0 %v5489, 8
      %v5672 = vpop.permute.xlu0 %5671
      %5673 = vrot.lane.b32.xlu0 %v5491, 8
      %v5674 = vpop.permute.xlu0 %5673
      %5675 = vrot.lane.b32.xlu0 %v5493, 8
      %v5676 = vpop.permute.xlu0 %5675
      %5677 = vrot.lane.b32.xlu0 %v5495, 8
      %v5678 = vpop.permute.xlu0 %5677
      %5679 = vrot.lane.b32.xlu0 %v5497, 8
      %v5680 = vpop.permute.xlu0 %5679
      %5699 = vrot.lane.b32.xlu0 %v5499, 16
      %v5700 = vpop.permute.xlu0 %5699
      %5701 = vrot.lane.b32.xlu0 %v5501, 16
      %v5702 = vpop.permute.xlu0 %5701
      %5703 = vrot.lane.b32.xlu0 %v5503, 16
      %v5704 = vpop.permute.xlu0 %5703
      %5705 = vrot.lane.b32.xlu0 %v5505, 16
      %v5706 = vpop.permute.xlu0 %5705
      %5707 = vrot.lane.b32.xlu0 %v5507, 16
      %v5708 = vpop.permute.xlu0 %5707
      %5709 = vrot.lane.b32.xlu0 %v5509, 16
      %v5710 = vpop.permute.xlu0 %5709
      %5711 = vrot.lane.b32.xlu0 %v5511, 16
      %v5712 = vpop.permute.xlu0 %5711
      %5713 = vrot.lane.b32.xlu0 %v5513, 16
      %v5714 = vpop.permute.xlu0 %5713
      %5715 = vrot.lane.b32.xlu0 %v5515, 16
      %v5716 = vpop.permute.xlu0 %5715
      %5735 = vrot.lane.b32.xlu0 %v5517, 24
      %v5736 = vpop.permute.xlu0 %5735
      %5737 = vrot.lane.b32.xlu0 %v5519, 24
      %v5738 = vpop.permute.xlu0 %5737
      %5739 = vrot.lane.b32.xlu0 %v5521, 24
      %v5740 = vpop.permute.xlu0 %5739
      %5741 = vrot.lane.b32.xlu0 %v5523, 24
      %v5742 = vpop.permute.xlu0 %5741
      %5743 = vrot.lane.b32.xlu0 %v5525, 24
      %v5744 = vpop.permute.xlu0 %5743
      %5745 = vrot.lane.b32.xlu0 %v5527, 24
      %v5746 = vpop.permute.xlu0 %5745
      %5747 = vrot.lane.b32.xlu0 %v5529, 24
      %v5748 = vpop.permute.xlu0 %5747
      %5749 = vrot.lane.b32.xlu0 %v5531, 24
      %v5750 = vpop.permute.xlu0 %5749
      %5751 = vrot.lane.b32.xlu0 %v5533, 24
      %v5752 = vpop.permute.xlu0 %5751
      %5763 = vrot.lane.b32.xlu0 %v5501, 32
      %v5764 = vpop.permute.xlu0 %5763
      %5765 = vrot.lane.b32.xlu0 %v5503, 32
      %v5766 = vpop.permute.xlu0 %5765
      %5767 = vrot.lane.b32.xlu0 %v5505, 32
      %v5768 = vpop.permute.xlu0 %5767
      %5769 = vrot.lane.b32.xlu0 %v5507, 32
      %v5770 = vpop.permute.xlu0 %5769
      %5771 = vrot.lane.b32.xlu0 %v5509, 32
      %v5772 = vpop.permute.xlu0 %5771
      %5773 = vrot.lane.b32.xlu0 %v5511, 32
      %v5774 = vpop.permute.xlu0 %5773
      %5775 = vrot.lane.b32.xlu0 %v5513, 32
      %v5776 = vpop.permute.xlu0 %5775
      %5777 = vrot.lane.b32.xlu0 %v5515, 32
      %v5778 = vpop.permute.xlu0 %5777
      %5779 = vrot.lane.b32.xlu0 %v5535, 32
      %v5780 = vpop.permute.xlu0 %5779
      %5791 = vrot.lane.b32.xlu0 %v5519, 40
      %v5792 = vpop.permute.xlu0 %5791
      %5793 = vrot.lane.b32.xlu0 %v5521, 40
      %v5794 = vpop.permute.xlu0 %5793
      %5795 = vrot.lane.b32.xlu0 %v5523, 40
      %v5796 = vpop.permute.xlu0 %5795
      %5797 = vrot.lane.b32.xlu0 %v5525, 40
      %v5798 = vpop.permute.xlu0 %5797
      %5799 = vrot.lane.b32.xlu0 %v5527, 40
      %v5800 = vpop.permute.xlu0 %5799
      %5801 = vrot.lane.b32.xlu0 %v5529, 40
      %v5802 = vpop.permute.xlu0 %5801
      %5803 = vrot.lane.b32.xlu0 %v5531, 40
      %v5804 = vpop.permute.xlu0 %5803
      %5805 = vrot.lane.b32.xlu0 %v5533, 40
      %v5806 = vpop.permute.xlu0 %5805
      %5807 = vrot.lane.b32.xlu0 %v5537, 40
      %v5808 = vpop.permute.xlu0 %5807
      %5827 = vrot.lane.b32.xlu0 %v5539, 48
      %v5828 = vpop.permute.xlu0 %5827
      %5829 = vrot.lane.b32.xlu0 %v5541, 48
      %v5830 = vpop.permute.xlu0 %5829
      %5831 = vrot.lane.b32.xlu0 %v5543, 48
      %v5832 = vpop.permute.xlu0 %5831
      %5833 = vrot.lane.b32.xlu0 %v5545, 48
      %v5834 = vpop.permute.xlu0 %5833
      %5835 = vrot.lane.b32.xlu0 %v5547, 48
      %v5836 = vpop.permute.xlu0 %5835
      %5837 = vrot.lane.b32.xlu0 %v5549, 48
      %v5838 = vpop.permute.xlu0 %5837
      %5839 = vrot.lane.b32.xlu0 %v5551, 48
      %v5840 = vpop.permute.xlu0 %5839
      %5841 = vrot.lane.b32.xlu0 %v5553, 48
      %v5842 = vpop.permute.xlu0 %5841
      %5843 = vrot.lane.b32.xlu0 %v5555, 48
      %v5844 = vpop.permute.xlu0 %5843
      %5863 = vrot.lane.b32.xlu0 %v5557, 56
      %v5864 = vpop.permute.xlu0 %5863
      %5865 = vrot.lane.b32.xlu0 %v5559, 56
      %v5866 = vpop.permute.xlu0 %5865
      %5867 = vrot.lane.b32.xlu0 %v5561, 56
      %v5868 = vpop.permute.xlu0 %5867
      %5869 = vrot.lane.b32.xlu0 %v5563, 56
      %v5870 = vpop.permute.xlu0 %5869
      %5871 = vrot.lane.b32.xlu0 %v5565, 56
      %v5872 = vpop.permute.xlu0 %5871
      %5873 = vrot.lane.b32.xlu0 %v5567, 56
      %v5874 = vpop.permute.xlu0 %5873
      %5875 = vrot.lane.b32.xlu0 %v5569, 56
      %v5876 = vpop.permute.xlu0 %5875
      %5877 = vrot.lane.b32.xlu0 %v5571, 56
      %v5878 = vpop.permute.xlu0 %5877
      %5879 = vrot.lane.b32.xlu0 %v5573, 56
      %v5880 = vpop.permute.xlu0 %5879
      %5891 = vrot.lane.b32.xlu0 %v5541, 64
      %v5892 = vpop.permute.xlu0 %5891
      %5893 = vrot.lane.b32.xlu0 %v5543, 64
      %v5894 = vpop.permute.xlu0 %5893
      %5895 = vrot.lane.b32.xlu0 %v5545, 64
      %v5896 = vpop.permute.xlu0 %5895
      %5897 = vrot.lane.b32.xlu0 %v5547, 64
      %v5898 = vpop.permute.xlu0 %5897
      %5899 = vrot.lane.b32.xlu0 %v5549, 64
      %v5900 = vpop.permute.xlu0 %5899
      %5901 = vrot.lane.b32.xlu0 %v5551, 64
      %v5902 = vpop.permute.xlu0 %5901
      %5903 = vrot.lane.b32.xlu0 %v5553, 64
      %v5904 = vpop.permute.xlu0 %5903
      %5905 = vrot.lane.b32.xlu0 %v5555, 64
      %v5906 = vpop.permute.xlu0 %5905
      %5907 = vrot.lane.b32.xlu0 %v5575, 64
      %v5908 = vpop.permute.xlu0 %5907
      %5919 = vrot.lane.b32.xlu0 %v5559, 72
      %v5920 = vpop.permute.xlu0 %5919
      %5921 = vrot.lane.b32.xlu0 %v5561, 72
      %v5922 = vpop.permute.xlu0 %5921
      %5923 = vrot.lane.b32.xlu0 %v5563, 72
      %v5924 = vpop.permute.xlu0 %5923
      %5925 = vrot.lane.b32.xlu0 %v5565, 72
      %v5926 = vpop.permute.xlu0 %5925
      %5927 = vrot.lane.b32.xlu0 %v5567, 72
      %v5928 = vpop.permute.xlu0 %5927
      %5929 = vrot.lane.b32.xlu0 %v5569, 72
      %v5930 = vpop.permute.xlu0 %5929
      %5931 = vrot.lane.b32.xlu0 %v5571, 72
      %v5932 = vpop.permute.xlu0 %5931
      %5933 = vrot.lane.b32.xlu0 %v5573, 72
      %v5934 = vpop.permute.xlu0 %5933
      %5935 = vrot.lane.b32.xlu0 %v5577, 72
      %v5936 = vpop.permute.xlu0 %5935
      %5955 = vrot.lane.b32.xlu0 %v5579, 80
      %v5956 = vpop.permute.xlu0 %5955
      %5957 = vrot.lane.b32.xlu0 %v5581, 80
      %v5958 = vpop.permute.xlu0 %5957
      %5959 = vrot.lane.b32.xlu0 %v5583, 80
      %v5960 = vpop.permute.xlu0 %5959
      %5961 = vrot.lane.b32.xlu0 %v5585, 80
      %v5962 = vpop.permute.xlu0 %5961
      %5963 = vrot.lane.b32.xlu0 %v5587, 80
      %v5964 = vpop.permute.xlu0 %5963
      %5965 = vrot.lane.b32.xlu0 %v5589, 80
      %v5966 = vpop.permute.xlu0 %5965
      %5967 = vrot.lane.b32.xlu0 %v5591, 80
      %v5968 = vpop.permute.xlu0 %5967
      %5969 = vrot.lane.b32.xlu0 %v5593, 80
      %v5970 = vpop.permute.xlu0 %5969
      %5971 = vrot.lane.b32.xlu0 %v5595, 80
      %v5972 = vpop.permute.xlu0 %5971
      %5991 = vrot.lane.b32.xlu0 %v5597, 88
      %v5992 = vpop.permute.xlu0 %5991
      %5993 = vrot.lane.b32.xlu0 %v5599, 88
      %v5994 = vpop.permute.xlu0 %5993
      %5995 = vrot.lane.b32.xlu0 %v5601, 88
      %v5996 = vpop.permute.xlu0 %5995
      %5997 = vrot.lane.b32.xlu0 %v5603, 88
      %v5998 = vpop.permute.xlu0 %5997
      %5999 = vrot.lane.b32.xlu0 %v5605, 88
      %v6000 = vpop.permute.xlu0 %5999
      %6001 = vrot.lane.b32.xlu0 %v5607, 88
      %v6002 = vpop.permute.xlu0 %6001
      %6003 = vrot.lane.b32.xlu0 %v5609, 88
      %v6004 = vpop.permute.xlu0 %6003
      %6005 = vrot.lane.b32.xlu0 %v5611, 88
      %v6006 = vpop.permute.xlu0 %6005
      %6007 = vrot.lane.b32.xlu0 %v5613, 88
      %v6008 = vpop.permute.xlu0 %6007
      %6019 = vrot.lane.b32.xlu0 %v5581, 96
      %v6020 = vpop.permute.xlu0 %6019
      %6021 = vrot.lane.b32.xlu0 %v5583, 96
      %v6022 = vpop.permute.xlu0 %6021
      %6023 = vrot.lane.b32.xlu0 %v5585, 96
      %v6024 = vpop.permute.xlu0 %6023
      %6025 = vrot.lane.b32.xlu0 %v5587, 96
      %v6026 = vpop.permute.xlu0 %6025
      %6027 = vrot.lane.b32.xlu0 %v5589, 96
      %v6028 = vpop.permute.xlu0 %6027
      %6029 = vrot.lane.b32.xlu0 %v5591, 96
      %v6030 = vpop.permute.xlu0 %6029
      %6031 = vrot.lane.b32.xlu0 %v5593, 96
      %v6032 = vpop.permute.xlu0 %6031
      %6033 = vrot.lane.b32.xlu0 %v5595, 96
      %v6034 = vpop.permute.xlu0 %6033
      %6035 = vrot.lane.b32.xlu0 %v5615, 96
      %v6036 = vpop.permute.xlu0 %6035
      %6047 = vrot.lane.b32.xlu0 %v5599, 104
      %v6048 = vpop.permute.xlu0 %6047
      %6049 = vrot.lane.b32.xlu0 %v5601, 104
      %v6050 = vpop.permute.xlu0 %6049
      %6051 = vrot.lane.b32.xlu0 %v5603, 104
      %v6052 = vpop.permute.xlu0 %6051
      %6053 = vrot.lane.b32.xlu0 %v5605, 104
      %v6054 = vpop.permute.xlu0 %6053
      %6055 = vrot.lane.b32.xlu0 %v5607, 104
      %v6056 = vpop.permute.xlu0 %6055
      %6057 = vrot.lane.b32.xlu0 %v5609, 104
      %v6058 = vpop.permute.xlu0 %6057
      %6059 = vrot.lane.b32.xlu0 %v5611, 104
      %v6060 = vpop.permute.xlu0 %6059
      %6061 = vrot.lane.b32.xlu0 %v5613, 104
      %v6062 = vpop.permute.xlu0 %6061
      %6063 = vrot.lane.b32.xlu0 %v5617, 104
      %v6064 = vpop.permute.xlu0 %6063
      %6083 = vrot.lane.b32.xlu0 %v5619, 112
      %v6084 = vpop.permute.xlu0 %6083
      %6085 = vrot.lane.b32.xlu0 %v5621, 112
      %v6086 = vpop.permute.xlu0 %6085
      %6087 = vrot.lane.b32.xlu0 %v5623, 112
      %v6088 = vpop.permute.xlu0 %6087
      %6089 = vrot.lane.b32.xlu0 %v5625, 112
      %v6090 = vpop.permute.xlu0 %6089
      %6091 = vrot.lane.b32.xlu0 %v5627, 112
      %v6092 = vpop.permute.xlu0 %6091
      %6093 = vrot.lane.b32.xlu0 %v5629, 112
      %v6094 = vpop.permute.xlu0 %6093
      %6095 = vrot.lane.b32.xlu0 %v5631, 112
      %v6096 = vpop.permute.xlu0 %6095
      %6097 = vrot.lane.b32.xlu0 %v5633, 112
      %v6098 = vpop.permute.xlu0 %6097
      %6099 = vrot.lane.b32.xlu0 %v5635, 112
      %v6100 = vpop.permute.xlu0 %6099
      %6119 = vrot.lane.b32.xlu0 %v5637, 120
      %v6120 = vpop.permute.xlu0 %6119
      %6121 = vrot.lane.b32.xlu0 %v5639, 120
      %v6122 = vpop.permute.xlu0 %6121
      %6123 = vrot.lane.b32.xlu0 %v5641, 120
      %v6124 = vpop.permute.xlu0 %6123
      %6125 = vrot.lane.b32.xlu0 %v5643, 120
      %v6126 = vpop.permute.xlu0 %6125
      %6127 = vrot.lane.b32.xlu0 %v5645, 120
      %v6128 = vpop.permute.xlu0 %6127
      %6129 = vrot.lane.b32.xlu0 %v5647, 120
      %v6130 = vpop.permute.xlu0 %6129
      %6131 = vrot.lane.b32.xlu0 %v5649, 120
      %v6132 = vpop.permute.xlu0 %6131
      %6133 = vrot.lane.b32.xlu0 %v5651, 120
      %v6134 = vpop.permute.xlu0 %6133
      %6135 = vrot.lane.b32.xlu0 %v5653, 120
      %v6136 = vpop.permute.xlu0 %6135
      %v6146 = vsel %vm446, %v5463, %v5664
      %v6147 = vsel %vm446, %v5465, %v5666
      %v6148 = vsel %vm446, %v5467, %v5668
      %v6149 = vsel %vm446, %v5469, %v5670
      %v6150 = vsel %vm446, %v5471, %v5672
      %v6151 = vsel %vm446, %v5473, %v5674
      %v6152 = vsel %vm446, %v5475, %v5676
      %v6153 = vsel %vm446, %v5477, %v5678
      %v6154 = vsel %vm446, %v5479, %v5680
      %v6155 = vsel %vm1275, %v6146, %v5700
      %v6156 = vsel %vm1275, %v6147, %v5702
      %v6157 = vsel %vm1275, %v6148, %v5704
      %v6158 = vsel %vm1275, %v6149, %v5706
      %v6159 = vsel %vm1275, %v6150, %v5708
      %v6160 = vsel %vm1275, %v6151, %v5710
      %v6161 = vsel %vm1275, %v6152, %v5712
      %v6162 = vsel %vm1275, %v6153, %v5714
      %v6163 = vsel %vm1275, %v6154, %v5716
      %v6164 = vsel %vm1313, %v6155, %v5736
      %v6165 = vsel %vm1313, %v6156, %v5738
      %v6166 = vsel %vm1313, %v6157, %v5740
      %v6167 = vsel %vm1313, %v6158, %v5742
      %v6168 = vsel %vm1313, %v6159, %v5744
      %v6169 = vsel %vm1313, %v6160, %v5746
      %v6170 = vsel %vm1313, %v6161, %v5748
      %v6171 = vsel %vm1313, %v6162, %v5750
      %v6172 = vsel %vm1313, %v6163, %v5752
      %v6173 = vsel %vm1351, %v6164, %v5764
      %v6174 = vsel %vm1351, %v6165, %v5766
      %v6175 = vsel %vm1351, %v6166, %v5768
      %v6176 = vsel %vm1351, %v6167, %v5770
      %v6177 = vsel %vm1351, %v6168, %v5772
      %v6178 = vsel %vm1351, %v6169, %v5774
      %v6179 = vsel %vm1351, %v6170, %v5776
      %v6180 = vsel %vm1351, %v6171, %v5778
      %v6181 = vsel %vm1351, %v6172, %v5780
      %v6182 = vsel %vm3827, %v6173, %v5792
      %v6183 = vsel %vm3827, %v6174, %v5794
      %v6184 = vsel %vm3827, %v6175, %v5796
      %v6185 = vsel %vm3827, %v6176, %v5798
      %v6186 = vsel %vm3827, %v6177, %v5800
      %v6187 = vsel %vm3827, %v6178, %v5802
      %v6188 = vsel %vm3827, %v6179, %v5804
      %v6189 = vsel %vm3827, %v6180, %v5806
      %v6190 = vsel %vm3827, %v6181, %v5808
      %v6191 = vsel %vm3846, %v6182, %v5828
      %v6192 = vsel %vm3846, %v6183, %v5830
      %v6193 = vsel %vm3846, %v6184, %v5832
      %v6194 = vsel %vm3846, %v6185, %v5834
      %v6195 = vsel %vm3846, %v6186, %v5836
      %v6196 = vsel %vm3846, %v6187, %v5838
      %v6197 = vsel %vm3846, %v6188, %v5840
      %v6198 = vsel %vm3846, %v6189, %v5842
      %v6199 = vsel %vm3846, %v6190, %v5844
      %v6200 = vsel %vm3865, %v6191, %v5864
      %v6201 = vsel %vm3865, %v6192, %v5866
      %v6202 = vsel %vm3865, %v6193, %v5868
      %v6203 = vsel %vm3865, %v6194, %v5870
      %v6204 = vsel %vm3865, %v6195, %v5872
      %v6205 = vsel %vm3865, %v6196, %v5874
      %v6206 = vsel %vm3865, %v6197, %v5876
      %v6207 = vsel %vm3865, %v6198, %v5878
      %v6208 = vsel %vm3865, %v6199, %v5880
      %v6209 = vsel %vm3884, %v6200, %v5892
      %v6210 = vsel %vm3884, %v6201, %v5894
      %v6211 = vsel %vm3884, %v6202, %v5896
      %v6212 = vsel %vm3884, %v6203, %v5898
      %v6213 = vsel %vm3884, %v6204, %v5900
      %v6214 = vsel %vm3884, %v6205, %v5902
      %v6215 = vsel %vm3884, %v6206, %v5904
      %v6216 = vsel %vm3884, %v6207, %v5906
      %v6217 = vsel %vm3884, %v6208, %v5908
      %v6218 = vsel %vm3942, %v6209, %v5920
      %v6219 = vsel %vm3942, %v6210, %v5922
      %v6220 = vsel %vm3942, %v6211, %v5924
      %v6221 = vsel %vm3942, %v6212, %v5926
      %v6222 = vsel %vm3942, %v6213, %v5928
      %v6223 = vsel %vm3942, %v6214, %v5930
      %v6224 = vsel %vm3942, %v6215, %v5932
      %v6225 = vsel %vm3942, %v6216, %v5934
      %v6226 = vsel %vm3942, %v6217, %v5936
      %vm6227 = vcmask 654336
      %v6228 = vsel %vm6227, %v6218, %v5956
      %v6229 = vsel %vm6227, %v6219, %v5958
      %v6230 = vsel %vm6227, %v6220, %v5960
      %v6231 = vsel %vm6227, %v6221, %v5962
      %v6232 = vsel %vm6227, %v6222, %v5964
      %v6233 = vsel %vm6227, %v6223, %v5966
      %v6234 = vsel %vm6227, %v6224, %v5968
      %v6235 = vsel %vm6227, %v6225, %v5970
      %v6236 = vsel %vm6227, %v6226, %v5972
      %vm6237 = vcmask 719872
      %v6238 = vsel %vm6237, %v6228, %v5992
      %v6239 = vsel %vm6237, %v6229, %v5994
      %v6240 = vsel %vm6237, %v6230, %v5996
      %v6241 = vsel %vm6237, %v6231, %v5998
      %v6242 = vsel %vm6237, %v6232, %v6000
      %v6243 = vsel %vm6237, %v6233, %v6002
      %v6244 = vsel %vm6237, %v6234, %v6004
      %v6245 = vsel %vm6237, %v6235, %v6006
      %v6246 = vsel %vm6237, %v6236, %v6008
      %vm6247 = vcmask 785408
      %v6248 = vsel %vm6247, %v6238, %v6020
      %v6249 = vsel %vm6247, %v6239, %v6022
      %v6250 = vsel %vm6247, %v6240, %v6024
      %v6251 = vsel %vm6247, %v6241, %v6026
      %v6252 = vsel %vm6247, %v6242, %v6028
      %v6253 = vsel %vm6247, %v6243, %v6030
      %v6254 = vsel %vm6247, %v6244, %v6032
      %v6255 = vsel %vm6247, %v6245, %v6034
      %v6256 = vsel %vm6247, %v6246, %v6036
      %vm6257 = vcmask 850944
      %v6258 = vsel %vm6257, %v6248, %v6048
      %v6259 = vsel %vm6257, %v6249, %v6050
      %v6260 = vsel %vm6257, %v6250, %v6052
      %v6261 = vsel %vm6257, %v6251, %v6054
      %v6262 = vsel %vm6257, %v6252, %v6056
      %v6263 = vsel %vm6257, %v6253, %v6058
      %v6264 = vsel %vm6257, %v6254, %v6060
      %v6265 = vsel %vm6257, %v6255, %v6062
      %v6266 = vsel %vm6257, %v6256, %v6064
      %vm6267 = vcmask 916480
      %v6268 = vsel %vm6267, %v6258, %v6084
      %v6269 = vsel %vm6267, %v6259, %v6086
      %v6270 = vsel %vm6267, %v6260, %v6088
      %v6271 = vsel %vm6267, %v6261, %v6090
      %v6272 = vsel %vm6267, %v6262, %v6092
      %v6273 = vsel %vm6267, %v6263, %v6094
      %v6274 = vsel %vm6267, %v6264, %v6096
      %v6275 = vsel %vm6267, %v6265, %v6098
      %v6276 = vsel %vm6267, %v6266, %v6100
      %vm6277 = vcmask 982016
      %v6278 = vsel %vm6277, %v6268, %v6120
      %v6279 = vsel %vm6277, %v6269, %v6122
      %v6280 = vsel %vm6277, %v6270, %v6124
      %v6281 = vsel %vm6277, %v6271, %v6126
      %v6282 = vsel %vm6277, %v6272, %v6128
      %v6283 = vsel %vm6277, %v6273, %v6130
      %v6284 = vsel %vm6277, %v6274, %v6132
      %v6285 = vsel %vm6277, %v6275, %v6134
      %v6286 = vsel %vm6277, %v6276, %v6136
      %v6287 = vpack.c.bf16 %v6279, %v6278
      %v6288 = vpack.c.bf16 %v6281, %v6280
      %v6289 = vpack.c.bf16 %v6283, %v6282
      %v6290 = vpack.c.bf16 %v6285, %v6284
      %v6291 = vpack.c.bf16 %v6286, %v6286
      %v6308 = vunpack.c.l.b16 %v5446
      %v6309 = vunpack.c.l.b16 %v5447
      %v6310 = vunpack.c.l.b16 %v5448
      %v6311 = vunpack.c.l.b16 %v5449
      %v6312 = vunpack.c.l.b16 %v5450
      %v6313 = vunpack.c.l.b16 %v5451
      %v6314 = vunpack.c.l.b16 %v5452
      %v6315 = vunpack.c.l.b16 %v5453
      %v6316 = vunpack.c.l.b16 %v5454
      %v6317 = vunpack.c.l.b16 %v5455
      %v6318 = vunpack.c.l.b16 %v5456
      %v6319 = vunpack.c.l.b16 %v5457
      %v6320 = vunpack.c.l.b16 %v5458
      %v6321 = vunpack.c.l.b16 %v5459
      %v6322 = vunpack.c.l.b16 %v5460
      %v6323 = vunpack.c.l.b16 %v5461
      %v6324 = vpack.c.b16 %v6309, %v6308
      %v6325 = vpack.c.b16 %v6311, %v6310
      %v6326 = vpack.c.b16 %v6313, %v6312
      %v6327 = vpack.c.b16 %v6315, %v6314
      %v6328 = vpack.c.b16 %v6317, %v6316
      %v6329 = vpack.c.b16 %v6319, %v6318
      %v6330 = vpack.c.b16 %v6321, %v6320
      %v6331 = vpack.c.b16 %v6323, %v6322
      %6340 = vmatpush.bf16.msra.mxu0 %v6331
      %6341 = vmatpush.bf16.msra.mxu0 %v6330
      %6342 = vmatpush.bf16.msra.mxu0 %v6329
      %6343 = vmatpush.bf16.msra.mxu0 %v6328
      %6344 = vmatpush.bf16.msra.mxu0 %v6327
      %6345 = vmatpush.bf16.msra.mxu0 %v6326
      %6346 = vmatpush.bf16.msra.mxu0 %v6325
      %6347 = vmatpush.bf16.msra.mxu0 %v6324
      %6348 = vmatmul.bf16.gmra.mxu0 %v6287
      %v6349 = vpop.f32.mrf.mxu0
      %v6350 = vadd.f32 0.0, %v6349
      %v6351 = vpop.f32.mrf.mxu0
      %v6352 = vadd.f32 0.0, %v6351
      %6353 = vmatmul.bf16.gmra.mxu0 %v6288
      %v6354 = vpop.f32.mrf.mxu0
      %v6355 = vadd.f32 0.0, %v6354
      %v6356 = vpop.f32.mrf.mxu0
      %v6357 = vadd.f32 0.0, %v6356
      %6358 = vmatmul.bf16.gmra.mxu0 %v6289
      %v6359 = vpop.f32.mrf.mxu0
      %v6360 = vadd.f32 0.0, %v6359
      %v6361 = vpop.f32.mrf.mxu0
      %v6362 = vadd.f32 0.0, %v6361
      %6363 = vmatmul.bf16.gmra.mxu0 %v6290
      %v6364 = vpop.f32.mrf.mxu0
      %v6365 = vadd.f32 0.0, %v6364
      %v6366 = vpop.f32.mrf.mxu0
      %v6367 = vadd.f32 0.0, %v6366
      %6368 = vmatmul.bf16.gmra.mxu0 %v6291
      %v6369 = vpop.f32.mrf.mxu0
      %v6370 = vadd.f32 0.0, %v6369
      %v6371 = vpop.f32.mrf.mxu0
      %6372 = vdwg.mxu0
      %6373 = vst.msk [vmem:[%s426] sm:$0xff] %vm446, %v6350
      %6374 = vst.msk [vmem:[%s426 + $0x8] sm:$0xff] %vm446, %v6352
      %6375 = vst.msk [vmem:[%s426 + $0x10] sm:$0xff] %vm446, %v6355
      %6376 = vst.msk [vmem:[%s426 + $0x18] sm:$0xff] %vm446, %v6357
      %6377 = vst.msk [vmem:[%s426 + $0x20] sm:$0xff] %vm446, %v6360
      %6378 = vst.msk [vmem:[%s426 + $0x28] sm:$0xff] %vm446, %v6362
      %6379 = vst.msk [vmem:[%s426 + $0x30] sm:$0xff] %vm446, %v6365
      %6380 = vst.msk [vmem:[%s426 + $0x38] sm:$0xff] %vm446, %v6367
      %6381 = vst.msk [vmem:[%s426 + $0x40] sm:$0xff] %vm446, %v6370
      %s6382 = scalar_lea.vmem [#allocation3], 149
      %v6383 = vld [vmem:[%s6382] ss:$2 sm:$0xff]
      %s6384 = scalar_lea.vmem [#allocation3], 165
      %v6385 = vld [vmem:[%s6384] ss:$2 sm:$0xff]
      %s6386 = scalar_lea.vmem [#allocation3], 181
      %v6387 = vld [vmem:[%s6386] ss:$2 sm:$0xff]
      %s6388 = scalar_lea.vmem [#allocation3], 197
      %v6389 = vld [vmem:[%s6388] ss:$2 sm:$0xff]
      %s6390 = scalar_lea.vmem [#allocation3], 213
      %v6391 = vld [vmem:[%s6390] ss:$2 sm:$0xff]
      %s6392 = scalar_lea.vmem [#allocation3], 229
      %v6393 = vld [vmem:[%s6392] ss:$2 sm:$0xff]
      %s6394 = scalar_lea.vmem [#allocation3], 245
      %v6395 = vld [vmem:[%s6394] ss:$2 sm:$0xff]
      %s6396 = scalar_lea.vmem [#allocation3], 261
      %v6397 = vld [vmem:[%s6396] ss:$2 sm:$0xff]
      %s6398 = scalar_lea.vmem [#allocation3], 277
      %v6399 = vld [vmem:[%s6398] ss:$2 sm:$0xff]
      %s6400 = scalar_lea.vmem [#allocation3], 150
      %v6401 = vld [vmem:[%s6400] ss:$2 sm:$0xff]
      %s6402 = scalar_lea.vmem [#allocation3], 166
      %v6403 = vld [vmem:[%s6402] ss:$2 sm:$0xff]
      %s6404 = scalar_lea.vmem [#allocation3], 182
      %v6405 = vld [vmem:[%s6404] ss:$2 sm:$0xff]
      %s6406 = scalar_lea.vmem [#allocation3], 198
      %v6407 = vld [vmem:[%s6406] ss:$2 sm:$0xff]
      %s6408 = scalar_lea.vmem [#allocation3], 214
      %v6409 = vld [vmem:[%s6408] ss:$2 sm:$0xff]
      %s6410 = scalar_lea.vmem [#allocation3], 230
      %v6411 = vld [vmem:[%s6410] ss:$2 sm:$0xff]
      %s6412 = scalar_lea.vmem [#allocation3], 246
      %v6413 = vld [vmem:[%s6412] ss:$2 sm:$0xff]
      %s6414 = scalar_lea.vmem [#allocation3], 262
      %v6415 = vld [vmem:[%s6414] ss:$2 sm:$0xff]
      %s6416 = scalar_lea.vmem [#allocation3], 278
      %v6417 = vld [vmem:[%s6416] ss:$2 sm:$0xff]
      %v6418 = vld [vmem:[%s5534] ss:$2 sm:$0xff]
      %s6419 = scalar_lea.vmem [#allocation3], 167
      %v6420 = vld [vmem:[%s6419] ss:$2 sm:$0xff]
      %s6421 = scalar_lea.vmem [#allocation3], 183
      %v6422 = vld [vmem:[%s6421] ss:$2 sm:$0xff]
      %s6423 = scalar_lea.vmem [#allocation3], 199
      %v6424 = vld [vmem:[%s6423] ss:$2 sm:$0xff]
      %s6425 = scalar_lea.vmem [#allocation3], 215
      %v6426 = vld [vmem:[%s6425] ss:$2 sm:$0xff]
      %s6427 = scalar_lea.vmem [#allocation3], 231
      %v6428 = vld [vmem:[%s6427] ss:$2 sm:$0xff]
      %s6429 = scalar_lea.vmem [#allocation3], 247
      %v6430 = vld [vmem:[%s6429] ss:$2 sm:$0xff]
      %s6431 = scalar_lea.vmem [#allocation3], 263
      %v6432 = vld [vmem:[%s6431] ss:$2 sm:$0xff]
      %s6433 = scalar_lea.vmem [#allocation3], 279
      %v6434 = vld [vmem:[%s6433] ss:$2 sm:$0xff]
      %v6435 = vld [vmem:[%s5536] ss:$2 sm:$0xff]
      %s6436 = scalar_lea.vmem [#allocation3], 168
      %v6437 = vld [vmem:[%s6436] ss:$2 sm:$0xff]
      %s6438 = scalar_lea.vmem [#allocation3], 184
      %v6439 = vld [vmem:[%s6438] ss:$2 sm:$0xff]
      %s6440 = scalar_lea.vmem [#allocation3], 200
      %v6441 = vld [vmem:[%s6440] ss:$2 sm:$0xff]
      %s6442 = scalar_lea.vmem [#allocation3], 216
      %v6443 = vld [vmem:[%s6442] ss:$2 sm:$0xff]
      %s6444 = scalar_lea.vmem [#allocation3], 232
      %v6445 = vld [vmem:[%s6444] ss:$2 sm:$0xff]
      %s6446 = scalar_lea.vmem [#allocation3], 248
      %v6447 = vld [vmem:[%s6446] ss:$2 sm:$0xff]
      %s6448 = scalar_lea.vmem [#allocation3], 264
      %v6449 = vld [vmem:[%s6448] ss:$2 sm:$0xff]
      %s6450 = scalar_lea.vmem [#allocation3], 280
      %v6451 = vld [vmem:[%s6450] ss:$2 sm:$0xff]
      %s6452 = scalar_lea.vmem [#allocation3], 295
      %v6453 = vld [vmem:[%s6452] ss:$2 sm:$0xff]
      %s6454 = scalar_lea.vmem [#allocation3], 296
      %v6455 = vld [vmem:[%s6454] ss:$2 sm:$0xff]
      %v6456 = vld [vmem:[%s5574] ss:$2 sm:$0xff]
      %s6457 = scalar_lea.vmem [#allocation3], 185
      %v6458 = vld [vmem:[%s6457] ss:$2 sm:$0xff]
      %s6459 = scalar_lea.vmem [#allocation3], 201
      %v6460 = vld [vmem:[%s6459] ss:$2 sm:$0xff]
      %s6461 = scalar_lea.vmem [#allocation3], 217
      %v6462 = vld [vmem:[%s6461] ss:$2 sm:$0xff]
      %s6463 = scalar_lea.vmem [#allocation3], 233
      %v6464 = vld [vmem:[%s6463] ss:$2 sm:$0xff]
      %s6465 = scalar_lea.vmem [#allocation3], 249
      %v6466 = vld [vmem:[%s6465] ss:$2 sm:$0xff]
      %s6467 = scalar_lea.vmem [#allocation3], 265
      %v6468 = vld [vmem:[%s6467] ss:$2 sm:$0xff]
      %s6469 = scalar_lea.vmem [#allocation3], 281
      %v6470 = vld [vmem:[%s6469] ss:$2 sm:$0xff]
      %s6471 = scalar_lea.vmem [#allocation3], 297
      %v6472 = vld [vmem:[%s6471] ss:$2 sm:$0xff]
      %v6473 = vld [vmem:[%s5576] ss:$2 sm:$0xff]
      %s6474 = scalar_lea.vmem [#allocation3], 186
      %v6475 = vld [vmem:[%s6474] ss:$2 sm:$0xff]
      %s6476 = scalar_lea.vmem [#allocation3], 202
      %v6477 = vld [vmem:[%s6476] ss:$2 sm:$0xff]
      %s6478 = scalar_lea.vmem [#allocation3], 218
      %v6479 = vld [vmem:[%s6478] ss:$2 sm:$0xff]
      %s6480 = scalar_lea.vmem [#allocation3], 234
      %v6481 = vld [vmem:[%s6480] ss:$2 sm:$0xff]
      %s6482 = scalar_lea.vmem [#allocation3], 250
      %v6483 = vld [vmem:[%s6482] ss:$2 sm:$0xff]
      %s6484 = scalar_lea.vmem [#allocation3], 266
      %v6485 = vld [vmem:[%s6484] ss:$2 sm:$0xff]
      %s6486 = scalar_lea.vmem [#allocation3], 282
      %v6487 = vld [vmem:[%s6486] ss:$2 sm:$0xff]
      %s6488 = scalar_lea.vmem [#allocation3], 298
      %v6489 = vld [vmem:[%s6488] ss:$2 sm:$0xff]
      %s6490 = scalar_lea.vmem [#allocation3], 313
      %v6491 = vld [vmem:[%s6490] ss:$2 sm:$0xff]
      %s6492 = scalar_lea.vmem [#allocation3], 314
      %v6493 = vld [vmem:[%s6492] ss:$2 sm:$0xff]
      %v6494 = vld [vmem:[%s5614] ss:$2 sm:$0xff]
      %s6495 = scalar_lea.vmem [#allocation3], 203
      %v6496 = vld [vmem:[%s6495] ss:$2 sm:$0xff]
      %s6497 = scalar_lea.vmem [#allocation3], 219
      %v6498 = vld [vmem:[%s6497] ss:$2 sm:$0xff]
      %s6499 = scalar_lea.vmem [#allocation3], 235
      %v6500 = vld [vmem:[%s6499] ss:$2 sm:$0xff]
      %s6501 = scalar_lea.vmem [#allocation3], 251
      %v6502 = vld [vmem:[%s6501] ss:$2 sm:$0xff]
      %s6503 = scalar_lea.vmem [#allocation3], 267
      %v6504 = vld [vmem:[%s6503] ss:$2 sm:$0xff]
      %s6505 = scalar_lea.vmem [#allocation3], 283
      %v6506 = vld [vmem:[%s6505] ss:$2 sm:$0xff]
      %s6507 = scalar_lea.vmem [#allocation3], 299
      %v6508 = vld [vmem:[%s6507] ss:$2 sm:$0xff]
      %s6509 = scalar_lea.vmem [#allocation3], 315
      %v6510 = vld [vmem:[%s6509] ss:$2 sm:$0xff]
      %v6511 = vld [vmem:[%s5616] ss:$2 sm:$0xff]
      %s6512 = scalar_lea.vmem [#allocation3], 204
      %v6513 = vld [vmem:[%s6512] ss:$2 sm:$0xff]
      %s6514 = scalar_lea.vmem [#allocation3], 220
      %v6515 = vld [vmem:[%s6514] ss:$2 sm:$0xff]
      %s6516 = scalar_lea.vmem [#allocation3], 236
      %v6517 = vld [vmem:[%s6516] ss:$2 sm:$0xff]
      %s6518 = scalar_lea.vmem [#allocation3], 252
      %v6519 = vld [vmem:[%s6518] ss:$2 sm:$0xff]
      %s6520 = scalar_lea.vmem [#allocation3], 268
      %v6521 = vld [vmem:[%s6520] ss:$2 sm:$0xff]
      %s6522 = scalar_lea.vmem [#allocation3], 284
      %v6523 = vld [vmem:[%s6522] ss:$2 sm:$0xff]
      %s6524 = scalar_lea.vmem [#allocation3], 300
      %v6525 = vld [vmem:[%s6524] ss:$2 sm:$0xff]
      %s6526 = scalar_lea.vmem [#allocation3], 316
      %v6527 = vld [vmem:[%s6526] ss:$2 sm:$0xff]
      %s6528 = scalar_lea.vmem [#allocation3], 331
      %v6529 = vld [vmem:[%s6528] ss:$2 sm:$0xff]
      %s6530 = scalar_lea.vmem [#allocation3], 332
      %v6531 = vld [vmem:[%s6530] ss:$2 sm:$0xff]
      %s6532 = scalar_lea.vmem [#allocation3], 205
      %v6533 = vld [vmem:[%s6532] ss:$2 sm:$0xff]
      %s6534 = scalar_lea.vmem [#allocation3], 221
      %v6535 = vld [vmem:[%s6534] ss:$2 sm:$0xff]
      %s6536 = scalar_lea.vmem [#allocation3], 237
      %v6537 = vld [vmem:[%s6536] ss:$2 sm:$0xff]
      %s6538 = scalar_lea.vmem [#allocation3], 253
      %v6539 = vld [vmem:[%s6538] ss:$2 sm:$0xff]
      %s6540 = scalar_lea.vmem [#allocation3], 269
      %v6541 = vld [vmem:[%s6540] ss:$2 sm:$0xff]
      %s6542 = scalar_lea.vmem [#allocation3], 285
      %v6543 = vld [vmem:[%s6542] ss:$2 sm:$0xff]
      %s6544 = scalar_lea.vmem [#allocation3], 301
      %v6545 = vld [vmem:[%s6544] ss:$2 sm:$0xff]
      %s6546 = scalar_lea.vmem [#allocation3], 317
      %v6547 = vld [vmem:[%s6546] ss:$2 sm:$0xff]
      %s6548 = scalar_lea.vmem [#allocation3], 333
      %v6549 = vld [vmem:[%s6548] ss:$2 sm:$0xff]
      %s6550 = scalar_lea.vmem [#allocation3], 206
      %v6551 = vld [vmem:[%s6550] ss:$2 sm:$0xff]
      %s6552 = scalar_lea.vmem [#allocation3], 222
      %v6553 = vld [vmem:[%s6552] ss:$2 sm:$0xff]
      %s6554 = scalar_lea.vmem [#allocation3], 238
      %v6555 = vld [vmem:[%s6554] ss:$2 sm:$0xff]
      %s6556 = scalar_lea.vmem [#allocation3], 254
      %v6557 = vld [vmem:[%s6556] ss:$2 sm:$0xff]
      %s6558 = scalar_lea.vmem [#allocation3], 270
      %v6559 = vld [vmem:[%s6558] ss:$2 sm:$0xff]
      %s6560 = scalar_lea.vmem [#allocation3], 286
      %v6561 = vld [vmem:[%s6560] ss:$2 sm:$0xff]
      %s6562 = scalar_lea.vmem [#allocation3], 302
      %v6563 = vld [vmem:[%s6562] ss:$2 sm:$0xff]
      %s6564 = scalar_lea.vmem [#allocation3], 318
      %v6565 = vld [vmem:[%s6564] ss:$2 sm:$0xff]
      %s6566 = scalar_lea.vmem [#allocation3], 334
      %v6567 = vld [vmem:[%s6566] ss:$2 sm:$0xff]
      %6577 = vrot.lane.b32.xlu0 %v6401, 8
      %v6578 = vpop.permute.xlu0 %6577
      %6579 = vrot.lane.b32.xlu0 %v6403, 8
      %v6580 = vpop.permute.xlu0 %6579
      %6581 = vrot.lane.b32.xlu0 %v6405, 8
      %v6582 = vpop.permute.xlu0 %6581
      %6583 = vrot.lane.b32.xlu0 %v6407, 8
      %v6584 = vpop.permute.xlu0 %6583
      %6585 = vrot.lane.b32.xlu0 %v6409, 8
      %v6586 = vpop.permute.xlu0 %6585
      %6587 = vrot.lane.b32.xlu0 %v6411, 8
      %v6588 = vpop.permute.xlu0 %6587
      %6589 = vrot.lane.b32.xlu0 %v6413, 8
      %v6590 = vpop.permute.xlu0 %6589
      %6591 = vrot.lane.b32.xlu0 %v6415, 8
      %v6592 = vpop.permute.xlu0 %6591
      %6593 = vrot.lane.b32.xlu0 %v6417, 8
      %v6594 = vpop.permute.xlu0 %6593
      %6613 = vrot.lane.b32.xlu0 %v6418, 16
      %v6614 = vpop.permute.xlu0 %6613
      %6615 = vrot.lane.b32.xlu0 %v6420, 16
      %v6616 = vpop.permute.xlu0 %6615
      %6617 = vrot.lane.b32.xlu0 %v6422, 16
      %v6618 = vpop.permute.xlu0 %6617
      %6619 = vrot.lane.b32.xlu0 %v6424, 16
      %v6620 = vpop.permute.xlu0 %6619
      %6621 = vrot.lane.b32.xlu0 %v6426, 16
      %v6622 = vpop.permute.xlu0 %6621
      %6623 = vrot.lane.b32.xlu0 %v6428, 16
      %v6624 = vpop.permute.xlu0 %6623
      %6625 = vrot.lane.b32.xlu0 %v6430, 16
      %v6626 = vpop.permute.xlu0 %6625
      %6627 = vrot.lane.b32.xlu0 %v6432, 16
      %v6628 = vpop.permute.xlu0 %6627
      %6629 = vrot.lane.b32.xlu0 %v6434, 16
      %v6630 = vpop.permute.xlu0 %6629
      %6649 = vrot.lane.b32.xlu0 %v6435, 24
      %v6650 = vpop.permute.xlu0 %6649
      %6651 = vrot.lane.b32.xlu0 %v6437, 24
      %v6652 = vpop.permute.xlu0 %6651
      %6653 = vrot.lane.b32.xlu0 %v6439, 24
      %v6654 = vpop.permute.xlu0 %6653
      %6655 = vrot.lane.b32.xlu0 %v6441, 24
      %v6656 = vpop.permute.xlu0 %6655
      %6657 = vrot.lane.b32.xlu0 %v6443, 24
      %v6658 = vpop.permute.xlu0 %6657
      %6659 = vrot.lane.b32.xlu0 %v6445, 24
      %v6660 = vpop.permute.xlu0 %6659
      %6661 = vrot.lane.b32.xlu0 %v6447, 24
      %v6662 = vpop.permute.xlu0 %6661
      %6663 = vrot.lane.b32.xlu0 %v6449, 24
      %v6664 = vpop.permute.xlu0 %6663
      %6665 = vrot.lane.b32.xlu0 %v6451, 24
      %v6666 = vpop.permute.xlu0 %6665
      %6677 = vrot.lane.b32.xlu0 %v6420, 32
      %v6678 = vpop.permute.xlu0 %6677
      %6679 = vrot.lane.b32.xlu0 %v6422, 32
      %v6680 = vpop.permute.xlu0 %6679
      %6681 = vrot.lane.b32.xlu0 %v6424, 32
      %v6682 = vpop.permute.xlu0 %6681
      %6683 = vrot.lane.b32.xlu0 %v6426, 32
      %v6684 = vpop.permute.xlu0 %6683
      %6685 = vrot.lane.b32.xlu0 %v6428, 32
      %v6686 = vpop.permute.xlu0 %6685
      %6687 = vrot.lane.b32.xlu0 %v6430, 32
      %v6688 = vpop.permute.xlu0 %6687
      %6689 = vrot.lane.b32.xlu0 %v6432, 32
      %v6690 = vpop.permute.xlu0 %6689
      %6691 = vrot.lane.b32.xlu0 %v6434, 32
      %v6692 = vpop.permute.xlu0 %6691
      %6693 = vrot.lane.b32.xlu0 %v6453, 32
      %v6694 = vpop.permute.xlu0 %6693
      %6705 = vrot.lane.b32.xlu0 %v6437, 40
      %v6706 = vpop.permute.xlu0 %6705
      %6707 = vrot.lane.b32.xlu0 %v6439, 40
      %v6708 = vpop.permute.xlu0 %6707
      %6709 = vrot.lane.b32.xlu0 %v6441, 40
      %v6710 = vpop.permute.xlu0 %6709
      %6711 = vrot.lane.b32.xlu0 %v6443, 40
      %v6712 = vpop.permute.xlu0 %6711
      %6713 = vrot.lane.b32.xlu0 %v6445, 40
      %v6714 = vpop.permute.xlu0 %6713
      %6715 = vrot.lane.b32.xlu0 %v6447, 40
      %v6716 = vpop.permute.xlu0 %6715
      %6717 = vrot.lane.b32.xlu0 %v6449, 40
      %v6718 = vpop.permute.xlu0 %6717
      %6719 = vrot.lane.b32.xlu0 %v6451, 40
      %v6720 = vpop.permute.xlu0 %6719
      %6721 = vrot.lane.b32.xlu0 %v6455, 40
      %v6722 = vpop.permute.xlu0 %6721
      %6741 = vrot.lane.b32.xlu0 %v6456, 48
      %v6742 = vpop.permute.xlu0 %6741
      %6743 = vrot.lane.b32.xlu0 %v6458, 48
      %v6744 = vpop.permute.xlu0 %6743
      %6745 = vrot.lane.b32.xlu0 %v6460, 48
      %v6746 = vpop.permute.xlu0 %6745
      %6747 = vrot.lane.b32.xlu0 %v6462, 48
      %v6748 = vpop.permute.xlu0 %6747
      %6749 = vrot.lane.b32.xlu0 %v6464, 48
      %v6750 = vpop.permute.xlu0 %6749
      %6751 = vrot.lane.b32.xlu0 %v6466, 48
      %v6752 = vpop.permute.xlu0 %6751
      %6753 = vrot.lane.b32.xlu0 %v6468, 48
      %v6754 = vpop.permute.xlu0 %6753
      %6755 = vrot.lane.b32.xlu0 %v6470, 48
      %v6756 = vpop.permute.xlu0 %6755
      %6757 = vrot.lane.b32.xlu0 %v6472, 48
      %v6758 = vpop.permute.xlu0 %6757
      %6777 = vrot.lane.b32.xlu0 %v6473, 56
      %v6778 = vpop.permute.xlu0 %6777
      %6779 = vrot.lane.b32.xlu0 %v6475, 56
      %v6780 = vpop.permute.xlu0 %6779
      %6781 = vrot.lane.b32.xlu0 %v6477, 56
      %v6782 = vpop.permute.xlu0 %6781
      %6783 = vrot.lane.b32.xlu0 %v6479, 56
      %v6784 = vpop.permute.xlu0 %6783
      %6785 = vrot.lane.b32.xlu0 %v6481, 56
      %v6786 = vpop.permute.xlu0 %6785
      %6787 = vrot.lane.b32.xlu0 %v6483, 56
      %v6788 = vpop.permute.xlu0 %6787
      %6789 = vrot.lane.b32.xlu0 %v6485, 56
      %v6790 = vpop.permute.xlu0 %6789
      %6791 = vrot.lane.b32.xlu0 %v6487, 56
      %v6792 = vpop.permute.xlu0 %6791
      %6793 = vrot.lane.b32.xlu0 %v6489, 56
      %v6794 = vpop.permute.xlu0 %6793
      %6805 = vrot.lane.b32.xlu0 %v6458, 64
      %v6806 = vpop.permute.xlu0 %6805
      %6807 = vrot.lane.b32.xlu0 %v6460, 64
      %v6808 = vpop.permute.xlu0 %6807
      %6809 = vrot.lane.b32.xlu0 %v6462, 64
      %v6810 = vpop.permute.xlu0 %6809
      %6811 = vrot.lane.b32.xlu0 %v6464, 64
      %v6812 = vpop.permute.xlu0 %6811
      %6813 = vrot.lane.b32.xlu0 %v6466, 64
      %v6814 = vpop.permute.xlu0 %6813
      %6815 = vrot.lane.b32.xlu0 %v6468, 64
      %v6816 = vpop.permute.xlu0 %6815
      %6817 = vrot.lane.b32.xlu0 %v6470, 64
      %v6818 = vpop.permute.xlu0 %6817
      %6819 = vrot.lane.b32.xlu0 %v6472, 64
      %v6820 = vpop.permute.xlu0 %6819
      %6821 = vrot.lane.b32.xlu0 %v6491, 64
      %v6822 = vpop.permute.xlu0 %6821
      %6833 = vrot.lane.b32.xlu0 %v6475, 72
      %v6834 = vpop.permute.xlu0 %6833
      %6835 = vrot.lane.b32.xlu0 %v6477, 72
      %v6836 = vpop.permute.xlu0 %6835
      %6837 = vrot.lane.b32.xlu0 %v6479, 72
      %v6838 = vpop.permute.xlu0 %6837
      %6839 = vrot.lane.b32.xlu0 %v6481, 72
      %v6840 = vpop.permute.xlu0 %6839
      %6841 = vrot.lane.b32.xlu0 %v6483, 72
      %v6842 = vpop.permute.xlu0 %6841
      %6843 = vrot.lane.b32.xlu0 %v6485, 72
      %v6844 = vpop.permute.xlu0 %6843
      %6845 = vrot.lane.b32.xlu0 %v6487, 72
      %v6846 = vpop.permute.xlu0 %6845
      %6847 = vrot.lane.b32.xlu0 %v6489, 72
      %v6848 = vpop.permute.xlu0 %6847
      %6849 = vrot.lane.b32.xlu0 %v6493, 72
      %v6850 = vpop.permute.xlu0 %6849
      %6869 = vrot.lane.b32.xlu0 %v6494, 80
      %v6870 = vpop.permute.xlu0 %6869
      %6871 = vrot.lane.b32.xlu0 %v6496, 80
      %v6872 = vpop.permute.xlu0 %6871
      %6873 = vrot.lane.b32.xlu0 %v6498, 80
      %v6874 = vpop.permute.xlu0 %6873
      %6875 = vrot.lane.b32.xlu0 %v6500, 80
      %v6876 = vpop.permute.xlu0 %6875
      %6877 = vrot.lane.b32.xlu0 %v6502, 80
      %v6878 = vpop.permute.xlu0 %6877
      %6879 = vrot.lane.b32.xlu0 %v6504, 80
      %v6880 = vpop.permute.xlu0 %6879
      %6881 = vrot.lane.b32.xlu0 %v6506, 80
      %v6882 = vpop.permute.xlu0 %6881
      %6883 = vrot.lane.b32.xlu0 %v6508, 80
      %v6884 = vpop.permute.xlu0 %6883
      %6885 = vrot.lane.b32.xlu0 %v6510, 80
      %v6886 = vpop.permute.xlu0 %6885
      %6905 = vrot.lane.b32.xlu0 %v6511, 88
      %v6906 = vpop.permute.xlu0 %6905
      %6907 = vrot.lane.b32.xlu0 %v6513, 88
      %v6908 = vpop.permute.xlu0 %6907
      %6909 = vrot.lane.b32.xlu0 %v6515, 88
      %v6910 = vpop.permute.xlu0 %6909
      %6911 = vrot.lane.b32.xlu0 %v6517, 88
      %v6912 = vpop.permute.xlu0 %6911
      %6913 = vrot.lane.b32.xlu0 %v6519, 88
      %v6914 = vpop.permute.xlu0 %6913
      %6915 = vrot.lane.b32.xlu0 %v6521, 88
      %v6916 = vpop.permute.xlu0 %6915
      %6917 = vrot.lane.b32.xlu0 %v6523, 88
      %v6918 = vpop.permute.xlu0 %6917
      %6919 = vrot.lane.b32.xlu0 %v6525, 88
      %v6920 = vpop.permute.xlu0 %6919
      %6921 = vrot.lane.b32.xlu0 %v6527, 88
      %v6922 = vpop.permute.xlu0 %6921
      %6933 = vrot.lane.b32.xlu0 %v6496, 96
      %v6934 = vpop.permute.xlu0 %6933
      %6935 = vrot.lane.b32.xlu0 %v6498, 96
      %v6936 = vpop.permute.xlu0 %6935
      %6937 = vrot.lane.b32.xlu0 %v6500, 96
      %v6938 = vpop.permute.xlu0 %6937
      %6939 = vrot.lane.b32.xlu0 %v6502, 96
      %v6940 = vpop.permute.xlu0 %6939
      %6941 = vrot.lane.b32.xlu0 %v6504, 96
      %v6942 = vpop.permute.xlu0 %6941
      %6943 = vrot.lane.b32.xlu0 %v6506, 96
      %v6944 = vpop.permute.xlu0 %6943
      %6945 = vrot.lane.b32.xlu0 %v6508, 96
      %v6946 = vpop.permute.xlu0 %6945
      %6947 = vrot.lane.b32.xlu0 %v6510, 96
      %v6948 = vpop.permute.xlu0 %6947
      %6949 = vrot.lane.b32.xlu0 %v6529, 96
      %v6950 = vpop.permute.xlu0 %6949
      %6961 = vrot.lane.b32.xlu0 %v6513, 104
      %v6962 = vpop.permute.xlu0 %6961
      %6963 = vrot.lane.b32.xlu0 %v6515, 104
      %v6964 = vpop.permute.xlu0 %6963
      %6965 = vrot.lane.b32.xlu0 %v6517, 104
      %v6966 = vpop.permute.xlu0 %6965
      %6967 = vrot.lane.b32.xlu0 %v6519, 104
      %v6968 = vpop.permute.xlu0 %6967
      %6969 = vrot.lane.b32.xlu0 %v6521, 104
      %v6970 = vpop.permute.xlu0 %6969
      %6971 = vrot.lane.b32.xlu0 %v6523, 104
      %v6972 = vpop.permute.xlu0 %6971
      %6973 = vrot.lane.b32.xlu0 %v6525, 104
      %v6974 = vpop.permute.xlu0 %6973
      %6975 = vrot.lane.b32.xlu0 %v6527, 104
      %v6976 = vpop.permute.xlu0 %6975
      %6977 = vrot.lane.b32.xlu0 %v6531, 104
      %v6978 = vpop.permute.xlu0 %6977
      %6997 = vrot.lane.b32.xlu0 %v6533, 112
      %v6998 = vpop.permute.xlu0 %6997
      %6999 = vrot.lane.b32.xlu0 %v6535, 112
      %v7000 = vpop.permute.xlu0 %6999
      %7001 = vrot.lane.b32.xlu0 %v6537, 112
      %v7002 = vpop.permute.xlu0 %7001
      %7003 = vrot.lane.b32.xlu0 %v6539, 112
      %v7004 = vpop.permute.xlu0 %7003
      %7005 = vrot.lane.b32.xlu0 %v6541, 112
      %v7006 = vpop.permute.xlu0 %7005
      %7007 = vrot.lane.b32.xlu0 %v6543, 112
      %v7008 = vpop.permute.xlu0 %7007
      %7009 = vrot.lane.b32.xlu0 %v6545, 112
      %v7010 = vpop.permute.xlu0 %7009
      %7011 = vrot.lane.b32.xlu0 %v6547, 112
      %v7012 = vpop.permute.xlu0 %7011
      %7013 = vrot.lane.b32.xlu0 %v6549, 112
      %v7014 = vpop.permute.xlu0 %7013
      %7033 = vrot.lane.b32.xlu0 %v6551, 120
      %v7034 = vpop.permute.xlu0 %7033
      %7035 = vrot.lane.b32.xlu0 %v6553, 120
      %v7036 = vpop.permute.xlu0 %7035
      %7037 = vrot.lane.b32.xlu0 %v6555, 120
      %v7038 = vpop.permute.xlu0 %7037
      %7039 = vrot.lane.b32.xlu0 %v6557, 120
      %v7040 = vpop.permute.xlu0 %7039
      %7041 = vrot.lane.b32.xlu0 %v6559, 120
      %v7042 = vpop.permute.xlu0 %7041
      %7043 = vrot.lane.b32.xlu0 %v6561, 120
      %v7044 = vpop.permute.xlu0 %7043
      %7045 = vrot.lane.b32.xlu0 %v6563, 120
      %v7046 = vpop.permute.xlu0 %7045
      %7047 = vrot.lane.b32.xlu0 %v6565, 120
      %v7048 = vpop.permute.xlu0 %7047
      %7049 = vrot.lane.b32.xlu0 %v6567, 120
      %v7050 = vpop.permute.xlu0 %7049
      %v7060 = vsel %vm446, %v6383, %v6578
      %v7061 = vsel %vm446, %v6385, %v6580
      %v7062 = vsel %vm446, %v6387, %v6582
      %v7063 = vsel %vm446, %v6389, %v6584
      %v7064 = vsel %vm446, %v6391, %v6586
      %v7065 = vsel %vm446, %v6393, %v6588
      %v7066 = vsel %vm446, %v6395, %v6590
      %v7067 = vsel %vm446, %v6397, %v6592
      %v7068 = vsel %vm446, %v6399, %v6594
      %v7069 = vsel %vm1275, %v7060, %v6614
      %v7070 = vsel %vm1275, %v7061, %v6616
      %v7071 = vsel %vm1275, %v7062, %v6618
      %v7072 = vsel %vm1275, %v7063, %v6620
      %v7073 = vsel %vm1275, %v7064, %v6622
      %v7074 = vsel %vm1275, %v7065, %v6624
      %v7075 = vsel %vm1275, %v7066, %v6626
      %v7076 = vsel %vm1275, %v7067, %v6628
      %v7077 = vsel %vm1275, %v7068, %v6630
      %v7078 = vsel %vm1313, %v7069, %v6650
      %v7079 = vsel %vm1313, %v7070, %v6652
      %v7080 = vsel %vm1313, %v7071, %v6654
      %v7081 = vsel %vm1313, %v7072, %v6656
      %v7082 = vsel %vm1313, %v7073, %v6658
      %v7083 = vsel %vm1313, %v7074, %v6660
      %v7084 = vsel %vm1313, %v7075, %v6662
      %v7085 = vsel %vm1313, %v7076, %v6664
      %v7086 = vsel %vm1313, %v7077, %v6666
      %v7087 = vsel %vm1351, %v7078, %v6678
      %v7088 = vsel %vm1351, %v7079, %v6680
      %v7089 = vsel %vm1351, %v7080, %v6682
      %v7090 = vsel %vm1351, %v7081, %v6684
      %v7091 = vsel %vm1351, %v7082, %v6686
      %v7092 = vsel %vm1351, %v7083, %v6688
      %v7093 = vsel %vm1351, %v7084, %v6690
      %v7094 = vsel %vm1351, %v7085, %v6692
      %v7095 = vsel %vm1351, %v7086, %v6694
      %v7096 = vsel %vm3827, %v7087, %v6706
      %v7097 = vsel %vm3827, %v7088, %v6708
      %v7098 = vsel %vm3827, %v7089, %v6710
      %v7099 = vsel %vm3827, %v7090, %v6712
      %v7100 = vsel %vm3827, %v7091, %v6714
      %v7101 = vsel %vm3827, %v7092, %v6716
      %v7102 = vsel %vm3827, %v7093, %v6718
      %v7103 = vsel %vm3827, %v7094, %v6720
      %v7104 = vsel %vm3827, %v7095, %v6722
      %v7105 = vsel %vm3846, %v7096, %v6742
      %v7106 = vsel %vm3846, %v7097, %v6744
      %v7107 = vsel %vm3846, %v7098, %v6746
      %v7108 = vsel %vm3846, %v7099, %v6748
      %v7109 = vsel %vm3846, %v7100, %v6750
      %v7110 = vsel %vm3846, %v7101, %v6752
      %v7111 = vsel %vm3846, %v7102, %v6754
      %v7112 = vsel %vm3846, %v7103, %v6756
      %v7113 = vsel %vm3846, %v7104, %v6758
      %v7114 = vsel %vm3865, %v7105, %v6778
      %v7115 = vsel %vm3865, %v7106, %v6780
      %v7116 = vsel %vm3865, %v7107, %v6782
      %v7117 = vsel %vm3865, %v7108, %v6784
      %v7118 = vsel %vm3865, %v7109, %v6786
      %v7119 = vsel %vm3865, %v7110, %v6788
      %v7120 = vsel %vm3865, %v7111, %v6790
      %v7121 = vsel %vm3865, %v7112, %v6792
      %v7122 = vsel %vm3865, %v7113, %v6794
      %v7123 = vsel %vm3884, %v7114, %v6806
      %v7124 = vsel %vm3884, %v7115, %v6808
      %v7125 = vsel %vm3884, %v7116, %v6810
      %v7126 = vsel %vm3884, %v7117, %v6812
      %v7127 = vsel %vm3884, %v7118, %v6814
      %v7128 = vsel %vm3884, %v7119, %v6816
      %v7129 = vsel %vm3884, %v7120, %v6818
      %v7130 = vsel %vm3884, %v7121, %v6820
      %v7131 = vsel %vm3884, %v7122, %v6822
      %v7132 = vsel %vm3942, %v7123, %v6834
      %v7133 = vsel %vm3942, %v7124, %v6836
      %v7134 = vsel %vm3942, %v7125, %v6838
      %v7135 = vsel %vm3942, %v7126, %v6840
      %v7136 = vsel %vm3942, %v7127, %v6842
      %v7137 = vsel %vm3942, %v7128, %v6844
      %v7138 = vsel %vm3942, %v7129, %v6846
      %v7139 = vsel %vm3942, %v7130, %v6848
      %v7140 = vsel %vm3942, %v7131, %v6850
      %v7141 = vsel %vm6227, %v7132, %v6870
      %v7142 = vsel %vm6227, %v7133, %v6872
      %v7143 = vsel %vm6227, %v7134, %v6874
      %v7144 = vsel %vm6227, %v7135, %v6876
      %v7145 = vsel %vm6227, %v7136, %v6878
      %v7146 = vsel %vm6227, %v7137, %v6880
      %v7147 = vsel %vm6227, %v7138, %v6882
      %v7148 = vsel %vm6227, %v7139, %v6884
      %v7149 = vsel %vm6227, %v7140, %v6886
      %v7150 = vsel %vm6237, %v7141, %v6906
      %v7151 = vsel %vm6237, %v7142, %v6908
      %v7152 = vsel %vm6237, %v7143, %v6910
      %v7153 = vsel %vm6237, %v7144, %v6912
      %v7154 = vsel %vm6237, %v7145, %v6914
      %v7155 = vsel %vm6237, %v7146, %v6916
      %v7156 = vsel %vm6237, %v7147, %v6918
      %v7157 = vsel %vm6237, %v7148, %v6920
      %v7158 = vsel %vm6237, %v7149, %v6922
      %v7159 = vsel %vm6247, %v7150, %v6934
      %v7160 = vsel %vm6247, %v7151, %v6936
      %v7161 = vsel %vm6247, %v7152, %v6938
      %v7162 = vsel %vm6247, %v7153, %v6940
      %v7163 = vsel %vm6247, %v7154, %v6942
      %v7164 = vsel %vm6247, %v7155, %v6944
      %v7165 = vsel %vm6247, %v7156, %v6946
      %v7166 = vsel %vm6247, %v7157, %v6948
      %v7167 = vsel %vm6247, %v7158, %v6950
      %v7168 = vsel %vm6257, %v7159, %v6962
      %v7169 = vsel %vm6257, %v7160, %v6964
      %v7170 = vsel %vm6257, %v7161, %v6966
      %v7171 = vsel %vm6257, %v7162, %v6968
      %v7172 = vsel %vm6257, %v7163, %v6970
      %v7173 = vsel %vm6257, %v7164, %v6972
      %v7174 = vsel %vm6257, %v7165, %v6974
      %v7175 = vsel %vm6257, %v7166, %v6976
      %v7176 = vsel %vm6257, %v7167, %v6978
      %v7177 = vsel %vm6267, %v7168, %v6998
      %v7178 = vsel %vm6267, %v7169, %v7000
      %v7179 = vsel %vm6267, %v7170, %v7002
      %v7180 = vsel %vm6267, %v7171, %v7004
      %v7181 = vsel %vm6267, %v7172, %v7006
      %v7182 = vsel %vm6267, %v7173, %v7008
      %v7183 = vsel %vm6267, %v7174, %v7010
      %v7184 = vsel %vm6267, %v7175, %v7012
      %v7185 = vsel %vm6267, %v7176, %v7014
      %v7186 = vsel %vm6277, %v7177, %v7034
      %v7187 = vsel %vm6277, %v7178, %v7036
      %v7188 = vsel %vm6277, %v7179, %v7038
      %v7189 = vsel %vm6277, %v7180, %v7040
      %v7190 = vsel %vm6277, %v7181, %v7042
      %v7191 = vsel %vm6277, %v7182, %v7044
      %v7192 = vsel %vm6277, %v7183, %v7046
      %v7193 = vsel %vm6277, %v7184, %v7048
      %v7194 = vsel %vm6277, %v7185, %v7050
      %v7195 = vpack.c.bf16 %v7187, %v7186
      %v7196 = vpack.c.bf16 %v7189, %v7188
      %v7197 = vpack.c.bf16 %v7191, %v7190
      %v7198 = vpack.c.bf16 %v7193, %v7192
      %v7199 = vpack.c.bf16 %v7194, %v7194
      %7200 = vmatpush.bf16.msra.mxu0 %v6331
      %7201 = vmatpush.bf16.msra.mxu0 %v6330
      %7202 = vmatpush.bf16.msra.mxu0 %v6329
      %7203 = vmatpush.bf16.msra.mxu0 %v6328
      %7204 = vmatpush.bf16.msra.mxu0 %v6327
      %7205 = vmatpush.bf16.msra.mxu0 %v6326
      %7206 = vmatpush.bf16.msra.mxu0 %v6325
      %7207 = vmatpush.bf16.msra.mxu0 %v6324
      %7208 = vmatmul.bf16.gmra.mxu0 %v7195
      %v7209 = vpop.f32.mrf.mxu0
      %v7210 = vadd.f32 0.0, %v7209
      %v7211 = vpop.f32.mrf.mxu0
      %v7212 = vadd.f32 0.0, %v7211
      %7213 = vmatmul.bf16.gmra.mxu0 %v7196
      %v7214 = vpop.f32.mrf.mxu0
      %v7215 = vadd.f32 0.0, %v7214
      %v7216 = vpop.f32.mrf.mxu0
      %v7217 = vadd.f32 0.0, %v7216
      %7218 = vmatmul.bf16.gmra.mxu0 %v7197
      %v7219 = vpop.f32.mrf.mxu0
      %v7220 = vadd.f32 0.0, %v7219
      %v7221 = vpop.f32.mrf.mxu0
      %v7222 = vadd.f32 0.0, %v7221
      %7223 = vmatmul.bf16.gmra.mxu0 %v7198
      %v7224 = vpop.f32.mrf.mxu0
      %v7225 = vadd.f32 0.0, %v7224
      %v7226 = vpop.f32.mrf.mxu0
      %v7227 = vadd.f32 0.0, %v7226
      %7228 = vmatmul.bf16.gmra.mxu0 %v7199
      %v7229 = vpop.f32.mrf.mxu0
      %v7230 = vadd.f32 0.0, %v7229
      %v7231 = vpop.f32.mrf.mxu0
      %7232 = vdwg.mxu0
      %7233 = vst.msk [vmem:[%s426 + $0x48] sm:$0xff] %vm446, %v7210
      %7234 = vst.msk [vmem:[%s426 + $0x50] sm:$0xff] %vm446, %v7212
      %7235 = vst.msk [vmem:[%s426 + $0x58] sm:$0xff] %vm446, %v7215
      %7236 = vst.msk [vmem:[%s426 + $0x60] sm:$0xff] %vm446, %v7217
      %7237 = vst.msk [vmem:[%s426 + $0x68] sm:$0xff] %vm446, %v7220
      %7238 = vst.msk [vmem:[%s426 + $0x70] sm:$0xff] %vm446, %v7222
      %7239 = vst.msk [vmem:[%s426 + $0x78] sm:$0xff] %vm446, %v7225
      %7240 = vst.msk [vmem:[%s426 + $0x80] sm:$0xff] %vm446, %v7227
      %7241 = vst.msk [vmem:[%s426 + $0x88] sm:$0xff] %vm446, %v7230
      %p7242 = scmp.lt.s32.totalorder %s24, 1
      %s7243 = scalar_select %p7242, %s24, 1
      %s7244 = smul.addr %s7243, 36
      %s7245 = smul.addr %s7244, 8
      %s7246 = scalar_lea.vmem %s11, %s7245
      %p7247 = scmp.lt.s32.totalorder %s24, 1
      %s7248 = scalar_select %p7247, %s24, 1
      %s7249 = smul.addr %s7248, 18
      %s7250 = smul.addr %s7249, 8
      %s7251 = scalar_lea.vmem %s12, %s7250
      // Predicated region
      $region65: #{tpu_custom_call.1} parent=63 // pred_check
        %p7252 = pneg %p278
      $region66: #{tpu_custom_call.1} parent=63 // pred_check_branch
        %7254 = sbr.rel (%p7252) target = $region68
      $region67: #{tpu_custom_call.1} parent=63 // pred_region
        _
      $region68: #{tpu_custom_call.1} parent=63 // pred_fallthru
        _
      // Predicated region
      $region69: #{tpu_custom_call.1} parent=63 // pred_check
        %p7255 = pneg %p304
      $region70: #{tpu_custom_call.1} parent=63 // pred_check_branch
        %7257 = sbr.rel (%p7255) target = $region72
      $region71: #{tpu_custom_call.1} parent=63 // pred_region
        _
      $region72: #{tpu_custom_call.1} parent=63 // pred_fallthru
        _
    $region64: #{tpu_custom_call.1} parent=5 // pred_fallthru
      _
    %p7258 = scmp.le.s32.totalorder 2, %s19
    // Predicated region
    $region73: #{tpu_custom_call.1} parent=5 // pred_check
      %p7259 = pneg %p7258
    $region74: #{tpu_custom_call.1} parent=5 // pred_check_branch
      %7261 = sbr.rel (%p7259) target = $region76
    $region75: #{tpu_custom_call.1} parent=5 // pred_region
      %s7262 = ssub.s32 %s19, 2
      // Predicated region
      $region77: #{tpu_custom_call.1} parent=75 // pred_check
        %p7263 = pneg %p284
      $region78: #{tpu_custom_call.1} parent=75 // pred_check_branch
        %7265 = sbr.rel (%p7263) target = $region80
      $region79: #{tpu_custom_call.1} parent=75 // pred_region
        %p7266 = scmp.lt.s32.totalorder %s25, 1
        %s7267 = scalar_select %p7266, %s25, 1
        %s7268 = smul.addr %s7267, 36
        %s7269 = smul.addr %s7268, 8
        %s7270 = scalar_lea.vmem %s11, %s7269
      $region80: #{tpu_custom_call.1} parent=75 // pred_fallthru
        _
      // Predicated region
      $region81: #{tpu_custom_call.1} parent=75 // pred_check
        %p7271 = pneg %p310
      $region82: #{tpu_custom_call.1} parent=75 // pred_check_branch
        %7273 = sbr.rel (%p7271) target = $region84
      $region83: #{tpu_custom_call.1} parent=75 // pred_region
        %p7274 = scmp.lt.s32.totalorder %s25, 1
        %s7275 = scalar_select %p7274, %s25, 1
        %s7276 = smul.addr %s7275, 18
        %s7277 = smul.addr %s7276, 8
        %s7278 = scalar_lea.vmem %s12, %s7277
      $region84: #{tpu_custom_call.1} parent=75 // pred_fallthru
        _
    $region76: #{tpu_custom_call.1} parent=5 // pred_fallthru
      _
  $region6: #{tpu_custom_call.1} parent=0 // loop_footer
    %s23 = sadd.s32 1, %s19
  $region7: #{tpu_custom_call.1} parent=0 // loop_footer_branch
    %18 = sbr.rel target = $region3
  $region8: #{tpu_custom_call.1} parent=0 // loop_exit
    _

</llo_original>
